<compile_context>
chip_gen: v7x
topology: tpu7x:2x2x1
jax: 0.10.0
libtpu: 0.0.40
codegen_flags: <defaults>
</compile_context>

<pallas_src>
import functools

import jax
import jax.numpy as jnp
from jax import lax
from jax.experimental import pallas as pl
from jax.experimental.pallas import tpu as pltpu

EPS = 1e-5
LANE = 128
N_CORES = 2      # megacore split for v7x; a size-2 outer axis costs nothing on v5e/v6e
ACC_ROWS = 8     # sublane-aligned (8,128) accumulator blocks (rows replicated)


def _round_up(x, m):
    return (x + m - 1) // m * m


# ---------------------------------------------------------------------------
# Pass 1 kernel: z1 = x @ w1 (bf16 MXU, f32 accumulate); store z1 as bf16;
# accumulate per-feature sum / sum-of-squares of z1 in f32 (per-core partial).
# Only the last real tile masks the row remainder; clamped duplicate tail
# steps (tile >= n_tiles) skip accumulation entirely.
# ---------------------------------------------------------------------------
def _matmul_stats_kernel(x_ref, w_ref, z_ref, sum_ref, ssq_ref, *,
                         n_valid, tile_n, n_inner, n_tiles):
    c = pl.program_id(0)
    i = pl.program_id(1)
    tile = c * n_inner + i

    @pl.when(i == 0)
    def _():
        sum_ref[...] = jnp.zeros_like(sum_ref)
        ssq_ref[...] = jnp.zeros_like(ssq_ref)

    z = jnp.dot(x_ref[...].astype(jnp.bfloat16), w_ref[...],
                preferred_element_type=jnp.float32)
    z_ref[...] = z.astype(z_ref.dtype)

    @pl.when(tile < n_tiles - 1)          # interior tiles: all rows valid
    def _():
        sum_ref[...] += jnp.sum(z, axis=0, keepdims=True)
        ssq_ref[...] += jnp.sum(z * z, axis=0, keepdims=True)

    @pl.when(tile == n_tiles - 1)         # last tile: mask the row remainder
    def _():
        row = tile * tile_n + lax.broadcasted_iota(jnp.int32, (tile_n, 1), 0)
        zm = jnp.where(row < n_valid, z, 0.0)
        sum_ref[...] += jnp.sum(zm, axis=0, keepdims=True)
        ssq_ref[...] += jnp.sum(zm * zm, axis=0, keepdims=True)


# ---------------------------------------------------------------------------
# Pass 2 kernel: h1 = relu(z1*scale1+shift1); z2 = h1 @ w2; accumulate only
# the per-feature sum / sum-of-squares of z2 (z2 itself is NOT stored).
# ---------------------------------------------------------------------------
def _bn_relu_matmul_stats_kernel(z_ref, scale_ref, shift_ref, w_ref,
                                 sum_ref, ssq_ref, *,
                                 n_valid, tile_n, n_inner, n_tiles):
    c = pl.program_id(0)
    i = pl.program_id(1)
    tile = c * n_inner + i

    @pl.when(i == 0)
    def _():
        sum_ref[...] = jnp.zeros_like(sum_ref)
        ssq_ref[...] = jnp.zeros_like(ssq_ref)

    h = jnp.maximum(z_ref[...] * scale_ref[...] + shift_ref[...], 0.0)  # f32
    z2 = jnp.dot(h.astype(jnp.bfloat16), w_ref[...],
                 preferred_element_type=jnp.float32)

    @pl.when(tile < n_tiles - 1)
    def _():
        sum_ref[...] += jnp.sum(z2, axis=0, keepdims=True)
        ssq_ref[...] += jnp.sum(z2 * z2, axis=0, keepdims=True)

    @pl.when(tile == n_tiles - 1)
    def _():
        row = tile * tile_n + lax.broadcasted_iota(jnp.int32, (tile_n, 1), 0)
        z2m = jnp.where(row < n_valid, z2, 0.0)
        sum_ref[...] += jnp.sum(z2m, axis=0, keepdims=True)
        ssq_ref[...] += jnp.sum(z2m * z2m, axis=0, keepdims=True)


# ---------------------------------------------------------------------------
# Pass 3 kernel: recompute z2 from z1 and apply the final folded BN + ReLU.
# Rows beyond n fall into the dropped out-of-bounds write region -> no mask.
# ---------------------------------------------------------------------------
def _recompute_bn_relu_kernel(z_ref, scale1_ref, shift1_ref, w_ref,
                              scale2_ref, shift2_ref, out_ref):
    h = jnp.maximum(z_ref[...] * scale1_ref[...] + shift1_ref[...], 0.0)
    z2 = jnp.dot(h.astype(jnp.bfloat16), w_ref[...],
                 preferred_element_type=jnp.float32)
    out_ref[...] = jnp.maximum(
        z2 * scale2_ref[...] + shift2_ref[...], 0.0).astype(out_ref.dtype)


def _fold_bn(acc_sum, acc_ssq, gamma, beta, n_valid):
    """Reduce per-core partials and fold batch stats + BN affine into scale/shift."""
    s = acc_sum[:, 0, :].sum(axis=0, keepdims=True)     # rows are replicated
    ss = acc_ssq[:, 0, :].sum(axis=0, keepdims=True)
    mean = s / n_valid
    var = jnp.maximum(ss / n_valid - mean * mean, 0.0)   # biased variance
    scale = gamma * lax.rsqrt(var + EPS)
    shift = beta - mean * scale
    return scale, shift


def apply_node_func(x, params, *, tile_n=512):
    """ApplyNodeFunc forward: ReLU(BN2(ReLU(BN1(x@W1)) @ W2)).

    x: [N, Din] float32. Linear biases (params['b1'], params['b2']) are
    intentionally not consumed: the following training-mode BatchNorm cancels
    them exactly.
    """
    n, din = x.shape
    hid = params["w1"].shape[1]
    dout = params["w2"].shape[1]

    hid_p = _round_up(hid, LANE)
    dout_p = _round_up(dout, LANE)

    f32, bf16 = jnp.float32, jnp.bfloat16

    # Only the small parameter arrays are padded/cast host-side.
    w1 = jnp.zeros((din, hid_p), bf16).at[:, :hid].set(params["w1"].astype(bf16))
    w2 = jnp.zeros((hid_p, dout_p), bf16).at[:hid, :dout].set(params["w2"].astype(bf16))
    g1 = jnp.zeros((1, hid_p), f32).at[:, :hid].set(params["g1"])
    be1 = jnp.zeros((1, hid_p), f32).at[:, :hid].set(params["be1"])
    g2 = jnp.zeros((1, dout_p), f32).at[:, :dout].set(params["g2"])
    be2 = jnp.zeros((1, dout_p), f32).at[:, :dout].set(params["be2"])

    # Row tiling: bf16-sublane aligned, shrink for tiny inputs.
    tile_n = _round_up(max(16, min(tile_n, _round_up(n, 16))), 16)
    n_tiles = pl.cdiv(n, tile_n)
    n_outer = N_CORES if n_tiles >= N_CORES else 1
    n_inner = pl.cdiv(n_tiles, n_outer)

    # Clamp so no block is ever fully out of bounds; duplicate tail steps are
    # idempotent for z1 and excluded from the stats accumulation.
    def row_map(c, i):
        return (jnp.minimum(c * n_inner + i, n_tiles - 1), 0)

    def res_map2(c, i):
        return (0, 0)

    acc_spec = lambda cols: pl.BlockSpec((None, ACC_ROWS, cols),
                                         lambda c, i: (c, 0, 0))
    acc_shape = lambda cols: jax.ShapeDtypeStruct((n_outer, ACC_ROWS, cols), f32)

    stats_params = dict(n_valid=n, tile_n=tile_n, n_inner=n_inner, n_tiles=n_tiles)
    mc_params = pltpu.CompilerParams(
        dimension_semantics=("parallel", "arbitrary"))
    # NOTE: at much larger tile_n / hidden widths, add vmem_limit_bytes here
    # (v5e default scoped VMEM is 16 MiB; v7x physical VMEM is 64 MiB).

    # --- pass 1: z1 = x @ w1 (bf16 store), per-feature stats of z1 ----------
    z1, s1, ss1 = pl.pallas_call(
        functools.partial(_matmul_stats_kernel, **stats_params),
        out_shape=(jax.ShapeDtypeStruct((n, hid_p), bf16),
                   acc_shape(hid_p), acc_shape(hid_p)),
        grid=(n_outer, n_inner),
        in_specs=[pl.BlockSpec((tile_n, din), row_map),
                  pl.BlockSpec((din, hid_p), res_map2)],
        out_specs=(pl.BlockSpec((tile_n, hid_p), row_map),
                   acc_spec(hid_p), acc_spec(hid_p)),
        compiler_params=mc_params,
    )(x.astype(f32), w1)
    scale1, shift1 = _fold_bn(s1, ss1, g1, be1, n)

    # --- pass 2: stats of z2 = ReLU(BN1(z1)) @ w2 (z2 never stored) ---------
    s2, ss2 = pl.pallas_call(
        functools.partial(_bn_relu_matmul_stats_kernel, **stats_params),
        out_shape=(acc_shape(dout_p), acc_shape(dout_p)),
        grid=(n_outer, n_inner),
        in_specs=[pl.BlockSpec((tile_n, hid_p), row_map),
                  pl.BlockSpec((1, hid_p), res_map2),
                  pl.BlockSpec((1, hid_p), res_map2),
                  pl.BlockSpec((hid_p, dout_p), res_map2)],
        out_specs=(acc_spec(dout_p), acc_spec(dout_p)),
        compiler_params=mc_params,
    )(z1, scale1, shift1, w2)
    scale2, shift2 = _fold_bn(s2, ss2, g2, be2, n)

    # --- pass 3: out = ReLU(BN2(ReLU(BN1(z1)) @ w2)) -------------------------
    res_map1 = lambda i: (0, 0)
    out = pl.pallas_call(
        _recompute_bn_relu_kernel,
        out_shape=jax.ShapeDtypeStruct((n, dout_p), f32),
        grid=(n_tiles,),
        in_specs=[pl.BlockSpec((tile_n, hid_p), lambda i: (i, 0)),
                  pl.BlockSpec((1, hid_p), res_map1),
                  pl.BlockSpec((1, hid_p), res_map1),
                  pl.BlockSpec((hid_p, dout_p), res_map1),
                  pl.BlockSpec((1, dout_p), res_map1),
                  pl.BlockSpec((1, dout_p), res_map1)],
        out_specs=pl.BlockSpec((tile_n, dout_p), lambda i: (i, 0)),
        compiler_params=pltpu.CompilerParams(
            dimension_semantics=("parallel",)),     # megacore-sharded on v7x
    )(z1, scale1, shift1, w2, scale2, shift2)

    return out[:, :dout]


def init_params(key, din, hidden, dout):
    ks = jax.random.split(key, 8)
    w1 = jax.random.normal(ks[0], (din, hidden), jnp.float32) * (2.0 / din) ** 0.5
    b1 = jax.random.normal(ks[1], (1, hidden), jnp.float32) * 0.01
    w2 = jax.random.normal(ks[2], (hidden, dout), jnp.float32) * (2.0 / hidden) ** 0.5
    b2 = jax.random.normal(ks[3], (1, dout), jnp.float32) * 0.01
    return {
        "w1": w1, "b1": b1,
        "g1": 1.0 + 0.1 * jax.random.normal(ks[4], (1, hidden), jnp.float32),
        "be1": 0.1 * jax.random.normal(ks[5], (1, hidden), jnp.float32),
        "w2": w2, "b2": b2,
        "g2": 1.0 + 0.1 * jax.random.normal(ks[6], (1, dout), jnp.float32),
        "be2": 0.1 * jax.random.normal(ks[7], (1, dout), jnp.float32),
    }


def _reference(x, p):
    # Pure-JAX f32 reference matching the PyTorch forward exactly (keeps the
    # Linear biases and the unfolded training-mode BatchNorm formulation).
    h1 = x @ p["w1"] + p["b1"]
    m = h1.mean(0, keepdims=True)
    v = ((h1 - m) ** 2).mean(0, keepdims=True)
    h1 = jnp.maximum((h1 - m) / jnp.sqrt(v + EPS) * p["g1"] + p["be1"], 0.0)
    h2 = h1 @ p["w2"] + p["b2"]
    m = h2.mean(0, keepdims=True)
    v = ((h2 - m) ** 2).mean(0, keepdims=True)
    return jnp.maximum((h2 - m) / jnp.sqrt(v + EPS) * p["g2"] + p["be2"], 0.0)


if __name__ == "__main__":
    key = jax.random.PRNGKey(0)
    k_x, k_p = jax.random.split(key)

    # Small but non-trivial: N is not a tile multiple (exercises the partial
    # last tile, the clamped duplicate megacore step, and the OOB row mask);
    # feature dims are not lane multiples (exercises lane padding of params).
    N, DIN, HIDDEN, DOUT = 1100, 48, 96, 64
    x = jax.random.normal(k_x, (N, DIN), jnp.float32)
    params = init_params(k_p, DIN, HIDDEN, DOUT)

    fwd = jax.jit(apply_node_func)
    out = jax.block_until_ready(fwd(x, params))
    ref = _reference(x, params)

    assert out.shape == (N, DOUT)
    # Tolerance loosened for bf16 activation/weight storage (stats and BN math
    # stay f32); f32-only variant matches the reference to ~1e-5.
    max_err = float(jnp.max(jnp.abs(out - ref)))
    mean_err = float(jnp.mean(jnp.abs(out - ref)))
    assert max_err < 0.25 and mean_err < 0.05, (max_err, mean_err)

    print("KERNEL_OK")
</pallas_src>

<mosaic_0001>
module attributes {stable_mosaic.version = 11 : i64} {
  func.func @_bn_relu_matmul_stats_kernel(%arg0: i32, %arg1: i32, %arg2: memref<512x128xbf16, #tpu.memory_space<vmem>>, %arg3: memref<1x128xf32, #tpu.memory_space<vmem>>, %arg4: memref<1x128xf32, #tpu.memory_space<vmem>>, %arg5: memref<128x128xbf16, #tpu.memory_space<vmem>>, %arg6: memref<1x8x128xf32, #tpu.memory_space<vmem>>, %arg7: memref<1x8x128xf32, #tpu.memory_space<vmem>>) attributes {dimension_semantics = [#tpu.dimension_semantics<parallel>, #tpu.dimension_semantics<arbitrary>], iteration_bounds = array<i64: 2, 2>, scalar_prefetch = 0 : i64, scratch_operands = 0 : i64, tpu.core_type = #tpu.core_type<tc>, window_params = [{transform_indices = @transform_0, window_bounds = array<i64: 512, 128>}, {pipeline_mode = #tpu.pipeline_mode<synchronous>, transform_indices = @transform_1, window_bounds = array<i64: 1, 128>}, {pipeline_mode = #tpu.pipeline_mode<synchronous>, transform_indices = @transform_2, window_bounds = array<i64: 1, 128>}, {pipeline_mode = #tpu.pipeline_mode<synchronous>, transform_indices = @transform_3, window_bounds = array<i64: 128, 128>}, {transform_indices = @transform_4, window_bounds = array<i64: 1, 8, 128>}, {transform_indices = @transform_5, window_bounds = array<i64: 1, 8, 128>}]} {
    %c2_i32 = arith.constant 2 : i32
    %0 = arith.muli %arg0, %c2_i32 : i32
    %1 = arith.addi %0, %arg1 : i32
    %c0_i32 = arith.constant 0 : i32
    %2 = arith.cmpi eq, %arg1, %c0_i32 : i32
    %3 = arith.extui %2 : i1 to i32
    %c0_i32_0 = arith.constant 0 : i32
    %4 = arith.cmpi ne, %3, %c0_i32_0 : i32
    scf.if %4 {
      %cst_13 = arith.constant 0.000000e+00 : f32
      %24 = vector.broadcast %cst_13 : f32 to vector<8x128xf32>
      %c0_14 = arith.constant 0 : index
      %c0_15 = arith.constant 0 : index
      %c0_16 = arith.constant 0 : index
      %25 = vector.load %arg6[%c0_14, %c0_15, %c0_16] : memref<1x8x128xf32, #tpu.memory_space<vmem>>, vector<1x8x128xf32>
      %26 = vector.shape_cast %25 : vector<1x8x128xf32> to vector<8x128xf32>
      %27 = vector.shape_cast %24 : vector<8x128xf32> to vector<1x8x128xf32>
      tpu.vector_store %arg6[%c0_14, %c0_15, %c0_16], %27 {strides = array<i32>} : memref<1x8x128xf32, #tpu.memory_space<vmem>>, vector<1x8x128xf32>,
      %cst_17 = arith.constant 0.000000e+00 : f32
      %28 = vector.broadcast %cst_17 : f32 to vector<8x128xf32>
      %c0_18 = arith.constant 0 : index
      %c0_19 = arith.constant 0 : index
      %c0_20 = arith.constant 0 : index
      %29 = vector.load %arg7[%c0_18, %c0_19, %c0_20] : memref<1x8x128xf32, #tpu.memory_space<vmem>>, vector<1x8x128xf32>
      %30 = vector.shape_cast %29 : vector<1x8x128xf32> to vector<8x128xf32>
      %31 = vector.shape_cast %28 : vector<8x128xf32> to vector<1x8x128xf32>
      tpu.vector_store %arg7[%c0_18, %c0_19, %c0_20], %31 {strides = array<i32>} : memref<1x8x128xf32, #tpu.memory_space<vmem>>, vector<1x8x128xf32>,
    } else {
    }
    %c0 = arith.constant 0 : index
    %c0_1 = arith.constant 0 : index
    %5 = vector.load %arg2[%c0, %c0_1] : memref<512x128xbf16, #tpu.memory_space<vmem>>, vector<512x128xbf16>
    %c0_2 = arith.constant 0 : index
    %c0_3 = arith.constant 0 : index
    %6 = vector.load %arg3[%c0_2, %c0_3] : memref<1x128xf32, #tpu.memory_space<vmem>>, vector<1x128xf32>
    %7 = arith.extf %5 : vector<512x128xbf16> to vector<512x128xf32>
    %8 = vector.broadcast %6 : vector<1x128xf32> to vector<512x128xf32>
    %9 = arith.mulf %7, %8 : vector<512x128xf32>
    %c0_4 = arith.constant 0 : index
    %c0_5 = arith.constant 0 : index
    %10 = vector.load %arg4[%c0_4, %c0_5] : memref<1x128xf32, #tpu.memory_space<vmem>>, vector<1x128xf32>
    %11 = vector.broadcast %10 : vector<1x128xf32> to vector<512x128xf32>
    %12 = arith.addf %9, %11 : vector<512x128xf32>
    %cst = arith.constant 0.000000e+00 : f32
    %13 = vector.broadcast %cst : f32 to vector<512x128xf32>
    %14 = arith.maximumf %12, %13 : vector<512x128xf32>
    %15 = arith.truncf %14 : vector<512x128xf32> to vector<512x128xbf16>
    %c0_6 = arith.constant 0 : index
    %c0_7 = arith.constant 0 : index
    %16 = vector.load %arg5[%c0_6, %c0_7] : memref<128x128xbf16, #tpu.memory_space<vmem>>, vector<128x128xbf16>
    %cst_8 = arith.constant dense<0.000000e+00> : vector<512x128xf32>
    %17 = tpu.matmul %15, %16, %cst_8 {dimension_numbers = #tpu.dot_dimension_numbers<[1], [0], [0], [1], [0, 0, 1, 1], [], []>} : vector<512x128xbf16>, vector<128x128xbf16>, vector<512x128xf32> -> vector<512x128xf32>
    %c2_i32_9 = arith.constant 2 : i32
    %18 = arith.cmpi slt, %1, %c2_i32_9 : i32
    %19 = arith.extui %18 : i1 to i32
    %c0_i32_10 = arith.constant 0 : i32
    %20 = arith.cmpi ne, %19, %c0_i32_10 : i32
    scf.if %20 {
      %c0_13 = arith.constant 0 : index
      %c0_14 = arith.constant 0 : index
      %c0_15 = arith.constant 0 : index
      %24 = vector.load %arg6[%c0_13, %c0_14, %c0_15] : memref<1x8x128xf32, #tpu.memory_space<vmem>>, vector<1x8x128xf32>
      %25 = vector.shape_cast %24 : vector<1x8x128xf32> to vector<8x128xf32>
      %cst_16 = arith.constant dense<0.000000e+00> : vector<128xf32>
      %26 = vector.multi_reduction <add>, %17, %cst_16 [0] : vector<512x128xf32> to vector<128xf32>
      %27 = vector.shape_cast %26 : vector<128xf32> to vector<1x128xf32>
      %28 = vector.broadcast %27 : vector<1x128xf32> to vector<8x128xf32>
      %29 = arith.addf %25, %28 : vector<8x128xf32>
      %c0_17 = arith.constant 0 : index
      %c0_18 = arith.constant 0 : index
      %c0_19 = arith.constant 0 : index
      %30 = vector.load %arg6[%c0_17, %c0_18, %c0_19] : memref<1x8x128xf32, #tpu.memory_space<vmem>>, vector<1x8x128xf32>
      %31 = vector.shape_cast %30 : vector<1x8x128xf32> to vector<8x128xf32>
      %32 = vector.shape_cast %29 : vector<8x128xf32> to vector<1x8x128xf32>
      tpu.vector_store %arg6[%c0_17, %c0_18, %c0_19], %32 {strides = array<i32>} : memref<1x8x128xf32, #tpu.memory_space<vmem>>, vector<1x8x128xf32>,
      %c0_20 = arith.constant 0 : index
      %c0_21 = arith.constant 0 : index
      %c0_22 = arith.constant 0 : index
      %33 = vector.load %arg7[%c0_20, %c0_21, %c0_22] : memref<1x8x128xf32, #tpu.memory_space<vmem>>, vector<1x8x128xf32>
      %34 = vector.shape_cast %33 : vector<1x8x128xf32> to vector<8x128xf32>
      %35 = arith.mulf %17, %17 : vector<512x128xf32>
      %cst_23 = arith.constant dense<0.000000e+00> : vector<128xf32>
      %36 = vector.multi_reduction <add>, %35, %cst_23 [0] : vector<512x128xf32> to vector<128xf32>
      %37 = vector.shape_cast %36 : vector<128xf32> to vector<1x128xf32>
      %38 = vector.broadcast %37 : vector<1x128xf32> to vector<8x128xf32>
      %39 = arith.addf %34, %38 : vector<8x128xf32>
      %c0_24 = arith.constant 0 : index
      %c0_25 = arith.constant 0 : index
      %c0_26 = arith.constant 0 : index
      %40 = vector.load %arg7[%c0_24, %c0_25, %c0_26] : memref<1x8x128xf32, #tpu.memory_space<vmem>>, vector<1x8x128xf32>
      %41 = vector.shape_cast %40 : vector<1x8x128xf32> to vector<8x128xf32>
      %42 = vector.shape_cast %39 : vector<8x128xf32> to vector<1x8x128xf32>
      tpu.vector_store %arg7[%c0_24, %c0_25, %c0_26], %42 {strides = array<i32>} : memref<1x8x128xf32, #tpu.memory_space<vmem>>, vector<1x8x128xf32>,
    } else {
    }
    %c2_i32_11 = arith.constant 2 : i32
    %21 = arith.cmpi eq, %1, %c2_i32_11 : i32
    %22 = arith.extui %21 : i1 to i32
    %c0_i32_12 = arith.constant 0 : i32
    %23 = arith.cmpi ne, %22, %c0_i32_12 : i32
    scf.if %23 {
      %c512_i32 = arith.constant 512 : i32
      %24 = arith.muli %1, %c512_i32 : i32
      %25 = tpu.iota {dimensions = array<i32: 0>} : vector<512x1xi32>
      %26 = vector.broadcast %24 : i32 to vector<512x1xi32>
      %27 = arith.addi %26, %25 : vector<512x1xi32>
      %c1100_i32 = arith.constant 1100 : i32
      %28 = vector.broadcast %c1100_i32 : i32 to vector<512x1xi32>
      %29 = arith.cmpi slt, %27, %28 : vector<512x1xi32>
      %cst_13 = arith.constant 0.000000e+00 : f32
      %30 = vector.shape_cast %29 : vector<512x1xi1> to vector<512x1xi1>
      %31 = vector.broadcast %30 : vector<512x1xi1> to vector<512x128xi1>
      %32 = vector.broadcast %cst_13 : f32 to vector<512x128xf32>
      %33 = arith.select %31, %17, %32 : vector<512x128xi1>, vector<512x128xf32>
      %c0_14 = arith.constant 0 : index
      %c0_15 = arith.constant 0 : index
      %c0_16 = arith.constant 0 : index
      %34 = vector.load %arg6[%c0_14, %c0_15, %c0_16] : memref<1x8x128xf32, #tpu.memory_space<vmem>>, vector<1x8x128xf32>
      %35 = vector.shape_cast %34 : vector<1x8x128xf32> to vector<8x128xf32>
      %cst_17 = arith.constant dense<0.000000e+00> : vector<128xf32>
      %36 = vector.multi_reduction <add>, %33, %cst_17 [0] : vector<512x128xf32> to vector<128xf32>
      %37 = vector.shape_cast %36 : vector<128xf32> to vector<1x128xf32>
      %38 = vector.broadcast %37 : vector<1x128xf32> to vector<8x128xf32>
      %39 = arith.addf %35, %38 : vector<8x128xf32>
      %c0_18 = arith.constant 0 : index
      %c0_19 = arith.constant 0 : index
      %c0_20 = arith.constant 0 : index
      %40 = vector.load %arg6[%c0_18, %c0_19, %c0_20] : memref<1x8x128xf32, #tpu.memory_space<vmem>>, vector<1x8x128xf32>
      %41 = vector.shape_cast %40 : vector<1x8x128xf32> to vector<8x128xf32>
      %42 = vector.shape_cast %39 : vector<8x128xf32> to vector<1x8x128xf32>
      tpu.vector_store %arg6[%c0_18, %c0_19, %c0_20], %42 {strides = array<i32>} : memref<1x8x128xf32, #tpu.memory_space<vmem>>, vector<1x8x128xf32>,
      %c0_21 = arith.constant 0 : index
      %c0_22 = arith.constant 0 : index
      %c0_23 = arith.constant 0 : index
      %43 = vector.load %arg7[%c0_21, %c0_22, %c0_23] : memref<1x8x128xf32, #tpu.memory_space<vmem>>, vector<1x8x128xf32>
      %44 = vector.shape_cast %43 : vector<1x8x128xf32> to vector<8x128xf32>
      %45 = arith.mulf %33, %33 : vector<512x128xf32>
      %cst_24 = arith.constant dense<0.000000e+00> : vector<128xf32>
      %46 = vector.multi_reduction <add>, %45, %cst_24 [0] : vector<512x128xf32> to vector<128xf32>
      %47 = vector.shape_cast %46 : vector<128xf32> to vector<1x128xf32>
      %48 = vector.broadcast %47 : vector<1x128xf32> to vector<8x128xf32>
      %49 = arith.addf %44, %48 : vector<8x128xf32>
      %c0_25 = arith.constant 0 : index
      %c0_26 = arith.constant 0 : index
      %c0_27 = arith.constant 0 : index
      %50 = vector.load %arg7[%c0_25, %c0_26, %c0_27] : memref<1x8x128xf32, #tpu.memory_space<vmem>>, vector<1x8x128xf32>
      %51 = vector.shape_cast %50 : vector<1x8x128xf32> to vector<8x128xf32>
      %52 = vector.shape_cast %49 : vector<8x128xf32> to vector<1x8x128xf32>
      tpu.vector_store %arg7[%c0_25, %c0_26, %c0_27], %52 {strides = array<i32>} : memref<1x8x128xf32, #tpu.memory_space<vmem>>, vector<1x8x128xf32>,
    } else {
    }
    return
  }
  func.func @transform_0(%arg0: i32, %arg1: i32) -> (i32, i32) {
    %c2_i32 = arith.constant 2 : i32
    %0 = arith.muli %arg0, %c2_i32 : i32
    %1 = arith.addi %0, %arg1 : i32
    %c2_i32_0 = arith.constant 2 : i32
    %2 = arith.minsi %1, %c2_i32_0 : i32
    %c0_i32 = arith.constant 0 : i32
    %c0_i32_1 = arith.constant 0 : i32
    return %2, %c0_i32 : i32, i32
  }
  func.func @transform_1(%arg0: i32, %arg1: i32) -> (i32, i32) {
    %c0_i32 = arith.constant 0 : i32
    %c0_i32_0 = arith.constant 0 : i32
    %c0_i32_1 = arith.constant 0 : i32
    return %c0_i32, %c0_i32_0 : i32, i32
  }
  func.func @transform_2(%arg0: i32, %arg1: i32) -> (i32, i32) {
    %c0_i32 = arith.constant 0 : i32
    %c0_i32_0 = arith.constant 0 : i32
    %c0_i32_1 = arith.constant 0 : i32
    return %c0_i32, %c0_i32_0 : i32, i32
  }
  func.func @transform_3(%arg0: i32, %arg1: i32) -> (i32, i32) {
    %c0_i32 = arith.constant 0 : i32
    %c0_i32_0 = arith.constant 0 : i32
    %c0_i32_1 = arith.constant 0 : i32
    return %c0_i32, %c0_i32_0 : i32, i32
  }
  func.func @transform_4(%arg0: i32, %arg1: i32) -> (i32, i32, i32) {
    %c0_i32 = arith.constant 0 : i32
    %c0_i32_0 = arith.constant 0 : i32
    %c0_i32_1 = arith.constant 0 : i32
    return %arg0, %c0_i32, %c0_i32_0 : i32, i32, i32
  }
  func.func @transform_5(%arg0: i32, %arg1: i32) -> (i32, i32, i32) {
    %c0_i32 = arith.constant 0 : i32
    %c0_i32_0 = arith.constant 0 : i32
    %c0_i32_1 = arith.constant 0 : i32
    return %arg0, %c0_i32, %c0_i32_0 : i32, i32, i32
  }
}

module attributes {stable_mosaic.version = 11 : i64} {
  func.func @_matmul_stats_kernel(%arg0: i32, %arg1: i32, %arg2: memref<512x48xf32, #tpu.memory_space<vmem>>, %arg3: memref<48x128xbf16, #tpu.memory_space<vmem>>, %arg4: memref<512x128xbf16, #tpu.memory_space<vmem>>, %arg5: memref<1x8x128xf32, #tpu.memory_space<vmem>>, %arg6: memref<1x8x128xf32, #tpu.memory_space<vmem>>) attributes {dimension_semantics = [#tpu.dimension_semantics<parallel>, #tpu.dimension_semantics<arbitrary>], iteration_bounds = array<i64: 2, 2>, scalar_prefetch = 0 : i64, scratch_operands = 0 : i64, tpu.core_type = #tpu.core_type<tc>, window_params = [{transform_indices = @transform_0, window_bounds = array<i64: 512, 48>}, {pipeline_mode = #tpu.pipeline_mode<synchronous>, transform_indices = @transform_1, window_bounds = array<i64: 48, 128>}, {transform_indices = @transform_2, window_bounds = array<i64: 512, 128>}, {transform_indices = @transform_3, window_bounds = array<i64: 1, 8, 128>}, {transform_indices = @transform_4, window_bounds = array<i64: 1, 8, 128>}]} {
    %c2_i32 = arith.constant 2 : i32
    %0 = arith.muli %arg0, %c2_i32 : i32
    %1 = arith.addi %0, %arg1 : i32
    %c0_i32 = arith.constant 0 : i32
    %2 = arith.cmpi eq, %arg1, %c0_i32 : i32
    %3 = arith.extui %2 : i1 to i32
    %c0_i32_0 = arith.constant 0 : i32
    %4 = arith.cmpi ne, %3, %c0_i32_0 : i32
    scf.if %4 {
      %cst_10 = arith.constant 0.000000e+00 : f32
      %17 = vector.broadcast %cst_10 : f32 to vector<8x128xf32>
      %c0_11 = arith.constant 0 : index
      %c0_12 = arith.constant 0 : index
      %c0_13 = arith.constant 0 : index
      %18 = vector.load %arg5[%c0_11, %c0_12, %c0_13] : memref<1x8x128xf32, #tpu.memory_space<vmem>>, vector<1x8x128xf32>
      %19 = vector.shape_cast %18 : vector<1x8x128xf32> to vector<8x128xf32>
      %20 = vector.shape_cast %17 : vector<8x128xf32> to vector<1x8x128xf32>
      tpu.vector_store %arg5[%c0_11, %c0_12, %c0_13], %20 {strides = array<i32>} : memref<1x8x128xf32, #tpu.memory_space<vmem>>, vector<1x8x128xf32>,
      %cst_14 = arith.constant 0.000000e+00 : f32
      %21 = vector.broadcast %cst_14 : f32 to vector<8x128xf32>
      %c0_15 = arith.constant 0 : index
      %c0_16 = arith.constant 0 : index
      %c0_17 = arith.constant 0 : index
      %22 = vector.load %arg6[%c0_15, %c0_16, %c0_17] : memref<1x8x128xf32, #tpu.memory_space<vmem>>, vector<1x8x128xf32>
      %23 = vector.shape_cast %22 : vector<1x8x128xf32> to vector<8x128xf32>
      %24 = vector.shape_cast %21 : vector<8x128xf32> to vector<1x8x128xf32>
      tpu.vector_store %arg6[%c0_15, %c0_16, %c0_17], %24 {strides = array<i32>} : memref<1x8x128xf32, #tpu.memory_space<vmem>>, vector<1x8x128xf32>,
    } else {
    }
    %c0 = arith.constant 0 : index
    %c0_1 = arith.constant 0 : index
    %5 = vector.load %arg2[%c0, %c0_1] : memref<512x48xf32, #tpu.memory_space<vmem>>, vector<512x48xf32>
    %6 = arith.truncf %5 : vector<512x48xf32> to vector<512x48xbf16>
    %c0_2 = arith.constant 0 : index
    %c0_3 = arith.constant 0 : index
    %7 = vector.load %arg3[%c0_2, %c0_3] : memref<48x128xbf16, #tpu.memory_space<vmem>>, vector<48x128xbf16>
    %cst = arith.constant dense<0.000000e+00> : vector<512x128xf32>
    %8 = tpu.matmul %6, %7, %cst {dimension_numbers = #tpu.dot_dimension_numbers<[1], [0], [0], [1], [0, 0, 1, 1], [], []>} : vector<512x48xbf16>, vector<48x128xbf16>, vector<512x128xf32> -> vector<512x128xf32>
    %9 = arith.truncf %8 : vector<512x128xf32> to vector<512x128xbf16>
    %c0_4 = arith.constant 0 : index
    %c0_5 = arith.constant 0 : index
    %10 = vector.load %arg4[%c0_4, %c0_5] : memref<512x128xbf16, #tpu.memory_space<vmem>>, vector<512x128xbf16>
    tpu.vector_store %arg4[%c0_4, %c0_5], %9 {strides = array<i32>} : memref<512x128xbf16, #tpu.memory_space<vmem>>, vector<512x128xbf16>,
    %c2_i32_6 = arith.constant 2 : i32
    %11 = arith.cmpi slt, %1, %c2_i32_6 : i32
    %12 = arith.extui %11 : i1 to i32
    %c0_i32_7 = arith.constant 0 : i32
    %13 = arith.cmpi ne, %12, %c0_i32_7 : i32
    scf.if %13 {
      %c0_10 = arith.constant 0 : index
      %c0_11 = arith.constant 0 : index
      %c0_12 = arith.constant 0 : index
      %17 = vector.load %arg5[%c0_10, %c0_11, %c0_12] : memref<1x8x128xf32, #tpu.memory_space<vmem>>, vector<1x8x128xf32>
      %18 = vector.shape_cast %17 : vector<1x8x128xf32> to vector<8x128xf32>
      %cst_13 = arith.constant dense<0.000000e+00> : vector<128xf32>
      %19 = vector.multi_reduction <add>, %8, %cst_13 [0] : vector<512x128xf32> to vector<128xf32>
      %20 = vector.shape_cast %19 : vector<128xf32> to vector<1x128xf32>
      %21 = vector.broadcast %20 : vector<1x128xf32> to vector<8x128xf32>
      %22 = arith.addf %18, %21 : vector<8x128xf32>
      %c0_14 = arith.constant 0 : index
      %c0_15 = arith.constant 0 : index
      %c0_16 = arith.constant 0 : index
      %23 = vector.load %arg5[%c0_14, %c0_15, %c0_16] : memref<1x8x128xf32, #tpu.memory_space<vmem>>, vector<1x8x128xf32>
      %24 = vector.shape_cast %23 : vector<1x8x128xf32> to vector<8x128xf32>
      %25 = vector.shape_cast %22 : vector<8x128xf32> to vector<1x8x128xf32>
      tpu.vector_store %arg5[%c0_14, %c0_15, %c0_16], %25 {strides = array<i32>} : memref<1x8x128xf32, #tpu.memory_space<vmem>>, vector<1x8x128xf32>,
      %c0_17 = arith.constant 0 : index
      %c0_18 = arith.constant 0 : index
      %c0_19 = arith.constant 0 : index
      %26 = vector.load %arg6[%c0_17, %c0_18, %c0_19] : memref<1x8x128xf32, #tpu.memory_space<vmem>>, vector<1x8x128xf32>
      %27 = vector.shape_cast %26 : vector<1x8x128xf32> to vector<8x128xf32>
      %28 = arith.mulf %8, %8 : vector<512x128xf32>
      %cst_20 = arith.constant dense<0.000000e+00> : vector<128xf32>
      %29 = vector.multi_reduction <add>, %28, %cst_20 [0] : vector<512x128xf32> to vector<128xf32>
      %30 = vector.shape_cast %29 : vector<128xf32> to vector<1x128xf32>
      %31 = vector.broadcast %30 : vector<1x128xf32> to vector<8x128xf32>
      %32 = arith.addf %27, %31 : vector<8x128xf32>
      %c0_21 = arith.constant 0 : index
      %c0_22 = arith.constant 0 : index
      %c0_23 = arith.constant 0 : index
      %33 = vector.load %arg6[%c0_21, %c0_22, %c0_23] : memref<1x8x128xf32, #tpu.memory_space<vmem>>, vector<1x8x128xf32>
      %34 = vector.shape_cast %33 : vector<1x8x128xf32> to vector<8x128xf32>
      %35 = vector.shape_cast %32 : vector<8x128xf32> to vector<1x8x128xf32>
      tpu.vector_store %arg6[%c0_21, %c0_22, %c0_23], %35 {strides = array<i32>} : memref<1x8x128xf32, #tpu.memory_space<vmem>>, vector<1x8x128xf32>,
    } else {
    }
    %c2_i32_8 = arith.constant 2 : i32
    %14 = arith.cmpi eq, %1, %c2_i32_8 : i32
    %15 = arith.extui %14 : i1 to i32
    %c0_i32_9 = arith.constant 0 : i32
    %16 = arith.cmpi ne, %15, %c0_i32_9 : i32
    scf.if %16 {
      %c512_i32 = arith.constant 512 : i32
      %17 = arith.muli %1, %c512_i32 : i32
      %18 = tpu.iota {dimensions = array<i32: 0>} : vector<512x1xi32>
      %19 = vector.broadcast %17 : i32 to vector<512x1xi32>
      %20 = arith.addi %19, %18 : vector<512x1xi32>
      %c1100_i32 = arith.constant 1100 : i32
      %21 = vector.broadcast %c1100_i32 : i32 to vector<512x1xi32>
      %22 = arith.cmpi slt, %20, %21 : vector<512x1xi32>
      %cst_10 = arith.constant 0.000000e+00 : f32
      %23 = vector.shape_cast %22 : vector<512x1xi1> to vector<512x1xi1>
      %24 = vector.broadcast %23 : vector<512x1xi1> to vector<512x128xi1>
      %25 = vector.broadcast %cst_10 : f32 to vector<512x128xf32>
      %26 = arith.select %24, %8, %25 : vector<512x128xi1>, vector<512x128xf32>
      %c0_11 = arith.constant 0 : index
      %c0_12 = arith.constant 0 : index
      %c0_13 = arith.constant 0 : index
      %27 = vector.load %arg5[%c0_11, %c0_12, %c0_13] : memref<1x8x128xf32, #tpu.memory_space<vmem>>, vector<1x8x128xf32>
      %28 = vector.shape_cast %27 : vector<1x8x128xf32> to vector<8x128xf32>
      %cst_14 = arith.constant dense<0.000000e+00> : vector<128xf32>
      %29 = vector.multi_reduction <add>, %26, %cst_14 [0] : vector<512x128xf32> to vector<128xf32>
      %30 = vector.shape_cast %29 : vector<128xf32> to vector<1x128xf32>
      %31 = vector.broadcast %30 : vector<1x128xf32> to vector<8x128xf32>
      %32 = arith.addf %28, %31 : vector<8x128xf32>
      %c0_15 = arith.constant 0 : index
      %c0_16 = arith.constant 0 : index
      %c0_17 = arith.constant 0 : index
      %33 = vector.load %arg5[%c0_15, %c0_16, %c0_17] : memref<1x8x128xf32, #tpu.memory_space<vmem>>, vector<1x8x128xf32>
      %34 = vector.shape_cast %33 : vector<1x8x128xf32> to vector<8x128xf32>
      %35 = vector.shape_cast %32 : vector<8x128xf32> to vector<1x8x128xf32>
      tpu.vector_store %arg5[%c0_15, %c0_16, %c0_17], %35 {strides = array<i32>} : memref<1x8x128xf32, #tpu.memory_space<vmem>>, vector<1x8x128xf32>,
      %c0_18 = arith.constant 0 : index
      %c0_19 = arith.constant 0 : index
      %c0_20 = arith.constant 0 : index
      %36 = vector.load %arg6[%c0_18, %c0_19, %c0_20] : memref<1x8x128xf32, #tpu.memory_space<vmem>>, vector<1x8x128xf32>
      %37 = vector.shape_cast %36 : vector<1x8x128xf32> to vector<8x128xf32>
      %38 = arith.mulf %26, %26 : vector<512x128xf32>
      %cst_21 = arith.constant dense<0.000000e+00> : vector<128xf32>
      %39 = vector.multi_reduction <add>, %38, %cst_21 [0] : vector<512x128xf32> to vector<128xf32>
      %40 = vector.shape_cast %39 : vector<128xf32> to vector<1x128xf32>
      %41 = vector.broadcast %40 : vector<1x128xf32> to vector<8x128xf32>
      %42 = arith.addf %37, %41 : vector<8x128xf32>
      %c0_22 = arith.constant 0 : index
      %c0_23 = arith.constant 0 : index
      %c0_24 = arith.constant 0 : index
      %43 = vector.load %arg6[%c0_22, %c0_23, %c0_24] : memref<1x8x128xf32, #tpu.memory_space<vmem>>, vector<1x8x128xf32>
      %44 = vector.shape_cast %43 : vector<1x8x128xf32> to vector<8x128xf32>
      %45 = vector.shape_cast %42 : vector<8x128xf32> to vector<1x8x128xf32>
      tpu.vector_store %arg6[%c0_22, %c0_23, %c0_24], %45 {strides = array<i32>} : memref<1x8x128xf32, #tpu.memory_space<vmem>>, vector<1x8x128xf32>,
    } else {
    }
    return
  }
  func.func @transform_0(%arg0: i32, %arg1: i32) -> (i32, i32) {
    %c2_i32 = arith.constant 2 : i32
    %0 = arith.muli %arg0, %c2_i32 : i32
    %1 = arith.addi %0, %arg1 : i32
    %c2_i32_0 = arith.constant 2 : i32
    %2 = arith.minsi %1, %c2_i32_0 : i32
    %c0_i32 = arith.constant 0 : i32
    %c0_i32_1 = arith.constant 0 : i32
    return %2, %c0_i32 : i32, i32
  }
  func.func @transform_1(%arg0: i32, %arg1: i32) -> (i32, i32) {
    %c0_i32 = arith.constant 0 : i32
    %c0_i32_0 = arith.constant 0 : i32
    %c0_i32_1 = arith.constant 0 : i32
    return %c0_i32, %c0_i32_0 : i32, i32
  }
  func.func @transform_2(%arg0: i32, %arg1: i32) -> (i32, i32) {
    %c2_i32 = arith.constant 2 : i32
    %0 = arith.muli %arg0, %c2_i32 : i32
    %1 = arith.addi %0, %arg1 : i32
    %c2_i32_0 = arith.constant 2 : i32
    %2 = arith.minsi %1, %c2_i32_0 : i32
    %c0_i32 = arith.constant 0 : i32
    %c0_i32_1 = arith.constant 0 : i32
    return %2, %c0_i32 : i32, i32
  }
  func.func @transform_3(%arg0: i32, %arg1: i32) -> (i32, i32, i32) {
    %c0_i32 = arith.constant 0 : i32
    %c0_i32_0 = arith.constant 0 : i32
    %c0_i32_1 = arith.constant 0 : i32
    return %arg0, %c0_i32, %c0_i32_0 : i32, i32, i32
  }
  func.func @transform_4(%arg0: i32, %arg1: i32) -> (i32, i32, i32) {
    %c0_i32 = arith.constant 0 : i32
    %c0_i32_0 = arith.constant 0 : i32
    %c0_i32_1 = arith.constant 0 : i32
    return %arg0, %c0_i32, %c0_i32_0 : i32, i32, i32
  }
}

module attributes {stable_mosaic.version = 11 : i64} {
  func.func @_recompute_bn_relu_kernel(%arg0: i32, %arg1: memref<512x128xbf16, #tpu.memory_space<vmem>>, %arg2: memref<1x128xf32, #tpu.memory_space<vmem>>, %arg3: memref<1x128xf32, #tpu.memory_space<vmem>>, %arg4: memref<128x128xbf16, #tpu.memory_space<vmem>>, %arg5: memref<1x128xf32, #tpu.memory_space<vmem>>, %arg6: memref<1x128xf32, #tpu.memory_space<vmem>>, %arg7: memref<512x128xf32, #tpu.memory_space<vmem>>) attributes {dimension_semantics = [#tpu.dimension_semantics<parallel>], iteration_bounds = array<i64: 3>, scalar_prefetch = 0 : i64, scratch_operands = 0 : i64, tpu.core_type = #tpu.core_type<tc>, window_params = [{transform_indices = @transform_0, window_bounds = array<i64: 512, 128>}, {pipeline_mode = #tpu.pipeline_mode<synchronous>, transform_indices = @transform_1, window_bounds = array<i64: 1, 128>}, {pipeline_mode = #tpu.pipeline_mode<synchronous>, transform_indices = @transform_2, window_bounds = array<i64: 1, 128>}, {pipeline_mode = #tpu.pipeline_mode<synchronous>, transform_indices = @transform_3, window_bounds = array<i64: 128, 128>}, {pipeline_mode = #tpu.pipeline_mode<synchronous>, transform_indices = @transform_4, window_bounds = array<i64: 1, 128>}, {pipeline_mode = #tpu.pipeline_mode<synchronous>, transform_indices = @transform_5, window_bounds = array<i64: 1, 128>}, {transform_indices = @transform_6, window_bounds = array<i64: 512, 128>}]} {
    %c0 = arith.constant 0 : index
    %c0_0 = arith.constant 0 : index
    %0 = vector.load %arg1[%c0, %c0_0] : memref<512x128xbf16, #tpu.memory_space<vmem>>, vector<512x128xbf16>
    %c0_1 = arith.constant 0 : index
    %c0_2 = arith.constant 0 : index
    %1 = vector.load %arg2[%c0_1, %c0_2] : memref<1x128xf32, #tpu.memory_space<vmem>>, vector<1x128xf32>
    %2 = arith.extf %0 : vector<512x128xbf16> to vector<512x128xf32>
    %3 = vector.broadcast %1 : vector<1x128xf32> to vector<512x128xf32>
    %4 = arith.mulf %2, %3 : vector<512x128xf32>
    %c0_3 = arith.constant 0 : index
    %c0_4 = arith.constant 0 : index
    %5 = vector.load %arg3[%c0_3, %c0_4] : memref<1x128xf32, #tpu.memory_space<vmem>>, vector<1x128xf32>
    %6 = vector.broadcast %5 : vector<1x128xf32> to vector<512x128xf32>
    %7 = arith.addf %4, %6 : vector<512x128xf32>
    %cst = arith.constant 0.000000e+00 : f32
    %8 = vector.broadcast %cst : f32 to vector<512x128xf32>
    %9 = arith.maximumf %7, %8 : vector<512x128xf32>
    %10 = arith.truncf %9 : vector<512x128xf32> to vector<512x128xbf16>
    %c0_5 = arith.constant 0 : index
    %c0_6 = arith.constant 0 : index
    %11 = vector.load %arg4[%c0_5, %c0_6] : memref<128x128xbf16, #tpu.memory_space<vmem>>, vector<128x128xbf16>
    %cst_7 = arith.constant dense<0.000000e+00> : vector<512x128xf32>
    %12 = tpu.matmul %10, %11, %cst_7 {dimension_numbers = #tpu.dot_dimension_numbers<[1], [0], [0], [1], [0, 0, 1, 1], [], []>} : vector<512x128xbf16>, vector<128x128xbf16>, vector<512x128xf32> -> vector<512x128xf32>
    %c0_8 = arith.constant 0 : index
    %c0_9 = arith.constant 0 : index
    %13 = vector.load %arg5[%c0_8, %c0_9] : memref<1x128xf32, #tpu.memory_space<vmem>>, vector<1x128xf32>
    %14 = vector.broadcast %13 : vector<1x128xf32> to vector<512x128xf32>
    %15 = arith.mulf %12, %14 : vector<512x128xf32>
    %c0_10 = arith.constant 0 : index
    %c0_11 = arith.constant 0 : index
    %16 = vector.load %arg6[%c0_10, %c0_11] : memref<1x128xf32, #tpu.memory_space<vmem>>, vector<1x128xf32>
    %17 = vector.broadcast %16 : vector<1x128xf32> to vector<512x128xf32>
    %18 = arith.addf %15, %17 : vector<512x128xf32>
    %cst_12 = arith.constant 0.000000e+00 : f32
    %19 = vector.broadcast %cst_12 : f32 to vector<512x128xf32>
    %20 = arith.maximumf %18, %19 : vector<512x128xf32>
    %c0_13 = arith.constant 0 : index
    %c0_14 = arith.constant 0 : index
    %21 = vector.load %arg7[%c0_13, %c0_14] : memref<512x128xf32, #tpu.memory_space<vmem>>, vector<512x128xf32>
    tpu.vector_store %arg7[%c0_13, %c0_14], %20 {strides = array<i32>} : memref<512x128xf32, #tpu.memory_space<vmem>>, vector<512x128xf32>,
    return
  }
  func.func @transform_0(%arg0: i32) -> (i32, i32) {
    %c0_i32 = arith.constant 0 : i32
    %c0_i32_0 = arith.constant 0 : i32
    return %arg0, %c0_i32 : i32, i32
  }
  func.func @transform_1(%arg0: i32) -> (i32, i32) {
    %c0_i32 = arith.constant 0 : i32
    %c0_i32_0 = arith.constant 0 : i32
    %c0_i32_1 = arith.constant 0 : i32
    return %c0_i32, %c0_i32_0 : i32, i32
  }
  func.func @transform_2(%arg0: i32) -> (i32, i32) {
    %c0_i32 = arith.constant 0 : i32
    %c0_i32_0 = arith.constant 0 : i32
    %c0_i32_1 = arith.constant 0 : i32
    return %c0_i32, %c0_i32_0 : i32, i32
  }
  func.func @transform_3(%arg0: i32) -> (i32, i32) {
    %c0_i32 = arith.constant 0 : i32
    %c0_i32_0 = arith.constant 0 : i32
    %c0_i32_1 = arith.constant 0 : i32
    return %c0_i32, %c0_i32_0 : i32, i32
  }
  func.func @transform_4(%arg0: i32) -> (i32, i32) {
    %c0_i32 = arith.constant 0 : i32
    %c0_i32_0 = arith.constant 0 : i32
    %c0_i32_1 = arith.constant 0 : i32
    return %c0_i32, %c0_i32_0 : i32, i32
  }
  func.func @transform_5(%arg0: i32) -> (i32, i32) {
    %c0_i32 = arith.constant 0 : i32
    %c0_i32_0 = arith.constant 0 : i32
    %c0_i32_1 = arith.constant 0 : i32
    return %c0_i32, %c0_i32_0 : i32, i32
  }
  func.func @transform_6(%arg0: i32) -> (i32, i32) {
    %c0_i32 = arith.constant 0 : i32
    %c0_i32_0 = arith.constant 0 : i32
    return %arg0, %c0_i32 : i32, i32
  }
}

</mosaic_0001>

<llo_original>
// kernel: apply_node_func.5
$region0: #{apply_node_func.5}
  #allocation0 [shape = 'u32[]', space=smem, size = 0x4, offset = 0x4, fixed_abs, tag = 'smem constant byte address 0x4 - core index']
  #allocation1 [shape = 'u32[144,128]{1,0:T(1,128)}', space=vmem, size = 0x12000, scoped, tag = 'internal scratch']
  %s0 = inlined_call_operand.vmem [shape: bf16[1100,128], index: 0, kind: input, shape index: {}]
  %s1 = inlined_call_operand.vmem [shape: f32[1,128], index: 1, kind: input, shape index: {}]
  %s2 = inlined_call_operand.vmem [shape: f32[1,128], index: 2, kind: input, shape index: {}]
  %s3 = inlined_call_operand.vmem [shape: bf16[128,128], index: 3, kind: input, shape index: {}]
  %s4 = inlined_call_operand.vmem [shape: f32[1,128], index: 4, kind: input, shape index: {}]
  %s5 = inlined_call_operand.vmem [shape: f32[1,128], index: 5, kind: input, shape index: {}]
  %s6 = inlined_call_operand.vmem [shape: f32[1100,128], index: 6, kind: output, shape index: {}]
  %s7 = sld [smem:[#allocation0]]
  $region105: #{apply_node_func.5} parent=0
    _
  %s9 = ssub.s32 1, %s7
  %s10 = scalar_select 0, %s9, %s7
  $region1: #{apply_node_func.5} parent=0
    #allocation2 [shape = 'u8[524288]{0}', space=vmem, size = 0x80000, scoped, tag = 'output window, operand 0']
    loop: start=0, step=1, limit=5
    $region2: #{apply_node_func.5} parent=1 // loop_pre_header
      _
    $region3: #{apply_node_func.5} parent=1 // loop_header
      %s12 = sphi 0, %s16
      %p13 = scmp.ge.s32.totalorder %s12, 5
      %s22 = sphi 0, %s24
      %s25 = sphi 0, %s22
      %s26 = sphi 0, %s25
      %s42 = sphi 0, %s26
      %s46 = sphi 0, %s46
      %s48 = sphi 0, %s46
      %s49 = sphi 0, %s48
      %s63 = sphi 0, %s49
      %s67 = sphi 0, %s67
      %s69 = sphi 0, %s67
      %s70 = sphi 0, %s69
      %s84 = sphi 0, %s70
      %s88 = sphi 0, %s88
      %s90 = sphi 0, %s88
      %s91 = sphi 0, %s90
      %s105 = sphi 0, %s91
      %s109 = sphi 0, %s109
      %s111 = sphi 0, %s109
      %s112 = sphi 0, %s111
      %s126 = sphi 0, %s112
      %s130 = sphi 0, %s130
      %s132 = sphi 0, %s130
      %s133 = sphi 0, %s132
      %s147 = sphi 0, %s133
      %s153 = sphi 0, %s155
      %s156 = sphi 0, %s153
      %s157 = sphi 0, %s156
      %s173 = sphi 0, %s157
    $region4: #{apply_node_func.5} parent=1 // loop_header_branch
      %15 = sbr.rel (%p13) target = $region8
    $region5: #{apply_node_func.5} parent=1 // loop_body
      %s17 = ssub.s32 %s12, 1
      %s18 = ssub.s32 %s12, 2
      %s19 = sadd.s32 %s12, 1
      %s20 = ssub.s32 %s12, %s19
      %p21 = scmp.eq.s32.totalorder %s20, 0
      %s23 = sadd.s32 %s22, 1
      %s24 = scalar_select %p21, %s22, %s23
      %p27 = pneg %p21
      %p28 = scmp.eq.s32.totalorder %s12, 2
      %p29 = por %p27, %p28
      %p30 = scmp.ne.s32.totalorder %s22, %s25
      %p31 = scmp.eq.s32.totalorder %s12, 0
      %p32 = por %p30, %p31
      %p33 = scmp.ne.s32.totalorder %s22, %s25
      %p34 = scmp.eq.s32.totalorder %s17, 2
      %p35 = por %p33, %p34
      %p36 = scmp.ne.s32.totalorder %s25, %s26
      %p37 = scmp.eq.s32.totalorder %s17, 0
      %p38 = por %p36, %p37
      %p39 = scmp.ne.s32.totalorder %s25, %s26
      %p40 = scmp.eq.s32.totalorder %s18, 2
      %p41 = por %p39, %p40
      %p43 = scmp.ne.s32.totalorder %s26, %s42
      %p44 = scmp.eq.s32.totalorder %s18, 0
      %p45 = por %p43, %p44
      %s47 = sadd.s32 %s46, 1
      %p50 = scmp.eq.s32.totalorder %s12, 2
      %p51 = scmp.ne.s32.totalorder %s46, %s48
      %p52 = scmp.eq.s32.totalorder %s12, 0
      %p53 = por %p51, %p52
      %p54 = scmp.ne.s32.totalorder %s46, %s48
      %p55 = scmp.eq.s32.totalorder %s17, 2
      %p56 = por %p54, %p55
      %p57 = scmp.ne.s32.totalorder %s48, %s49
      %p58 = scmp.eq.s32.totalorder %s17, 0
      %p59 = por %p57, %p58
      %p60 = scmp.ne.s32.totalorder %s48, %s49
      %p61 = scmp.eq.s32.totalorder %s18, 2
      %p62 = por %p60, %p61
      %p64 = scmp.ne.s32.totalorder %s49, %s63
      %p65 = scmp.eq.s32.totalorder %s18, 0
      %p66 = por %p64, %p65
      %s68 = sadd.s32 %s67, 1
      %p71 = scmp.eq.s32.totalorder %s12, 2
      %p72 = scmp.ne.s32.totalorder %s67, %s69
      %p73 = scmp.eq.s32.totalorder %s12, 0
      %p74 = por %p72, %p73
      %p75 = scmp.ne.s32.totalorder %s67, %s69
      %p76 = scmp.eq.s32.totalorder %s17, 2
      %p77 = por %p75, %p76
      %p78 = scmp.ne.s32.totalorder %s69, %s70
      %p79 = scmp.eq.s32.totalorder %s17, 0
      %p80 = por %p78, %p79
      %p81 = scmp.ne.s32.totalorder %s69, %s70
      %p82 = scmp.eq.s32.totalorder %s18, 2
      %p83 = por %p81, %p82
      %p85 = scmp.ne.s32.totalorder %s70, %s84
      %p86 = scmp.eq.s32.totalorder %s18, 0
      %p87 = por %p85, %p86
      %s89 = sadd.s32 %s88, 1
      %p92 = scmp.eq.s32.totalorder %s12, 2
      %p93 = scmp.ne.s32.totalorder %s88, %s90
      %p94 = scmp.eq.s32.totalorder %s12, 0
      %p95 = por %p93, %p94
      %p96 = scmp.ne.s32.totalorder %s88, %s90
      %p97 = scmp.eq.s32.totalorder %s17, 2
      %p98 = por %p96, %p97
      %p99 = scmp.ne.s32.totalorder %s90, %s91
      %p100 = scmp.eq.s32.totalorder %s17, 0
      %p101 = por %p99, %p100
      %p102 = scmp.ne.s32.totalorder %s90, %s91
      %p103 = scmp.eq.s32.totalorder %s18, 2
      %p104 = por %p102, %p103
      %p106 = scmp.ne.s32.totalorder %s91, %s105
      %p107 = scmp.eq.s32.totalorder %s18, 0
      %p108 = por %p106, %p107
      %s110 = sadd.s32 %s109, 1
      %p113 = scmp.eq.s32.totalorder %s12, 2
      %p114 = scmp.ne.s32.totalorder %s109, %s111
      %p115 = scmp.eq.s32.totalorder %s12, 0
      %p116 = por %p114, %p115
      %p117 = scmp.ne.s32.totalorder %s109, %s111
      %p118 = scmp.eq.s32.totalorder %s17, 2
      %p119 = por %p117, %p118
      %p120 = scmp.ne.s32.totalorder %s111, %s112
      %p121 = scmp.eq.s32.totalorder %s17, 0
      %p122 = por %p120, %p121
      %p123 = scmp.ne.s32.totalorder %s111, %s112
      %p124 = scmp.eq.s32.totalorder %s18, 2
      %p125 = por %p123, %p124
      %p127 = scmp.ne.s32.totalorder %s112, %s126
      %p128 = scmp.eq.s32.totalorder %s18, 0
      %p129 = por %p127, %p128
      %s131 = sadd.s32 %s130, 1
      %p134 = scmp.eq.s32.totalorder %s12, 2
      %p135 = scmp.ne.s32.totalorder %s130, %s132
      %p136 = scmp.eq.s32.totalorder %s12, 0
      %p137 = por %p135, %p136
      %p138 = scmp.ne.s32.totalorder %s130, %s132
      %p139 = scmp.eq.s32.totalorder %s17, 2
      %p140 = por %p138, %p139
      %p141 = scmp.ne.s32.totalorder %s132, %s133
      %p142 = scmp.eq.s32.totalorder %s17, 0
      %p143 = por %p141, %p142
      %p144 = scmp.ne.s32.totalorder %s132, %s133
      %p145 = scmp.eq.s32.totalorder %s18, 2
      %p146 = por %p144, %p145
      %p148 = scmp.ne.s32.totalorder %s133, %s147
      %p149 = scmp.eq.s32.totalorder %s18, 0
      %p150 = por %p148, %p149
      %s151 = ssub.s32 %s12, %s19
      %p152 = scmp.eq.s32.totalorder %s151, 0
      %s154 = sadd.s32 %s153, 1
      %s155 = scalar_select %p152, %s153, %s154
      %p158 = pneg %p152
      %p159 = scmp.eq.s32.totalorder %s12, 2
      %p160 = por %p158, %p159
      %p161 = scmp.ne.s32.totalorder %s153, %s156
      %p162 = scmp.eq.s32.totalorder %s12, 0
      %p163 = por %p161, %p162
      %p164 = scmp.ne.s32.totalorder %s153, %s156
      %p165 = scmp.eq.s32.totalorder %s17, 2
      %p166 = por %p164, %p165
      %p167 = scmp.ne.s32.totalorder %s156, %s157
      %p168 = scmp.eq.s32.totalorder %s17, 0
      %p169 = por %p167, %p168
      %p170 = scmp.ne.s32.totalorder %s156, %s157
      %p171 = scmp.eq.s32.totalorder %s18, 2
      %p172 = por %p170, %p171
      %p174 = scmp.ne.s32.totalorder %s157, %s173
      %p175 = scmp.eq.s32.totalorder %s18, 0
      %p176 = por %p174, %p175
      %p177 = scmp.le.s32.totalorder 1, %s12
      %p178 = scmp.lt.s32.totalorder %s12, 4
      %p179 = pnand %p177, %p178
      %p180 = pneg %p179
      // Predicated region
      $region9: #{apply_node_func.5} parent=5 // pred_check
        _
      $region10: #{apply_node_func.5} parent=5 // pred_check_branch
        %182 = sbr.rel (%p179) target = $region12
      $region11: #{apply_node_func.5} parent=5 // pred_region
        %s183 = ssub.s32 %s12, 1
        // Predicated region
        $region13: #{apply_node_func.5} parent=11 // pred_check
          %p184 = pneg %p59
        $region14: #{apply_node_func.5} parent=11 // pred_check_branch
          %186 = sbr.rel (%p184) target = $region16
        $region15: #{apply_node_func.5} parent=11 // pred_region
          _
        $region16: #{apply_node_func.5} parent=11 // pred_fallthru
          _
        // Predicated region
        $region17: #{apply_node_func.5} parent=11 // pred_check
          %p187 = pneg %p80
        $region18: #{apply_node_func.5} parent=11 // pred_check_branch
          %189 = sbr.rel (%p187) target = $region20
        $region19: #{apply_node_func.5} parent=11 // pred_region
          _
        $region20: #{apply_node_func.5} parent=11 // pred_fallthru
          _
        // Predicated region
        $region21: #{apply_node_func.5} parent=11 // pred_check
          %p190 = pneg %p101
        $region22: #{apply_node_func.5} parent=11 // pred_check_branch
          %192 = sbr.rel (%p190) target = $region24
        $region23: #{apply_node_func.5} parent=11 // pred_region
          _
        $region24: #{apply_node_func.5} parent=11 // pred_fallthru
          _
        // Predicated region
        $region25: #{apply_node_func.5} parent=11 // pred_check
          %p193 = pneg %p122
        $region26: #{apply_node_func.5} parent=11 // pred_check_branch
          %195 = sbr.rel (%p193) target = $region28
        $region27: #{apply_node_func.5} parent=11 // pred_region
          _
        $region28: #{apply_node_func.5} parent=11 // pred_fallthru
          _
        // Predicated region
        $region29: #{apply_node_func.5} parent=11 // pred_check
          %p196 = pneg %p143
        $region30: #{apply_node_func.5} parent=11 // pred_check_branch
          %198 = sbr.rel (%p196) target = $region32
        $region31: #{apply_node_func.5} parent=11 // pred_region
          _
        $region32: #{apply_node_func.5} parent=11 // pred_fallthru
          _
      $region12: #{apply_node_func.5} parent=5 // pred_fallthru
        _
      %p199 = scmp.lt.s32.totalorder %s12, 3
      // Predicated region
      $region33: #{apply_node_func.5} parent=5 // pred_check
        %p200 = pneg %p199
      $region34: #{apply_node_func.5} parent=5 // pred_check_branch
        %202 = sbr.rel (%p200) target = $region36
      $region35: #{apply_node_func.5} parent=5 // pred_region
        // Predicated region
        $region37: #{apply_node_func.5} parent=35 // pred_check
          %p203 = pneg %p32
        $region38: #{apply_node_func.5} parent=35 // pred_check_branch
          %205 = sbr.rel (%p203) target = $region40
        $region39: #{apply_node_func.5} parent=35 // pred_region
          %s206 = smul.u32 64, %s12
          %s207 = ssub.s32 138, %s206
          %p208 = scmp.lt.s32.totalorder %s207, 64
          %s209 = scalar_select %p208, %s207, 64
          %s210 = smul.u32 64, %s209
          %p211 = scmp.lt.s32.totalorder %s206, 137
          %s212 = scalar_select %p211, %s206, 137
          %s213 = smul.addr %s212, 4
          %s214 = scalar_lea.vmem %s0, %s213
          %s215 = smul.u32 64, %s12
          %s216 = ssub.s32 138, %s215
          %p217 = scmp.lt.s32.totalorder %s216, 64
          %s218 = scalar_select %p217, %s216, 64
          %s219 = smul.u32 64, %s218
        $region40: #{apply_node_func.5} parent=35 // pred_fallthru
          _
      $region36: #{apply_node_func.5} parent=5 // pred_fallthru
        _
      %p220 = scmp.le.s32.totalorder 1, %s12
      %p221 = scmp.lt.s32.totalorder %s12, 4
      %p222 = pnand %p220, %p221
      %p223 = pneg %p222
      // Predicated region
      $region41: #{apply_node_func.5} parent=5 // pred_check
        _
      $region42: #{apply_node_func.5} parent=5 // pred_check_branch
        %225 = sbr.rel (%p222) target = $region44
      $region43: #{apply_node_func.5} parent=5 // pred_region
        %s226 = ssub.s32 %s12, 1
        %s227 = smul.u32 64, %s17
        %s228 = ssub.s32 138, %s227
        %p229 = scmp.lt.s32.totalorder %s228, 64
        %s230 = scalar_select %p229, %s228, 64
        %s231 = smul.u32 64, %s230
        %p232 = scmp.lt.s32.totalorder %s227, 137
        %s233 = scalar_select %p232, %s227, 137
        %s234 = smul.addr %s233, 4
        %s235 = scalar_lea.vmem %s0, %s234
        %p236 = pneg %p38
        %p237 = pneg %p35
        %p238 = pneg %p59
        %p239 = pneg %p56
        %p240 = pneg %p80
        %p241 = pneg %p77
        %p242 = pneg %p101
        %p243 = pneg %p98
        %p244 = pneg %p122
        %p245 = pneg %p119
        %p246 = pneg %p143
        %p247 = pneg %p140
        %p248 = pneg %p169
        %p249 = pneg %p166
        %s250 = sand.u32 %s156, 1
        %s251 = sand.u32 %s156, 1
        %s252 = smul.addr %s251, 512
        %s253 = scalar_lea.vmem [#allocation2], %s252
        %s254 = smul.u32 64, %s17
        %s255 = ssub.s32 138, %s254
        %p256 = scmp.lt.s32.totalorder %s255, 64
        %s257 = scalar_select %p256, %s255, 64
        %s258 = smul.u32 64, %s257
        %p259 = scmp.lt.s32.totalorder %s254, 137
        %s260 = scalar_select %p259, %s254, 137
        %s261 = smul.addr %s260, 4
        %s262 = scalar_lea.vmem %s0, %s261
        %s263 = smul.u32 64, %s17
        %s264 = ssub.s32 138, %s263
        %p265 = scmp.lt.s32.totalorder %s264, 64
        %s266 = scalar_select %p265, %s264, 64
        %s267 = smul.u32 64, %s266
        %s268 = smul.u32 64, %s17
        %s269 = ssub.s32 138, %s268
        %p270 = scmp.lt.s32.totalorder %s269, 64
        %s271 = scalar_select %p270, %s269, 64
        %s272 = smul.u32 128, %s271
        %v274 = vld [vmem:[%s262] sm:$0xf]
        %v275 = vld [vmem:[%s262 + $0x4] sm:$0xf]
        %v276 = vld [vmem:[%s262 + $0x8] sm:$0xf]
        %v277 = vld [vmem:[%s262 + $0xc] sm:$0xf]
        %v278 = vld [vmem:[%s262 + $0x10] sm:$0xf]
        %v279 = vld [vmem:[%s262 + $0x14] sm:$0xf]
        %v280 = vld [vmem:[%s262 + $0x18] sm:$0xf]
        %v281 = vld [vmem:[%s262 + $0x1c] sm:$0xf]
        %v282 = vld [vmem:[%s262 + $0x20] sm:$0xf]
        %v283 = vld [vmem:[%s262 + $0x24] sm:$0xf]
        %v284 = vld [vmem:[%s262 + $0x28] sm:$0xf]
        %v285 = vld [vmem:[%s262 + $0x2c] sm:$0xf]
        %v286 = vld [vmem:[%s262 + $0x30] sm:$0xf]
        %v287 = vld [vmem:[%s262 + $0x34] sm:$0xf]
        %v288 = vld [vmem:[%s262 + $0x38] sm:$0xf]
        %v289 = vld [vmem:[%s262 + $0x3c] sm:$0xf]
        %v290 = vld [vmem:[%s262 + $0x40] sm:$0xf]
        %v291 = vld [vmem:[%s262 + $0x44] sm:$0xf]
        %v292 = vld [vmem:[%s262 + $0x48] sm:$0xf]
        %v293 = vld [vmem:[%s262 + $0x4c] sm:$0xf]
        %v294 = vld [vmem:[%s262 + $0x50] sm:$0xf]
        %v295 = vld [vmem:[%s262 + $0x54] sm:$0xf]
        %v296 = vld [vmem:[%s262 + $0x58] sm:$0xf]
        %v297 = vld [vmem:[%s262 + $0x5c] sm:$0xf]
        %v298 = vld [vmem:[%s262 + $0x60] sm:$0xf]
        %v299 = vld [vmem:[%s262 + $0x64] sm:$0xf]
        %v300 = vld [vmem:[%s262 + $0x68] sm:$0xf]
        %v301 = vld [vmem:[%s262 + $0x6c] sm:$0xf]
        %v302 = vld [vmem:[%s262 + $0x70] sm:$0xf]
        %v303 = vld [vmem:[%s262 + $0x74] sm:$0xf]
        %v304 = vld [vmem:[%s262 + $0x78] sm:$0xf]
        %v305 = vld [vmem:[%s262 + $0x7c] sm:$0xf]
        %v306 = vld [vmem:[%s262 + $0x80] sm:$0xf]
        %v307 = vld [vmem:[%s262 + $0x84] sm:$0xf]
        %v308 = vld [vmem:[%s262 + $0x88] sm:$0xf]
        %v309 = vld [vmem:[%s262 + $0x8c] sm:$0xf]
        %v310 = vld [vmem:[%s262 + $0x90] sm:$0xf]
        %v311 = vld [vmem:[%s262 + $0x94] sm:$0xf]
        %v312 = vld [vmem:[%s262 + $0x98] sm:$0xf]
        %v313 = vld [vmem:[%s262 + $0x9c] sm:$0xf]
        %v314 = vld [vmem:[%s262 + $0xa0] sm:$0xf]
        %v315 = vld [vmem:[%s262 + $0xa4] sm:$0xf]
        %v316 = vld [vmem:[%s262 + $0xa8] sm:$0xf]
        %v317 = vld [vmem:[%s262 + $0xac] sm:$0xf]
        %v318 = vld [vmem:[%s262 + $0xb0] sm:$0xf]
        %v319 = vld [vmem:[%s262 + $0xb4] sm:$0xf]
        %v320 = vld [vmem:[%s262 + $0xb8] sm:$0xf]
        %v321 = vld [vmem:[%s262 + $0xbc] sm:$0xf]
        %v322 = vld [vmem:[%s262 + $0xc0] sm:$0xf]
        %v323 = vld [vmem:[%s262 + $0xc4] sm:$0xf]
        %v324 = vld [vmem:[%s262 + $0xc8] sm:$0xf]
        %v325 = vld [vmem:[%s262 + $0xcc] sm:$0xf]
        %v326 = vld [vmem:[%s262 + $0xd0] sm:$0xf]
        %v327 = vld [vmem:[%s262 + $0xd4] sm:$0xf]
        %v328 = vld [vmem:[%s262 + $0xd8] sm:$0xf]
        %v329 = vld [vmem:[%s262 + $0xdc] sm:$0xf]
        %v330 = vld [vmem:[%s262 + $0xe0] sm:$0xf]
        %v331 = vld [vmem:[%s262 + $0xe4] sm:$0xf]
        %v332 = vld [vmem:[%s262 + $0xe8] sm:$0xf]
        %v333 = vld [vmem:[%s262 + $0xec] sm:$0xf]
        %v334 = vld [vmem:[%s262 + $0xf0] sm:$0xf]
        %v335 = vld [vmem:[%s262 + $0xf4] sm:$0xf]
        %v336 = vld [vmem:[%s262 + $0xf8] sm:$0xf]
        %v337 = vld [vmem:[%s262 + $0xfc] sm:$0xf]
        %v338 = vld [vmem:[%s1] sm:$0x1]
        %v339 = vunpack.c.l.bf16 %v274
        %v340 = vunpack.c.l.bf16 %v275
        %v341 = vunpack.c.l.bf16 %v276
        %v342 = vunpack.c.l.bf16 %v277
        %v343 = vunpack.c.l.bf16 %v278
        %v344 = vunpack.c.l.bf16 %v279
        %v345 = vunpack.c.l.bf16 %v280
        %v346 = vunpack.c.l.bf16 %v281
        %v347 = vunpack.c.l.bf16 %v282
        %v348 = vunpack.c.l.bf16 %v283
        %v349 = vunpack.c.l.bf16 %v284
        %v350 = vunpack.c.l.bf16 %v285
        %v351 = vunpack.c.l.bf16 %v286
        %v352 = vunpack.c.l.bf16 %v287
        %v353 = vunpack.c.l.bf16 %v288
        %v354 = vunpack.c.l.bf16 %v289
        %v355 = vunpack.c.l.bf16 %v290
        %v356 = vunpack.c.l.bf16 %v291
        %v357 = vunpack.c.l.bf16 %v292
        %v358 = vunpack.c.l.bf16 %v293
        %v359 = vunpack.c.l.bf16 %v294
        %v360 = vunpack.c.l.bf16 %v295
        %v361 = vunpack.c.l.bf16 %v296
        %v362 = vunpack.c.l.bf16 %v297
        %v363 = vunpack.c.l.bf16 %v298
        %v364 = vunpack.c.l.bf16 %v299
        %v365 = vunpack.c.l.bf16 %v300
        %v366 = vunpack.c.l.bf16 %v301
        %v367 = vunpack.c.l.bf16 %v302
        %v368 = vunpack.c.l.bf16 %v303
        %v369 = vunpack.c.l.bf16 %v304
        %v370 = vunpack.c.l.bf16 %v305
        %v371 = vunpack.c.l.bf16 %v306
        %v372 = vunpack.c.l.bf16 %v307
        %v373 = vunpack.c.l.bf16 %v308
        %v374 = vunpack.c.l.bf16 %v309
        %v375 = vunpack.c.l.bf16 %v310
        %v376 = vunpack.c.l.bf16 %v311
        %v377 = vunpack.c.l.bf16 %v312
        %v378 = vunpack.c.l.bf16 %v313
        %v379 = vunpack.c.l.bf16 %v314
        %v380 = vunpack.c.l.bf16 %v315
        %v381 = vunpack.c.l.bf16 %v316
        %v382 = vunpack.c.l.bf16 %v317
        %v383 = vunpack.c.l.bf16 %v318
        %v384 = vunpack.c.l.bf16 %v319
        %v385 = vunpack.c.l.bf16 %v320
        %v386 = vunpack.c.l.bf16 %v321
        %v387 = vunpack.c.l.bf16 %v322
        %v388 = vunpack.c.l.bf16 %v323
        %v389 = vunpack.c.l.bf16 %v324
        %v390 = vunpack.c.l.bf16 %v325
        %v391 = vunpack.c.l.bf16 %v326
        %v392 = vunpack.c.l.bf16 %v327
        %v393 = vunpack.c.l.bf16 %v328
        %v394 = vunpack.c.l.bf16 %v329
        %v395 = vunpack.c.l.bf16 %v330
        %v396 = vunpack.c.l.bf16 %v331
        %v397 = vunpack.c.l.bf16 %v332
        %v398 = vunpack.c.l.bf16 %v333
        %v399 = vunpack.c.l.bf16 %v334
        %v400 = vunpack.c.l.bf16 %v335
        %v401 = vunpack.c.l.bf16 %v336
        %v402 = vunpack.c.l.bf16 %v337
        %v404 = vlaneseq
        %v405 = vshrl.u32 %v404, 7
        %v406 = vsub.s32 0, %v405
        %v407 = vrot.slane %v338, %v406
        %v409 = vmul.f32 %v339, %v407
        %v410 = vmul.f32 %v340, %v407
        %v411 = vmul.f32 %v341, %v407
        %v412 = vmul.f32 %v342, %v407
        %v413 = vmul.f32 %v343, %v407
        %v414 = vmul.f32 %v344, %v407
        %v415 = vmul.f32 %v345, %v407
        %v416 = vmul.f32 %v346, %v407
        %v417 = vmul.f32 %v347, %v407
        %v418 = vmul.f32 %v348, %v407
        %v419 = vmul.f32 %v349, %v407
        %v420 = vmul.f32 %v350, %v407
        %v421 = vmul.f32 %v351, %v407
        %v422 = vmul.f32 %v352, %v407
        %v423 = vmul.f32 %v353, %v407
        %v424 = vmul.f32 %v354, %v407
        %v425 = vmul.f32 %v355, %v407
        %v426 = vmul.f32 %v356, %v407
        %v427 = vmul.f32 %v357, %v407
        %v428 = vmul.f32 %v358, %v407
        %v429 = vmul.f32 %v359, %v407
        %v430 = vmul.f32 %v360, %v407
        %v431 = vmul.f32 %v361, %v407
        %v432 = vmul.f32 %v362, %v407
        %v433 = vmul.f32 %v363, %v407
        %v434 = vmul.f32 %v364, %v407
        %v435 = vmul.f32 %v365, %v407
        %v436 = vmul.f32 %v366, %v407
        %v437 = vmul.f32 %v367, %v407
        %v438 = vmul.f32 %v368, %v407
        %v439 = vmul.f32 %v369, %v407
        %v440 = vmul.f32 %v370, %v407
        %v441 = vmul.f32 %v371, %v407
        %v442 = vmul.f32 %v372, %v407
        %v443 = vmul.f32 %v373, %v407
        %v444 = vmul.f32 %v374, %v407
        %v445 = vmul.f32 %v375, %v407
        %v446 = vmul.f32 %v376, %v407
        %v447 = vmul.f32 %v377, %v407
        %v448 = vmul.f32 %v378, %v407
        %v449 = vmul.f32 %v379, %v407
        %v450 = vmul.f32 %v380, %v407
        %v451 = vmul.f32 %v381, %v407
        %v452 = vmul.f32 %v382, %v407
        %v453 = vmul.f32 %v383, %v407
        %v454 = vmul.f32 %v384, %v407
        %v455 = vmul.f32 %v385, %v407
        %v456 = vmul.f32 %v386, %v407
        %v457 = vmul.f32 %v387, %v407
        %v458 = vmul.f32 %v388, %v407
        %v459 = vmul.f32 %v389, %v407
        %v460 = vmul.f32 %v390, %v407
        %v461 = vmul.f32 %v391, %v407
        %v462 = vmul.f32 %v392, %v407
        %v463 = vmul.f32 %v393, %v407
        %v464 = vmul.f32 %v394, %v407
        %v465 = vmul.f32 %v395, %v407
        %v466 = vmul.f32 %v396, %v407
        %v467 = vmul.f32 %v397, %v407
        %v468 = vmul.f32 %v398, %v407
        %v469 = vmul.f32 %v399, %v407
        %v470 = vmul.f32 %v400, %v407
        %v471 = vmul.f32 %v401, %v407
        %v472 = vmul.f32 %v402, %v407
        %v473 = vld [vmem:[%s2] sm:$0x1]
        %v475 = vlaneseq
        %v476 = vshrl.u32 %v475, 7
        %v477 = vsub.s32 0, %v476
        %v478 = vrot.slane %v473, %v477
        %v480 = vadd.f32 %v409, %v478
        %v481 = vadd.f32 %v410, %v478
        %v482 = vadd.f32 %v411, %v478
        %v483 = vadd.f32 %v412, %v478
        %v484 = vadd.f32 %v413, %v478
        %v485 = vadd.f32 %v414, %v478
        %v486 = vadd.f32 %v415, %v478
        %v487 = vadd.f32 %v416, %v478
        %v488 = vadd.f32 %v417, %v478
        %v489 = vadd.f32 %v418, %v478
        %v490 = vadd.f32 %v419, %v478
        %v491 = vadd.f32 %v420, %v478
        %v492 = vadd.f32 %v421, %v478
        %v493 = vadd.f32 %v422, %v478
        %v494 = vadd.f32 %v423, %v478
        %v495 = vadd.f32 %v424, %v478
        %v496 = vadd.f32 %v425, %v478
        %v497 = vadd.f32 %v426, %v478
        %v498 = vadd.f32 %v427, %v478
        %v499 = vadd.f32 %v428, %v478
        %v500 = vadd.f32 %v429, %v478
        %v501 = vadd.f32 %v430, %v478
        %v502 = vadd.f32 %v431, %v478
        %v503 = vadd.f32 %v432, %v478
        %v504 = vadd.f32 %v433, %v478
        %v505 = vadd.f32 %v434, %v478
        %v506 = vadd.f32 %v435, %v478
        %v507 = vadd.f32 %v436, %v478
        %v508 = vadd.f32 %v437, %v478
        %v509 = vadd.f32 %v438, %v478
        %v510 = vadd.f32 %v439, %v478
        %v511 = vadd.f32 %v440, %v478
        %v512 = vadd.f32 %v441, %v478
        %v513 = vadd.f32 %v442, %v478
        %v514 = vadd.f32 %v443, %v478
        %v515 = vadd.f32 %v444, %v478
        %v516 = vadd.f32 %v445, %v478
        %v517 = vadd.f32 %v446, %v478
        %v518 = vadd.f32 %v447, %v478
        %v519 = vadd.f32 %v448, %v478
        %v520 = vadd.f32 %v449, %v478
        %v521 = vadd.f32 %v450, %v478
        %v522 = vadd.f32 %v451, %v478
        %v523 = vadd.f32 %v452, %v478
        %v524 = vadd.f32 %v453, %v478
        %v525 = vadd.f32 %v454, %v478
        %v526 = vadd.f32 %v455, %v478
        %v527 = vadd.f32 %v456, %v478
        %v528 = vadd.f32 %v457, %v478
        %v529 = vadd.f32 %v458, %v478
        %v530 = vadd.f32 %v459, %v478
        %v531 = vadd.f32 %v460, %v478
        %v532 = vadd.f32 %v461, %v478
        %v533 = vadd.f32 %v462, %v478
        %v534 = vadd.f32 %v463, %v478
        %v535 = vadd.f32 %v464, %v478
        %v536 = vadd.f32 %v465, %v478
        %v537 = vadd.f32 %v466, %v478
        %v538 = vadd.f32 %v467, %v478
        %v539 = vadd.f32 %v468, %v478
        %v540 = vadd.f32 %v469, %v478
        %v541 = vadd.f32 %v470, %v478
        %v542 = vadd.f32 %v471, %v478
        %v543 = vadd.f32 %v472, %v478
        %v544 = vmax.f32 %v480, 0.0
        %v545 = vmax.f32 %v481, 0.0
        %v546 = vmax.f32 %v482, 0.0
        %v547 = vmax.f32 %v483, 0.0
        %v548 = vmax.f32 %v484, 0.0
        %v549 = vmax.f32 %v485, 0.0
        %v550 = vmax.f32 %v486, 0.0
        %v551 = vmax.f32 %v487, 0.0
        %v552 = vmax.f32 %v488, 0.0
        %v553 = vmax.f32 %v489, 0.0
        %v554 = vmax.f32 %v490, 0.0
        %v555 = vmax.f32 %v491, 0.0
        %v556 = vmax.f32 %v492, 0.0
        %v557 = vmax.f32 %v493, 0.0
        %v558 = vmax.f32 %v494, 0.0
        %v559 = vmax.f32 %v495, 0.0
        %v560 = vmax.f32 %v496, 0.0
        %v561 = vmax.f32 %v497, 0.0
        %v562 = vmax.f32 %v498, 0.0
        %v563 = vmax.f32 %v499, 0.0
        %v564 = vmax.f32 %v500, 0.0
        %v565 = vmax.f32 %v501, 0.0
        %v566 = vmax.f32 %v502, 0.0
        %v567 = vmax.f32 %v503, 0.0
        %v568 = vmax.f32 %v504, 0.0
        %v569 = vmax.f32 %v505, 0.0
        %v570 = vmax.f32 %v506, 0.0
        %v571 = vmax.f32 %v507, 0.0
        %v572 = vmax.f32 %v508, 0.0
        %v573 = vmax.f32 %v509, 0.0
        %v574 = vmax.f32 %v510, 0.0
        %v575 = vmax.f32 %v511, 0.0
        %v576 = vmax.f32 %v512, 0.0
        %v577 = vmax.f32 %v513, 0.0
        %v578 = vmax.f32 %v514, 0.0
        %v579 = vmax.f32 %v515, 0.0
        %v580 = vmax.f32 %v516, 0.0
        %v581 = vmax.f32 %v517, 0.0
        %v582 = vmax.f32 %v518, 0.0
        %v583 = vmax.f32 %v519, 0.0
        %v584 = vmax.f32 %v520, 0.0
        %v585 = vmax.f32 %v521, 0.0
        %v586 = vmax.f32 %v522, 0.0
        %v587 = vmax.f32 %v523, 0.0
        %v588 = vmax.f32 %v524, 0.0
        %v589 = vmax.f32 %v525, 0.0
        %v590 = vmax.f32 %v526, 0.0
        %v591 = vmax.f32 %v527, 0.0
        %v592 = vmax.f32 %v528, 0.0
        %v593 = vmax.f32 %v529, 0.0
        %v594 = vmax.f32 %v530, 0.0
        %v595 = vmax.f32 %v531, 0.0
        %v596 = vmax.f32 %v532, 0.0
        %v597 = vmax.f32 %v533, 0.0
        %v598 = vmax.f32 %v534, 0.0
        %v599 = vmax.f32 %v535, 0.0
        %v600 = vmax.f32 %v536, 0.0
        %v601 = vmax.f32 %v537, 0.0
        %v602 = vmax.f32 %v538, 0.0
        %v603 = vmax.f32 %v539, 0.0
        %v604 = vmax.f32 %v540, 0.0
        %v605 = vmax.f32 %v541, 0.0
        %v606 = vmax.f32 %v542, 0.0
        %v607 = vmax.f32 %v543, 0.0
        %v608 = vpack.c.bf16 %v545, %v544
        %v609 = vpack.c.bf16 %v547, %v546
        %v610 = vpack.c.bf16 %v549, %v548
        %v611 = vpack.c.bf16 %v551, %v550
        %v612 = vpack.c.bf16 %v553, %v552
        %v613 = vpack.c.bf16 %v555, %v554
        %v614 = vpack.c.bf16 %v557, %v556
        %v615 = vpack.c.bf16 %v559, %v558
        %v616 = vpack.c.bf16 %v561, %v560
        %v617 = vpack.c.bf16 %v563, %v562
        %v618 = vpack.c.bf16 %v565, %v564
        %v619 = vpack.c.bf16 %v567, %v566
        %v620 = vpack.c.bf16 %v569, %v568
        %v621 = vpack.c.bf16 %v571, %v570
        %v622 = vpack.c.bf16 %v573, %v572
        %v623 = vpack.c.bf16 %v575, %v574
        %v624 = vpack.c.bf16 %v577, %v576
        %v625 = vpack.c.bf16 %v579, %v578
        %v626 = vpack.c.bf16 %v581, %v580
        %v627 = vpack.c.bf16 %v583, %v582
        %v628 = vpack.c.bf16 %v585, %v584
        %v629 = vpack.c.bf16 %v587, %v586
        %v630 = vpack.c.bf16 %v589, %v588
        %v631 = vpack.c.bf16 %v591, %v590
        %v632 = vpack.c.bf16 %v593, %v592
        %v633 = vpack.c.bf16 %v595, %v594
        %v634 = vpack.c.bf16 %v597, %v596
        %v635 = vpack.c.bf16 %v599, %v598
        %v636 = vpack.c.bf16 %v601, %v600
        %v637 = vpack.c.bf16 %v603, %v602
        %v638 = vpack.c.bf16 %v605, %v604
        %v639 = vpack.c.bf16 %v607, %v606
        %v640 = vld [vmem:[%s3] sm:$0xf]
        %v641 = vld [vmem:[%s3 + $0x4] sm:$0xf]
        %v642 = vld [vmem:[%s3 + $0x8] sm:$0xf]
        %v643 = vld [vmem:[%s3 + $0xc] sm:$0xf]
        %v644 = vld [vmem:[%s3 + $0x10] sm:$0xf]
        %v645 = vld [vmem:[%s3 + $0x14] sm:$0xf]
        %v646 = vld [vmem:[%s3 + $0x18] sm:$0xf]
        %v647 = vld [vmem:[%s3 + $0x1c] sm:$0xf]
        %v648 = vld [vmem:[%s3 + $0x20] sm:$0xf]
        %v649 = vld [vmem:[%s3 + $0x24] sm:$0xf]
        %v650 = vld [vmem:[%s3 + $0x28] sm:$0xf]
        %v651 = vld [vmem:[%s3 + $0x2c] sm:$0xf]
        %v652 = vld [vmem:[%s3 + $0x30] sm:$0xf]
        %v653 = vld [vmem:[%s3 + $0x34] sm:$0xf]
        %v654 = vld [vmem:[%s3 + $0x38] sm:$0xf]
        %v655 = vld [vmem:[%s3 + $0x3c] sm:$0xf]
        %v672 = vunpack.c.l.b16 %v640
        %v673 = vunpack.c.l.b16 %v641
        %v674 = vunpack.c.l.b16 %v642
        %v675 = vunpack.c.l.b16 %v643
        %v676 = vunpack.c.l.b16 %v644
        %v677 = vunpack.c.l.b16 %v645
        %v678 = vunpack.c.l.b16 %v646
        %v679 = vunpack.c.l.b16 %v647
        %v680 = vunpack.c.l.b16 %v648
        %v681 = vunpack.c.l.b16 %v649
        %v682 = vunpack.c.l.b16 %v650
        %v683 = vunpack.c.l.b16 %v651
        %v684 = vunpack.c.l.b16 %v652
        %v685 = vunpack.c.l.b16 %v653
        %v686 = vunpack.c.l.b16 %v654
        %v687 = vunpack.c.l.b16 %v655
        %v688 = vpack.c.b16 %v673, %v672
        %v689 = vpack.c.b16 %v675, %v674
        %v690 = vpack.c.b16 %v677, %v676
        %v691 = vpack.c.b16 %v679, %v678
        %v692 = vpack.c.b16 %v681, %v680
        %v693 = vpack.c.b16 %v683, %v682
        %v694 = vpack.c.b16 %v685, %v684
        %v695 = vpack.c.b16 %v687, %v686
        %704 = vmatprep.subr.bf16.mxu0 0
        %705 = vmatpush1.bf16.msra.mxu0 %v688
        %706 = vmatprep.subr.bf16.mxu0 0
        %707 = vmatpush1.bf16.msra.mxu0 %v689
        %708 = vmatprep.subr.bf16.mxu0 0
        %709 = vmatpush1.bf16.msra.mxu0 %v690
        %710 = vmatprep.subr.bf16.mxu0 0
        %711 = vmatpush1.bf16.msra.mxu0 %v691
        %712 = vmatprep.subr.bf16.mxu0 0
        %713 = vmatpush1.bf16.msra.mxu0 %v692
        %714 = vmatprep.subr.bf16.mxu0 0
        %715 = vmatpush1.bf16.msra.mxu0 %v693
        %716 = vmatprep.subr.bf16.mxu0 0
        %717 = vmatpush1.bf16.msra.mxu0 %v694
        %718 = vmatprep.subr.bf16.mxu0 0
        %719 = vmatpush1.bf16.msra.mxu0 %v695
        %720 = vmatprep.subr.bf16.mxu0 0
        %721 = vmatpush1.bf16.msra.mxu0 0
        %722 = vmatprep.subr.bf16.mxu0 0
        %723 = vmatpush1.bf16.msra.mxu0 0
        %724 = vmatprep.subr.bf16.mxu0 0
        %725 = vmatpush1.bf16.msra.mxu0 0
        %726 = vmatprep.subr.bf16.mxu0 0
        %727 = vmatpush1.bf16.msra.mxu0 0
        %728 = vmatprep.subr.bf16.mxu0 0
        %729 = vmatpush1.bf16.msra.mxu0 0
        %730 = vmatprep.subr.bf16.mxu0 0
        %731 = vmatpush1.bf16.msra.mxu0 0
        %732 = vmatprep.subr.bf16.mxu0 0
        %733 = vmatpush1.bf16.msra.mxu0 0
        %734 = vmatprep.subr.bf16.mxu0 0
        %735 = vmatpush1.bf16.msra.mxu0 0
        %736 = vmatprep.mubr.bf16.mxu0 0
        %737 = vmatmul.mubr.bf16.gmra.mrb[0].mxu0 %v608
        %v738 = vpop.f32.mrb[0].mxu0
        %v739 = vadd.f32 0.0, %v738
        %v740 = vpop.f32.mrb[0].mxu0
        %v741 = vpop.f32.mrb[0].mxu0
        %v742 = vadd.f32 0.0, %v741
        %v743 = vpop.f32.mrb[0].mxu0
        %744 = vmatprep.mubr.bf16.mxu0 0
        %745 = vmatmul.mubr.bf16.gmra.mrb[0].mxu0 %v609
        %v746 = vpop.f32.mrb[0].mxu0
        %v747 = vadd.f32 0.0, %v746
        %v748 = vpop.f32.mrb[0].mxu0
        %v749 = vpop.f32.mrb[0].mxu0
        %v750 = vadd.f32 0.0, %v749
        %v751 = vpop.f32.mrb[0].mxu0
        %752 = vmatprep.mubr.bf16.mxu0 0
        %753 = vmatmul.mubr.bf16.gmra.mrb[0].mxu0 %v610
        %v754 = vpop.f32.mrb[0].mxu0
        %v755 = vadd.f32 0.0, %v754
        %v756 = vpop.f32.mrb[0].mxu0
        %v757 = vpop.f32.mrb[0].mxu0
        %v758 = vadd.f32 0.0, %v757
        %v759 = vpop.f32.mrb[0].mxu0
        %760 = vmatprep.mubr.bf16.mxu0 0
        %761 = vmatmul.mubr.bf16.gmra.mrb[0].mxu0 %v611
        %v762 = vpop.f32.mrb[0].mxu0
        %v763 = vadd.f32 0.0, %v762
        %v764 = vpop.f32.mrb[0].mxu0
        %v765 = vpop.f32.mrb[0].mxu0
        %v766 = vadd.f32 0.0, %v765
        %v767 = vpop.f32.mrb[0].mxu0
        %768 = vmatprep.mubr.bf16.mxu0 0
        %769 = vmatmul.mubr.bf16.gmra.mrb[0].mxu0 %v612
        %v770 = vpop.f32.mrb[0].mxu0
        %v771 = vadd.f32 0.0, %v770
        %v772 = vpop.f32.mrb[0].mxu0
        %v773 = vpop.f32.mrb[0].mxu0
        %v774 = vadd.f32 0.0, %v773
        %v775 = vpop.f32.mrb[0].mxu0
        %776 = vmatprep.mubr.bf16.mxu0 0
        %777 = vmatmul.mubr.bf16.gmra.mrb[0].mxu0 %v613
        %v778 = vpop.f32.mrb[0].mxu0
        %v779 = vadd.f32 0.0, %v778
        %v780 = vpop.f32.mrb[0].mxu0
        %v781 = vpop.f32.mrb[0].mxu0
        %v782 = vadd.f32 0.0, %v781
        %v783 = vpop.f32.mrb[0].mxu0
        %784 = vmatprep.mubr.bf16.mxu0 0
        %785 = vmatmul.mubr.bf16.gmra.mrb[0].mxu0 %v614
        %v786 = vpop.f32.mrb[0].mxu0
        %v787 = vadd.f32 0.0, %v786
        %v788 = vpop.f32.mrb[0].mxu0
        %v789 = vpop.f32.mrb[0].mxu0
        %v790 = vadd.f32 0.0, %v789
        %v791 = vpop.f32.mrb[0].mxu0
        %792 = vmatprep.mubr.bf16.mxu0 0
        %793 = vmatmul.mubr.bf16.gmra.mrb[0].mxu0 %v615
        %v794 = vpop.f32.mrb[0].mxu0
        %v795 = vadd.f32 0.0, %v794
        %v796 = vpop.f32.mrb[0].mxu0
        %v797 = vpop.f32.mrb[0].mxu0
        %v798 = vadd.f32 0.0, %v797
        %v799 = vpop.f32.mrb[0].mxu0
        %800 = vmatprep.mubr.bf16.mxu0 0
        %801 = vmatmul.mubr.bf16.gmra.mrb[0].mxu0 %v616
        %v802 = vpop.f32.mrb[0].mxu0
        %v803 = vadd.f32 0.0, %v802
        %v804 = vpop.f32.mrb[0].mxu0
        %v805 = vpop.f32.mrb[0].mxu0
        %v806 = vadd.f32 0.0, %v805
        %v807 = vpop.f32.mrb[0].mxu0
        %808 = vmatprep.mubr.bf16.mxu0 0
        %809 = vmatmul.mubr.bf16.gmra.mrb[0].mxu0 %v617
        %v810 = vpop.f32.mrb[0].mxu0
        %v811 = vadd.f32 0.0, %v810
        %v812 = vpop.f32.mrb[0].mxu0
        %v813 = vpop.f32.mrb[0].mxu0
        %v814 = vadd.f32 0.0, %v813
        %v815 = vpop.f32.mrb[0].mxu0
        %816 = vmatprep.mubr.bf16.mxu0 0
        %817 = vmatmul.mubr.bf16.gmra.mrb[0].mxu0 %v618
        %v818 = vpop.f32.mrb[0].mxu0
        %v819 = vadd.f32 0.0, %v818
        %v820 = vpop.f32.mrb[0].mxu0
        %v821 = vpop.f32.mrb[0].mxu0
        %v822 = vadd.f32 0.0, %v821
        %v823 = vpop.f32.mrb[0].mxu0
        %824 = vmatprep.mubr.bf16.mxu0 0
        %825 = vmatmul.mubr.bf16.gmra.mrb[0].mxu0 %v619
        %v826 = vpop.f32.mrb[0].mxu0
        %v827 = vadd.f32 0.0, %v826
        %v828 = vpop.f32.mrb[0].mxu0
        %v829 = vpop.f32.mrb[0].mxu0
        %v830 = vadd.f32 0.0, %v829
        %v831 = vpop.f32.mrb[0].mxu0
        %832 = vmatprep.mubr.bf16.mxu0 0
        %833 = vmatmul.mubr.bf16.gmra.mrb[0].mxu0 %v620
        %v834 = vpop.f32.mrb[0].mxu0
        %v835 = vadd.f32 0.0, %v834
        %v836 = vpop.f32.mrb[0].mxu0
        %v837 = vpop.f32.mrb[0].mxu0
        %v838 = vadd.f32 0.0, %v837
        %v839 = vpop.f32.mrb[0].mxu0
        %840 = vmatprep.mubr.bf16.mxu0 0
        %841 = vmatmul.mubr.bf16.gmra.mrb[0].mxu0 %v621
        %v842 = vpop.f32.mrb[0].mxu0
        %v843 = vadd.f32 0.0, %v842
        %v844 = vpop.f32.mrb[0].mxu0
        %v845 = vpop.f32.mrb[0].mxu0
        %v846 = vadd.f32 0.0, %v845
        %v847 = vpop.f32.mrb[0].mxu0
        %848 = vmatprep.mubr.bf16.mxu0 0
        %849 = vmatmul.mubr.bf16.gmra.mrb[0].mxu0 %v622
        %v850 = vpop.f32.mrb[0].mxu0
        %v851 = vadd.f32 0.0, %v850
        %v852 = vpop.f32.mrb[0].mxu0
        %v853 = vpop.f32.mrb[0].mxu0
        %v854 = vadd.f32 0.0, %v853
        %v855 = vpop.f32.mrb[0].mxu0
        %856 = vmatprep.mubr.bf16.mxu0 0
        %857 = vmatmul.mubr.bf16.gmra.mrb[0].mxu0 %v623
        %v858 = vpop.f32.mrb[0].mxu0
        %v859 = vadd.f32 0.0, %v858
        %v860 = vpop.f32.mrb[0].mxu0
        %v861 = vpop.f32.mrb[0].mxu0
        %v862 = vadd.f32 0.0, %v861
        %v863 = vpop.f32.mrb[0].mxu0
        %864 = vmatprep.mubr.bf16.mxu0 0
        %865 = vmatmul.mubr.bf16.gmra.mrb[0].mxu0 %v624
        %v866 = vpop.f32.mrb[0].mxu0
        %v867 = vadd.f32 0.0, %v866
        %v868 = vpop.f32.mrb[0].mxu0
        %v869 = vpop.f32.mrb[0].mxu0
        %v870 = vadd.f32 0.0, %v869
        %v871 = vpop.f32.mrb[0].mxu0
        %872 = vmatprep.mubr.bf16.mxu0 0
        %873 = vmatmul.mubr.bf16.gmra.mrb[0].mxu0 %v625
        %v874 = vpop.f32.mrb[0].mxu0
        %v875 = vadd.f32 0.0, %v874
        %v876 = vpop.f32.mrb[0].mxu0
        %v877 = vpop.f32.mrb[0].mxu0
        %v878 = vadd.f32 0.0, %v877
        %v879 = vpop.f32.mrb[0].mxu0
        %880 = vmatprep.mubr.bf16.mxu0 0
        %881 = vmatmul.mubr.bf16.gmra.mrb[0].mxu0 %v626
        %v882 = vpop.f32.mrb[0].mxu0
        %v883 = vadd.f32 0.0, %v882
        %v884 = vpop.f32.mrb[0].mxu0
        %v885 = vpop.f32.mrb[0].mxu0
        %v886 = vadd.f32 0.0, %v885
        %v887 = vpop.f32.mrb[0].mxu0
        %888 = vmatprep.mubr.bf16.mxu0 0
        %889 = vmatmul.mubr.bf16.gmra.mrb[0].mxu0 %v627
        %v890 = vpop.f32.mrb[0].mxu0
        %v891 = vadd.f32 0.0, %v890
        %v892 = vpop.f32.mrb[0].mxu0
        %v893 = vpop.f32.mrb[0].mxu0
        %v894 = vadd.f32 0.0, %v893
        %v895 = vpop.f32.mrb[0].mxu0
        %896 = vmatprep.mubr.bf16.mxu0 0
        %897 = vmatmul.mubr.bf16.gmra.mrb[0].mxu0 %v628
        %v898 = vpop.f32.mrb[0].mxu0
        %v899 = vadd.f32 0.0, %v898
        %v900 = vpop.f32.mrb[0].mxu0
        %v901 = vpop.f32.mrb[0].mxu0
        %v902 = vadd.f32 0.0, %v901
        %v903 = vpop.f32.mrb[0].mxu0
        %904 = vmatprep.mubr.bf16.mxu0 0
        %905 = vmatmul.mubr.bf16.gmra.mrb[0].mxu0 %v629
        %v906 = vpop.f32.mrb[0].mxu0
        %v907 = vadd.f32 0.0, %v906
        %v908 = vpop.f32.mrb[0].mxu0
        %v909 = vpop.f32.mrb[0].mxu0
        %v910 = vadd.f32 0.0, %v909
        %v911 = vpop.f32.mrb[0].mxu0
        %912 = vmatprep.mubr.bf16.mxu0 0
        %913 = vmatmul.mubr.bf16.gmra.mrb[0].mxu0 %v630
        %v914 = vpop.f32.mrb[0].mxu0
        %v915 = vadd.f32 0.0, %v914
        %v916 = vpop.f32.mrb[0].mxu0
        %v917 = vpop.f32.mrb[0].mxu0
        %v918 = vadd.f32 0.0, %v917
        %v919 = vpop.f32.mrb[0].mxu0
        %920 = vmatprep.mubr.bf16.mxu0 0
        %921 = vmatmul.mubr.bf16.gmra.mrb[0].mxu0 %v631
        %v922 = vpop.f32.mrb[0].mxu0
        %v923 = vadd.f32 0.0, %v922
        %v924 = vpop.f32.mrb[0].mxu0
        %v925 = vpop.f32.mrb[0].mxu0
        %v926 = vadd.f32 0.0, %v925
        %v927 = vpop.f32.mrb[0].mxu0
        %928 = vmatprep.mubr.bf16.mxu0 0
        %929 = vmatmul.mubr.bf16.gmra.mrb[0].mxu0 %v632
        %v930 = vpop.f32.mrb[0].mxu0
        %v931 = vadd.f32 0.0, %v930
        %v932 = vpop.f32.mrb[0].mxu0
        %v933 = vpop.f32.mrb[0].mxu0
        %v934 = vadd.f32 0.0, %v933
        %v935 = vpop.f32.mrb[0].mxu0
        %936 = vmatprep.mubr.bf16.mxu0 0
        %937 = vmatmul.mubr.bf16.gmra.mrb[0].mxu0 %v633
        %v938 = vpop.f32.mrb[0].mxu0
        %v939 = vadd.f32 0.0, %v938
        %v940 = vpop.f32.mrb[0].mxu0
        %v941 = vpop.f32.mrb[0].mxu0
        %v942 = vadd.f32 0.0, %v941
        %v943 = vpop.f32.mrb[0].mxu0
        %944 = vmatprep.mubr.bf16.mxu0 0
        %945 = vmatmul.mubr.bf16.gmra.mrb[0].mxu0 %v634
        %v946 = vpop.f32.mrb[0].mxu0
        %v947 = vadd.f32 0.0, %v946
        %v948 = vpop.f32.mrb[0].mxu0
        %v949 = vpop.f32.mrb[0].mxu0
        %v950 = vadd.f32 0.0, %v949
        %v951 = vpop.f32.mrb[0].mxu0
        %952 = vmatprep.mubr.bf16.mxu0 0
        %953 = vmatmul.mubr.bf16.gmra.mrb[0].mxu0 %v635
        %v954 = vpop.f32.mrb[0].mxu0
        %v955 = vadd.f32 0.0, %v954
        %v956 = vpop.f32.mrb[0].mxu0
        %v957 = vpop.f32.mrb[0].mxu0
        %v958 = vadd.f32 0.0, %v957
        %v959 = vpop.f32.mrb[0].mxu0
        %960 = vmatprep.mubr.bf16.mxu0 0
        %961 = vmatmul.mubr.bf16.gmra.mrb[0].mxu0 %v636
        %v962 = vpop.f32.mrb[0].mxu0
        %v963 = vadd.f32 0.0, %v962
        %v964 = vpop.f32.mrb[0].mxu0
        %v965 = vpop.f32.mrb[0].mxu0
        %v966 = vadd.f32 0.0, %v965
        %v967 = vpop.f32.mrb[0].mxu0
        %968 = vmatprep.mubr.bf16.mxu0 0
        %969 = vmatmul.mubr.bf16.gmra.mrb[0].mxu0 %v637
        %v970 = vpop.f32.mrb[0].mxu0
        %v971 = vadd.f32 0.0, %v970
        %v972 = vpop.f32.mrb[0].mxu0
        %v973 = vpop.f32.mrb[0].mxu0
        %v974 = vadd.f32 0.0, %v973
        %v975 = vpop.f32.mrb[0].mxu0
        %976 = vmatprep.mubr.bf16.mxu0 0
        %977 = vmatmul.mubr.bf16.gmra.mrb[0].mxu0 %v638
        %v978 = vpop.f32.mrb[0].mxu0
        %v979 = vadd.f32 0.0, %v978
        %v980 = vpop.f32.mrb[0].mxu0
        %v981 = vpop.f32.mrb[0].mxu0
        %v982 = vadd.f32 0.0, %v981
        %v983 = vpop.f32.mrb[0].mxu0
        %984 = vmatprep.mubr.bf16.mxu0 0
        %985 = vmatmul.mubr.bf16.gmra.mrb[0].mxu0 %v639
        %v986 = vpop.f32.mrb[0].mxu0
        %v987 = vadd.f32 0.0, %v986
        %v988 = vpop.f32.mrb[0].mxu0
        %v989 = vpop.f32.mrb[0].mxu0
        %v990 = vadd.f32 0.0, %v989
        %v991 = vpop.f32.mrb[0].mxu0
        %992 = vdwg.mxu0
        %v993 = vld [vmem:[%s4] sm:$0x1]
        %v995 = vlaneseq
        %v996 = vshrl.u32 %v995, 7
        %v997 = vsub.s32 0, %v996
        %v998 = vrot.slane %v993, %v997
        %v1000 = vmul.f32 %v739, %v998
        %v1001 = vmul.f32 %v742, %v998
        %v1002 = vmul.f32 %v747, %v998
        %v1003 = vmul.f32 %v750, %v998
        %v1004 = vmul.f32 %v755, %v998
        %v1005 = vmul.f32 %v758, %v998
        %v1006 = vmul.f32 %v763, %v998
        %v1007 = vmul.f32 %v766, %v998
        %v1008 = vmul.f32 %v771, %v998
        %v1009 = vmul.f32 %v774, %v998
        %v1010 = vmul.f32 %v779, %v998
        %v1011 = vmul.f32 %v782, %v998
        %v1012 = vmul.f32 %v787, %v998
        %v1013 = vmul.f32 %v790, %v998
        %v1014 = vmul.f32 %v795, %v998
        %v1015 = vmul.f32 %v798, %v998
        %v1016 = vmul.f32 %v803, %v998
        %v1017 = vmul.f32 %v806, %v998
        %v1018 = vmul.f32 %v811, %v998
        %v1019 = vmul.f32 %v814, %v998
        %v1020 = vmul.f32 %v819, %v998
        %v1021 = vmul.f32 %v822, %v998
        %v1022 = vmul.f32 %v827, %v998
        %v1023 = vmul.f32 %v830, %v998
        %v1024 = vmul.f32 %v835, %v998
        %v1025 = vmul.f32 %v838, %v998
        %v1026 = vmul.f32 %v843, %v998
        %v1027 = vmul.f32 %v846, %v998
        %v1028 = vmul.f32 %v851, %v998
        %v1029 = vmul.f32 %v854, %v998
        %v1030 = vmul.f32 %v859, %v998
        %v1031 = vmul.f32 %v862, %v998
        %v1032 = vmul.f32 %v867, %v998
        %v1033 = vmul.f32 %v870, %v998
        %v1034 = vmul.f32 %v875, %v998
        %v1035 = vmul.f32 %v878, %v998
        %v1036 = vmul.f32 %v883, %v998
        %v1037 = vmul.f32 %v886, %v998
        %v1038 = vmul.f32 %v891, %v998
        %v1039 = vmul.f32 %v894, %v998
        %v1040 = vmul.f32 %v899, %v998
        %v1041 = vmul.f32 %v902, %v998
        %v1042 = vmul.f32 %v907, %v998
        %v1043 = vmul.f32 %v910, %v998
        %v1044 = vmul.f32 %v915, %v998
        %v1045 = vmul.f32 %v918, %v998
        %v1046 = vmul.f32 %v923, %v998
        %v1047 = vmul.f32 %v926, %v998
        %v1048 = vmul.f32 %v931, %v998
        %v1049 = vmul.f32 %v934, %v998
        %v1050 = vmul.f32 %v939, %v998
        %v1051 = vmul.f32 %v942, %v998
        %v1052 = vmul.f32 %v947, %v998
        %v1053 = vmul.f32 %v950, %v998
        %v1054 = vmul.f32 %v955, %v998
        %v1055 = vmul.f32 %v958, %v998
        %v1056 = vmul.f32 %v963, %v998
        %v1057 = vmul.f32 %v966, %v998
        %v1058 = vmul.f32 %v971, %v998
        %v1059 = vmul.f32 %v974, %v998
        %v1060 = vmul.f32 %v979, %v998
        %v1061 = vmul.f32 %v982, %v998
        %v1062 = vmul.f32 %v987, %v998
        %v1063 = vmul.f32 %v990, %v998
        %v1064 = vld [vmem:[%s5] sm:$0x1]
        %v1066 = vlaneseq
        %v1067 = vshrl.u32 %v1066, 7
        %v1068 = vsub.s32 0, %v1067
        %v1069 = vrot.slane %v1064, %v1068
        %v1071 = vadd.f32 %v1000, %v1069
        %v1072 = vadd.f32 %v1001, %v1069
        %v1073 = vadd.f32 %v1002, %v1069
        %v1074 = vadd.f32 %v1003, %v1069
        %v1075 = vadd.f32 %v1004, %v1069
        %v1076 = vadd.f32 %v1005, %v1069
        %v1077 = vadd.f32 %v1006, %v1069
        %v1078 = vadd.f32 %v1007, %v1069
        %v1079 = vadd.f32 %v1008, %v1069
        %v1080 = vadd.f32 %v1009, %v1069
        %v1081 = vadd.f32 %v1010, %v1069
        %v1082 = vadd.f32 %v1011, %v1069
        %v1083 = vadd.f32 %v1012, %v1069
        %v1084 = vadd.f32 %v1013, %v1069
        %v1085 = vadd.f32 %v1014, %v1069
        %v1086 = vadd.f32 %v1015, %v1069
        %v1087 = vadd.f32 %v1016, %v1069
        %v1088 = vadd.f32 %v1017, %v1069
        %v1089 = vadd.f32 %v1018, %v1069
        %v1090 = vadd.f32 %v1019, %v1069
        %v1091 = vadd.f32 %v1020, %v1069
        %v1092 = vadd.f32 %v1021, %v1069
        %v1093 = vadd.f32 %v1022, %v1069
        %v1094 = vadd.f32 %v1023, %v1069
        %v1095 = vadd.f32 %v1024, %v1069
        %v1096 = vadd.f32 %v1025, %v1069
        %v1097 = vadd.f32 %v1026, %v1069
        %v1098 = vadd.f32 %v1027, %v1069
        %v1099 = vadd.f32 %v1028, %v1069
        %v1100 = vadd.f32 %v1029, %v1069
        %v1101 = vadd.f32 %v1030, %v1069
        %v1102 = vadd.f32 %v1031, %v1069
        %v1103 = vadd.f32 %v1032, %v1069
        %v1104 = vadd.f32 %v1033, %v1069
        %v1105 = vadd.f32 %v1034, %v1069
        %v1106 = vadd.f32 %v1035, %v1069
        %v1107 = vadd.f32 %v1036, %v1069
        %v1108 = vadd.f32 %v1037, %v1069
        %v1109 = vadd.f32 %v1038, %v1069
        %v1110 = vadd.f32 %v1039, %v1069
        %v1111 = vadd.f32 %v1040, %v1069
        %v1112 = vadd.f32 %v1041, %v1069
        %v1113 = vadd.f32 %v1042, %v1069
        %v1114 = vadd.f32 %v1043, %v1069
        %v1115 = vadd.f32 %v1044, %v1069
        %v1116 = vadd.f32 %v1045, %v1069
        %v1117 = vadd.f32 %v1046, %v1069
        %v1118 = vadd.f32 %v1047, %v1069
        %v1119 = vadd.f32 %v1048, %v1069
        %v1120 = vadd.f32 %v1049, %v1069
        %v1121 = vadd.f32 %v1050, %v1069
        %v1122 = vadd.f32 %v1051, %v1069
        %v1123 = vadd.f32 %v1052, %v1069
        %v1124 = vadd.f32 %v1053, %v1069
        %v1125 = vadd.f32 %v1054, %v1069
        %v1126 = vadd.f32 %v1055, %v1069
        %v1127 = vadd.f32 %v1056, %v1069
        %v1128 = vadd.f32 %v1057, %v1069
        %v1129 = vadd.f32 %v1058, %v1069
        %v1130 = vadd.f32 %v1059, %v1069
        %v1131 = vadd.f32 %v1060, %v1069
        %v1132 = vadd.f32 %v1061, %v1069
        %v1133 = vadd.f32 %v1062, %v1069
        %v1134 = vadd.f32 %v1063, %v1069
        %v1135 = vmax.f32 %v1071, 0.0
        %v1136 = vmax.f32 %v1072, 0.0
        %v1137 = vmax.f32 %v1073, 0.0
        %v1138 = vmax.f32 %v1074, 0.0
        %v1139 = vmax.f32 %v1075, 0.0
        %v1140 = vmax.f32 %v1076, 0.0
        %v1141 = vmax.f32 %v1077, 0.0
        %v1142 = vmax.f32 %v1078, 0.0
        %v1143 = vmax.f32 %v1079, 0.0
        %v1144 = vmax.f32 %v1080, 0.0
        %v1145 = vmax.f32 %v1081, 0.0
        %v1146 = vmax.f32 %v1082, 0.0
        %v1147 = vmax.f32 %v1083, 0.0
        %v1148 = vmax.f32 %v1084, 0.0
        %v1149 = vmax.f32 %v1085, 0.0
        %v1150 = vmax.f32 %v1086, 0.0
        %v1151 = vmax.f32 %v1087, 0.0
        %v1152 = vmax.f32 %v1088, 0.0
        %v1153 = vmax.f32 %v1089, 0.0
        %v1154 = vmax.f32 %v1090, 0.0
        %v1155 = vmax.f32 %v1091, 0.0
        %v1156 = vmax.f32 %v1092, 0.0
        %v1157 = vmax.f32 %v1093, 0.0
        %v1158 = vmax.f32 %v1094, 0.0
        %v1159 = vmax.f32 %v1095, 0.0
        %v1160 = vmax.f32 %v1096, 0.0
        %v1161 = vmax.f32 %v1097, 0.0
        %v1162 = vmax.f32 %v1098, 0.0
        %v1163 = vmax.f32 %v1099, 0.0
        %v1164 = vmax.f32 %v1100, 0.0
        %v1165 = vmax.f32 %v1101, 0.0
        %v1166 = vmax.f32 %v1102, 0.0
        %v1167 = vmax.f32 %v1103, 0.0
        %v1168 = vmax.f32 %v1104, 0.0
        %v1169 = vmax.f32 %v1105, 0.0
        %v1170 = vmax.f32 %v1106, 0.0
        %v1171 = vmax.f32 %v1107, 0.0
        %v1172 = vmax.f32 %v1108, 0.0
        %v1173 = vmax.f32 %v1109, 0.0
        %v1174 = vmax.f32 %v1110, 0.0
        %v1175 = vmax.f32 %v1111, 0.0
        %v1176 = vmax.f32 %v1112, 0.0
        %v1177 = vmax.f32 %v1113, 0.0
        %v1178 = vmax.f32 %v1114, 0.0
        %v1179 = vmax.f32 %v1115, 0.0
        %v1180 = vmax.f32 %v1116, 0.0
        %v1181 = vmax.f32 %v1117, 0.0
        %v1182 = vmax.f32 %v1118, 0.0
        %v1183 = vmax.f32 %v1119, 0.0
        %v1184 = vmax.f32 %v1120, 0.0
        %v1185 = vmax.f32 %v1121, 0.0
        %v1186 = vmax.f32 %v1122, 0.0
        %v1187 = vmax.f32 %v1123, 0.0
        %v1188 = vmax.f32 %v1124, 0.0
        %v1189 = vmax.f32 %v1125, 0.0
        %v1190 = vmax.f32 %v1126, 0.0
        %v1191 = vmax.f32 %v1127, 0.0
        %v1192 = vmax.f32 %v1128, 0.0
        %v1193 = vmax.f32 %v1129, 0.0
        %v1194 = vmax.f32 %v1130, 0.0
        %v1195 = vmax.f32 %v1131, 0.0
        %v1196 = vmax.f32 %v1132, 0.0
        %v1197 = vmax.f32 %v1133, 0.0
        %v1198 = vmax.f32 %v1134, 0.0
        %1199 = vst [vmem:[%s253] sm:$0xff] %v1135
        %1200 = vst [vmem:[%s253 + $0x8] sm:$0xff] %v1136
        %1201 = vst [vmem:[%s253 + $0x10] sm:$0xff] %v1137
        %1202 = vst [vmem:[%s253 + $0x18] sm:$0xff] %v1138
        %1203 = vst [vmem:[%s253 + $0x20] sm:$0xff] %v1139
        %1204 = vst [vmem:[%s253 + $0x28] sm:$0xff] %v1140
        %1205 = vst [vmem:[%s253 + $0x30] sm:$0xff] %v1141
        %1206 = vst [vmem:[%s253 + $0x38] sm:$0xff] %v1142
        %1207 = vst [vmem:[%s253 + $0x40] sm:$0xff] %v1143
        %1208 = vst [vmem:[%s253 + $0x48] sm:$0xff] %v1144
        %1209 = vst [vmem:[%s253 + $0x50] sm:$0xff] %v1145
        %1210 = vst [vmem:[%s253 + $0x58] sm:$0xff] %v1146
        %1211 = vst [vmem:[%s253 + $0x60] sm:$0xff] %v1147
        %1212 = vst [vmem:[%s253 + $0x68] sm:$0xff] %v1148
        %1213 = vst [vmem:[%s253 + $0x70] sm:$0xff] %v1149
        %1214 = vst [vmem:[%s253 + $0x78] sm:$0xff] %v1150
        %1215 = vst [vmem:[%s253 + $0x80] sm:$0xff] %v1151
        %1216 = vst [vmem:[%s253 + $0x88] sm:$0xff] %v1152
        %1217 = vst [vmem:[%s253 + $0x90] sm:$0xff] %v1153
        %1218 = vst [vmem:[%s253 + $0x98] sm:$0xff] %v1154
        %1219 = vst [vmem:[%s253 + $0xa0] sm:$0xff] %v1155
        %1220 = vst [vmem:[%s253 + $0xa8] sm:$0xff] %v1156
        %1221 = vst [vmem:[%s253 + $0xb0] sm:$0xff] %v1157
        %1222 = vst [vmem:[%s253 + $0xb8] sm:$0xff] %v1158
        %1223 = vst [vmem:[%s253 + $0xc0] sm:$0xff] %v1159
        %1224 = vst [vmem:[%s253 + $0xc8] sm:$0xff] %v1160
        %1225 = vst [vmem:[%s253 + $0xd0] sm:$0xff] %v1161
        %1226 = vst [vmem:[%s253 + $0xd8] sm:$0xff] %v1162
        %1227 = vst [vmem:[%s253 + $0xe0] sm:$0xff] %v1163
        %1228 = vst [vmem:[%s253 + $0xe8] sm:$0xff] %v1164
        %1229 = vst [vmem:[%s253 + $0xf0] sm:$0xff] %v1165
        %1230 = vst [vmem:[%s253 + $0xf8] sm:$0xff] %v1166
        %1231 = vst [vmem:[%s253 + $0x100] sm:$0xff] %v1167
        %1232 = vst [vmem:[%s253 + $0x108] sm:$0xff] %v1168
        %1233 = vst [vmem:[%s253 + $0x110] sm:$0xff] %v1169
        %1234 = vst [vmem:[%s253 + $0x118] sm:$0xff] %v1170
        %1235 = vst [vmem:[%s253 + $0x120] sm:$0xff] %v1171
        %1236 = vst [vmem:[%s253 + $0x128] sm:$0xff] %v1172
        %1237 = vst [vmem:[%s253 + $0x130] sm:$0xff] %v1173
        %1238 = vst [vmem:[%s253 + $0x138] sm:$0xff] %v1174
        %1239 = vst [vmem:[%s253 + $0x140] sm:$0xff] %v1175
        %1240 = vst [vmem:[%s253 + $0x148] sm:$0xff] %v1176
        %1241 = vst [vmem:[%s253 + $0x150] sm:$0xff] %v1177
        %1242 = vst [vmem:[%s253 + $0x158] sm:$0xff] %v1178
        %1243 = vst [vmem:[%s253 + $0x160] sm:$0xff] %v1179
        %1244 = vst [vmem:[%s253 + $0x168] sm:$0xff] %v1180
        %1245 = vst [vmem:[%s253 + $0x170] sm:$0xff] %v1181
        %1246 = vst [vmem:[%s253 + $0x178] sm:$0xff] %v1182
        %1247 = vst [vmem:[%s253 + $0x180] sm:$0xff] %v1183
        %1248 = vst [vmem:[%s253 + $0x188] sm:$0xff] %v1184
        %1249 = vst [vmem:[%s253 + $0x190] sm:$0xff] %v1185
        %1250 = vst [vmem:[%s253 + $0x198] sm:$0xff] %v1186
        %1251 = vst [vmem:[%s253 + $0x1a0] sm:$0xff] %v1187
        %1252 = vst [vmem:[%s253 + $0x1a8] sm:$0xff] %v1188
        %1253 = vst [vmem:[%s253 + $0x1b0] sm:$0xff] %v1189
        %1254 = vst [vmem:[%s253 + $0x1b8] sm:$0xff] %v1190
        %1255 = vst [vmem:[%s253 + $0x1c0] sm:$0xff] %v1191
        %1256 = vst [vmem:[%s253 + $0x1c8] sm:$0xff] %v1192
        %1257 = vst [vmem:[%s253 + $0x1d0] sm:$0xff] %v1193
        %1258 = vst [vmem:[%s253 + $0x1d8] sm:$0xff] %v1194
        %1259 = vst [vmem:[%s253 + $0x1e0] sm:$0xff] %v1195
        %1260 = vst [vmem:[%s253 + $0x1e8] sm:$0xff] %v1196
        %1261 = vst [vmem:[%s253 + $0x1f0] sm:$0xff] %v1197
        %1262 = vst [vmem:[%s253 + $0x1f8] sm:$0xff] %v1198
        %s1263 = sand.u32 %s156, 1
        %s1264 = sand.u32 %s156, 1
        %s1265 = smul.addr %s1264, 512
        %s1266 = scalar_lea.vmem [#allocation2], %s1265
        // Predicated region
        $region45: #{apply_node_func.5} parent=43 // pred_check
          %p1267 = pneg %p166
        $region46: #{apply_node_func.5} parent=43 // pred_check_branch
          %1269 = sbr.rel (%p1267) target = $region48
        $region47: #{apply_node_func.5} parent=43 // pred_region
          %s1270 = smul.u32 64, %s17
          %s1271 = ssub.s32 138, %s1270
          %p1272 = scmp.lt.s32.totalorder %s1271, 64
          %s1273 = scalar_select %p1272, %s1271, 64
          %s1274 = smul.u32 128, %s1273
          %p1275 = scmp.ne.s32.totalorder 0, %s1274
          %s1276 = smul.addr %s1270, 8
          %s1277 = scalar_lea.vmem %s6, %s1276
          // Predicated region
          $region49: #{apply_node_func.5} parent=47 // pred_check
            %p1278 = pneg %p1275
          $region50: #{apply_node_func.5} parent=47 // pred_check_branch
            %1280 = sbr.rel (%p1278) target = $region52
          $region51: #{apply_node_func.5} parent=47 // pred_region
            // Predicated region
            $region53: #{apply_node_func.5} parent=51 // pred_check
              _
            $region54: #{apply_node_func.5} parent=51 // pred_check_branch
              %1282 = sbr.rel (0) target = $region56
            $region55: #{apply_node_func.5} parent=51 // pred_region
              // Predicated region
              $region75: #{apply_node_func.5} parent=55 // pred_check
                _
              $region76: #{apply_node_func.5} parent=55 // pred_check_branch
                %1457 = sbr.rel (0) target = $region78
              $region77: #{apply_node_func.5} parent=55 // pred_region
                %s1458 = sshrl.u32 %s1273, 6
                // While loop
                $region79: #{apply_node_func.5} parent=77 // loop_pre_header
                  _
                $region80: #{apply_node_func.5} parent=77 // loop_header
                  %s1460 = sphi 0, %s1462
                  %p1461 = scmp.ge.s32.totalorder %s1460, %s1458
                  %s1465 = sphi 0, %s1598
                  %s1466 = sphi %s1266, %s1601
                  %s1467 = sphi %s1277, %s1602
                $region81: #{apply_node_func.5} parent=77 // loop_header_branch
                  %1464 = sbr.rel (%p1461) target = $region85
                $region82: #{apply_node_func.5} parent=77 // loop_body
                  %v1468 = vld [vmem:[%s1466] sm:$0xff]
                  %1469 = vst [vmem:[%s1467] sm:$0xff] %v1468
                  %v1470 = vld [vmem:[%s1466 + $0x8] sm:$0xff]
                  %1471 = vst [vmem:[%s1467 + $0x8] sm:$0xff] %v1470
                  %v1472 = vld [vmem:[%s1466 + $0x10] sm:$0xff]
                  %1473 = vst [vmem:[%s1467 + $0x10] sm:$0xff] %v1472
                  %v1474 = vld [vmem:[%s1466 + $0x18] sm:$0xff]
                  %1475 = vst [vmem:[%s1467 + $0x18] sm:$0xff] %v1474
                  %v1476 = vld [vmem:[%s1466 + $0x20] sm:$0xff]
                  %1477 = vst [vmem:[%s1467 + $0x20] sm:$0xff] %v1476
                  %v1478 = vld [vmem:[%s1466 + $0x28] sm:$0xff]
                  %1479 = vst [vmem:[%s1467 + $0x28] sm:$0xff] %v1478
                  %v1480 = vld [vmem:[%s1466 + $0x30] sm:$0xff]
                  %1481 = vst [vmem:[%s1467 + $0x30] sm:$0xff] %v1480
                  %v1482 = vld [vmem:[%s1466 + $0x38] sm:$0xff]
                  %1483 = vst [vmem:[%s1467 + $0x38] sm:$0xff] %v1482
                  %v1484 = vld [vmem:[%s1466 + $0x40] sm:$0xff]
                  %1485 = vst [vmem:[%s1467 + $0x40] sm:$0xff] %v1484
                  %v1486 = vld [vmem:[%s1466 + $0x48] sm:$0xff]
                  %1487 = vst [vmem:[%s1467 + $0x48] sm:$0xff] %v1486
                  %v1488 = vld [vmem:[%s1466 + $0x50] sm:$0xff]
                  %1489 = vst [vmem:[%s1467 + $0x50] sm:$0xff] %v1488
                  %v1490 = vld [vmem:[%s1466 + $0x58] sm:$0xff]
                  %1491 = vst [vmem:[%s1467 + $0x58] sm:$0xff] %v1490
                  %v1492 = vld [vmem:[%s1466 + $0x60] sm:$0xff]
                  %1493 = vst [vmem:[%s1467 + $0x60] sm:$0xff] %v1492
                  %v1494 = vld [vmem:[%s1466 + $0x68] sm:$0xff]
                  %1495 = vst [vmem:[%s1467 + $0x68] sm:$0xff] %v1494
                  %v1496 = vld [vmem:[%s1466 + $0x70] sm:$0xff]
                  %1497 = vst [vmem:[%s1467 + $0x70] sm:$0xff] %v1496
                  %v1498 = vld [vmem:[%s1466 + $0x78] sm:$0xff]
                  %1499 = vst [vmem:[%s1467 + $0x78] sm:$0xff] %v1498
                  %v1500 = vld [vmem:[%s1466 + $0x80] sm:$0xff]
                  %1501 = vst [vmem:[%s1467 + $0x80] sm:$0xff] %v1500
                  %v1502 = vld [vmem:[%s1466 + $0x88] sm:$0xff]
                  %1503 = vst [vmem:[%s1467 + $0x88] sm:$0xff] %v1502
                  %v1504 = vld [vmem:[%s1466 + $0x90] sm:$0xff]
                  %1505 = vst [vmem:[%s1467 + $0x90] sm:$0xff] %v1504
                  %v1506 = vld [vmem:[%s1466 + $0x98] sm:$0xff]
                  %1507 = vst [vmem:[%s1467 + $0x98] sm:$0xff] %v1506
                  %v1508 = vld [vmem:[%s1466 + $0xa0] sm:$0xff]
                  %1509 = vst [vmem:[%s1467 + $0xa0] sm:$0xff] %v1508
                  %v1510 = vld [vmem:[%s1466 + $0xa8] sm:$0xff]
                  %1511 = vst [vmem:[%s1467 + $0xa8] sm:$0xff] %v1510
                  %v1512 = vld [vmem:[%s1466 + $0xb0] sm:$0xff]
                  %1513 = vst [vmem:[%s1467 + $0xb0] sm:$0xff] %v1512
                  %v1514 = vld [vmem:[%s1466 + $0xb8] sm:$0xff]
                  %1515 = vst [vmem:[%s1467 + $0xb8] sm:$0xff] %v1514
                  %v1516 = vld [vmem:[%s1466 + $0xc0] sm:$0xff]
                  %1517 = vst [vmem:[%s1467 + $0xc0] sm:$0xff] %v1516
                  %v1518 = vld [vmem:[%s1466 + $0xc8] sm:$0xff]
                  %1519 = vst [vmem:[%s1467 + $0xc8] sm:$0xff] %v1518
                  %v1520 = vld [vmem:[%s1466 + $0xd0] sm:$0xff]
                  %1521 = vst [vmem:[%s1467 + $0xd0] sm:$0xff] %v1520
                  %v1522 = vld [vmem:[%s1466 + $0xd8] sm:$0xff]
                  %1523 = vst [vmem:[%s1467 + $0xd8] sm:$0xff] %v1522
                  %v1524 = vld [vmem:[%s1466 + $0xe0] sm:$0xff]
                  %1525 = vst [vmem:[%s1467 + $0xe0] sm:$0xff] %v1524
                  %v1526 = vld [vmem:[%s1466 + $0xe8] sm:$0xff]
                  %1527 = vst [vmem:[%s1467 + $0xe8] sm:$0xff] %v1526
                  %v1528 = vld [vmem:[%s1466 + $0xf0] sm:$0xff]
                  %1529 = vst [vmem:[%s1467 + $0xf0] sm:$0xff] %v1528
                  %v1530 = vld [vmem:[%s1466 + $0xf8] sm:$0xff]
                  %1531 = vst [vmem:[%s1467 + $0xf8] sm:$0xff] %v1530
                  %v1532 = vld [vmem:[%s1466 + $0x100] sm:$0xff]
                  %1533 = vst [vmem:[%s1467 + $0x100] sm:$0xff] %v1532
                  %v1534 = vld [vmem:[%s1466 + $0x108] sm:$0xff]
                  %1535 = vst [vmem:[%s1467 + $0x108] sm:$0xff] %v1534
                  %v1536 = vld [vmem:[%s1466 + $0x110] sm:$0xff]
                  %1537 = vst [vmem:[%s1467 + $0x110] sm:$0xff] %v1536
                  %v1538 = vld [vmem:[%s1466 + $0x118] sm:$0xff]
                  %1539 = vst [vmem:[%s1467 + $0x118] sm:$0xff] %v1538
                  %v1540 = vld [vmem:[%s1466 + $0x120] sm:$0xff]
                  %1541 = vst [vmem:[%s1467 + $0x120] sm:$0xff] %v1540
                  %v1542 = vld [vmem:[%s1466 + $0x128] sm:$0xff]
                  %1543 = vst [vmem:[%s1467 + $0x128] sm:$0xff] %v1542
                  %v1544 = vld [vmem:[%s1466 + $0x130] sm:$0xff]
                  %1545 = vst [vmem:[%s1467 + $0x130] sm:$0xff] %v1544
                  %v1546 = vld [vmem:[%s1466 + $0x138] sm:$0xff]
                  %1547 = vst [vmem:[%s1467 + $0x138] sm:$0xff] %v1546
                  %v1548 = vld [vmem:[%s1466 + $0x140] sm:$0xff]
                  %1549 = vst [vmem:[%s1467 + $0x140] sm:$0xff] %v1548
                  %v1550 = vld [vmem:[%s1466 + $0x148] sm:$0xff]
                  %1551 = vst [vmem:[%s1467 + $0x148] sm:$0xff] %v1550
                  %v1552 = vld [vmem:[%s1466 + $0x150] sm:$0xff]
                  %1553 = vst [vmem:[%s1467 + $0x150] sm:$0xff] %v1552
                  %v1554 = vld [vmem:[%s1466 + $0x158] sm:$0xff]
                  %1555 = vst [vmem:[%s1467 + $0x158] sm:$0xff] %v1554
                  %v1556 = vld [vmem:[%s1466 + $0x160] sm:$0xff]
                  %1557 = vst [vmem:[%s1467 + $0x160] sm:$0xff] %v1556
                  %v1558 = vld [vmem:[%s1466 + $0x168] sm:$0xff]
                  %1559 = vst [vmem:[%s1467 + $0x168] sm:$0xff] %v1558
                  %v1560 = vld [vmem:[%s1466 + $0x170] sm:$0xff]
                  %1561 = vst [vmem:[%s1467 + $0x170] sm:$0xff] %v1560
                  %v1562 = vld [vmem:[%s1466 + $0x178] sm:$0xff]
                  %1563 = vst [vmem:[%s1467 + $0x178] sm:$0xff] %v1562
                  %v1564 = vld [vmem:[%s1466 + $0x180] sm:$0xff]
                  %1565 = vst [vmem:[%s1467 + $0x180] sm:$0xff] %v1564
                  %v1566 = vld [vmem:[%s1466 + $0x188] sm:$0xff]
                  %1567 = vst [vmem:[%s1467 + $0x188] sm:$0xff] %v1566
                  %v1568 = vld [vmem:[%s1466 + $0x190] sm:$0xff]
                  %1569 = vst [vmem:[%s1467 + $0x190] sm:$0xff] %v1568
                  %v1570 = vld [vmem:[%s1466 + $0x198] sm:$0xff]
                  %1571 = vst [vmem:[%s1467 + $0x198] sm:$0xff] %v1570
                  %v1572 = vld [vmem:[%s1466 + $0x1a0] sm:$0xff]
                  %1573 = vst [vmem:[%s1467 + $0x1a0] sm:$0xff] %v1572
                  %v1574 = vld [vmem:[%s1466 + $0x1a8] sm:$0xff]
                  %1575 = vst [vmem:[%s1467 + $0x1a8] sm:$0xff] %v1574
                  %v1576 = vld [vmem:[%s1466 + $0x1b0] sm:$0xff]
                  %1577 = vst [vmem:[%s1467 + $0x1b0] sm:$0xff] %v1576
                  %v1578 = vld [vmem:[%s1466 + $0x1b8] sm:$0xff]
                  %1579 = vst [vmem:[%s1467 + $0x1b8] sm:$0xff] %v1578
                  %v1580 = vld [vmem:[%s1466 + $0x1c0] sm:$0xff]
                  %1581 = vst [vmem:[%s1467 + $0x1c0] sm:$0xff] %v1580
                  %v1582 = vld [vmem:[%s1466 + $0x1c8] sm:$0xff]
                  %1583 = vst [vmem:[%s1467 + $0x1c8] sm:$0xff] %v1582
                  %v1584 = vld [vmem:[%s1466 + $0x1d0] sm:$0xff]
                  %1585 = vst [vmem:[%s1467 + $0x1d0] sm:$0xff] %v1584
                  %v1586 = vld [vmem:[%s1466 + $0x1d8] sm:$0xff]
                  %1587 = vst [vmem:[%s1467 + $0x1d8] sm:$0xff] %v1586
                  %v1588 = vld [vmem:[%s1466 + $0x1e0] sm:$0xff]
                  %1589 = vst [vmem:[%s1467 + $0x1e0] sm:$0xff] %v1588
                  %v1590 = vld [vmem:[%s1466 + $0x1e8] sm:$0xff]
                  %1591 = vst [vmem:[%s1467 + $0x1e8] sm:$0xff] %v1590
                  %v1592 = vld [vmem:[%s1466 + $0x1f0] sm:$0xff]
                  %1593 = vst [vmem:[%s1467 + $0x1f0] sm:$0xff] %v1592
                  %v1594 = vld [vmem:[%s1466 + $0x1f8] sm:$0xff]
                  %1595 = vst [vmem:[%s1467 + $0x1f8] sm:$0xff] %v1594
                  %s1596 = sadd.s32 1, %s1465
                  %p1597 = scmp.ge.s32.totalorder %s1596, %s1458
                  %s1598 = scalar_select %p1597, 0, %s1596
                  %s1599 = smul.u32 %s1598, 512
                  %s1600 = smul.u32 %s1598, 512
                  %s1601 = scalar_lea.vmem %s1266, %s1599 [#allocation2]
                  %s1602 = scalar_lea.vmem %s1277, %s1600
                $region83: #{apply_node_func.5} parent=77 // loop_footer
                  %s1462 = sadd.s32 %s1460, 1
                $region84: #{apply_node_func.5} parent=77 // loop_footer_branch
                  %1459 = sbr.rel target = $region80
                $region85: #{apply_node_func.5} parent=77 // loop_exit
                  _
                %s1603 = sshrl.u32 %s1273, 6
                %s1604 = sand.u32 %s1273, 63
                %s1605 = smul.u32 %s1603, 64
                %s1606 = smul.u32 8, %s1605
                %s1607 = scalar_lea.vmem %s1266, %s1606 [#allocation2]
                %s1608 = smul.u32 8, %s1605
                %s1609 = scalar_lea.vmem %s1277, %s1608
                // While loop
                $region86: #{apply_node_func.5} parent=77 // loop_pre_header
                  _
                $region87: #{apply_node_func.5} parent=77 // loop_header
                  %s1611 = sphi 0, %s1613
                  %p1612 = scmp.ge.s32.totalorder %s1611, %s1604
                  %s1616 = sphi 0, %s1623
                  %s1617 = sphi %s1607, %s1626
                  %s1618 = sphi %s1609, %s1627
                $region88: #{apply_node_func.5} parent=77 // loop_header_branch
                  %1615 = sbr.rel (%p1612) target = $region92
                $region89: #{apply_node_func.5} parent=77 // loop_body
                  %v1619 = vld [vmem:[%s1617] sm:$0xff]
                  %1620 = vst [vmem:[%s1618] sm:$0xff] %v1619
                  %s1621 = sadd.s32 1, %s1616
                  %p1622 = scmp.ge.s32.totalorder %s1621, %s1604
                  %s1623 = scalar_select %p1622, 0, %s1621
                  %s1624 = smul.u32 %s1623, 8
                  %s1625 = smul.u32 %s1623, 8
                  %s1626 = scalar_lea.vmem %s1607, %s1624 [#allocation2]
                  %s1627 = scalar_lea.vmem %s1609, %s1625
                $region90: #{apply_node_func.5} parent=77 // loop_footer
                  %s1613 = sadd.s32 %s1611, 1
                $region91: #{apply_node_func.5} parent=77 // loop_footer_branch
                  %1610 = sbr.rel target = $region87
                $region92: #{apply_node_func.5} parent=77 // loop_exit
                  _
              $region78: #{apply_node_func.5} parent=55 // pred_fallthru
                _
              // Predicated region
              $region93: #{apply_node_func.5} parent=55 // pred_check
                _
              $region94: #{apply_node_func.5} parent=55 // pred_check_branch
                %1629 = sbr.rel target = $region96
              $region95: #{apply_node_func.5} parent=55 // pred_region
                _
              $region96: #{apply_node_func.5} parent=55 // pred_fallthru
                _
            $region56: #{apply_node_func.5} parent=51 // pred_fallthru
              _
            // Predicated region
            $region57: #{apply_node_func.5} parent=51 // pred_check
              _
            $region58: #{apply_node_func.5} parent=51 // pred_check_branch
              %1284 = sbr.rel target = $region60
            $region59: #{apply_node_func.5} parent=51 // pred_region
              %s1286 = sshrl.u32 %s1273, 6
              // While loop
              $region61: #{apply_node_func.5} parent=59 // loop_pre_header
                _
              $region62: #{apply_node_func.5} parent=59 // loop_header
                %s1288 = sphi 0, %s1290
                %p1289 = scmp.ge.s32.totalorder %s1288, %s1286
                %s1293 = sphi 0, %s1426
                %s1294 = sphi %s1266, %s1429
                %s1295 = sphi %s1277, %s1430
              $region63: #{apply_node_func.5} parent=59 // loop_header_branch
                %1292 = sbr.rel (%p1289) target = $region67
              $region64: #{apply_node_func.5} parent=59 // loop_body
                %v1296 = vld [vmem:[%s1294] sm:$0xff]
                %1297 = vst [vmem:[%s1295] sm:$0xff] %v1296
                %v1298 = vld [vmem:[%s1294 + $0x8] sm:$0xff]
                %1299 = vst [vmem:[%s1295 + $0x8] sm:$0xff] %v1298
                %v1300 = vld [vmem:[%s1294 + $0x10] sm:$0xff]
                %1301 = vst [vmem:[%s1295 + $0x10] sm:$0xff] %v1300
                %v1302 = vld [vmem:[%s1294 + $0x18] sm:$0xff]
                %1303 = vst [vmem:[%s1295 + $0x18] sm:$0xff] %v1302
                %v1304 = vld [vmem:[%s1294 + $0x20] sm:$0xff]
                %1305 = vst [vmem:[%s1295 + $0x20] sm:$0xff] %v1304
                %v1306 = vld [vmem:[%s1294 + $0x28] sm:$0xff]
                %1307 = vst [vmem:[%s1295 + $0x28] sm:$0xff] %v1306
                %v1308 = vld [vmem:[%s1294 + $0x30] sm:$0xff]
                %1309 = vst [vmem:[%s1295 + $0x30] sm:$0xff] %v1308
                %v1310 = vld [vmem:[%s1294 + $0x38] sm:$0xff]
                %1311 = vst [vmem:[%s1295 + $0x38] sm:$0xff] %v1310
                %v1312 = vld [vmem:[%s1294 + $0x40] sm:$0xff]
                %1313 = vst [vmem:[%s1295 + $0x40] sm:$0xff] %v1312
                %v1314 = vld [vmem:[%s1294 + $0x48] sm:$0xff]
                %1315 = vst [vmem:[%s1295 + $0x48] sm:$0xff] %v1314
                %v1316 = vld [vmem:[%s1294 + $0x50] sm:$0xff]
                %1317 = vst [vmem:[%s1295 + $0x50] sm:$0xff] %v1316
                %v1318 = vld [vmem:[%s1294 + $0x58] sm:$0xff]
                %1319 = vst [vmem:[%s1295 + $0x58] sm:$0xff] %v1318
                %v1320 = vld [vmem:[%s1294 + $0x60] sm:$0xff]
                %1321 = vst [vmem:[%s1295 + $0x60] sm:$0xff] %v1320
                %v1322 = vld [vmem:[%s1294 + $0x68] sm:$0xff]
                %1323 = vst [vmem:[%s1295 + $0x68] sm:$0xff] %v1322
                %v1324 = vld [vmem:[%s1294 + $0x70] sm:$0xff]
                %1325 = vst [vmem:[%s1295 + $0x70] sm:$0xff] %v1324
                %v1326 = vld [vmem:[%s1294 + $0x78] sm:$0xff]
                %1327 = vst [vmem:[%s1295 + $0x78] sm:$0xff] %v1326
                %v1328 = vld [vmem:[%s1294 + $0x80] sm:$0xff]
                %1329 = vst [vmem:[%s1295 + $0x80] sm:$0xff] %v1328
                %v1330 = vld [vmem:[%s1294 + $0x88] sm:$0xff]
                %1331 = vst [vmem:[%s1295 + $0x88] sm:$0xff] %v1330
                %v1332 = vld [vmem:[%s1294 + $0x90] sm:$0xff]
                %1333 = vst [vmem:[%s1295 + $0x90] sm:$0xff] %v1332
                %v1334 = vld [vmem:[%s1294 + $0x98] sm:$0xff]
                %1335 = vst [vmem:[%s1295 + $0x98] sm:$0xff] %v1334
                %v1336 = vld [vmem:[%s1294 + $0xa0] sm:$0xff]
                %1337 = vst [vmem:[%s1295 + $0xa0] sm:$0xff] %v1336
                %v1338 = vld [vmem:[%s1294 + $0xa8] sm:$0xff]
                %1339 = vst [vmem:[%s1295 + $0xa8] sm:$0xff] %v1338
                %v1340 = vld [vmem:[%s1294 + $0xb0] sm:$0xff]
                %1341 = vst [vmem:[%s1295 + $0xb0] sm:$0xff] %v1340
                %v1342 = vld [vmem:[%s1294 + $0xb8] sm:$0xff]
                %1343 = vst [vmem:[%s1295 + $0xb8] sm:$0xff] %v1342
                %v1344 = vld [vmem:[%s1294 + $0xc0] sm:$0xff]
                %1345 = vst [vmem:[%s1295 + $0xc0] sm:$0xff] %v1344
                %v1346 = vld [vmem:[%s1294 + $0xc8] sm:$0xff]
                %1347 = vst [vmem:[%s1295 + $0xc8] sm:$0xff] %v1346
                %v1348 = vld [vmem:[%s1294 + $0xd0] sm:$0xff]
                %1349 = vst [vmem:[%s1295 + $0xd0] sm:$0xff] %v1348
                %v1350 = vld [vmem:[%s1294 + $0xd8] sm:$0xff]
                %1351 = vst [vmem:[%s1295 + $0xd8] sm:$0xff] %v1350
                %v1352 = vld [vmem:[%s1294 + $0xe0] sm:$0xff]
                %1353 = vst [vmem:[%s1295 + $0xe0] sm:$0xff] %v1352
                %v1354 = vld [vmem:[%s1294 + $0xe8] sm:$0xff]
                %1355 = vst [vmem:[%s1295 + $0xe8] sm:$0xff] %v1354
                %v1356 = vld [vmem:[%s1294 + $0xf0] sm:$0xff]
                %1357 = vst [vmem:[%s1295 + $0xf0] sm:$0xff] %v1356
                %v1358 = vld [vmem:[%s1294 + $0xf8] sm:$0xff]
                %1359 = vst [vmem:[%s1295 + $0xf8] sm:$0xff] %v1358
                %v1360 = vld [vmem:[%s1294 + $0x100] sm:$0xff]
                %1361 = vst [vmem:[%s1295 + $0x100] sm:$0xff] %v1360
                %v1362 = vld [vmem:[%s1294 + $0x108] sm:$0xff]
                %1363 = vst [vmem:[%s1295 + $0x108] sm:$0xff] %v1362
                %v1364 = vld [vmem:[%s1294 + $0x110] sm:$0xff]
                %1365 = vst [vmem:[%s1295 + $0x110] sm:$0xff] %v1364
                %v1366 = vld [vmem:[%s1294 + $0x118] sm:$0xff]
                %1367 = vst [vmem:[%s1295 + $0x118] sm:$0xff] %v1366
                %v1368 = vld [vmem:[%s1294 + $0x120] sm:$0xff]
                %1369 = vst [vmem:[%s1295 + $0x120] sm:$0xff] %v1368
                %v1370 = vld [vmem:[%s1294 + $0x128] sm:$0xff]
                %1371 = vst [vmem:[%s1295 + $0x128] sm:$0xff] %v1370
                %v1372 = vld [vmem:[%s1294 + $0x130] sm:$0xff]
                %1373 = vst [vmem:[%s1295 + $0x130] sm:$0xff] %v1372
                %v1374 = vld [vmem:[%s1294 + $0x138] sm:$0xff]
                %1375 = vst [vmem:[%s1295 + $0x138] sm:$0xff] %v1374
                %v1376 = vld [vmem:[%s1294 + $0x140] sm:$0xff]
                %1377 = vst [vmem:[%s1295 + $0x140] sm:$0xff] %v1376
                %v1378 = vld [vmem:[%s1294 + $0x148] sm:$0xff]
                %1379 = vst [vmem:[%s1295 + $0x148] sm:$0xff] %v1378
                %v1380 = vld [vmem:[%s1294 + $0x150] sm:$0xff]
                %1381 = vst [vmem:[%s1295 + $0x150] sm:$0xff] %v1380
                %v1382 = vld [vmem:[%s1294 + $0x158] sm:$0xff]
                %1383 = vst [vmem:[%s1295 + $0x158] sm:$0xff] %v1382
                %v1384 = vld [vmem:[%s1294 + $0x160] sm:$0xff]
                %1385 = vst [vmem:[%s1295 + $0x160] sm:$0xff] %v1384
                %v1386 = vld [vmem:[%s1294 + $0x168] sm:$0xff]
                %1387 = vst [vmem:[%s1295 + $0x168] sm:$0xff] %v1386
                %v1388 = vld [vmem:[%s1294 + $0x170] sm:$0xff]
                %1389 = vst [vmem:[%s1295 + $0x170] sm:$0xff] %v1388
                %v1390 = vld [vmem:[%s1294 + $0x178] sm:$0xff]
                %1391 = vst [vmem:[%s1295 + $0x178] sm:$0xff] %v1390
                %v1392 = vld [vmem:[%s1294 + $0x180] sm:$0xff]
                %1393 = vst [vmem:[%s1295 + $0x180] sm:$0xff] %v1392
                %v1394 = vld [vmem:[%s1294 + $0x188] sm:$0xff]
                %1395 = vst [vmem:[%s1295 + $0x188] sm:$0xff] %v1394
                %v1396 = vld [vmem:[%s1294 + $0x190] sm:$0xff]
                %1397 = vst [vmem:[%s1295 + $0x190] sm:$0xff] %v1396
                %v1398 = vld [vmem:[%s1294 + $0x198] sm:$0xff]
                %1399 = vst [vmem:[%s1295 + $0x198] sm:$0xff] %v1398
                %v1400 = vld [vmem:[%s1294 + $0x1a0] sm:$0xff]
                %1401 = vst [vmem:[%s1295 + $0x1a0] sm:$0xff] %v1400
                %v1402 = vld [vmem:[%s1294 + $0x1a8] sm:$0xff]
                %1403 = vst [vmem:[%s1295 + $0x1a8] sm:$0xff] %v1402
                %v1404 = vld [vmem:[%s1294 + $0x1b0] sm:$0xff]
                %1405 = vst [vmem:[%s1295 + $0x1b0] sm:$0xff] %v1404
                %v1406 = vld [vmem:[%s1294 + $0x1b8] sm:$0xff]
                %1407 = vst [vmem:[%s1295 + $0x1b8] sm:$0xff] %v1406
                %v1408 = vld [vmem:[%s1294 + $0x1c0] sm:$0xff]
                %1409 = vst [vmem:[%s1295 + $0x1c0] sm:$0xff] %v1408
                %v1410 = vld [vmem:[%s1294 + $0x1c8] sm:$0xff]
                %1411 = vst [vmem:[%s1295 + $0x1c8] sm:$0xff] %v1410
                %v1412 = vld [vmem:[%s1294 + $0x1d0] sm:$0xff]
                %1413 = vst [vmem:[%s1295 + $0x1d0] sm:$0xff] %v1412
                %v1414 = vld [vmem:[%s1294 + $0x1d8] sm:$0xff]
                %1415 = vst [vmem:[%s1295 + $0x1d8] sm:$0xff] %v1414
                %v1416 = vld [vmem:[%s1294 + $0x1e0] sm:$0xff]
                %1417 = vst [vmem:[%s1295 + $0x1e0] sm:$0xff] %v1416
                %v1418 = vld [vmem:[%s1294 + $0x1e8] sm:$0xff]
                %1419 = vst [vmem:[%s1295 + $0x1e8] sm:$0xff] %v1418
                %v1420 = vld [vmem:[%s1294 + $0x1f0] sm:$0xff]
                %1421 = vst [vmem:[%s1295 + $0x1f0] sm:$0xff] %v1420
                %v1422 = vld [vmem:[%s1294 + $0x1f8] sm:$0xff]
                %1423 = vst [vmem:[%s1295 + $0x1f8] sm:$0xff] %v1422
                %s1424 = sadd.s32 1, %s1293
                %p1425 = scmp.ge.s32.totalorder %s1424, %s1286
                %s1426 = scalar_select %p1425, 0, %s1424
                %s1427 = smul.u32 %s1426, 512
                %s1428 = smul.u32 %s1426, 512
                %s1429 = scalar_lea.vmem %s1266, %s1427 [#allocation2]
                %s1430 = scalar_lea.vmem %s1277, %s1428
              $region65: #{apply_node_func.5} parent=59 // loop_footer
                %s1290 = sadd.s32 %s1288, 1
              $region66: #{apply_node_func.5} parent=59 // loop_footer_branch
                %1287 = sbr.rel target = $region62
              $region67: #{apply_node_func.5} parent=59 // loop_exit
                _
              %s1431 = sshrl.u32 %s1273, 6
              %s1432 = sand.u32 %s1273, 63
              %s1433 = smul.u32 %s1431, 64
              %s1434 = smul.u32 8, %s1433
              %s1435 = scalar_lea.vmem %s1266, %s1434 [#allocation2]
              %s1436 = smul.u32 8, %s1433
              %s1437 = scalar_lea.vmem %s1277, %s1436
              // While loop
              $region68: #{apply_node_func.5} parent=59 // loop_pre_header
                _
              $region69: #{apply_node_func.5} parent=59 // loop_header
                %s1439 = sphi 0, %s1441
                %p1440 = scmp.ge.s32.totalorder %s1439, %s1432
                %s1444 = sphi 0, %s1451
                %s1445 = sphi %s1435, %s1454
                %s1446 = sphi %s1437, %s1455
              $region70: #{apply_node_func.5} parent=59 // loop_header_branch
                %1443 = sbr.rel (%p1440) target = $region74
              $region71: #{apply_node_func.5} parent=59 // loop_body
                %v1447 = vld [vmem:[%s1445] sm:$0xff]
                %1448 = vst [vmem:[%s1446] sm:$0xff] %v1447
                %s1449 = sadd.s32 1, %s1444
                %p1450 = scmp.ge.s32.totalorder %s1449, %s1432
                %s1451 = scalar_select %p1450, 0, %s1449
                %s1452 = smul.u32 %s1451, 8
                %s1453 = smul.u32 %s1451, 8
                %s1454 = scalar_lea.vmem %s1435, %s1452 [#allocation2]
                %s1455 = scalar_lea.vmem %s1437, %s1453
              $region72: #{apply_node_func.5} parent=59 // loop_footer
                %s1441 = sadd.s32 %s1439, 1
              $region73: #{apply_node_func.5} parent=59 // loop_footer_branch
                %1438 = sbr.rel target = $region69
              $region74: #{apply_node_func.5} parent=59 // loop_exit
                _
            $region60: #{apply_node_func.5} parent=51 // pred_fallthru
              _
          $region52: #{apply_node_func.5} parent=47 // pred_fallthru
            _
          %1630 = vnop
        $region48: #{apply_node_func.5} parent=43 // pred_fallthru
          _
      $region44: #{apply_node_func.5} parent=5 // pred_fallthru
        _
      %p1631 = scmp.le.s32.totalorder 2, %s12
      // Predicated region
      $region97: #{apply_node_func.5} parent=5 // pred_check
        %p1632 = pneg %p1631
      $region98: #{apply_node_func.5} parent=5 // pred_check_branch
        %1634 = sbr.rel (%p1632) target = $region100
      $region99: #{apply_node_func.5} parent=5 // pred_region
        %s1635 = ssub.s32 %s12, 2
        // Predicated region
        $region101: #{apply_node_func.5} parent=99 // pred_check
          %p1636 = pneg %p172
        $region102: #{apply_node_func.5} parent=99 // pred_check_branch
          %1638 = sbr.rel (%p1636) target = $region104
        $region103: #{apply_node_func.5} parent=99 // pred_region
          %s1639 = sand.u32 %s157, 1
          %s1640 = sand.u32 %s157, 1
          %s1641 = smul.addr %s1640, 512
          %s1642 = scalar_lea.vmem [#allocation2], %s1641
        $region104: #{apply_node_func.5} parent=99 // pred_fallthru
          _
      $region100: #{apply_node_func.5} parent=5 // pred_fallthru
        _
    $region6: #{apply_node_func.5} parent=1 // loop_footer
      %s16 = sadd.s32 1, %s12
    $region7: #{apply_node_func.5} parent=1 // loop_footer_branch
      %11 = sbr.rel target = $region3
    $region8: #{apply_node_func.5} parent=1 // loop_exit
      _

// kernel: apply_node_func.4
$region0: #{apply_node_func.4}
  #allocation0 [shape = 'u32[]', space=smem, size = 0x4, offset = 0x4, fixed_abs, tag = 'smem constant byte address 0x4 - core index']
  #allocation1 [shape = 'u32[144,128]{1,0:T(1,128)}', space=vmem, size = 0x12000, scoped, tag = 'internal scratch']
  %s0 = inlined_call_operand.vmem [shape: bf16[1100,128], index: 0, kind: input, shape index: {}]
  %s1 = inlined_call_operand.vmem [shape: f32[1,128], index: 1, kind: input, shape index: {}]
  %s2 = inlined_call_operand.vmem [shape: f32[1,128], index: 2, kind: input, shape index: {}]
  %s3 = inlined_call_operand.vmem [shape: bf16[128,128], index: 3, kind: input, shape index: {}]
  %s4 = inlined_call_operand.vmem [shape: f32[2,8,128], index: 4, kind: output, shape index: {0}]
  %s5 = inlined_call_operand.vmem [shape: f32[2,8,128], index: 5, kind: output, shape index: {1}]
  %6 = xla_tuple %s4, %s5
  %s7 = sld [smem:[#allocation0]]
  $region69: #{apply_node_func.4} parent=0
    _
  %s9 = ssub.s32 1, %s7
  %s10 = scalar_select 0, %s9, %s7
  loop: start=0, step=1, limit=6
  $region2: #{apply_node_func.4} parent=0 // loop_pre_header
    _
  $region3: #{apply_node_func.4} parent=0 // loop_header
    %s12 = sphi 0, %s16
    %p13 = scmp.ge.s32.totalorder %s12, 6
    %s19 = sphi 0, %s31
    %s20 = sphi 0, %s27
    %s21 = sphi 0, %s19
    %s22 = sphi 0, %s20
    %s23 = sphi 0, %s21
    %s24 = sphi 0, %s22
    %s42 = sphi 0, %s44
    %s45 = sphi 0, %s42
    %s46 = sphi 0, %s45
    %s62 = sphi 0, %s46
    %s66 = sphi 0, %s66
    %s68 = sphi 0, %s66
    %s69 = sphi 0, %s68
    %s83 = sphi 0, %s69
    %s87 = sphi 0, %s87
    %s89 = sphi 0, %s87
    %s90 = sphi 0, %s89
    %s104 = sphi 0, %s90
    %s108 = sphi 0, %s108
    %s110 = sphi 0, %s108
    %s111 = sphi 0, %s110
    %s125 = sphi 0, %s111
    %s131 = sphi 0, %s133
    %s134 = sphi 0, %s131
    %s135 = sphi 0, %s134
    %s151 = sphi 0, %s135
    %s157 = sphi 0, %s159
    %s160 = sphi 0, %s157
    %s161 = sphi 0, %s160
    %s177 = sphi 0, %s161
  $region4: #{apply_node_func.4} parent=0 // loop_header_branch
    %15 = sbr.rel (%p13) target = $region8
  $region5: #{apply_node_func.4} parent=0 // loop_body
    %s17 = ssub.s32 %s12, 1
    %s18 = ssub.s32 %s12, 2
    %s25 = sadd.s32 1, %s20
    %p26 = scmp.ge.s32.totalorder %s25, 2
    %s27 = scalar_select %p26, 0, %s25
    %s28 = sadd.s32 1, %s19
    %s29 = scalar_select %p26, %s28, %s19
    %p30 = scmp.ge.s32.totalorder %s29, 2
    %s31 = scalar_select %p30, 0, %s29
    %s32 = smul.u32 %s19, 2
    %s33 = sadd.s32 %s32, %s20
    %p34 = scmp.lt.s32.totalorder %s33, 2
    %s35 = scalar_select %p34, %s33, 2
    %s36 = smul.u32 %s31, 2
    %s37 = sadd.s32 %s36, %s27
    %p38 = scmp.lt.s32.totalorder %s37, 2
    %s39 = scalar_select %p38, %s37, 2
    %s40 = ssub.s32 %s35, %s39
    %p41 = scmp.eq.s32.totalorder %s40, 0
    %s43 = sadd.s32 %s42, 1
    %s44 = scalar_select %p41, %s42, %s43
    %p47 = pneg %p41
    %p48 = scmp.eq.s32.totalorder %s12, 3
    %p49 = por %p47, %p48
    %p50 = scmp.ne.s32.totalorder %s42, %s45
    %p51 = scmp.eq.s32.totalorder %s12, 0
    %p52 = por %p50, %p51
    %p53 = scmp.ne.s32.totalorder %s42, %s45
    %p54 = scmp.eq.s32.totalorder %s17, 3
    %p55 = por %p53, %p54
    %p56 = scmp.ne.s32.totalorder %s45, %s46
    %p57 = scmp.eq.s32.totalorder %s17, 0
    %p58 = por %p56, %p57
    %p59 = scmp.ne.s32.totalorder %s45, %s46
    %p60 = scmp.eq.s32.totalorder %s18, 3
    %p61 = por %p59, %p60
    %p63 = scmp.ne.s32.totalorder %s46, %s62
    %p64 = scmp.eq.s32.totalorder %s18, 0
    %p65 = por %p63, %p64
    %s67 = sadd.s32 %s66, 1
    %p70 = scmp.eq.s32.totalorder %s12, 3
    %p71 = scmp.ne.s32.totalorder %s66, %s68
    %p72 = scmp.eq.s32.totalorder %s12, 0
    %p73 = por %p71, %p72
    %p74 = scmp.ne.s32.totalorder %s66, %s68
    %p75 = scmp.eq.s32.totalorder %s17, 3
    %p76 = por %p74, %p75
    %p77 = scmp.ne.s32.totalorder %s68, %s69
    %p78 = scmp.eq.s32.totalorder %s17, 0
    %p79 = por %p77, %p78
    %p80 = scmp.ne.s32.totalorder %s68, %s69
    %p81 = scmp.eq.s32.totalorder %s18, 3
    %p82 = por %p80, %p81
    %p84 = scmp.ne.s32.totalorder %s69, %s83
    %p85 = scmp.eq.s32.totalorder %s18, 0
    %p86 = por %p84, %p85
    %s88 = sadd.s32 %s87, 1
    %p91 = scmp.eq.s32.totalorder %s12, 3
    %p92 = scmp.ne.s32.totalorder %s87, %s89
    %p93 = scmp.eq.s32.totalorder %s12, 0
    %p94 = por %p92, %p93
    %p95 = scmp.ne.s32.totalorder %s87, %s89
    %p96 = scmp.eq.s32.totalorder %s17, 3
    %p97 = por %p95, %p96
    %p98 = scmp.ne.s32.totalorder %s89, %s90
    %p99 = scmp.eq.s32.totalorder %s17, 0
    %p100 = por %p98, %p99
    %p101 = scmp.ne.s32.totalorder %s89, %s90
    %p102 = scmp.eq.s32.totalorder %s18, 3
    %p103 = por %p101, %p102
    %p105 = scmp.ne.s32.totalorder %s90, %s104
    %p106 = scmp.eq.s32.totalorder %s18, 0
    %p107 = por %p105, %p106
    %s109 = sadd.s32 %s108, 1
    %p112 = scmp.eq.s32.totalorder %s12, 3
    %p113 = scmp.ne.s32.totalorder %s108, %s110
    %p114 = scmp.eq.s32.totalorder %s12, 0
    %p115 = por %p113, %p114
    %p116 = scmp.ne.s32.totalorder %s108, %s110
    %p117 = scmp.eq.s32.totalorder %s17, 3
    %p118 = por %p116, %p117
    %p119 = scmp.ne.s32.totalorder %s110, %s111
    %p120 = scmp.eq.s32.totalorder %s17, 0
    %p121 = por %p119, %p120
    %p122 = scmp.ne.s32.totalorder %s110, %s111
    %p123 = scmp.eq.s32.totalorder %s18, 3
    %p124 = por %p122, %p123
    %p126 = scmp.ne.s32.totalorder %s111, %s125
    %p127 = scmp.eq.s32.totalorder %s18, 0
    %p128 = por %p126, %p127
    %s129 = ssub.s32 %s19, %s31
    %p130 = scmp.eq.s32.totalorder %s129, 0
    %s132 = sadd.s32 %s131, 1
    %s133 = scalar_select %p130, %s131, %s132
    %p136 = pneg %p130
    %p137 = scmp.eq.s32.totalorder %s12, 3
    %p138 = por %p136, %p137
    %p139 = scmp.ne.s32.totalorder %s131, %s134
    %p140 = scmp.eq.s32.totalorder %s12, 0
    %p141 = por %p139, %p140
    %p142 = scmp.ne.s32.totalorder %s131, %s134
    %p143 = scmp.eq.s32.totalorder %s17, 3
    %p144 = por %p142, %p143
    %p145 = scmp.ne.s32.totalorder %s134, %s135
    %p146 = scmp.eq.s32.totalorder %s17, 0
    %p147 = por %p145, %p146
    %p148 = scmp.ne.s32.totalorder %s134, %s135
    %p149 = scmp.eq.s32.totalorder %s18, 3
    %p150 = por %p148, %p149
    %p152 = scmp.ne.s32.totalorder %s135, %s151
    %p153 = scmp.eq.s32.totalorder %s18, 0
    %p154 = por %p152, %p153
    %s155 = ssub.s32 %s19, %s31
    %p156 = scmp.eq.s32.totalorder %s155, 0
    %s158 = sadd.s32 %s157, 1
    %s159 = scalar_select %p156, %s157, %s158
    %p162 = pneg %p156
    %p163 = scmp.eq.s32.totalorder %s12, 3
    %p164 = por %p162, %p163
    %p165 = scmp.ne.s32.totalorder %s157, %s160
    %p166 = scmp.eq.s32.totalorder %s12, 0
    %p167 = por %p165, %p166
    %p168 = scmp.ne.s32.totalorder %s157, %s160
    %p169 = scmp.eq.s32.totalorder %s17, 3
    %p170 = por %p168, %p169
    %p171 = scmp.ne.s32.totalorder %s160, %s161
    %p172 = scmp.eq.s32.totalorder %s17, 0
    %p173 = por %p171, %p172
    %p174 = scmp.ne.s32.totalorder %s160, %s161
    %p175 = scmp.eq.s32.totalorder %s18, 3
    %p176 = por %p174, %p175
    %p178 = scmp.ne.s32.totalorder %s161, %s177
    %p179 = scmp.eq.s32.totalorder %s18, 0
    %p180 = por %p178, %p179
    %p181 = scmp.le.s32.totalorder 1, %s12
    %p182 = scmp.lt.s32.totalorder %s12, 5
    %p183 = pnand %p181, %p182
    %p184 = pneg %p183
    // Predicated region
    $region9: #{apply_node_func.4} parent=5 // pred_check
      _
    $region10: #{apply_node_func.4} parent=5 // pred_check_branch
      %186 = sbr.rel (%p183) target = $region12
    $region11: #{apply_node_func.4} parent=5 // pred_region
      %s187 = ssub.s32 %s12, 1
      // Predicated region
      $region13: #{apply_node_func.4} parent=11 // pred_check
        %p188 = pneg %p79
      $region14: #{apply_node_func.4} parent=11 // pred_check_branch
        %190 = sbr.rel (%p188) target = $region16
      $region15: #{apply_node_func.4} parent=11 // pred_region
        _
      $region16: #{apply_node_func.4} parent=11 // pred_fallthru
        _
      // Predicated region
      $region17: #{apply_node_func.4} parent=11 // pred_check
        %p191 = pneg %p100
      $region18: #{apply_node_func.4} parent=11 // pred_check_branch
        %193 = sbr.rel (%p191) target = $region20
      $region19: #{apply_node_func.4} parent=11 // pred_region
        _
      $region20: #{apply_node_func.4} parent=11 // pred_fallthru
        _
      // Predicated region
      $region21: #{apply_node_func.4} parent=11 // pred_check
        %p194 = pneg %p121
      $region22: #{apply_node_func.4} parent=11 // pred_check_branch
        %196 = sbr.rel (%p194) target = $region24
      $region23: #{apply_node_func.4} parent=11 // pred_region
        _
      $region24: #{apply_node_func.4} parent=11 // pred_fallthru
        _
    $region12: #{apply_node_func.4} parent=5 // pred_fallthru
      _
    %p197 = scmp.lt.s32.totalorder %s12, 4
    // Predicated region
    $region25: #{apply_node_func.4} parent=5 // pred_check
      %p198 = pneg %p197
    $region26: #{apply_node_func.4} parent=5 // pred_check_branch
      %200 = sbr.rel (%p198) target = $region28
    $region27: #{apply_node_func.4} parent=5 // pred_region
      // Predicated region
      $region29: #{apply_node_func.4} parent=27 // pred_check
        %p201 = pneg %p52
      $region30: #{apply_node_func.4} parent=27 // pred_check_branch
        %203 = sbr.rel (%p201) target = $region32
      $region31: #{apply_node_func.4} parent=27 // pred_region
        %s204 = smul.u32 %s19, 2
        %s205 = sadd.s32 %s204, %s20
        %p206 = scmp.lt.s32.totalorder %s205, 2
        %s207 = scalar_select %p206, %s205, 2
        %s208 = smul.u32 64, %s207
        %s209 = ssub.s32 138, %s208
        %p210 = scmp.lt.s32.totalorder %s209, 64
        %s211 = scalar_select %p210, %s209, 64
        %s212 = smul.u32 64, %s211
        %p213 = scmp.lt.s32.totalorder %s208, 137
        %s214 = scalar_select %p213, %s208, 137
        %s215 = smul.addr %s214, 4
        %s216 = scalar_lea.vmem %s0, %s215
        %s217 = smul.u32 %s19, 2
        %s218 = sadd.s32 %s217, %s20
        %p219 = scmp.lt.s32.totalorder %s218, 2
        %s220 = scalar_select %p219, %s218, 2
        %s221 = smul.u32 64, %s220
        %s222 = ssub.s32 138, %s221
        %p223 = scmp.lt.s32.totalorder %s222, 64
        %s224 = scalar_select %p223, %s222, 64
        %s225 = smul.u32 64, %s224
      $region32: #{apply_node_func.4} parent=27 // pred_fallthru
        _
    $region28: #{apply_node_func.4} parent=5 // pred_fallthru
      _
    %p226 = scmp.le.s32.totalorder 1, %s12
    %p227 = scmp.lt.s32.totalorder %s12, 5
    %p228 = pnand %p226, %p227
    %p229 = pneg %p228
    // Predicated region
    $region33: #{apply_node_func.4} parent=5 // pred_check
      _
    $region34: #{apply_node_func.4} parent=5 // pred_check_branch
      %231 = sbr.rel (%p228) target = $region36
    $region35: #{apply_node_func.4} parent=5 // pred_region
      %s232 = ssub.s32 %s12, 1
      %s233 = smul.u32 %s21, 2
      %s234 = sadd.s32 %s233, %s22
      %p235 = scmp.lt.s32.totalorder %s234, 2
      %s236 = scalar_select %p235, %s234, 2
      %s237 = smul.u32 64, %s236
      %s238 = ssub.s32 138, %s237
      %p239 = scmp.lt.s32.totalorder %s238, 64
      %s240 = scalar_select %p239, %s238, 64
      %s241 = smul.u32 64, %s240
      %p242 = scmp.lt.s32.totalorder %s237, 137
      %s243 = scalar_select %p242, %s237, 137
      %s244 = smul.addr %s243, 4
      %s245 = scalar_lea.vmem %s0, %s244
      %p246 = pneg %p58
      %p247 = pneg %p55
      %p248 = pneg %p79
      %p249 = pneg %p76
      %p250 = pneg %p100
      %p251 = pneg %p97
      %p252 = pneg %p121
      %p253 = pneg %p118
      %p254 = pneg %p147
      %p255 = pneg %p144
      %p256 = scmp.lt.s32.totalorder %s21, 1
      %s257 = scalar_select %p256, %s21, 1
      %s258 = smul.addr %s257, 8
      %s259 = scalar_lea.vmem %s4, %s258
      %p260 = pneg %p173
      %p261 = pneg %p170
      %p262 = scmp.lt.s32.totalorder %s21, 1
      %s263 = scalar_select %p262, %s21, 1
      %s264 = smul.addr %s263, 8
      %s265 = scalar_lea.vmem %s5, %s264
      %s266 = smul.u32 %s21, 2
      %s267 = sadd.s32 %s266, %s22
      %p268 = scmp.lt.s32.totalorder %s267, 2
      %s269 = scalar_select %p268, %s267, 2
      %s270 = smul.u32 64, %s269
      %s271 = ssub.s32 138, %s270
      %p272 = scmp.lt.s32.totalorder %s271, 64
      %s273 = scalar_select %p272, %s271, 64
      %s274 = smul.u32 64, %s273
      %p275 = scmp.lt.s32.totalorder %s270, 137
      %s276 = scalar_select %p275, %s270, 137
      %s277 = smul.addr %s276, 4
      %s278 = scalar_lea.vmem %s0, %s277
      %s279 = smul.u32 %s21, 2
      %s280 = sadd.s32 %s279, %s22
      %p281 = scmp.lt.s32.totalorder %s280, 2
      %s282 = scalar_select %p281, %s280, 2
      %s283 = smul.u32 64, %s282
      %s284 = ssub.s32 138, %s283
      %p285 = scmp.lt.s32.totalorder %s284, 64
      %s286 = scalar_select %p285, %s284, 64
      %s287 = smul.u32 64, %s286
      %p288 = scmp.lt.s32.totalorder %s21, 1
      %s289 = scalar_select %p288, %s21, 1
      %s290 = smul.addr %s289, 8
      %s291 = scalar_lea.vmem %s4, %s290
      %p292 = scmp.lt.s32.totalorder %s21, 1
      %s293 = scalar_select %p292, %s21, 1
      %s294 = smul.addr %s293, 8
      %s295 = scalar_lea.vmem %s5, %s294
      %s297 = smul.u32 %s21, 2
      %s298 = sadd.s32 %s297, %s22
      %p299 = scmp.eq.s32.totalorder %s22, 0
      // Predicated region
      $region37: #{apply_node_func.4} parent=35 // pred_check
        %p300 = pneg %p299
      $region38: #{apply_node_func.4} parent=35 // pred_check_branch
        %302 = sbr.rel (%p300) target = $region40
      $region39: #{apply_node_func.4} parent=35 // pred_region
        %303 = vst [vmem:[%s291] sm:$0xff] 0.0
        %304 = vst [vmem:[%s295] sm:$0xff] 0.0
      $region40: #{apply_node_func.4} parent=35 // pred_fallthru
        _
      %v305 = vld [vmem:[%s278] sm:$0xf]
      %v306 = vld [vmem:[%s278 + $0x4] sm:$0xf]
      %v307 = vld [vmem:[%s278 + $0x8] sm:$0xf]
      %v308 = vld [vmem:[%s278 + $0xc] sm:$0xf]
      %v309 = vld [vmem:[%s278 + $0x10] sm:$0xf]
      %v310 = vld [vmem:[%s278 + $0x14] sm:$0xf]
      %v311 = vld [vmem:[%s278 + $0x18] sm:$0xf]
      %v312 = vld [vmem:[%s278 + $0x1c] sm:$0xf]
      %v313 = vld [vmem:[%s278 + $0x20] sm:$0xf]
      %v314 = vld [vmem:[%s278 + $0x24] sm:$0xf]
      %v315 = vld [vmem:[%s278 + $0x28] sm:$0xf]
      %v316 = vld [vmem:[%s278 + $0x2c] sm:$0xf]
      %v317 = vld [vmem:[%s278 + $0x30] sm:$0xf]
      %v318 = vld [vmem:[%s278 + $0x34] sm:$0xf]
      %v319 = vld [vmem:[%s278 + $0x38] sm:$0xf]
      %v320 = vld [vmem:[%s278 + $0x3c] sm:$0xf]
      %v321 = vld [vmem:[%s278 + $0x40] sm:$0xf]
      %v322 = vld [vmem:[%s278 + $0x44] sm:$0xf]
      %v323 = vld [vmem:[%s278 + $0x48] sm:$0xf]
      %v324 = vld [vmem:[%s278 + $0x4c] sm:$0xf]
      %v325 = vld [vmem:[%s278 + $0x50] sm:$0xf]
      %v326 = vld [vmem:[%s278 + $0x54] sm:$0xf]
      %v327 = vld [vmem:[%s278 + $0x58] sm:$0xf]
      %v328 = vld [vmem:[%s278 + $0x5c] sm:$0xf]
      %v329 = vld [vmem:[%s278 + $0x60] sm:$0xf]
      %v330 = vld [vmem:[%s278 + $0x64] sm:$0xf]
      %v331 = vld [vmem:[%s278 + $0x68] sm:$0xf]
      %v332 = vld [vmem:[%s278 + $0x6c] sm:$0xf]
      %v333 = vld [vmem:[%s278 + $0x70] sm:$0xf]
      %v334 = vld [vmem:[%s278 + $0x74] sm:$0xf]
      %v335 = vld [vmem:[%s278 + $0x78] sm:$0xf]
      %v336 = vld [vmem:[%s278 + $0x7c] sm:$0xf]
      %v337 = vld [vmem:[%s278 + $0x80] sm:$0xf]
      %v338 = vld [vmem:[%s278 + $0x84] sm:$0xf]
      %v339 = vld [vmem:[%s278 + $0x88] sm:$0xf]
      %v340 = vld [vmem:[%s278 + $0x8c] sm:$0xf]
      %v341 = vld [vmem:[%s278 + $0x90] sm:$0xf]
      %v342 = vld [vmem:[%s278 + $0x94] sm:$0xf]
      %v343 = vld [vmem:[%s278 + $0x98] sm:$0xf]
      %v344 = vld [vmem:[%s278 + $0x9c] sm:$0xf]
      %v345 = vld [vmem:[%s278 + $0xa0] sm:$0xf]
      %v346 = vld [vmem:[%s278 + $0xa4] sm:$0xf]
      %v347 = vld [vmem:[%s278 + $0xa8] sm:$0xf]
      %v348 = vld [vmem:[%s278 + $0xac] sm:$0xf]
      %v349 = vld [vmem:[%s278 + $0xb0] sm:$0xf]
      %v350 = vld [vmem:[%s278 + $0xb4] sm:$0xf]
      %v351 = vld [vmem:[%s278 + $0xb8] sm:$0xf]
      %v352 = vld [vmem:[%s278 + $0xbc] sm:$0xf]
      %v353 = vld [vmem:[%s278 + $0xc0] sm:$0xf]
      %v354 = vld [vmem:[%s278 + $0xc4] sm:$0xf]
      %v355 = vld [vmem:[%s278 + $0xc8] sm:$0xf]
      %v356 = vld [vmem:[%s278 + $0xcc] sm:$0xf]
      %v357 = vld [vmem:[%s278 + $0xd0] sm:$0xf]
      %v358 = vld [vmem:[%s278 + $0xd4] sm:$0xf]
      %v359 = vld [vmem:[%s278 + $0xd8] sm:$0xf]
      %v360 = vld [vmem:[%s278 + $0xdc] sm:$0xf]
      %v361 = vld [vmem:[%s278 + $0xe0] sm:$0xf]
      %v362 = vld [vmem:[%s278 + $0xe4] sm:$0xf]
      %v363 = vld [vmem:[%s278 + $0xe8] sm:$0xf]
      %v364 = vld [vmem:[%s278 + $0xec] sm:$0xf]
      %v365 = vld [vmem:[%s278 + $0xf0] sm:$0xf]
      %v366 = vld [vmem:[%s278 + $0xf4] sm:$0xf]
      %v367 = vld [vmem:[%s278 + $0xf8] sm:$0xf]
      %v368 = vld [vmem:[%s278 + $0xfc] sm:$0xf]
      %v369 = vld [vmem:[%s1] sm:$0x1]
      %v370 = vunpack.c.l.bf16 %v305
      %v371 = vunpack.c.l.bf16 %v306
      %v372 = vunpack.c.l.bf16 %v307
      %v373 = vunpack.c.l.bf16 %v308
      %v374 = vunpack.c.l.bf16 %v309
      %v375 = vunpack.c.l.bf16 %v310
      %v376 = vunpack.c.l.bf16 %v311
      %v377 = vunpack.c.l.bf16 %v312
      %v378 = vunpack.c.l.bf16 %v313
      %v379 = vunpack.c.l.bf16 %v314
      %v380 = vunpack.c.l.bf16 %v315
      %v381 = vunpack.c.l.bf16 %v316
      %v382 = vunpack.c.l.bf16 %v317
      %v383 = vunpack.c.l.bf16 %v318
      %v384 = vunpack.c.l.bf16 %v319
      %v385 = vunpack.c.l.bf16 %v320
      %v386 = vunpack.c.l.bf16 %v321
      %v387 = vunpack.c.l.bf16 %v322
      %v388 = vunpack.c.l.bf16 %v323
      %v389 = vunpack.c.l.bf16 %v324
      %v390 = vunpack.c.l.bf16 %v325
      %v391 = vunpack.c.l.bf16 %v326
      %v392 = vunpack.c.l.bf16 %v327
      %v393 = vunpack.c.l.bf16 %v328
      %v394 = vunpack.c.l.bf16 %v329
      %v395 = vunpack.c.l.bf16 %v330
      %v396 = vunpack.c.l.bf16 %v331
      %v397 = vunpack.c.l.bf16 %v332
      %v398 = vunpack.c.l.bf16 %v333
      %v399 = vunpack.c.l.bf16 %v334
      %v400 = vunpack.c.l.bf16 %v335
      %v401 = vunpack.c.l.bf16 %v336
      %v402 = vunpack.c.l.bf16 %v337
      %v403 = vunpack.c.l.bf16 %v338
      %v404 = vunpack.c.l.bf16 %v339
      %v405 = vunpack.c.l.bf16 %v340
      %v406 = vunpack.c.l.bf16 %v341
      %v407 = vunpack.c.l.bf16 %v342
      %v408 = vunpack.c.l.bf16 %v343
      %v409 = vunpack.c.l.bf16 %v344
      %v410 = vunpack.c.l.bf16 %v345
      %v411 = vunpack.c.l.bf16 %v346
      %v412 = vunpack.c.l.bf16 %v347
      %v413 = vunpack.c.l.bf16 %v348
      %v414 = vunpack.c.l.bf16 %v349
      %v415 = vunpack.c.l.bf16 %v350
      %v416 = vunpack.c.l.bf16 %v351
      %v417 = vunpack.c.l.bf16 %v352
      %v418 = vunpack.c.l.bf16 %v353
      %v419 = vunpack.c.l.bf16 %v354
      %v420 = vunpack.c.l.bf16 %v355
      %v421 = vunpack.c.l.bf16 %v356
      %v422 = vunpack.c.l.bf16 %v357
      %v423 = vunpack.c.l.bf16 %v358
      %v424 = vunpack.c.l.bf16 %v359
      %v425 = vunpack.c.l.bf16 %v360
      %v426 = vunpack.c.l.bf16 %v361
      %v427 = vunpack.c.l.bf16 %v362
      %v428 = vunpack.c.l.bf16 %v363
      %v429 = vunpack.c.l.bf16 %v364
      %v430 = vunpack.c.l.bf16 %v365
      %v431 = vunpack.c.l.bf16 %v366
      %v432 = vunpack.c.l.bf16 %v367
      %v433 = vunpack.c.l.bf16 %v368
      %v435 = vlaneseq
      %v436 = vshrl.u32 %v435, 7
      %v437 = vsub.s32 0, %v436
      %v438 = vrot.slane %v369, %v437
      %v440 = vmul.f32 %v370, %v438
      %v441 = vmul.f32 %v371, %v438
      %v442 = vmul.f32 %v372, %v438
      %v443 = vmul.f32 %v373, %v438
      %v444 = vmul.f32 %v374, %v438
      %v445 = vmul.f32 %v375, %v438
      %v446 = vmul.f32 %v376, %v438
      %v447 = vmul.f32 %v377, %v438
      %v448 = vmul.f32 %v378, %v438
      %v449 = vmul.f32 %v379, %v438
      %v450 = vmul.f32 %v380, %v438
      %v451 = vmul.f32 %v381, %v438
      %v452 = vmul.f32 %v382, %v438
      %v453 = vmul.f32 %v383, %v438
      %v454 = vmul.f32 %v384, %v438
      %v455 = vmul.f32 %v385, %v438
      %v456 = vmul.f32 %v386, %v438
      %v457 = vmul.f32 %v387, %v438
      %v458 = vmul.f32 %v388, %v438
      %v459 = vmul.f32 %v389, %v438
      %v460 = vmul.f32 %v390, %v438
      %v461 = vmul.f32 %v391, %v438
      %v462 = vmul.f32 %v392, %v438
      %v463 = vmul.f32 %v393, %v438
      %v464 = vmul.f32 %v394, %v438
      %v465 = vmul.f32 %v395, %v438
      %v466 = vmul.f32 %v396, %v438
      %v467 = vmul.f32 %v397, %v438
      %v468 = vmul.f32 %v398, %v438
      %v469 = vmul.f32 %v399, %v438
      %v470 = vmul.f32 %v400, %v438
      %v471 = vmul.f32 %v401, %v438
      %v472 = vmul.f32 %v402, %v438
      %v473 = vmul.f32 %v403, %v438
      %v474 = vmul.f32 %v404, %v438
      %v475 = vmul.f32 %v405, %v438
      %v476 = vmul.f32 %v406, %v438
      %v477 = vmul.f32 %v407, %v438
      %v478 = vmul.f32 %v408, %v438
      %v479 = vmul.f32 %v409, %v438
      %v480 = vmul.f32 %v410, %v438
      %v481 = vmul.f32 %v411, %v438
      %v482 = vmul.f32 %v412, %v438
      %v483 = vmul.f32 %v413, %v438
      %v484 = vmul.f32 %v414, %v438
      %v485 = vmul.f32 %v415, %v438
      %v486 = vmul.f32 %v416, %v438
      %v487 = vmul.f32 %v417, %v438
      %v488 = vmul.f32 %v418, %v438
      %v489 = vmul.f32 %v419, %v438
      %v490 = vmul.f32 %v420, %v438
      %v491 = vmul.f32 %v421, %v438
      %v492 = vmul.f32 %v422, %v438
      %v493 = vmul.f32 %v423, %v438
      %v494 = vmul.f32 %v424, %v438
      %v495 = vmul.f32 %v425, %v438
      %v496 = vmul.f32 %v426, %v438
      %v497 = vmul.f32 %v427, %v438
      %v498 = vmul.f32 %v428, %v438
      %v499 = vmul.f32 %v429, %v438
      %v500 = vmul.f32 %v430, %v438
      %v501 = vmul.f32 %v431, %v438
      %v502 = vmul.f32 %v432, %v438
      %v503 = vmul.f32 %v433, %v438
      %v504 = vld [vmem:[%s2] sm:$0x1]
      %v506 = vlaneseq
      %v507 = vshrl.u32 %v506, 7
      %v508 = vsub.s32 0, %v507
      %v509 = vrot.slane %v504, %v508
      %v511 = vadd.f32 %v440, %v509
      %v512 = vadd.f32 %v441, %v509
      %v513 = vadd.f32 %v442, %v509
      %v514 = vadd.f32 %v443, %v509
      %v515 = vadd.f32 %v444, %v509
      %v516 = vadd.f32 %v445, %v509
      %v517 = vadd.f32 %v446, %v509
      %v518 = vadd.f32 %v447, %v509
      %v519 = vadd.f32 %v448, %v509
      %v520 = vadd.f32 %v449, %v509
      %v521 = vadd.f32 %v450, %v509
      %v522 = vadd.f32 %v451, %v509
      %v523 = vadd.f32 %v452, %v509
      %v524 = vadd.f32 %v453, %v509
      %v525 = vadd.f32 %v454, %v509
      %v526 = vadd.f32 %v455, %v509
      %v527 = vadd.f32 %v456, %v509
      %v528 = vadd.f32 %v457, %v509
      %v529 = vadd.f32 %v458, %v509
      %v530 = vadd.f32 %v459, %v509
      %v531 = vadd.f32 %v460, %v509
      %v532 = vadd.f32 %v461, %v509
      %v533 = vadd.f32 %v462, %v509
      %v534 = vadd.f32 %v463, %v509
      %v535 = vadd.f32 %v464, %v509
      %v536 = vadd.f32 %v465, %v509
      %v537 = vadd.f32 %v466, %v509
      %v538 = vadd.f32 %v467, %v509
      %v539 = vadd.f32 %v468, %v509
      %v540 = vadd.f32 %v469, %v509
      %v541 = vadd.f32 %v470, %v509
      %v542 = vadd.f32 %v471, %v509
      %v543 = vadd.f32 %v472, %v509
      %v544 = vadd.f32 %v473, %v509
      %v545 = vadd.f32 %v474, %v509
      %v546 = vadd.f32 %v475, %v509
      %v547 = vadd.f32 %v476, %v509
      %v548 = vadd.f32 %v477, %v509
      %v549 = vadd.f32 %v478, %v509
      %v550 = vadd.f32 %v479, %v509
      %v551 = vadd.f32 %v480, %v509
      %v552 = vadd.f32 %v481, %v509
      %v553 = vadd.f32 %v482, %v509
      %v554 = vadd.f32 %v483, %v509
      %v555 = vadd.f32 %v484, %v509
      %v556 = vadd.f32 %v485, %v509
      %v557 = vadd.f32 %v486, %v509
      %v558 = vadd.f32 %v487, %v509
      %v559 = vadd.f32 %v488, %v509
      %v560 = vadd.f32 %v489, %v509
      %v561 = vadd.f32 %v490, %v509
      %v562 = vadd.f32 %v491, %v509
      %v563 = vadd.f32 %v492, %v509
      %v564 = vadd.f32 %v493, %v509
      %v565 = vadd.f32 %v494, %v509
      %v566 = vadd.f32 %v495, %v509
      %v567 = vadd.f32 %v496, %v509
      %v568 = vadd.f32 %v497, %v509
      %v569 = vadd.f32 %v498, %v509
      %v570 = vadd.f32 %v499, %v509
      %v571 = vadd.f32 %v500, %v509
      %v572 = vadd.f32 %v501, %v509
      %v573 = vadd.f32 %v502, %v509
      %v574 = vadd.f32 %v503, %v509
      %v575 = vmax.f32 %v511, 0.0
      %v576 = vmax.f32 %v512, 0.0
      %v577 = vmax.f32 %v513, 0.0
      %v578 = vmax.f32 %v514, 0.0
      %v579 = vmax.f32 %v515, 0.0
      %v580 = vmax.f32 %v516, 0.0
      %v581 = vmax.f32 %v517, 0.0
      %v582 = vmax.f32 %v518, 0.0
      %v583 = vmax.f32 %v519, 0.0
      %v584 = vmax.f32 %v520, 0.0
      %v585 = vmax.f32 %v521, 0.0
      %v586 = vmax.f32 %v522, 0.0
      %v587 = vmax.f32 %v523, 0.0
      %v588 = vmax.f32 %v524, 0.0
      %v589 = vmax.f32 %v525, 0.0
      %v590 = vmax.f32 %v526, 0.0
      %v591 = vmax.f32 %v527, 0.0
      %v592 = vmax.f32 %v528, 0.0
      %v593 = vmax.f32 %v529, 0.0
      %v594 = vmax.f32 %v530, 0.0
      %v595 = vmax.f32 %v531, 0.0
      %v596 = vmax.f32 %v532, 0.0
      %v597 = vmax.f32 %v533, 0.0
      %v598 = vmax.f32 %v534, 0.0
      %v599 = vmax.f32 %v535, 0.0
      %v600 = vmax.f32 %v536, 0.0
      %v601 = vmax.f32 %v537, 0.0
      %v602 = vmax.f32 %v538, 0.0
      %v603 = vmax.f32 %v539, 0.0
      %v604 = vmax.f32 %v540, 0.0
      %v605 = vmax.f32 %v541, 0.0
      %v606 = vmax.f32 %v542, 0.0
      %v607 = vmax.f32 %v543, 0.0
      %v608 = vmax.f32 %v544, 0.0
      %v609 = vmax.f32 %v545, 0.0
      %v610 = vmax.f32 %v546, 0.0
      %v611 = vmax.f32 %v547, 0.0
      %v612 = vmax.f32 %v548, 0.0
      %v613 = vmax.f32 %v549, 0.0
      %v614 = vmax.f32 %v550, 0.0
      %v615 = vmax.f32 %v551, 0.0
      %v616 = vmax.f32 %v552, 0.0
      %v617 = vmax.f32 %v553, 0.0
      %v618 = vmax.f32 %v554, 0.0
      %v619 = vmax.f32 %v555, 0.0
      %v620 = vmax.f32 %v556, 0.0
      %v621 = vmax.f32 %v557, 0.0
      %v622 = vmax.f32 %v558, 0.0
      %v623 = vmax.f32 %v559, 0.0
      %v624 = vmax.f32 %v560, 0.0
      %v625 = vmax.f32 %v561, 0.0
      %v626 = vmax.f32 %v562, 0.0
      %v627 = vmax.f32 %v563, 0.0
      %v628 = vmax.f32 %v564, 0.0
      %v629 = vmax.f32 %v565, 0.0
      %v630 = vmax.f32 %v566, 0.0
      %v631 = vmax.f32 %v567, 0.0
      %v632 = vmax.f32 %v568, 0.0
      %v633 = vmax.f32 %v569, 0.0
      %v634 = vmax.f32 %v570, 0.0
      %v635 = vmax.f32 %v571, 0.0
      %v636 = vmax.f32 %v572, 0.0
      %v637 = vmax.f32 %v573, 0.0
      %v638 = vmax.f32 %v574, 0.0
      %v639 = vpack.c.bf16 %v576, %v575
      %v640 = vpack.c.bf16 %v578, %v577
      %v641 = vpack.c.bf16 %v580, %v579
      %v642 = vpack.c.bf16 %v582, %v581
      %v643 = vpack.c.bf16 %v584, %v583
      %v644 = vpack.c.bf16 %v586, %v585
      %v645 = vpack.c.bf16 %v588, %v587
      %v646 = vpack.c.bf16 %v590, %v589
      %v647 = vpack.c.bf16 %v592, %v591
      %v648 = vpack.c.bf16 %v594, %v593
      %v649 = vpack.c.bf16 %v596, %v595
      %v650 = vpack.c.bf16 %v598, %v597
      %v651 = vpack.c.bf16 %v600, %v599
      %v652 = vpack.c.bf16 %v602, %v601
      %v653 = vpack.c.bf16 %v604, %v603
      %v654 = vpack.c.bf16 %v606, %v605
      %v655 = vpack.c.bf16 %v608, %v607
      %v656 = vpack.c.bf16 %v610, %v609
      %v657 = vpack.c.bf16 %v612, %v611
      %v658 = vpack.c.bf16 %v614, %v613
      %v659 = vpack.c.bf16 %v616, %v615
      %v660 = vpack.c.bf16 %v618, %v617
      %v661 = vpack.c.bf16 %v620, %v619
      %v662 = vpack.c.bf16 %v622, %v621
      %v663 = vpack.c.bf16 %v624, %v623
      %v664 = vpack.c.bf16 %v626, %v625
      %v665 = vpack.c.bf16 %v628, %v627
      %v666 = vpack.c.bf16 %v630, %v629
      %v667 = vpack.c.bf16 %v632, %v631
      %v668 = vpack.c.bf16 %v634, %v633
      %v669 = vpack.c.bf16 %v636, %v635
      %v670 = vpack.c.bf16 %v638, %v637
      %v671 = vld [vmem:[%s3] sm:$0xf]
      %v672 = vld [vmem:[%s3 + $0x4] sm:$0xf]
      %v673 = vld [vmem:[%s3 + $0x8] sm:$0xf]
      %v674 = vld [vmem:[%s3 + $0xc] sm:$0xf]
      %v675 = vld [vmem:[%s3 + $0x10] sm:$0xf]
      %v676 = vld [vmem:[%s3 + $0x14] sm:$0xf]
      %v677 = vld [vmem:[%s3 + $0x18] sm:$0xf]
      %v678 = vld [vmem:[%s3 + $0x1c] sm:$0xf]
      %v679 = vld [vmem:[%s3 + $0x20] sm:$0xf]
      %v680 = vld [vmem:[%s3 + $0x24] sm:$0xf]
      %v681 = vld [vmem:[%s3 + $0x28] sm:$0xf]
      %v682 = vld [vmem:[%s3 + $0x2c] sm:$0xf]
      %v683 = vld [vmem:[%s3 + $0x30] sm:$0xf]
      %v684 = vld [vmem:[%s3 + $0x34] sm:$0xf]
      %v685 = vld [vmem:[%s3 + $0x38] sm:$0xf]
      %v686 = vld [vmem:[%s3 + $0x3c] sm:$0xf]
      %v703 = vunpack.c.l.b16 %v671
      %v704 = vunpack.c.l.b16 %v672
      %v705 = vunpack.c.l.b16 %v673
      %v706 = vunpack.c.l.b16 %v674
      %v707 = vunpack.c.l.b16 %v675
      %v708 = vunpack.c.l.b16 %v676
      %v709 = vunpack.c.l.b16 %v677
      %v710 = vunpack.c.l.b16 %v678
      %v711 = vunpack.c.l.b16 %v679
      %v712 = vunpack.c.l.b16 %v680
      %v713 = vunpack.c.l.b16 %v681
      %v714 = vunpack.c.l.b16 %v682
      %v715 = vunpack.c.l.b16 %v683
      %v716 = vunpack.c.l.b16 %v684
      %v717 = vunpack.c.l.b16 %v685
      %v718 = vunpack.c.l.b16 %v686
      %v719 = vpack.c.b16 %v704, %v703
      %v720 = vpack.c.b16 %v706, %v705
      %v721 = vpack.c.b16 %v708, %v707
      %v722 = vpack.c.b16 %v710, %v709
      %v723 = vpack.c.b16 %v712, %v711
      %v724 = vpack.c.b16 %v714, %v713
      %v725 = vpack.c.b16 %v716, %v715
      %v726 = vpack.c.b16 %v718, %v717
      %735 = vmatprep.subr.bf16.mxu0 0
      %736 = vmatpush1.bf16.msra.mxu0 %v719
      %737 = vmatprep.subr.bf16.mxu0 0
      %738 = vmatpush1.bf16.msra.mxu0 %v720
      %739 = vmatprep.subr.bf16.mxu0 0
      %740 = vmatpush1.bf16.msra.mxu0 %v721
      %741 = vmatprep.subr.bf16.mxu0 0
      %742 = vmatpush1.bf16.msra.mxu0 %v722
      %743 = vmatprep.subr.bf16.mxu0 0
      %744 = vmatpush1.bf16.msra.mxu0 %v723
      %745 = vmatprep.subr.bf16.mxu0 0
      %746 = vmatpush1.bf16.msra.mxu0 %v724
      %747 = vmatprep.subr.bf16.mxu0 0
      %748 = vmatpush1.bf16.msra.mxu0 %v725
      %749 = vmatprep.subr.bf16.mxu0 0
      %750 = vmatpush1.bf16.msra.mxu0 %v726
      %751 = vmatprep.subr.bf16.mxu0 0
      %752 = vmatpush1.bf16.msra.mxu0 0
      %753 = vmatprep.subr.bf16.mxu0 0
      %754 = vmatpush1.bf16.msra.mxu0 0
      %755 = vmatprep.subr.bf16.mxu0 0
      %756 = vmatpush1.bf16.msra.mxu0 0
      %757 = vmatprep.subr.bf16.mxu0 0
      %758 = vmatpush1.bf16.msra.mxu0 0
      %759 = vmatprep.subr.bf16.mxu0 0
      %760 = vmatpush1.bf16.msra.mxu0 0
      %761 = vmatprep.subr.bf16.mxu0 0
      %762 = vmatpush1.bf16.msra.mxu0 0
      %763 = vmatprep.subr.bf16.mxu0 0
      %764 = vmatpush1.bf16.msra.mxu0 0
      %765 = vmatprep.subr.bf16.mxu0 0
      %766 = vmatpush1.bf16.msra.mxu0 0
      %767 = vmatprep.mubr.bf16.mxu0 0
      %768 = vmatmul.mubr.bf16.gmra.mrb[0].mxu0 %v639
      %v769 = vpop.f32.mrb[0].mxu0
      %v770 = vadd.f32 0.0, %v769
      %v771 = vpop.f32.mrb[0].mxu0
      %v772 = vpop.f32.mrb[0].mxu0
      %v773 = vadd.f32 0.0, %v772
      %v774 = vpop.f32.mrb[0].mxu0
      %775 = vmatprep.mubr.bf16.mxu0 0
      %776 = vmatmul.mubr.bf16.gmra.mrb[0].mxu0 %v640
      %v777 = vpop.f32.mrb[0].mxu0
      %v778 = vadd.f32 0.0, %v777
      %v779 = vpop.f32.mrb[0].mxu0
      %v780 = vpop.f32.mrb[0].mxu0
      %v781 = vadd.f32 0.0, %v780
      %v782 = vpop.f32.mrb[0].mxu0
      %783 = vmatprep.mubr.bf16.mxu0 0
      %784 = vmatmul.mubr.bf16.gmra.mrb[0].mxu0 %v641
      %v785 = vpop.f32.mrb[0].mxu0
      %v786 = vadd.f32 0.0, %v785
      %v787 = vpop.f32.mrb[0].mxu0
      %v788 = vpop.f32.mrb[0].mxu0
      %v789 = vadd.f32 0.0, %v788
      %v790 = vpop.f32.mrb[0].mxu0
      %791 = vmatprep.mubr.bf16.mxu0 0
      %792 = vmatmul.mubr.bf16.gmra.mrb[0].mxu0 %v642
      %v793 = vpop.f32.mrb[0].mxu0
      %v794 = vadd.f32 0.0, %v793
      %v795 = vpop.f32.mrb[0].mxu0
      %v796 = vpop.f32.mrb[0].mxu0
      %v797 = vadd.f32 0.0, %v796
      %v798 = vpop.f32.mrb[0].mxu0
      %799 = vmatprep.mubr.bf16.mxu0 0
      %800 = vmatmul.mubr.bf16.gmra.mrb[0].mxu0 %v643
      %v801 = vpop.f32.mrb[0].mxu0
      %v802 = vadd.f32 0.0, %v801
      %v803 = vpop.f32.mrb[0].mxu0
      %v804 = vpop.f32.mrb[0].mxu0
      %v805 = vadd.f32 0.0, %v804
      %v806 = vpop.f32.mrb[0].mxu0
      %807 = vmatprep.mubr.bf16.mxu0 0
      %808 = vmatmul.mubr.bf16.gmra.mrb[0].mxu0 %v644
      %v809 = vpop.f32.mrb[0].mxu0
      %v810 = vadd.f32 0.0, %v809
      %v811 = vpop.f32.mrb[0].mxu0
      %v812 = vpop.f32.mrb[0].mxu0
      %v813 = vadd.f32 0.0, %v812
      %v814 = vpop.f32.mrb[0].mxu0
      %815 = vmatprep.mubr.bf16.mxu0 0
      %816 = vmatmul.mubr.bf16.gmra.mrb[0].mxu0 %v645
      %v817 = vpop.f32.mrb[0].mxu0
      %v818 = vadd.f32 0.0, %v817
      %v819 = vpop.f32.mrb[0].mxu0
      %v820 = vpop.f32.mrb[0].mxu0
      %v821 = vadd.f32 0.0, %v820
      %v822 = vpop.f32.mrb[0].mxu0
      %823 = vmatprep.mubr.bf16.mxu0 0
      %824 = vmatmul.mubr.bf16.gmra.mrb[0].mxu0 %v646
      %v825 = vpop.f32.mrb[0].mxu0
      %v826 = vadd.f32 0.0, %v825
      %v827 = vpop.f32.mrb[0].mxu0
      %v828 = vpop.f32.mrb[0].mxu0
      %v829 = vadd.f32 0.0, %v828
      %v830 = vpop.f32.mrb[0].mxu0
      %831 = vmatprep.mubr.bf16.mxu0 0
      %832 = vmatmul.mubr.bf16.gmra.mrb[0].mxu0 %v647
      %v833 = vpop.f32.mrb[0].mxu0
      %v834 = vadd.f32 0.0, %v833
      %v835 = vpop.f32.mrb[0].mxu0
      %v836 = vpop.f32.mrb[0].mxu0
      %v837 = vadd.f32 0.0, %v836
      %v838 = vpop.f32.mrb[0].mxu0
      %839 = vmatprep.mubr.bf16.mxu0 0
      %840 = vmatmul.mubr.bf16.gmra.mrb[0].mxu0 %v648
      %v841 = vpop.f32.mrb[0].mxu0
      %v842 = vadd.f32 0.0, %v841
      %v843 = vpop.f32.mrb[0].mxu0
      %v844 = vpop.f32.mrb[0].mxu0
      %v845 = vadd.f32 0.0, %v844
      %v846 = vpop.f32.mrb[0].mxu0
      %847 = vmatprep.mubr.bf16.mxu0 0
      %848 = vmatmul.mubr.bf16.gmra.mrb[0].mxu0 %v649
      %v849 = vpop.f32.mrb[0].mxu0
      %v850 = vadd.f32 0.0, %v849
      %v851 = vpop.f32.mrb[0].mxu0
      %v852 = vpop.f32.mrb[0].mxu0
      %v853 = vadd.f32 0.0, %v852
      %v854 = vpop.f32.mrb[0].mxu0
      %855 = vmatprep.mubr.bf16.mxu0 0
      %856 = vmatmul.mubr.bf16.gmra.mrb[0].mxu0 %v650
      %v857 = vpop.f32.mrb[0].mxu0
      %v858 = vadd.f32 0.0, %v857
      %v859 = vpop.f32.mrb[0].mxu0
      %v860 = vpop.f32.mrb[0].mxu0
      %v861 = vadd.f32 0.0, %v860
      %v862 = vpop.f32.mrb[0].mxu0
      %863 = vmatprep.mubr.bf16.mxu0 0
      %864 = vmatmul.mubr.bf16.gmra.mrb[0].mxu0 %v651
      %v865 = vpop.f32.mrb[0].mxu0
      %v866 = vadd.f32 0.0, %v865
      %v867 = vpop.f32.mrb[0].mxu0
      %v868 = vpop.f32.mrb[0].mxu0
      %v869 = vadd.f32 0.0, %v868
      %v870 = vpop.f32.mrb[0].mxu0
      %871 = vmatprep.mubr.bf16.mxu0 0
      %872 = vmatmul.mubr.bf16.gmra.mrb[0].mxu0 %v652
      %v873 = vpop.f32.mrb[0].mxu0
      %v874 = vadd.f32 0.0, %v873
      %v875 = vpop.f32.mrb[0].mxu0
      %v876 = vpop.f32.mrb[0].mxu0
      %v877 = vadd.f32 0.0, %v876
      %v878 = vpop.f32.mrb[0].mxu0
      %879 = vmatprep.mubr.bf16.mxu0 0
      %880 = vmatmul.mubr.bf16.gmra.mrb[0].mxu0 %v653
      %v881 = vpop.f32.mrb[0].mxu0
      %v882 = vadd.f32 0.0, %v881
      %v883 = vpop.f32.mrb[0].mxu0
      %v884 = vpop.f32.mrb[0].mxu0
      %v885 = vadd.f32 0.0, %v884
      %v886 = vpop.f32.mrb[0].mxu0
      %887 = vmatprep.mubr.bf16.mxu0 0
      %888 = vmatmul.mubr.bf16.gmra.mrb[0].mxu0 %v654
      %v889 = vpop.f32.mrb[0].mxu0
      %v890 = vadd.f32 0.0, %v889
      %v891 = vpop.f32.mrb[0].mxu0
      %v892 = vpop.f32.mrb[0].mxu0
      %v893 = vadd.f32 0.0, %v892
      %v894 = vpop.f32.mrb[0].mxu0
      %895 = vmatprep.mubr.bf16.mxu0 0
      %896 = vmatmul.mubr.bf16.gmra.mrb[0].mxu0 %v655
      %v897 = vpop.f32.mrb[0].mxu0
      %v898 = vadd.f32 0.0, %v897
      %v899 = vpop.f32.mrb[0].mxu0
      %v900 = vpop.f32.mrb[0].mxu0
      %v901 = vadd.f32 0.0, %v900
      %v902 = vpop.f32.mrb[0].mxu0
      %903 = vmatprep.mubr.bf16.mxu0 0
      %904 = vmatmul.mubr.bf16.gmra.mrb[0].mxu0 %v656
      %v905 = vpop.f32.mrb[0].mxu0
      %v906 = vadd.f32 0.0, %v905
      %v907 = vpop.f32.mrb[0].mxu0
      %v908 = vpop.f32.mrb[0].mxu0
      %v909 = vadd.f32 0.0, %v908
      %v910 = vpop.f32.mrb[0].mxu0
      %911 = vmatprep.mubr.bf16.mxu0 0
      %912 = vmatmul.mubr.bf16.gmra.mrb[0].mxu0 %v657
      %v913 = vpop.f32.mrb[0].mxu0
      %v914 = vadd.f32 0.0, %v913
      %v915 = vpop.f32.mrb[0].mxu0
      %v916 = vpop.f32.mrb[0].mxu0
      %v917 = vadd.f32 0.0, %v916
      %v918 = vpop.f32.mrb[0].mxu0
      %919 = vmatprep.mubr.bf16.mxu0 0
      %920 = vmatmul.mubr.bf16.gmra.mrb[0].mxu0 %v658
      %v921 = vpop.f32.mrb[0].mxu0
      %v922 = vadd.f32 0.0, %v921
      %v923 = vpop.f32.mrb[0].mxu0
      %v924 = vpop.f32.mrb[0].mxu0
      %v925 = vadd.f32 0.0, %v924
      %v926 = vpop.f32.mrb[0].mxu0
      %927 = vmatprep.mubr.bf16.mxu0 0
      %928 = vmatmul.mubr.bf16.gmra.mrb[0].mxu0 %v659
      %v929 = vpop.f32.mrb[0].mxu0
      %v930 = vadd.f32 0.0, %v929
      %v931 = vpop.f32.mrb[0].mxu0
      %v932 = vpop.f32.mrb[0].mxu0
      %v933 = vadd.f32 0.0, %v932
      %v934 = vpop.f32.mrb[0].mxu0
      %935 = vmatprep.mubr.bf16.mxu0 0
      %936 = vmatmul.mubr.bf16.gmra.mrb[0].mxu0 %v660
      %v937 = vpop.f32.mrb[0].mxu0
      %v938 = vadd.f32 0.0, %v937
      %v939 = vpop.f32.mrb[0].mxu0
      %v940 = vpop.f32.mrb[0].mxu0
      %v941 = vadd.f32 0.0, %v940
      %v942 = vpop.f32.mrb[0].mxu0
      %943 = vmatprep.mubr.bf16.mxu0 0
      %944 = vmatmul.mubr.bf16.gmra.mrb[0].mxu0 %v661
      %v945 = vpop.f32.mrb[0].mxu0
      %v946 = vadd.f32 0.0, %v945
      %v947 = vpop.f32.mrb[0].mxu0
      %v948 = vpop.f32.mrb[0].mxu0
      %v949 = vadd.f32 0.0, %v948
      %v950 = vpop.f32.mrb[0].mxu0
      %951 = vmatprep.mubr.bf16.mxu0 0
      %952 = vmatmul.mubr.bf16.gmra.mrb[0].mxu0 %v662
      %v953 = vpop.f32.mrb[0].mxu0
      %v954 = vadd.f32 0.0, %v953
      %v955 = vpop.f32.mrb[0].mxu0
      %v956 = vpop.f32.mrb[0].mxu0
      %v957 = vadd.f32 0.0, %v956
      %v958 = vpop.f32.mrb[0].mxu0
      %959 = vmatprep.mubr.bf16.mxu0 0
      %960 = vmatmul.mubr.bf16.gmra.mrb[0].mxu0 %v663
      %v961 = vpop.f32.mrb[0].mxu0
      %v962 = vadd.f32 0.0, %v961
      %v963 = vpop.f32.mrb[0].mxu0
      %v964 = vpop.f32.mrb[0].mxu0
      %v965 = vadd.f32 0.0, %v964
      %v966 = vpop.f32.mrb[0].mxu0
      %967 = vmatprep.mubr.bf16.mxu0 0
      %968 = vmatmul.mubr.bf16.gmra.mrb[0].mxu0 %v664
      %v969 = vpop.f32.mrb[0].mxu0
      %v970 = vadd.f32 0.0, %v969
      %v971 = vpop.f32.mrb[0].mxu0
      %v972 = vpop.f32.mrb[0].mxu0
      %v973 = vadd.f32 0.0, %v972
      %v974 = vpop.f32.mrb[0].mxu0
      %975 = vmatprep.mubr.bf16.mxu0 0
      %976 = vmatmul.mubr.bf16.gmra.mrb[0].mxu0 %v665
      %v977 = vpop.f32.mrb[0].mxu0
      %v978 = vadd.f32 0.0, %v977
      %v979 = vpop.f32.mrb[0].mxu0
      %v980 = vpop.f32.mrb[0].mxu0
      %v981 = vadd.f32 0.0, %v980
      %v982 = vpop.f32.mrb[0].mxu0
      %983 = vmatprep.mubr.bf16.mxu0 0
      %984 = vmatmul.mubr.bf16.gmra.mrb[0].mxu0 %v666
      %v985 = vpop.f32.mrb[0].mxu0
      %v986 = vadd.f32 0.0, %v985
      %v987 = vpop.f32.mrb[0].mxu0
      %v988 = vpop.f32.mrb[0].mxu0
      %v989 = vadd.f32 0.0, %v988
      %v990 = vpop.f32.mrb[0].mxu0
      %991 = vmatprep.mubr.bf16.mxu0 0
      %992 = vmatmul.mubr.bf16.gmra.mrb[0].mxu0 %v667
      %v993 = vpop.f32.mrb[0].mxu0
      %v994 = vadd.f32 0.0, %v993
      %v995 = vpop.f32.mrb[0].mxu0
      %v996 = vpop.f32.mrb[0].mxu0
      %v997 = vadd.f32 0.0, %v996
      %v998 = vpop.f32.mrb[0].mxu0
      %999 = vmatprep.mubr.bf16.mxu0 0
      %1000 = vmatmul.mubr.bf16.gmra.mrb[0].mxu0 %v668
      %v1001 = vpop.f32.mrb[0].mxu0
      %v1002 = vadd.f32 0.0, %v1001
      %v1003 = vpop.f32.mrb[0].mxu0
      %v1004 = vpop.f32.mrb[0].mxu0
      %v1005 = vadd.f32 0.0, %v1004
      %v1006 = vpop.f32.mrb[0].mxu0
      %1007 = vmatprep.mubr.bf16.mxu0 0
      %1008 = vmatmul.mubr.bf16.gmra.mrb[0].mxu0 %v669
      %v1009 = vpop.f32.mrb[0].mxu0
      %v1010 = vadd.f32 0.0, %v1009
      %v1011 = vpop.f32.mrb[0].mxu0
      %v1012 = vpop.f32.mrb[0].mxu0
      %v1013 = vadd.f32 0.0, %v1012
      %v1014 = vpop.f32.mrb[0].mxu0
      %1015 = vmatprep.mubr.bf16.mxu0 0
      %1016 = vmatmul.mubr.bf16.gmra.mrb[0].mxu0 %v670
      %v1017 = vpop.f32.mrb[0].mxu0
      %v1018 = vadd.f32 0.0, %v1017
      %v1019 = vpop.f32.mrb[0].mxu0
      %v1020 = vpop.f32.mrb[0].mxu0
      %v1021 = vadd.f32 0.0, %v1020
      %v1022 = vpop.f32.mrb[0].mxu0
      %1023 = vdwg.mxu0
      %p1024 = scmp.lt.s32.totalorder %s298, 2
      // Predicated region
      $region41: #{apply_node_func.4} parent=35 // pred_check
        %p1025 = pneg %p1024
      $region42: #{apply_node_func.4} parent=35 // pred_check_branch
        %1027 = sbr.rel (%p1025) target = $region44
      $region43: #{apply_node_func.4} parent=35 // pred_region
        %v1028 = vld [vmem:[%s291] sm:$0xff]
        %v1029 = vadd.f32 %v770, %v773
        %v1030 = vadd.f32 %v1029, %v778
        %v1031 = vadd.f32 %v1030, %v781
        %v1032 = vadd.f32 %v1031, %v786
        %v1033 = vadd.f32 %v1032, %v789
        %v1034 = vadd.f32 %v1033, %v794
        %v1035 = vadd.f32 %v1034, %v797
        %v1036 = vadd.f32 %v1035, %v802
        %v1037 = vadd.f32 %v1036, %v805
        %v1038 = vadd.f32 %v1037, %v810
        %v1039 = vadd.f32 %v1038, %v813
        %v1040 = vadd.f32 %v1039, %v818
        %v1041 = vadd.f32 %v1040, %v821
        %v1042 = vadd.f32 %v1041, %v826
        %v1043 = vadd.f32 %v1042, %v829
        %v1044 = vadd.f32 %v1043, %v834
        %v1045 = vadd.f32 %v1044, %v837
        %v1046 = vadd.f32 %v1045, %v842
        %v1047 = vadd.f32 %v1046, %v845
        %v1048 = vadd.f32 %v1047, %v850
        %v1049 = vadd.f32 %v1048, %v853
        %v1050 = vadd.f32 %v1049, %v858
        %v1051 = vadd.f32 %v1050, %v861
        %v1052 = vadd.f32 %v1051, %v866
        %v1053 = vadd.f32 %v1052, %v869
        %v1054 = vadd.f32 %v1053, %v874
        %v1055 = vadd.f32 %v1054, %v877
        %v1056 = vadd.f32 %v1055, %v882
        %v1057 = vadd.f32 %v1056, %v885
        %v1058 = vadd.f32 %v1057, %v890
        %v1059 = vadd.f32 %v1058, %v893
        %v1060 = vadd.f32 %v1059, %v898
        %v1061 = vadd.f32 %v1060, %v901
        %v1062 = vadd.f32 %v1061, %v906
        %v1063 = vadd.f32 %v1062, %v909
        %v1064 = vadd.f32 %v1063, %v914
        %v1065 = vadd.f32 %v1064, %v917
        %v1066 = vadd.f32 %v1065, %v922
        %v1067 = vadd.f32 %v1066, %v925
        %v1068 = vadd.f32 %v1067, %v930
        %v1069 = vadd.f32 %v1068, %v933
        %v1070 = vadd.f32 %v1069, %v938
        %v1071 = vadd.f32 %v1070, %v941
        %v1072 = vadd.f32 %v1071, %v946
        %v1073 = vadd.f32 %v1072, %v949
        %v1074 = vadd.f32 %v1073, %v954
        %v1075 = vadd.f32 %v1074, %v957
        %v1076 = vadd.f32 %v1075, %v962
        %v1077 = vadd.f32 %v1076, %v965
        %v1078 = vadd.f32 %v1077, %v970
        %v1079 = vadd.f32 %v1078, %v973
        %v1080 = vadd.f32 %v1079, %v978
        %v1081 = vadd.f32 %v1080, %v981
        %v1082 = vadd.f32 %v1081, %v986
        %v1083 = vadd.f32 %v1082, %v989
        %v1084 = vadd.f32 %v1083, %v994
        %v1085 = vadd.f32 %v1084, %v997
        %v1086 = vadd.f32 %v1085, %v1002
        %v1087 = vadd.f32 %v1086, %v1005
        %v1088 = vadd.f32 %v1087, %v1010
        %v1089 = vadd.f32 %v1088, %v1013
        %v1090 = vadd.f32 %v1089, %v1018
        %v1091 = vadd.f32 %v1090, %v1021
        %v1092 = vrot.slane %v1091, 4
        %v1093 = vadd.f32 %v1091, %v1092
        %v1094 = vrot.slane %v1093, 2
        %v1095 = vadd.f32 %v1093, %v1094
        %v1096 = vrot.slane %v1095, 1
        %v1097 = vadd.f32 %v1095, %v1096
        %v1098 = vadd.f32 %v1028, %v1097
        %1099 = vst [vmem:[%s291] sm:$0xff] %v1098
        %v1100 = vld [vmem:[%s295] sm:$0xff]
        %v1101 = vmul.f32 %v770, %v770
        %v1102 = vmul.f32 %v773, %v773
        %v1103 = vmul.f32 %v778, %v778
        %v1104 = vmul.f32 %v781, %v781
        %v1105 = vmul.f32 %v786, %v786
        %v1106 = vmul.f32 %v789, %v789
        %v1107 = vmul.f32 %v794, %v794
        %v1108 = vmul.f32 %v797, %v797
        %v1109 = vmul.f32 %v802, %v802
        %v1110 = vmul.f32 %v805, %v805
        %v1111 = vmul.f32 %v810, %v810
        %v1112 = vmul.f32 %v813, %v813
        %v1113 = vmul.f32 %v818, %v818
        %v1114 = vmul.f32 %v821, %v821
        %v1115 = vmul.f32 %v826, %v826
        %v1116 = vmul.f32 %v829, %v829
        %v1117 = vmul.f32 %v834, %v834
        %v1118 = vmul.f32 %v837, %v837
        %v1119 = vmul.f32 %v842, %v842
        %v1120 = vmul.f32 %v845, %v845
        %v1121 = vmul.f32 %v850, %v850
        %v1122 = vmul.f32 %v853, %v853
        %v1123 = vmul.f32 %v858, %v858
        %v1124 = vmul.f32 %v861, %v861
        %v1125 = vmul.f32 %v866, %v866
        %v1126 = vmul.f32 %v869, %v869
        %v1127 = vmul.f32 %v874, %v874
        %v1128 = vmul.f32 %v877, %v877
        %v1129 = vmul.f32 %v882, %v882
        %v1130 = vmul.f32 %v885, %v885
        %v1131 = vmul.f32 %v890, %v890
        %v1132 = vmul.f32 %v893, %v893
        %v1133 = vmul.f32 %v898, %v898
        %v1134 = vmul.f32 %v901, %v901
        %v1135 = vmul.f32 %v906, %v906
        %v1136 = vmul.f32 %v909, %v909
        %v1137 = vmul.f32 %v914, %v914
        %v1138 = vmul.f32 %v917, %v917
        %v1139 = vmul.f32 %v922, %v922
        %v1140 = vmul.f32 %v925, %v925
        %v1141 = vmul.f32 %v930, %v930
        %v1142 = vmul.f32 %v933, %v933
        %v1143 = vmul.f32 %v938, %v938
        %v1144 = vmul.f32 %v941, %v941
        %v1145 = vmul.f32 %v946, %v946
        %v1146 = vmul.f32 %v949, %v949
        %v1147 = vmul.f32 %v954, %v954
        %v1148 = vmul.f32 %v957, %v957
        %v1149 = vmul.f32 %v962, %v962
        %v1150 = vmul.f32 %v965, %v965
        %v1151 = vmul.f32 %v970, %v970
        %v1152 = vmul.f32 %v973, %v973
        %v1153 = vmul.f32 %v978, %v978
        %v1154 = vmul.f32 %v981, %v981
        %v1155 = vmul.f32 %v986, %v986
        %v1156 = vmul.f32 %v989, %v989
        %v1157 = vmul.f32 %v994, %v994
        %v1158 = vmul.f32 %v997, %v997
        %v1159 = vmul.f32 %v1002, %v1002
        %v1160 = vmul.f32 %v1005, %v1005
        %v1161 = vmul.f32 %v1010, %v1010
        %v1162 = vmul.f32 %v1013, %v1013
        %v1163 = vmul.f32 %v1018, %v1018
        %v1164 = vmul.f32 %v1021, %v1021
        %v1165 = vadd.f32 %v1101, %v1102
        %v1166 = vadd.f32 %v1165, %v1103
        %v1167 = vadd.f32 %v1166, %v1104
        %v1168 = vadd.f32 %v1167, %v1105
        %v1169 = vadd.f32 %v1168, %v1106
        %v1170 = vadd.f32 %v1169, %v1107
        %v1171 = vadd.f32 %v1170, %v1108
        %v1172 = vadd.f32 %v1171, %v1109
        %v1173 = vadd.f32 %v1172, %v1110
        %v1174 = vadd.f32 %v1173, %v1111
        %v1175 = vadd.f32 %v1174, %v1112
        %v1176 = vadd.f32 %v1175, %v1113
        %v1177 = vadd.f32 %v1176, %v1114
        %v1178 = vadd.f32 %v1177, %v1115
        %v1179 = vadd.f32 %v1178, %v1116
        %v1180 = vadd.f32 %v1179, %v1117
        %v1181 = vadd.f32 %v1180, %v1118
        %v1182 = vadd.f32 %v1181, %v1119
        %v1183 = vadd.f32 %v1182, %v1120
        %v1184 = vadd.f32 %v1183, %v1121
        %v1185 = vadd.f32 %v1184, %v1122
        %v1186 = vadd.f32 %v1185, %v1123
        %v1187 = vadd.f32 %v1186, %v1124
        %v1188 = vadd.f32 %v1187, %v1125
        %v1189 = vadd.f32 %v1188, %v1126
        %v1190 = vadd.f32 %v1189, %v1127
        %v1191 = vadd.f32 %v1190, %v1128
        %v1192 = vadd.f32 %v1191, %v1129
        %v1193 = vadd.f32 %v1192, %v1130
        %v1194 = vadd.f32 %v1193, %v1131
        %v1195 = vadd.f32 %v1194, %v1132
        %v1196 = vadd.f32 %v1195, %v1133
        %v1197 = vadd.f32 %v1196, %v1134
        %v1198 = vadd.f32 %v1197, %v1135
        %v1199 = vadd.f32 %v1198, %v1136
        %v1200 = vadd.f32 %v1199, %v1137
        %v1201 = vadd.f32 %v1200, %v1138
        %v1202 = vadd.f32 %v1201, %v1139
        %v1203 = vadd.f32 %v1202, %v1140
        %v1204 = vadd.f32 %v1203, %v1141
        %v1205 = vadd.f32 %v1204, %v1142
        %v1206 = vadd.f32 %v1205, %v1143
        %v1207 = vadd.f32 %v1206, %v1144
        %v1208 = vadd.f32 %v1207, %v1145
        %v1209 = vadd.f32 %v1208, %v1146
        %v1210 = vadd.f32 %v1209, %v1147
        %v1211 = vadd.f32 %v1210, %v1148
        %v1212 = vadd.f32 %v1211, %v1149
        %v1213 = vadd.f32 %v1212, %v1150
        %v1214 = vadd.f32 %v1213, %v1151
        %v1215 = vadd.f32 %v1214, %v1152
        %v1216 = vadd.f32 %v1215, %v1153
        %v1217 = vadd.f32 %v1216, %v1154
        %v1218 = vadd.f32 %v1217, %v1155
        %v1219 = vadd.f32 %v1218, %v1156
        %v1220 = vadd.f32 %v1219, %v1157
        %v1221 = vadd.f32 %v1220, %v1158
        %v1222 = vadd.f32 %v1221, %v1159
        %v1223 = vadd.f32 %v1222, %v1160
        %v1224 = vadd.f32 %v1223, %v1161
        %v1225 = vadd.f32 %v1224, %v1162
        %v1226 = vadd.f32 %v1225, %v1163
        %v1227 = vadd.f32 %v1226, %v1164
        %v1228 = vrot.slane %v1227, 4
        %v1229 = vadd.f32 %v1227, %v1228
        %v1230 = vrot.slane %v1229, 2
        %v1231 = vadd.f32 %v1229, %v1230
        %v1232 = vrot.slane %v1231, 1
        %v1233 = vadd.f32 %v1231, %v1232
        %v1234 = vadd.f32 %v1100, %v1233
        %1235 = vst [vmem:[%s295] sm:$0xff] %v1234
      $region44: #{apply_node_func.4} parent=35 // pred_fallthru
        _
      %p1236 = scmp.eq.s32.totalorder %s298, 2
      // Predicated region
      $region45: #{apply_node_func.4} parent=35 // pred_check
        %p1237 = pneg %p1236
      $region46: #{apply_node_func.4} parent=35 // pred_check_branch
        %1239 = sbr.rel (%p1237) target = $region48
      $region47: #{apply_node_func.4} parent=35 // pred_region
        %s1240 = smul.u32 %s298, 512
        %v1241 = vlaneseq
        %v1242 = vshrl.u32 %v1241, 7
        %v1243 = vadd.s32 %v1242, 8
        %v1244 = vadd.s32 %v1242, 16
        %v1245 = vadd.s32 %v1242, 24
        %v1246 = vadd.s32 %v1242, 32
        %v1247 = vadd.s32 %v1242, 40
        %v1248 = vadd.s32 %v1242, 48
        %v1249 = vadd.s32 %v1242, 56
        %v1250 = vadd.s32 %v1242, 64
        %v1251 = vadd.s32 %v1242, 72
        %v1252 = vadd.s32 %v1242, 80
        %v1253 = vadd.s32 %v1242, 88
        %v1254 = vadd.s32 %v1242, 96
        %v1255 = vadd.s32 %v1242, 104
        %v1256 = vadd.s32 %v1242, 112
        %v1257 = vadd.s32 %v1242, 120
        %v1258 = vadd.s32 %v1242, 128
        %v1259 = vadd.s32 %v1242, 136
        %v1260 = vadd.s32 %v1242, 144
        %v1261 = vadd.s32 %v1242, 152
        %v1262 = vadd.s32 %v1242, 160
        %v1263 = vadd.s32 %v1242, 168
        %v1264 = vadd.s32 %v1242, 176
        %v1265 = vadd.s32 %v1242, 184
        %v1266 = vadd.s32 %v1242, 192
        %v1267 = vadd.s32 %v1242, 200
        %v1268 = vadd.s32 %v1242, 208
        %v1269 = vadd.s32 %v1242, 216
        %v1270 = vadd.s32 %v1242, 224
        %v1271 = vadd.s32 %v1242, 232
        %v1272 = vadd.s32 %v1242, 240
        %v1273 = vadd.s32 %v1242, 248
        %v1274 = vadd.s32 %v1242, 256
        %v1275 = vadd.s32 %v1242, 264
        %v1276 = vadd.s32 %v1242, 272
        %v1277 = vadd.s32 %v1242, 280
        %v1278 = vadd.s32 %v1242, 288
        %v1279 = vadd.s32 %v1242, 296
        %v1280 = vadd.s32 %v1242, 304
        %v1281 = vadd.s32 %v1242, 312
        %v1282 = vadd.s32 %v1242, 320
        %v1283 = vadd.s32 %v1242, 328
        %v1284 = vadd.s32 %v1242, 336
        %v1285 = vadd.s32 %v1242, 344
        %v1286 = vadd.s32 %v1242, 352
        %v1287 = vadd.s32 %v1242, 360
        %v1288 = vadd.s32 %v1242, 368
        %v1289 = vadd.s32 %v1242, 376
        %v1290 = vadd.s32 %v1242, 384
        %v1291 = vadd.s32 %v1242, 392
        %v1292 = vadd.s32 %v1242, 400
        %v1293 = vadd.s32 %v1242, 408
        %v1294 = vadd.s32 %v1242, 416
        %v1295 = vadd.s32 %v1242, 424
        %v1296 = vadd.s32 %v1242, 432
        %v1297 = vadd.s32 %v1242, 440
        %v1298 = vadd.s32 %v1242, 448
        %v1299 = vadd.s32 %v1242, 456
        %v1300 = vadd.s32 %v1242, 464
        %v1301 = vadd.s32 %v1242, 472
        %v1302 = vadd.s32 %v1242, 480
        %v1303 = vadd.s32 %v1242, 488
        %v1304 = vadd.s32 %v1242, 496
        %v1305 = vadd.s32 %v1242, 504
        %v1306 = vstv %s1240
        %v1307 = vadd.s32 %v1306, %v1242
        %v1308 = vadd.s32 %v1306, %v1243
        %v1309 = vadd.s32 %v1306, %v1244
        %v1310 = vadd.s32 %v1306, %v1245
        %v1311 = vadd.s32 %v1306, %v1246
        %v1312 = vadd.s32 %v1306, %v1247
        %v1313 = vadd.s32 %v1306, %v1248
        %v1314 = vadd.s32 %v1306, %v1249
        %v1315 = vadd.s32 %v1306, %v1250
        %v1316 = vadd.s32 %v1306, %v1251
        %v1317 = vadd.s32 %v1306, %v1252
        %v1318 = vadd.s32 %v1306, %v1253
        %v1319 = vadd.s32 %v1306, %v1254
        %v1320 = vadd.s32 %v1306, %v1255
        %v1321 = vadd.s32 %v1306, %v1256
        %v1322 = vadd.s32 %v1306, %v1257
        %v1323 = vadd.s32 %v1306, %v1258
        %v1324 = vadd.s32 %v1306, %v1259
        %v1325 = vadd.s32 %v1306, %v1260
        %v1326 = vadd.s32 %v1306, %v1261
        %v1327 = vadd.s32 %v1306, %v1262
        %v1328 = vadd.s32 %v1306, %v1263
        %v1329 = vadd.s32 %v1306, %v1264
        %v1330 = vadd.s32 %v1306, %v1265
        %v1331 = vadd.s32 %v1306, %v1266
        %v1332 = vadd.s32 %v1306, %v1267
        %v1333 = vadd.s32 %v1306, %v1268
        %v1334 = vadd.s32 %v1306, %v1269
        %v1335 = vadd.s32 %v1306, %v1270
        %v1336 = vadd.s32 %v1306, %v1271
        %v1337 = vadd.s32 %v1306, %v1272
        %v1338 = vadd.s32 %v1306, %v1273
        %v1339 = vadd.s32 %v1306, %v1274
        %v1340 = vadd.s32 %v1306, %v1275
        %v1341 = vadd.s32 %v1306, %v1276
        %v1342 = vadd.s32 %v1306, %v1277
        %v1343 = vadd.s32 %v1306, %v1278
        %v1344 = vadd.s32 %v1306, %v1279
        %v1345 = vadd.s32 %v1306, %v1280
        %v1346 = vadd.s32 %v1306, %v1281
        %v1347 = vadd.s32 %v1306, %v1282
        %v1348 = vadd.s32 %v1306, %v1283
        %v1349 = vadd.s32 %v1306, %v1284
        %v1350 = vadd.s32 %v1306, %v1285
        %v1351 = vadd.s32 %v1306, %v1286
        %v1352 = vadd.s32 %v1306, %v1287
        %v1353 = vadd.s32 %v1306, %v1288
        %v1354 = vadd.s32 %v1306, %v1289
        %v1355 = vadd.s32 %v1306, %v1290
        %v1356 = vadd.s32 %v1306, %v1291
        %v1357 = vadd.s32 %v1306, %v1292
        %v1358 = vadd.s32 %v1306, %v1293
        %v1359 = vadd.s32 %v1306, %v1294
        %v1360 = vadd.s32 %v1306, %v1295
        %v1361 = vadd.s32 %v1306, %v1296
        %v1362 = vadd.s32 %v1306, %v1297
        %v1363 = vadd.s32 %v1306, %v1298
        %v1364 = vadd.s32 %v1306, %v1299
        %v1365 = vadd.s32 %v1306, %v1300
        %v1366 = vadd.s32 %v1306, %v1301
        %v1367 = vadd.s32 %v1306, %v1302
        %v1368 = vadd.s32 %v1306, %v1303
        %v1369 = vadd.s32 %v1306, %v1304
        %v1370 = vadd.s32 %v1306, %v1305
        %vm1371 = vcmp.lt.s32.totalorder %v1307, 1100
        %vm1372 = vcmp.lt.s32.totalorder %v1308, 1100
        %vm1373 = vcmp.lt.s32.totalorder %v1309, 1100
        %vm1374 = vcmp.lt.s32.totalorder %v1310, 1100
        %vm1375 = vcmp.lt.s32.totalorder %v1311, 1100
        %vm1376 = vcmp.lt.s32.totalorder %v1312, 1100
        %vm1377 = vcmp.lt.s32.totalorder %v1313, 1100
        %vm1378 = vcmp.lt.s32.totalorder %v1314, 1100
        %vm1379 = vcmp.lt.s32.totalorder %v1315, 1100
        %vm1380 = vcmp.lt.s32.totalorder %v1316, 1100
        %vm1381 = vcmp.lt.s32.totalorder %v1317, 1100
        %vm1382 = vcmp.lt.s32.totalorder %v1318, 1100
        %vm1383 = vcmp.lt.s32.totalorder %v1319, 1100
        %vm1384 = vcmp.lt.s32.totalorder %v1320, 1100
        %vm1385 = vcmp.lt.s32.totalorder %v1321, 1100
        %vm1386 = vcmp.lt.s32.totalorder %v1322, 1100
        %vm1387 = vcmp.lt.s32.totalorder %v1323, 1100
        %vm1388 = vcmp.lt.s32.totalorder %v1324, 1100
        %vm1389 = vcmp.lt.s32.totalorder %v1325, 1100
        %vm1390 = vcmp.lt.s32.totalorder %v1326, 1100
        %vm1391 = vcmp.lt.s32.totalorder %v1327, 1100
        %vm1392 = vcmp.lt.s32.totalorder %v1328, 1100
        %vm1393 = vcmp.lt.s32.totalorder %v1329, 1100
        %vm1394 = vcmp.lt.s32.totalorder %v1330, 1100
        %vm1395 = vcmp.lt.s32.totalorder %v1331, 1100
        %vm1396 = vcmp.lt.s32.totalorder %v1332, 1100
        %vm1397 = vcmp.lt.s32.totalorder %v1333, 1100
        %vm1398 = vcmp.lt.s32.totalorder %v1334, 1100
        %vm1399 = vcmp.lt.s32.totalorder %v1335, 1100
        %vm1400 = vcmp.lt.s32.totalorder %v1336, 1100
        %vm1401 = vcmp.lt.s32.totalorder %v1337, 1100
        %vm1402 = vcmp.lt.s32.totalorder %v1338, 1100
        %vm1403 = vcmp.lt.s32.totalorder %v1339, 1100
        %vm1404 = vcmp.lt.s32.totalorder %v1340, 1100
        %vm1405 = vcmp.lt.s32.totalorder %v1341, 1100
        %vm1406 = vcmp.lt.s32.totalorder %v1342, 1100
        %vm1407 = vcmp.lt.s32.totalorder %v1343, 1100
        %vm1408 = vcmp.lt.s32.totalorder %v1344, 1100
        %vm1409 = vcmp.lt.s32.totalorder %v1345, 1100
        %vm1410 = vcmp.lt.s32.totalorder %v1346, 1100
        %vm1411 = vcmp.lt.s32.totalorder %v1347, 1100
        %vm1412 = vcmp.lt.s32.totalorder %v1348, 1100
        %vm1413 = vcmp.lt.s32.totalorder %v1349, 1100
        %vm1414 = vcmp.lt.s32.totalorder %v1350, 1100
        %vm1415 = vcmp.lt.s32.totalorder %v1351, 1100
        %vm1416 = vcmp.lt.s32.totalorder %v1352, 1100
        %vm1417 = vcmp.lt.s32.totalorder %v1353, 1100
        %vm1418 = vcmp.lt.s32.totalorder %v1354, 1100
        %vm1419 = vcmp.lt.s32.totalorder %v1355, 1100
        %vm1420 = vcmp.lt.s32.totalorder %v1356, 1100
        %vm1421 = vcmp.lt.s32.totalorder %v1357, 1100
        %vm1422 = vcmp.lt.s32.totalorder %v1358, 1100
        %vm1423 = vcmp.lt.s32.totalorder %v1359, 1100
        %vm1424 = vcmp.lt.s32.totalorder %v1360, 1100
        %vm1425 = vcmp.lt.s32.totalorder %v1361, 1100
        %vm1426 = vcmp.lt.s32.totalorder %v1362, 1100
        %vm1427 = vcmp.lt.s32.totalorder %v1363, 1100
        %vm1428 = vcmp.lt.s32.totalorder %v1364, 1100
        %vm1429 = vcmp.lt.s32.totalorder %v1365, 1100
        %vm1430 = vcmp.lt.s32.totalorder %v1366, 1100
        %vm1431 = vcmp.lt.s32.totalorder %v1367, 1100
        %vm1432 = vcmp.lt.s32.totalorder %v1368, 1100
        %vm1433 = vcmp.lt.s32.totalorder %v1369, 1100
        %vm1434 = vcmp.lt.s32.totalorder %v1370, 1100
        %v1435 = vsel %vm1371, 1, 0
        %v1436 = vsel %vm1372, 1, 0
        %v1437 = vsel %vm1373, 1, 0
        %v1438 = vsel %vm1374, 1, 0
        %v1439 = vsel %vm1375, 1, 0
        %v1440 = vsel %vm1376, 1, 0
        %v1441 = vsel %vm1377, 1, 0
        %v1442 = vsel %vm1378, 1, 0
        %v1443 = vsel %vm1379, 1, 0
        %v1444 = vsel %vm1380, 1, 0
        %v1445 = vsel %vm1381, 1, 0
        %v1446 = vsel %vm1382, 1, 0
        %v1447 = vsel %vm1383, 1, 0
        %v1448 = vsel %vm1384, 1, 0
        %v1449 = vsel %vm1385, 1, 0
        %v1450 = vsel %vm1386, 1, 0
        %v1451 = vsel %vm1387, 1, 0
        %v1452 = vsel %vm1388, 1, 0
        %v1453 = vsel %vm1389, 1, 0
        %v1454 = vsel %vm1390, 1, 0
        %v1455 = vsel %vm1391, 1, 0
        %v1456 = vsel %vm1392, 1, 0
        %v1457 = vsel %vm1393, 1, 0
        %v1458 = vsel %vm1394, 1, 0
        %v1459 = vsel %vm1395, 1, 0
        %v1460 = vsel %vm1396, 1, 0
        %v1461 = vsel %vm1397, 1, 0
        %v1462 = vsel %vm1398, 1, 0
        %v1463 = vsel %vm1399, 1, 0
        %v1464 = vsel %vm1400, 1, 0
        %v1465 = vsel %vm1401, 1, 0
        %v1466 = vsel %vm1402, 1, 0
        %v1467 = vsel %vm1403, 1, 0
        %v1468 = vsel %vm1404, 1, 0
        %v1469 = vsel %vm1405, 1, 0
        %v1470 = vsel %vm1406, 1, 0
        %v1471 = vsel %vm1407, 1, 0
        %v1472 = vsel %vm1408, 1, 0
        %v1473 = vsel %vm1409, 1, 0
        %v1474 = vsel %vm1410, 1, 0
        %v1475 = vsel %vm1411, 1, 0
        %v1476 = vsel %vm1412, 1, 0
        %v1477 = vsel %vm1413, 1, 0
        %v1478 = vsel %vm1414, 1, 0
        %v1479 = vsel %vm1415, 1, 0
        %v1480 = vsel %vm1416, 1, 0
        %v1481 = vsel %vm1417, 1, 0
        %v1482 = vsel %vm1418, 1, 0
        %v1483 = vsel %vm1419, 1, 0
        %v1484 = vsel %vm1420, 1, 0
        %v1485 = vsel %vm1421, 1, 0
        %v1486 = vsel %vm1422, 1, 0
        %v1487 = vsel %vm1423, 1, 0
        %v1488 = vsel %vm1424, 1, 0
        %v1489 = vsel %vm1425, 1, 0
        %v1490 = vsel %vm1426, 1, 0
        %v1491 = vsel %vm1427, 1, 0
        %v1492 = vsel %vm1428, 1, 0
        %v1493 = vsel %vm1429, 1, 0
        %v1494 = vsel %vm1430, 1, 0
        %v1495 = vsel %vm1431, 1, 0
        %v1496 = vsel %vm1432, 1, 0
        %v1497 = vsel %vm1433, 1, 0
        %v1498 = vsel %vm1434, 1, 0
        %vm1499 = vcmp.eq.s32.totalorder %v1435, 1
        %vm1500 = vcmp.eq.s32.totalorder %v1436, 1
        %vm1501 = vcmp.eq.s32.totalorder %v1437, 1
        %vm1502 = vcmp.eq.s32.totalorder %v1438, 1
        %vm1503 = vcmp.eq.s32.totalorder %v1439, 1
        %vm1504 = vcmp.eq.s32.totalorder %v1440, 1
        %vm1505 = vcmp.eq.s32.totalorder %v1441, 1
        %vm1506 = vcmp.eq.s32.totalorder %v1442, 1
        %vm1507 = vcmp.eq.s32.totalorder %v1443, 1
        %vm1508 = vcmp.eq.s32.totalorder %v1444, 1
        %vm1509 = vcmp.eq.s32.totalorder %v1445, 1
        %vm1510 = vcmp.eq.s32.totalorder %v1446, 1
        %vm1511 = vcmp.eq.s32.totalorder %v1447, 1
        %vm1512 = vcmp.eq.s32.totalorder %v1448, 1
        %vm1513 = vcmp.eq.s32.totalorder %v1449, 1
        %vm1514 = vcmp.eq.s32.totalorder %v1450, 1
        %vm1515 = vcmp.eq.s32.totalorder %v1451, 1
        %vm1516 = vcmp.eq.s32.totalorder %v1452, 1
        %vm1517 = vcmp.eq.s32.totalorder %v1453, 1
        %vm1518 = vcmp.eq.s32.totalorder %v1454, 1
        %vm1519 = vcmp.eq.s32.totalorder %v1455, 1
        %vm1520 = vcmp.eq.s32.totalorder %v1456, 1
        %vm1521 = vcmp.eq.s32.totalorder %v1457, 1
        %vm1522 = vcmp.eq.s32.totalorder %v1458, 1
        %vm1523 = vcmp.eq.s32.totalorder %v1459, 1
        %vm1524 = vcmp.eq.s32.totalorder %v1460, 1
        %vm1525 = vcmp.eq.s32.totalorder %v1461, 1
        %vm1526 = vcmp.eq.s32.totalorder %v1462, 1
        %vm1527 = vcmp.eq.s32.totalorder %v1463, 1
        %vm1528 = vcmp.eq.s32.totalorder %v1464, 1
        %vm1529 = vcmp.eq.s32.totalorder %v1465, 1
        %vm1530 = vcmp.eq.s32.totalorder %v1466, 1
        %vm1531 = vcmp.eq.s32.totalorder %v1467, 1
        %vm1532 = vcmp.eq.s32.totalorder %v1468, 1
        %vm1533 = vcmp.eq.s32.totalorder %v1469, 1
        %vm1534 = vcmp.eq.s32.totalorder %v1470, 1
        %vm1535 = vcmp.eq.s32.totalorder %v1471, 1
        %vm1536 = vcmp.eq.s32.totalorder %v1472, 1
        %vm1537 = vcmp.eq.s32.totalorder %v1473, 1
        %vm1538 = vcmp.eq.s32.totalorder %v1474, 1
        %vm1539 = vcmp.eq.s32.totalorder %v1475, 1
        %vm1540 = vcmp.eq.s32.totalorder %v1476, 1
        %vm1541 = vcmp.eq.s32.totalorder %v1477, 1
        %vm1542 = vcmp.eq.s32.totalorder %v1478, 1
        %vm1543 = vcmp.eq.s32.totalorder %v1479, 1
        %vm1544 = vcmp.eq.s32.totalorder %v1480, 1
        %vm1545 = vcmp.eq.s32.totalorder %v1481, 1
        %vm1546 = vcmp.eq.s32.totalorder %v1482, 1
        %vm1547 = vcmp.eq.s32.totalorder %v1483, 1
        %vm1548 = vcmp.eq.s32.totalorder %v1484, 1
        %vm1549 = vcmp.eq.s32.totalorder %v1485, 1
        %vm1550 = vcmp.eq.s32.totalorder %v1486, 1
        %vm1551 = vcmp.eq.s32.totalorder %v1487, 1
        %vm1552 = vcmp.eq.s32.totalorder %v1488, 1
        %vm1553 = vcmp.eq.s32.totalorder %v1489, 1
        %vm1554 = vcmp.eq.s32.totalorder %v1490, 1
        %vm1555 = vcmp.eq.s32.totalorder %v1491, 1
        %vm1556 = vcmp.eq.s32.totalorder %v1492, 1
        %vm1557 = vcmp.eq.s32.totalorder %v1493, 1
        %vm1558 = vcmp.eq.s32.totalorder %v1494, 1
        %vm1559 = vcmp.eq.s32.totalorder %v1495, 1
        %vm1560 = vcmp.eq.s32.totalorder %v1496, 1
        %vm1561 = vcmp.eq.s32.totalorder %v1497, 1
        %vm1562 = vcmp.eq.s32.totalorder %v1498, 1
        %v1563 = vsel %vm1499, %v770, 0.0
        %v1564 = vsel %vm1500, %v773, 0.0
        %v1565 = vsel %vm1501, %v778, 0.0
        %v1566 = vsel %vm1502, %v781, 0.0
        %v1567 = vsel %vm1503, %v786, 0.0
        %v1568 = vsel %vm1504, %v789, 0.0
        %v1569 = vsel %vm1505, %v794, 0.0
        %v1570 = vsel %vm1506, %v797, 0.0
        %v1571 = vsel %vm1507, %v802, 0.0
        %v1572 = vsel %vm1508, %v805, 0.0
        %v1573 = vsel %vm1509, %v810, 0.0
        %v1574 = vsel %vm1510, %v813, 0.0
        %v1575 = vsel %vm1511, %v818, 0.0
        %v1576 = vsel %vm1512, %v821, 0.0
        %v1577 = vsel %vm1513, %v826, 0.0
        %v1578 = vsel %vm1514, %v829, 0.0
        %v1579 = vsel %vm1515, %v834, 0.0
        %v1580 = vsel %vm1516, %v837, 0.0
        %v1581 = vsel %vm1517, %v842, 0.0
        %v1582 = vsel %vm1518, %v845, 0.0
        %v1583 = vsel %vm1519, %v850, 0.0
        %v1584 = vsel %vm1520, %v853, 0.0
        %v1585 = vsel %vm1521, %v858, 0.0
        %v1586 = vsel %vm1522, %v861, 0.0
        %v1587 = vsel %vm1523, %v866, 0.0
        %v1588 = vsel %vm1524, %v869, 0.0
        %v1589 = vsel %vm1525, %v874, 0.0
        %v1590 = vsel %vm1526, %v877, 0.0
        %v1591 = vsel %vm1527, %v882, 0.0
        %v1592 = vsel %vm1528, %v885, 0.0
        %v1593 = vsel %vm1529, %v890, 0.0
        %v1594 = vsel %vm1530, %v893, 0.0
        %v1595 = vsel %vm1531, %v898, 0.0
        %v1596 = vsel %vm1532, %v901, 0.0
        %v1597 = vsel %vm1533, %v906, 0.0
        %v1598 = vsel %vm1534, %v909, 0.0
        %v1599 = vsel %vm1535, %v914, 0.0
        %v1600 = vsel %vm1536, %v917, 0.0
        %v1601 = vsel %vm1537, %v922, 0.0
        %v1602 = vsel %vm1538, %v925, 0.0
        %v1603 = vsel %vm1539, %v930, 0.0
        %v1604 = vsel %vm1540, %v933, 0.0
        %v1605 = vsel %vm1541, %v938, 0.0
        %v1606 = vsel %vm1542, %v941, 0.0
        %v1607 = vsel %vm1543, %v946, 0.0
        %v1608 = vsel %vm1544, %v949, 0.0
        %v1609 = vsel %vm1545, %v954, 0.0
        %v1610 = vsel %vm1546, %v957, 0.0
        %v1611 = vsel %vm1547, %v962, 0.0
        %v1612 = vsel %vm1548, %v965, 0.0
        %v1613 = vsel %vm1549, %v970, 0.0
        %v1614 = vsel %vm1550, %v973, 0.0
        %v1615 = vsel %vm1551, %v978, 0.0
        %v1616 = vsel %vm1552, %v981, 0.0
        %v1617 = vsel %vm1553, %v986, 0.0
        %v1618 = vsel %vm1554, %v989, 0.0
        %v1619 = vsel %vm1555, %v994, 0.0
        %v1620 = vsel %vm1556, %v997, 0.0
        %v1621 = vsel %vm1557, %v1002, 0.0
        %v1622 = vsel %vm1558, %v1005, 0.0
        %v1623 = vsel %vm1559, %v1010, 0.0
        %v1624 = vsel %vm1560, %v1013, 0.0
        %v1625 = vsel %vm1561, %v1018, 0.0
        %v1626 = vsel %vm1562, %v1021, 0.0
        %v1627 = vld [vmem:[%s291] sm:$0xff]
        %v1628 = vadd.f32 %v1563, %v1564
        %v1629 = vadd.f32 %v1628, %v1565
        %v1630 = vadd.f32 %v1629, %v1566
        %v1631 = vadd.f32 %v1630, %v1567
        %v1632 = vadd.f32 %v1631, %v1568
        %v1633 = vadd.f32 %v1632, %v1569
        %v1634 = vadd.f32 %v1633, %v1570
        %v1635 = vadd.f32 %v1634, %v1571
        %v1636 = vadd.f32 %v1635, %v1572
        %v1637 = vadd.f32 %v1636, %v1573
        %v1638 = vadd.f32 %v1637, %v1574
        %v1639 = vadd.f32 %v1638, %v1575
        %v1640 = vadd.f32 %v1639, %v1576
        %v1641 = vadd.f32 %v1640, %v1577
        %v1642 = vadd.f32 %v1641, %v1578
        %v1643 = vadd.f32 %v1642, %v1579
        %v1644 = vadd.f32 %v1643, %v1580
        %v1645 = vadd.f32 %v1644, %v1581
        %v1646 = vadd.f32 %v1645, %v1582
        %v1647 = vadd.f32 %v1646, %v1583
        %v1648 = vadd.f32 %v1647, %v1584
        %v1649 = vadd.f32 %v1648, %v1585
        %v1650 = vadd.f32 %v1649, %v1586
        %v1651 = vadd.f32 %v1650, %v1587
        %v1652 = vadd.f32 %v1651, %v1588
        %v1653 = vadd.f32 %v1652, %v1589
        %v1654 = vadd.f32 %v1653, %v1590
        %v1655 = vadd.f32 %v1654, %v1591
        %v1656 = vadd.f32 %v1655, %v1592
        %v1657 = vadd.f32 %v1656, %v1593
        %v1658 = vadd.f32 %v1657, %v1594
        %v1659 = vadd.f32 %v1658, %v1595
        %v1660 = vadd.f32 %v1659, %v1596
        %v1661 = vadd.f32 %v1660, %v1597
        %v1662 = vadd.f32 %v1661, %v1598
        %v1663 = vadd.f32 %v1662, %v1599
        %v1664 = vadd.f32 %v1663, %v1600
        %v1665 = vadd.f32 %v1664, %v1601
        %v1666 = vadd.f32 %v1665, %v1602
        %v1667 = vadd.f32 %v1666, %v1603
        %v1668 = vadd.f32 %v1667, %v1604
        %v1669 = vadd.f32 %v1668, %v1605
        %v1670 = vadd.f32 %v1669, %v1606
        %v1671 = vadd.f32 %v1670, %v1607
        %v1672 = vadd.f32 %v1671, %v1608
        %v1673 = vadd.f32 %v1672, %v1609
        %v1674 = vadd.f32 %v1673, %v1610
        %v1675 = vadd.f32 %v1674, %v1611
        %v1676 = vadd.f32 %v1675, %v1612
        %v1677 = vadd.f32 %v1676, %v1613
        %v1678 = vadd.f32 %v1677, %v1614
        %v1679 = vadd.f32 %v1678, %v1615
        %v1680 = vadd.f32 %v1679, %v1616
        %v1681 = vadd.f32 %v1680, %v1617
        %v1682 = vadd.f32 %v1681, %v1618
        %v1683 = vadd.f32 %v1682, %v1619
        %v1684 = vadd.f32 %v1683, %v1620
        %v1685 = vadd.f32 %v1684, %v1621
        %v1686 = vadd.f32 %v1685, %v1622
        %v1687 = vadd.f32 %v1686, %v1623
        %v1688 = vadd.f32 %v1687, %v1624
        %v1689 = vadd.f32 %v1688, %v1625
        %v1690 = vadd.f32 %v1689, %v1626
        %v1691 = vrot.slane %v1690, 4
        %v1692 = vadd.f32 %v1690, %v1691
        %v1693 = vrot.slane %v1692, 2
        %v1694 = vadd.f32 %v1692, %v1693
        %v1695 = vrot.slane %v1694, 1
        %v1696 = vadd.f32 %v1694, %v1695
        %v1697 = vadd.f32 %v1627, %v1696
        %1698 = vst [vmem:[%s291] sm:$0xff] %v1697
        %v1699 = vld [vmem:[%s295] sm:$0xff]
        %v1700 = vmul.f32 %v1563, %v1563
        %v1701 = vmul.f32 %v1564, %v1564
        %v1702 = vmul.f32 %v1565, %v1565
        %v1703 = vmul.f32 %v1566, %v1566
        %v1704 = vmul.f32 %v1567, %v1567
        %v1705 = vmul.f32 %v1568, %v1568
        %v1706 = vmul.f32 %v1569, %v1569
        %v1707 = vmul.f32 %v1570, %v1570
        %v1708 = vmul.f32 %v1571, %v1571
        %v1709 = vmul.f32 %v1572, %v1572
        %v1710 = vmul.f32 %v1573, %v1573
        %v1711 = vmul.f32 %v1574, %v1574
        %v1712 = vmul.f32 %v1575, %v1575
        %v1713 = vmul.f32 %v1576, %v1576
        %v1714 = vmul.f32 %v1577, %v1577
        %v1715 = vmul.f32 %v1578, %v1578
        %v1716 = vmul.f32 %v1579, %v1579
        %v1717 = vmul.f32 %v1580, %v1580
        %v1718 = vmul.f32 %v1581, %v1581
        %v1719 = vmul.f32 %v1582, %v1582
        %v1720 = vmul.f32 %v1583, %v1583
        %v1721 = vmul.f32 %v1584, %v1584
        %v1722 = vmul.f32 %v1585, %v1585
        %v1723 = vmul.f32 %v1586, %v1586
        %v1724 = vmul.f32 %v1587, %v1587
        %v1725 = vmul.f32 %v1588, %v1588
        %v1726 = vmul.f32 %v1589, %v1589
        %v1727 = vmul.f32 %v1590, %v1590
        %v1728 = vmul.f32 %v1591, %v1591
        %v1729 = vmul.f32 %v1592, %v1592
        %v1730 = vmul.f32 %v1593, %v1593
        %v1731 = vmul.f32 %v1594, %v1594
        %v1732 = vmul.f32 %v1595, %v1595
        %v1733 = vmul.f32 %v1596, %v1596
        %v1734 = vmul.f32 %v1597, %v1597
        %v1735 = vmul.f32 %v1598, %v1598
        %v1736 = vmul.f32 %v1599, %v1599
        %v1737 = vmul.f32 %v1600, %v1600
        %v1738 = vmul.f32 %v1601, %v1601
        %v1739 = vmul.f32 %v1602, %v1602
        %v1740 = vmul.f32 %v1603, %v1603
        %v1741 = vmul.f32 %v1604, %v1604
        %v1742 = vmul.f32 %v1605, %v1605
        %v1743 = vmul.f32 %v1606, %v1606
        %v1744 = vmul.f32 %v1607, %v1607
        %v1745 = vmul.f32 %v1608, %v1608
        %v1746 = vmul.f32 %v1609, %v1609
        %v1747 = vmul.f32 %v1610, %v1610
        %v1748 = vmul.f32 %v1611, %v1611
        %v1749 = vmul.f32 %v1612, %v1612
        %v1750 = vmul.f32 %v1613, %v1613
        %v1751 = vmul.f32 %v1614, %v1614
        %v1752 = vmul.f32 %v1615, %v1615
        %v1753 = vmul.f32 %v1616, %v1616
        %v1754 = vmul.f32 %v1617, %v1617
        %v1755 = vmul.f32 %v1618, %v1618
        %v1756 = vmul.f32 %v1619, %v1619
        %v1757 = vmul.f32 %v1620, %v1620
        %v1758 = vmul.f32 %v1621, %v1621
        %v1759 = vmul.f32 %v1622, %v1622
        %v1760 = vmul.f32 %v1623, %v1623
        %v1761 = vmul.f32 %v1624, %v1624
        %v1762 = vmul.f32 %v1625, %v1625
        %v1763 = vmul.f32 %v1626, %v1626
        %v1764 = vadd.f32 %v1700, %v1701
        %v1765 = vadd.f32 %v1764, %v1702
        %v1766 = vadd.f32 %v1765, %v1703
        %v1767 = vadd.f32 %v1766, %v1704
        %v1768 = vadd.f32 %v1767, %v1705
        %v1769 = vadd.f32 %v1768, %v1706
        %v1770 = vadd.f32 %v1769, %v1707
        %v1771 = vadd.f32 %v1770, %v1708
        %v1772 = vadd.f32 %v1771, %v1709
        %v1773 = vadd.f32 %v1772, %v1710
        %v1774 = vadd.f32 %v1773, %v1711
        %v1775 = vadd.f32 %v1774, %v1712
        %v1776 = vadd.f32 %v1775, %v1713
        %v1777 = vadd.f32 %v1776, %v1714
        %v1778 = vadd.f32 %v1777, %v1715
        %v1779 = vadd.f32 %v1778, %v1716
        %v1780 = vadd.f32 %v1779, %v1717
        %v1781 = vadd.f32 %v1780, %v1718
        %v1782 = vadd.f32 %v1781, %v1719
        %v1783 = vadd.f32 %v1782, %v1720
        %v1784 = vadd.f32 %v1783, %v1721
        %v1785 = vadd.f32 %v1784, %v1722
        %v1786 = vadd.f32 %v1785, %v1723
        %v1787 = vadd.f32 %v1786, %v1724
        %v1788 = vadd.f32 %v1787, %v1725
        %v1789 = vadd.f32 %v1788, %v1726
        %v1790 = vadd.f32 %v1789, %v1727
        %v1791 = vadd.f32 %v1790, %v1728
        %v1792 = vadd.f32 %v1791, %v1729
        %v1793 = vadd.f32 %v1792, %v1730
        %v1794 = vadd.f32 %v1793, %v1731
        %v1795 = vadd.f32 %v1794, %v1732
        %v1796 = vadd.f32 %v1795, %v1733
        %v1797 = vadd.f32 %v1796, %v1734
        %v1798 = vadd.f32 %v1797, %v1735
        %v1799 = vadd.f32 %v1798, %v1736
        %v1800 = vadd.f32 %v1799, %v1737
        %v1801 = vadd.f32 %v1800, %v1738
        %v1802 = vadd.f32 %v1801, %v1739
        %v1803 = vadd.f32 %v1802, %v1740
        %v1804 = vadd.f32 %v1803, %v1741
        %v1805 = vadd.f32 %v1804, %v1742
        %v1806 = vadd.f32 %v1805, %v1743
        %v1807 = vadd.f32 %v1806, %v1744
        %v1808 = vadd.f32 %v1807, %v1745
        %v1809 = vadd.f32 %v1808, %v1746
        %v1810 = vadd.f32 %v1809, %v1747
        %v1811 = vadd.f32 %v1810, %v1748
        %v1812 = vadd.f32 %v1811, %v1749
        %v1813 = vadd.f32 %v1812, %v1750
        %v1814 = vadd.f32 %v1813, %v1751
        %v1815 = vadd.f32 %v1814, %v1752
        %v1816 = vadd.f32 %v1815, %v1753
        %v1817 = vadd.f32 %v1816, %v1754
        %v1818 = vadd.f32 %v1817, %v1755
        %v1819 = vadd.f32 %v1818, %v1756
        %v1820 = vadd.f32 %v1819, %v1757
        %v1821 = vadd.f32 %v1820, %v1758
        %v1822 = vadd.f32 %v1821, %v1759
        %v1823 = vadd.f32 %v1822, %v1760
        %v1824 = vadd.f32 %v1823, %v1761
        %v1825 = vadd.f32 %v1824, %v1762
        %v1826 = vadd.f32 %v1825, %v1763
        %v1827 = vrot.slane %v1826, 4
        %v1828 = vadd.f32 %v1826, %v1827
        %v1829 = vrot.slane %v1828, 2
        %v1830 = vadd.f32 %v1828, %v1829
        %v1831 = vrot.slane %v1830, 1
        %v1832 = vadd.f32 %v1830, %v1831
        %v1833 = vadd.f32 %v1699, %v1832
        %1834 = vst [vmem:[%s295] sm:$0xff] %v1833
      $region48: #{apply_node_func.4} parent=35 // pred_fallthru
        _
      %p1835 = scmp.lt.s32.totalorder %s21, 1
      %s1836 = scalar_select %p1835, %s21, 1
      %s1837 = smul.addr %s1836, 8
      %s1838 = scalar_lea.vmem %s4, %s1837
      %p1839 = scmp.lt.s32.totalorder %s21, 1
      %s1840 = scalar_select %p1839, %s21, 1
      %s1841 = smul.addr %s1840, 8
      %s1842 = scalar_lea.vmem %s5, %s1841
      // Predicated region
      $region49: #{apply_node_func.4} parent=35 // pred_check
        %p1843 = pneg %p144
      $region50: #{apply_node_func.4} parent=35 // pred_check_branch
        %1845 = sbr.rel (%p1843) target = $region52
      $region51: #{apply_node_func.4} parent=35 // pred_region
        _
      $region52: #{apply_node_func.4} parent=35 // pred_fallthru
        _
      // Predicated region
      $region53: #{apply_node_func.4} parent=35 // pred_check
        %p1846 = pneg %p170
      $region54: #{apply_node_func.4} parent=35 // pred_check_branch
        %1848 = sbr.rel (%p1846) target = $region56
      $region55: #{apply_node_func.4} parent=35 // pred_region
        _
      $region56: #{apply_node_func.4} parent=35 // pred_fallthru
        _
    $region36: #{apply_node_func.4} parent=5 // pred_fallthru
      _
    %p1849 = scmp.le.s32.totalorder 2, %s12
    // Predicated region
    $region57: #{apply_node_func.4} parent=5 // pred_check
      %p1850 = pneg %p1849
    $region58: #{apply_node_func.4} parent=5 // pred_check_branch
      %1852 = sbr.rel (%p1850) target = $region60
    $region59: #{apply_node_func.4} parent=5 // pred_region
      %s1853 = ssub.s32 %s12, 2
      // Predicated region
      $region61: #{apply_node_func.4} parent=59 // pred_check
        %p1854 = pneg %p150
      $region62: #{apply_node_func.4} parent=59 // pred_check_branch
        %1856 = sbr.rel (%p1854) target = $region64
      $region63: #{apply_node_func.4} parent=59 // pred_region
        %p1857 = scmp.lt.s32.totalorder %s23, 1
        %s1858 = scalar_select %p1857, %s23, 1
        %s1859 = smul.addr %s1858, 8
        %s1860 = scalar_lea.vmem %s4, %s1859
      $region64: #{apply_node_func.4} parent=59 // pred_fallthru
        _
      // Predicated region
      $region65: #{apply_node_func.4} parent=59 // pred_check
        %p1861 = pneg %p176
      $region66: #{apply_node_func.4} parent=59 // pred_check_branch
        %1863 = sbr.rel (%p1861) target = $region68
      $region67: #{apply_node_func.4} parent=59 // pred_region
        %p1864 = scmp.lt.s32.totalorder %s23, 1
        %s1865 = scalar_select %p1864, %s23, 1
        %s1866 = smul.addr %s1865, 8
        %s1867 = scalar_lea.vmem %s5, %s1866
      $region68: #{apply_node_func.4} parent=59 // pred_fallthru
        _
    $region60: #{apply_node_func.4} parent=5 // pred_fallthru
      _
  $region6: #{apply_node_func.4} parent=0 // loop_footer
    %s16 = sadd.s32 1, %s12
  $region7: #{apply_node_func.4} parent=0 // loop_footer_branch
    %11 = sbr.rel target = $region3
  $region8: #{apply_node_func.4} parent=0 // loop_exit
    _

// kernel: apply_node_func.3
$region0: #{apply_node_func.3}
  #allocation0 [shape = 'u32[]', space=smem, size = 0x4, offset = 0x4, fixed_abs, tag = 'smem constant byte address 0x4 - core index']
  #allocation1 [shape = 'u32[144,128]{1,0:T(1,128)}', space=vmem, size = 0x12000, scoped, tag = 'internal scratch']
  %s0 = inlined_call_operand.vmem [shape: f32[1100,48], index: 0, kind: input, shape index: {}]
  %s1 = inlined_call_operand.vmem [shape: bf16[48,128], index: 1, kind: input, shape index: {}]
  %s2 = inlined_call_operand.vmem [shape: bf16[1100,128], index: 2, kind: output, shape index: {0}]
  %s3 = inlined_call_operand.vmem [shape: f32[2,8,128], index: 3, kind: output, shape index: {1}]
  %s4 = inlined_call_operand.vmem [shape: f32[2,8,128], index: 4, kind: output, shape index: {2}]
  %5 = xla_tuple %s2, %s3, %s4
  %s6 = sld [smem:[#allocation0]]
  $region113: #{apply_node_func.3} parent=0
    _
  %s8 = ssub.s32 1, %s6
  %s9 = scalar_select 0, %s8, %s6
  $region1: #{apply_node_func.3} parent=0
    #allocation2 [shape = 'u8[262144]{0}', space=vmem, size = 0x40000, scoped, tag = 'output window, operand 0']
    loop: start=0, step=1, limit=6
    $region2: #{apply_node_func.3} parent=1 // loop_pre_header
      _
    $region3: #{apply_node_func.3} parent=1 // loop_header
      %s11 = sphi 0, %s15
      %p12 = scmp.ge.s32.totalorder %s11, 6
      %s18 = sphi 0, %s30
      %s19 = sphi 0, %s26
      %s20 = sphi 0, %s18
      %s21 = sphi 0, %s19
      %s22 = sphi 0, %s20
      %s23 = sphi 0, %s21
      %s41 = sphi 0, %s43
      %s44 = sphi 0, %s41
      %s45 = sphi 0, %s44
      %s61 = sphi 0, %s45
      %s65 = sphi 0, %s65
      %s67 = sphi 0, %s65
      %s68 = sphi 0, %s67
      %s82 = sphi 0, %s68
      %s96 = sphi 0, %s98
      %s99 = sphi 0, %s96
      %s100 = sphi 0, %s99
      %s116 = sphi 0, %s100
      %s122 = sphi 0, %s124
      %s125 = sphi 0, %s122
      %s126 = sphi 0, %s125
      %s142 = sphi 0, %s126
      %s148 = sphi 0, %s150
      %s151 = sphi 0, %s148
      %s152 = sphi 0, %s151
      %s168 = sphi 0, %s152
    $region4: #{apply_node_func.3} parent=1 // loop_header_branch
      %14 = sbr.rel (%p12) target = $region8
    $region5: #{apply_node_func.3} parent=1 // loop_body
      %s16 = ssub.s32 %s11, 1
      %s17 = ssub.s32 %s11, 2
      %s24 = sadd.s32 1, %s19
      %p25 = scmp.ge.s32.totalorder %s24, 2
      %s26 = scalar_select %p25, 0, %s24
      %s27 = sadd.s32 1, %s18
      %s28 = scalar_select %p25, %s27, %s18
      %p29 = scmp.ge.s32.totalorder %s28, 2
      %s30 = scalar_select %p29, 0, %s28
      %s31 = smul.u32 %s18, 2
      %s32 = sadd.s32 %s31, %s19
      %p33 = scmp.lt.s32.totalorder %s32, 2
      %s34 = scalar_select %p33, %s32, 2
      %s35 = smul.u32 %s30, 2
      %s36 = sadd.s32 %s35, %s26
      %p37 = scmp.lt.s32.totalorder %s36, 2
      %s38 = scalar_select %p37, %s36, 2
      %s39 = ssub.s32 %s34, %s38
      %p40 = scmp.eq.s32.totalorder %s39, 0
      %s42 = sadd.s32 %s41, 1
      %s43 = scalar_select %p40, %s41, %s42
      %p46 = pneg %p40
      %p47 = scmp.eq.s32.totalorder %s11, 3
      %p48 = por %p46, %p47
      %p49 = scmp.ne.s32.totalorder %s41, %s44
      %p50 = scmp.eq.s32.totalorder %s11, 0
      %p51 = por %p49, %p50
      %p52 = scmp.ne.s32.totalorder %s41, %s44
      %p53 = scmp.eq.s32.totalorder %s16, 3
      %p54 = por %p52, %p53
      %p55 = scmp.ne.s32.totalorder %s44, %s45
      %p56 = scmp.eq.s32.totalorder %s16, 0
      %p57 = por %p55, %p56
      %p58 = scmp.ne.s32.totalorder %s44, %s45
      %p59 = scmp.eq.s32.totalorder %s17, 3
      %p60 = por %p58, %p59
      %p62 = scmp.ne.s32.totalorder %s45, %s61
      %p63 = scmp.eq.s32.totalorder %s17, 0
      %p64 = por %p62, %p63
      %s66 = sadd.s32 %s65, 1
      %p69 = scmp.eq.s32.totalorder %s11, 3
      %p70 = scmp.ne.s32.totalorder %s65, %s67
      %p71 = scmp.eq.s32.totalorder %s11, 0
      %p72 = por %p70, %p71
      %p73 = scmp.ne.s32.totalorder %s65, %s67
      %p74 = scmp.eq.s32.totalorder %s16, 3
      %p75 = por %p73, %p74
      %p76 = scmp.ne.s32.totalorder %s67, %s68
      %p77 = scmp.eq.s32.totalorder %s16, 0
      %p78 = por %p76, %p77
      %p79 = scmp.ne.s32.totalorder %s67, %s68
      %p80 = scmp.eq.s32.totalorder %s17, 3
      %p81 = por %p79, %p80
      %p83 = scmp.ne.s32.totalorder %s68, %s82
      %p84 = scmp.eq.s32.totalorder %s17, 0
      %p85 = por %p83, %p84
      %s86 = smul.u32 %s18, 2
      %s87 = sadd.s32 %s86, %s19
      %p88 = scmp.lt.s32.totalorder %s87, 2
      %s89 = scalar_select %p88, %s87, 2
      %s90 = smul.u32 %s30, 2
      %s91 = sadd.s32 %s90, %s26
      %p92 = scmp.lt.s32.totalorder %s91, 2
      %s93 = scalar_select %p92, %s91, 2
      %s94 = ssub.s32 %s89, %s93
      %p95 = scmp.eq.s32.totalorder %s94, 0
      %s97 = sadd.s32 %s96, 1
      %s98 = scalar_select %p95, %s96, %s97
      %p101 = pneg %p95
      %p102 = scmp.eq.s32.totalorder %s11, 3
      %p103 = por %p101, %p102
      %p104 = scmp.ne.s32.totalorder %s96, %s99
      %p105 = scmp.eq.s32.totalorder %s11, 0
      %p106 = por %p104, %p105
      %p107 = scmp.ne.s32.totalorder %s96, %s99
      %p108 = scmp.eq.s32.totalorder %s16, 3
      %p109 = por %p107, %p108
      %p110 = scmp.ne.s32.totalorder %s99, %s100
      %p111 = scmp.eq.s32.totalorder %s16, 0
      %p112 = por %p110, %p111
      %p113 = scmp.ne.s32.totalorder %s99, %s100
      %p114 = scmp.eq.s32.totalorder %s17, 3
      %p115 = por %p113, %p114
      %p117 = scmp.ne.s32.totalorder %s100, %s116
      %p118 = scmp.eq.s32.totalorder %s17, 0
      %p119 = por %p117, %p118
      %s120 = ssub.s32 %s18, %s30
      %p121 = scmp.eq.s32.totalorder %s120, 0
      %s123 = sadd.s32 %s122, 1
      %s124 = scalar_select %p121, %s122, %s123
      %p127 = pneg %p121
      %p128 = scmp.eq.s32.totalorder %s11, 3
      %p129 = por %p127, %p128
      %p130 = scmp.ne.s32.totalorder %s122, %s125
      %p131 = scmp.eq.s32.totalorder %s11, 0
      %p132 = por %p130, %p131
      %p133 = scmp.ne.s32.totalorder %s122, %s125
      %p134 = scmp.eq.s32.totalorder %s16, 3
      %p135 = por %p133, %p134
      %p136 = scmp.ne.s32.totalorder %s125, %s126
      %p137 = scmp.eq.s32.totalorder %s16, 0
      %p138 = por %p136, %p137
      %p139 = scmp.ne.s32.totalorder %s125, %s126
      %p140 = scmp.eq.s32.totalorder %s17, 3
      %p141 = por %p139, %p140
      %p143 = scmp.ne.s32.totalorder %s126, %s142
      %p144 = scmp.eq.s32.totalorder %s17, 0
      %p145 = por %p143, %p144
      %s146 = ssub.s32 %s18, %s30
      %p147 = scmp.eq.s32.totalorder %s146, 0
      %s149 = sadd.s32 %s148, 1
      %s150 = scalar_select %p147, %s148, %s149
      %p153 = pneg %p147
      %p154 = scmp.eq.s32.totalorder %s11, 3
      %p155 = por %p153, %p154
      %p156 = scmp.ne.s32.totalorder %s148, %s151
      %p157 = scmp.eq.s32.totalorder %s11, 0
      %p158 = por %p156, %p157
      %p159 = scmp.ne.s32.totalorder %s148, %s151
      %p160 = scmp.eq.s32.totalorder %s16, 3
      %p161 = por %p159, %p160
      %p162 = scmp.ne.s32.totalorder %s151, %s152
      %p163 = scmp.eq.s32.totalorder %s16, 0
      %p164 = por %p162, %p163
      %p165 = scmp.ne.s32.totalorder %s151, %s152
      %p166 = scmp.eq.s32.totalorder %s17, 3
      %p167 = por %p165, %p166
      %p169 = scmp.ne.s32.totalorder %s152, %s168
      %p170 = scmp.eq.s32.totalorder %s17, 0
      %p171 = por %p169, %p170
      %p172 = scmp.le.s32.totalorder 1, %s11
      %p173 = scmp.lt.s32.totalorder %s11, 5
      %p174 = pnand %p172, %p173
      %p175 = pneg %p174
      // Predicated region
      $region9: #{apply_node_func.3} parent=5 // pred_check
        _
      $region10: #{apply_node_func.3} parent=5 // pred_check_branch
        %177 = sbr.rel (%p174) target = $region12
      $region11: #{apply_node_func.3} parent=5 // pred_region
        %s178 = ssub.s32 %s11, 1
        // Predicated region
        $region13: #{apply_node_func.3} parent=11 // pred_check
          %p179 = pneg %p78
        $region14: #{apply_node_func.3} parent=11 // pred_check_branch
          %181 = sbr.rel (%p179) target = $region16
        $region15: #{apply_node_func.3} parent=11 // pred_region
          _
        $region16: #{apply_node_func.3} parent=11 // pred_fallthru
          _
      $region12: #{apply_node_func.3} parent=5 // pred_fallthru
        _
      %p182 = scmp.lt.s32.totalorder %s11, 4
      // Predicated region
      $region17: #{apply_node_func.3} parent=5 // pred_check
        %p183 = pneg %p182
      $region18: #{apply_node_func.3} parent=5 // pred_check_branch
        %185 = sbr.rel (%p183) target = $region20
      $region19: #{apply_node_func.3} parent=5 // pred_region
        // Predicated region
        $region21: #{apply_node_func.3} parent=19 // pred_check
          %p186 = pneg %p51
        $region22: #{apply_node_func.3} parent=19 // pred_check_branch
          %188 = sbr.rel (%p186) target = $region24
        $region23: #{apply_node_func.3} parent=19 // pred_region
          %s189 = smul.u32 %s18, 2
          %s190 = sadd.s32 %s189, %s19
          %p191 = scmp.lt.s32.totalorder %s190, 2
          %s192 = scalar_select %p191, %s190, 2
          %s193 = smul.u32 64, %s192
          %s194 = ssub.s32 138, %s193
          %p195 = scmp.lt.s32.totalorder %s194, 64
          %s196 = scalar_select %p195, %s194, 64
          %s197 = smul.u32 128, %s196
          %p198 = scmp.lt.s32.totalorder %s193, 137
          %s199 = scalar_select %p198, %s193, 137
          %s200 = smul.addr %s199, 8
          %s201 = scalar_lea.vmem %s0, %s200
          %s202 = smul.u32 %s18, 2
          %s203 = sadd.s32 %s202, %s19
          %p204 = scmp.lt.s32.totalorder %s203, 2
          %s205 = scalar_select %p204, %s203, 2
          %s206 = smul.u32 64, %s205
          %s207 = ssub.s32 138, %s206
          %p208 = scmp.lt.s32.totalorder %s207, 64
          %s209 = scalar_select %p208, %s207, 64
          %s210 = smul.u32 128, %s209
        $region24: #{apply_node_func.3} parent=19 // pred_fallthru
          _
      $region20: #{apply_node_func.3} parent=5 // pred_fallthru
        _
      %p211 = scmp.le.s32.totalorder 1, %s11
      %p212 = scmp.lt.s32.totalorder %s11, 5
      %p213 = pnand %p211, %p212
      %p214 = pneg %p213
      // Predicated region
      $region25: #{apply_node_func.3} parent=5 // pred_check
        _
      $region26: #{apply_node_func.3} parent=5 // pred_check_branch
        %216 = sbr.rel (%p213) target = $region28
      $region27: #{apply_node_func.3} parent=5 // pred_region
        %s217 = ssub.s32 %s11, 1
        %s218 = smul.u32 %s20, 2
        %s219 = sadd.s32 %s218, %s21
        %p220 = scmp.lt.s32.totalorder %s219, 2
        %s221 = scalar_select %p220, %s219, 2
        %s222 = smul.u32 64, %s221
        %s223 = ssub.s32 138, %s222
        %p224 = scmp.lt.s32.totalorder %s223, 64
        %s225 = scalar_select %p224, %s223, 64
        %s226 = smul.u32 128, %s225
        %p227 = scmp.lt.s32.totalorder %s222, 137
        %s228 = scalar_select %p227, %s222, 137
        %s229 = smul.addr %s228, 8
        %s230 = scalar_lea.vmem %s0, %s229
        %p231 = pneg %p57
        %p232 = pneg %p54
        %p233 = pneg %p78
        %p234 = pneg %p75
        %p235 = pneg %p112
        %p236 = pneg %p109
        %s237 = sand.u32 %s99, 1
        %s238 = sand.u32 %s99, 1
        %s239 = smul.addr %s238, 256
        %s240 = scalar_lea.vmem [#allocation2], %s239
        %p241 = pneg %p138
        %p242 = pneg %p135
        %p243 = scmp.lt.s32.totalorder %s20, 1
        %s244 = scalar_select %p243, %s20, 1
        %s245 = smul.addr %s244, 8
        %s246 = scalar_lea.vmem %s3, %s245
        %p247 = pneg %p164
        %p248 = pneg %p161
        %p249 = scmp.lt.s32.totalorder %s20, 1
        %s250 = scalar_select %p249, %s20, 1
        %s251 = smul.addr %s250, 8
        %s252 = scalar_lea.vmem %s4, %s251
        %s253 = smul.u32 %s20, 2
        %s254 = sadd.s32 %s253, %s21
        %p255 = scmp.lt.s32.totalorder %s254, 2
        %s256 = scalar_select %p255, %s254, 2
        %s257 = smul.u32 64, %s256
        %s258 = ssub.s32 138, %s257
        %p259 = scmp.lt.s32.totalorder %s258, 64
        %s260 = scalar_select %p259, %s258, 64
        %s261 = smul.u32 128, %s260
        %p262 = scmp.lt.s32.totalorder %s257, 137
        %s263 = scalar_select %p262, %s257, 137
        %s264 = smul.addr %s263, 8
        %s265 = scalar_lea.vmem %s0, %s264
        %s266 = smul.u32 %s20, 2
        %s267 = sadd.s32 %s266, %s21
        %p268 = scmp.lt.s32.totalorder %s267, 2
        %s269 = scalar_select %p268, %s267, 2
        %s270 = smul.u32 64, %s269
        %s271 = ssub.s32 138, %s270
        %p272 = scmp.lt.s32.totalorder %s271, 64
        %s273 = scalar_select %p272, %s271, 64
        %s274 = smul.u32 128, %s273
        %s275 = smul.u32 %s20, 2
        %s276 = sadd.s32 %s275, %s21
        %p277 = scmp.lt.s32.totalorder %s276, 2
        %s278 = scalar_select %p277, %s276, 2
        %s279 = smul.u32 64, %s278
        %s280 = ssub.s32 138, %s279
        %p281 = scmp.lt.s32.totalorder %s280, 64
        %s282 = scalar_select %p281, %s280, 64
        %s283 = smul.u32 64, %s282
        %p284 = scmp.lt.s32.totalorder %s20, 1
        %s285 = scalar_select %p284, %s20, 1
        %s286 = smul.addr %s285, 8
        %s287 = scalar_lea.vmem %s3, %s286
        %p288 = scmp.lt.s32.totalorder %s20, 1
        %s289 = scalar_select %p288, %s20, 1
        %s290 = smul.addr %s289, 8
        %s291 = scalar_lea.vmem %s4, %s290
        %s293 = smul.u32 %s20, 2
        %s294 = sadd.s32 %s293, %s21
        %p295 = scmp.eq.s32.totalorder %s21, 0
        // Predicated region
        $region29: #{apply_node_func.3} parent=27 // pred_check
          %p296 = pneg %p295
        $region30: #{apply_node_func.3} parent=27 // pred_check_branch
          %298 = sbr.rel (%p296) target = $region32
        $region31: #{apply_node_func.3} parent=27 // pred_region
          %299 = vst [vmem:[%s287] sm:$0xff] 0.0
          %300 = vst [vmem:[%s291] sm:$0xff] 0.0
        $region32: #{apply_node_func.3} parent=27 // pred_fallthru
          _
        %v301 = vld [vmem:[%s265] sm:$0xff]
        %v302 = vld [vmem:[%s265 + $0x8] sm:$0xff]
        %v303 = vld [vmem:[%s265 + $0x10] sm:$0xff]
        %v304 = vld [vmem:[%s265 + $0x18] sm:$0xff]
        %v305 = vld [vmem:[%s265 + $0x20] sm:$0xff]
        %v306 = vld [vmem:[%s265 + $0x28] sm:$0xff]
        %v307 = vld [vmem:[%s265 + $0x30] sm:$0xff]
        %v308 = vld [vmem:[%s265 + $0x38] sm:$0xff]
        %v309 = vld [vmem:[%s265 + $0x40] sm:$0xff]
        %v310 = vld [vmem:[%s265 + $0x48] sm:$0xff]
        %v311 = vld [vmem:[%s265 + $0x50] sm:$0xff]
        %v312 = vld [vmem:[%s265 + $0x58] sm:$0xff]
        %v313 = vld [vmem:[%s265 + $0x60] sm:$0xff]
        %v314 = vld [vmem:[%s265 + $0x68] sm:$0xff]
        %v315 = vld [vmem:[%s265 + $0x70] sm:$0xff]
        %v316 = vld [vmem:[%s265 + $0x78] sm:$0xff]
        %v317 = vld [vmem:[%s265 + $0x80] sm:$0xff]
        %v318 = vld [vmem:[%s265 + $0x88] sm:$0xff]
        %v319 = vld [vmem:[%s265 + $0x90] sm:$0xff]
        %v320 = vld [vmem:[%s265 + $0x98] sm:$0xff]
        %v321 = vld [vmem:[%s265 + $0xa0] sm:$0xff]
        %v322 = vld [vmem:[%s265 + $0xa8] sm:$0xff]
        %v323 = vld [vmem:[%s265 + $0xb0] sm:$0xff]
        %v324 = vld [vmem:[%s265 + $0xb8] sm:$0xff]
        %v325 = vld [vmem:[%s265 + $0xc0] sm:$0xff]
        %v326 = vld [vmem:[%s265 + $0xc8] sm:$0xff]
        %v327 = vld [vmem:[%s265 + $0xd0] sm:$0xff]
        %v328 = vld [vmem:[%s265 + $0xd8] sm:$0xff]
        %v329 = vld [vmem:[%s265 + $0xe0] sm:$0xff]
        %v330 = vld [vmem:[%s265 + $0xe8] sm:$0xff]
        %v331 = vld [vmem:[%s265 + $0xf0] sm:$0xff]
        %v332 = vld [vmem:[%s265 + $0xf8] sm:$0xff]
        %v333 = vld [vmem:[%s265 + $0x100] sm:$0xff]
        %v334 = vld [vmem:[%s265 + $0x108] sm:$0xff]
        %v335 = vld [vmem:[%s265 + $0x110] sm:$0xff]
        %v336 = vld [vmem:[%s265 + $0x118] sm:$0xff]
        %v337 = vld [vmem:[%s265 + $0x120] sm:$0xff]
        %v338 = vld [vmem:[%s265 + $0x128] sm:$0xff]
        %v339 = vld [vmem:[%s265 + $0x130] sm:$0xff]
        %v340 = vld [vmem:[%s265 + $0x138] sm:$0xff]
        %v341 = vld [vmem:[%s265 + $0x140] sm:$0xff]
        %v342 = vld [vmem:[%s265 + $0x148] sm:$0xff]
        %v343 = vld [vmem:[%s265 + $0x150] sm:$0xff]
        %v344 = vld [vmem:[%s265 + $0x158] sm:$0xff]
        %v345 = vld [vmem:[%s265 + $0x160] sm:$0xff]
        %v346 = vld [vmem:[%s265 + $0x168] sm:$0xff]
        %v347 = vld [vmem:[%s265 + $0x170] sm:$0xff]
        %v348 = vld [vmem:[%s265 + $0x178] sm:$0xff]
        %v349 = vld [vmem:[%s265 + $0x180] sm:$0xff]
        %v350 = vld [vmem:[%s265 + $0x188] sm:$0xff]
        %v351 = vld [vmem:[%s265 + $0x190] sm:$0xff]
        %v352 = vld [vmem:[%s265 + $0x198] sm:$0xff]
        %v353 = vld [vmem:[%s265 + $0x1a0] sm:$0xff]
        %v354 = vld [vmem:[%s265 + $0x1a8] sm:$0xff]
        %v355 = vld [vmem:[%s265 + $0x1b0] sm:$0xff]
        %v356 = vld [vmem:[%s265 + $0x1b8] sm:$0xff]
        %v357 = vld [vmem:[%s265 + $0x1c0] sm:$0xff]
        %v358 = vld [vmem:[%s265 + $0x1c8] sm:$0xff]
        %v359 = vld [vmem:[%s265 + $0x1d0] sm:$0xff]
        %v360 = vld [vmem:[%s265 + $0x1d8] sm:$0xff]
        %v361 = vld [vmem:[%s265 + $0x1e0] sm:$0xff]
        %v362 = vld [vmem:[%s265 + $0x1e8] sm:$0xff]
        %v363 = vld [vmem:[%s265 + $0x1f0] sm:$0xff]
        %v364 = vld [vmem:[%s265 + $0x1f8] sm:$0xff]
        %v365 = vpack.c.bf16 %v302, %v301
        %v366 = vpack.c.bf16 %v304, %v303
        %v367 = vpack.c.bf16 %v306, %v305
        %v368 = vpack.c.bf16 %v308, %v307
        %v369 = vpack.c.bf16 %v310, %v309
        %v370 = vpack.c.bf16 %v312, %v311
        %v371 = vpack.c.bf16 %v314, %v313
        %v372 = vpack.c.bf16 %v316, %v315
        %v373 = vpack.c.bf16 %v318, %v317
        %v374 = vpack.c.bf16 %v320, %v319
        %v375 = vpack.c.bf16 %v322, %v321
        %v376 = vpack.c.bf16 %v324, %v323
        %v377 = vpack.c.bf16 %v326, %v325
        %v378 = vpack.c.bf16 %v328, %v327
        %v379 = vpack.c.bf16 %v330, %v329
        %v380 = vpack.c.bf16 %v332, %v331
        %v381 = vpack.c.bf16 %v334, %v333
        %v382 = vpack.c.bf16 %v336, %v335
        %v383 = vpack.c.bf16 %v338, %v337
        %v384 = vpack.c.bf16 %v340, %v339
        %v385 = vpack.c.bf16 %v342, %v341
        %v386 = vpack.c.bf16 %v344, %v343
        %v387 = vpack.c.bf16 %v346, %v345
        %v388 = vpack.c.bf16 %v348, %v347
        %v389 = vpack.c.bf16 %v350, %v349
        %v390 = vpack.c.bf16 %v352, %v351
        %v391 = vpack.c.bf16 %v354, %v353
        %v392 = vpack.c.bf16 %v356, %v355
        %v393 = vpack.c.bf16 %v358, %v357
        %v394 = vpack.c.bf16 %v360, %v359
        %v395 = vpack.c.bf16 %v362, %v361
        %v396 = vpack.c.bf16 %v364, %v363
        %v397 = vld [vmem:[%s1] sm:$0xf]
        %v398 = vld [vmem:[%s1 + $0x4] sm:$0xf]
        %v399 = vld [vmem:[%s1 + $0x8] sm:$0xf]
        %v400 = vld [vmem:[%s1 + $0xc] sm:$0xf]
        %v401 = vld [vmem:[%s1 + $0x10] sm:$0xf]
        %v402 = vld [vmem:[%s1 + $0x14] sm:$0xf]
        %v409 = vunpack.c.l.b16 %v397
        %v410 = vunpack.c.l.b16 %v398
        %v411 = vunpack.c.l.b16 %v399
        %v412 = vunpack.c.l.b16 %v400
        %v413 = vunpack.c.l.b16 %v401
        %v414 = vunpack.c.l.b16 %v402
        %v415 = vpack.c.b16 %v410, %v409
        %v416 = vpack.c.b16 %v412, %v411
        %v417 = vpack.c.b16 %v414, %v413
        %vm421 = vcmask 392192
        %v423 = vsel %vm421, %v365, 0
        %v426 = vsel %vm421, %v366, 0
        %v429 = vsel %vm421, %v367, 0
        %v432 = vsel %vm421, %v368, 0
        %v435 = vsel %vm421, %v369, 0
        %v438 = vsel %vm421, %v370, 0
        %v441 = vsel %vm421, %v371, 0
        %v444 = vsel %vm421, %v372, 0
        %v447 = vsel %vm421, %v373, 0
        %v450 = vsel %vm421, %v374, 0
        %v453 = vsel %vm421, %v375, 0
        %v456 = vsel %vm421, %v376, 0
        %v459 = vsel %vm421, %v377, 0
        %v462 = vsel %vm421, %v378, 0
        %v465 = vsel %vm421, %v379, 0
        %v468 = vsel %vm421, %v380, 0
        %v471 = vsel %vm421, %v381, 0
        %v474 = vsel %vm421, %v382, 0
        %v477 = vsel %vm421, %v383, 0
        %v480 = vsel %vm421, %v384, 0
        %v483 = vsel %vm421, %v385, 0
        %v486 = vsel %vm421, %v386, 0
        %v489 = vsel %vm421, %v387, 0
        %v492 = vsel %vm421, %v388, 0
        %v495 = vsel %vm421, %v389, 0
        %v498 = vsel %vm421, %v390, 0
        %v501 = vsel %vm421, %v391, 0
        %v504 = vsel %vm421, %v392, 0
        %v507 = vsel %vm421, %v393, 0
        %v510 = vsel %vm421, %v394, 0
        %v513 = vsel %vm421, %v395, 0
        %v516 = vsel %vm421, %v396, 0
        %518 = vmatprep.subr.bf16.mxu0 0
        %519 = vmatpush1.bf16.msra.mxu0 %v415
        %520 = vmatprep.subr.bf16.mxu0 0
        %521 = vmatpush1.bf16.msra.mxu0 %v416
        %522 = vmatprep.subr.bf16.mxu0 0
        %523 = vmatpush1.bf16.msra.mxu0 %v417
        %524 = vmatprep.subr.bf16.mxu0 0
        %525 = vmatpush1.bf16.msra.mxu0 0
        %526 = vmatprep.subr.bf16.mxu0 0
        %527 = vmatpush1.bf16.msra.mxu0 0
        %528 = vmatprep.subr.bf16.mxu0 0
        %529 = vmatpush1.bf16.msra.mxu0 0
        %530 = vmatprep.subr.bf16.mxu0 0
        %531 = vmatpush1.bf16.msra.mxu0 0
        %532 = vmatprep.subr.bf16.mxu0 0
        %533 = vmatpush1.bf16.msra.mxu0 0
        %534 = vmatprep.subr.bf16.mxu0 0
        %535 = vmatpush1.bf16.msra.mxu0 0
        %536 = vmatprep.subr.bf16.mxu0 0
        %537 = vmatpush1.bf16.msra.mxu0 0
        %538 = vmatprep.subr.bf16.mxu0 0
        %539 = vmatpush1.bf16.msra.mxu0 0
        %540 = vmatprep.subr.bf16.mxu0 0
        %541 = vmatpush1.bf16.msra.mxu0 0
        %542 = vmatprep.subr.bf16.mxu0 0
        %543 = vmatpush1.bf16.msra.mxu0 0
        %544 = vmatprep.subr.bf16.mxu0 0
        %545 = vmatpush1.bf16.msra.mxu0 0
        %546 = vmatprep.subr.bf16.mxu0 0
        %547 = vmatpush1.bf16.msra.mxu0 0
        %548 = vmatprep.subr.bf16.mxu0 0
        %549 = vmatpush1.bf16.msra.mxu0 0
        %550 = vmatprep.mubr.bf16.mxu0 0
        %551 = vmatmul.mubr.bf16.gmra.mrb[0].mxu0 %v423
        %v552 = vpop.f32.mrb[0].mxu0
        %v553 = vadd.f32 0.0, %v552
        %v554 = vpop.f32.mrb[0].mxu0
        %v555 = vpop.f32.mrb[0].mxu0
        %v556 = vadd.f32 0.0, %v555
        %v557 = vpop.f32.mrb[0].mxu0
        %558 = vmatprep.mubr.bf16.mxu0 0
        %559 = vmatmul.mubr.bf16.gmra.mrb[0].mxu0 %v426
        %v560 = vpop.f32.mrb[0].mxu0
        %v561 = vadd.f32 0.0, %v560
        %v562 = vpop.f32.mrb[0].mxu0
        %v563 = vpop.f32.mrb[0].mxu0
        %v564 = vadd.f32 0.0, %v563
        %v565 = vpop.f32.mrb[0].mxu0
        %566 = vmatprep.mubr.bf16.mxu0 0
        %567 = vmatmul.mubr.bf16.gmra.mrb[0].mxu0 %v429
        %v568 = vpop.f32.mrb[0].mxu0
        %v569 = vadd.f32 0.0, %v568
        %v570 = vpop.f32.mrb[0].mxu0
        %v571 = vpop.f32.mrb[0].mxu0
        %v572 = vadd.f32 0.0, %v571
        %v573 = vpop.f32.mrb[0].mxu0
        %574 = vmatprep.mubr.bf16.mxu0 0
        %575 = vmatmul.mubr.bf16.gmra.mrb[0].mxu0 %v432
        %v576 = vpop.f32.mrb[0].mxu0
        %v577 = vadd.f32 0.0, %v576
        %v578 = vpop.f32.mrb[0].mxu0
        %v579 = vpop.f32.mrb[0].mxu0
        %v580 = vadd.f32 0.0, %v579
        %v581 = vpop.f32.mrb[0].mxu0
        %582 = vmatprep.mubr.bf16.mxu0 0
        %583 = vmatmul.mubr.bf16.gmra.mrb[0].mxu0 %v435
        %v584 = vpop.f32.mrb[0].mxu0
        %v585 = vadd.f32 0.0, %v584
        %v586 = vpop.f32.mrb[0].mxu0
        %v587 = vpop.f32.mrb[0].mxu0
        %v588 = vadd.f32 0.0, %v587
        %v589 = vpop.f32.mrb[0].mxu0
        %590 = vmatprep.mubr.bf16.mxu0 0
        %591 = vmatmul.mubr.bf16.gmra.mrb[0].mxu0 %v438
        %v592 = vpop.f32.mrb[0].mxu0
        %v593 = vadd.f32 0.0, %v592
        %v594 = vpop.f32.mrb[0].mxu0
        %v595 = vpop.f32.mrb[0].mxu0
        %v596 = vadd.f32 0.0, %v595
        %v597 = vpop.f32.mrb[0].mxu0
        %598 = vmatprep.mubr.bf16.mxu0 0
        %599 = vmatmul.mubr.bf16.gmra.mrb[0].mxu0 %v441
        %v600 = vpop.f32.mrb[0].mxu0
        %v601 = vadd.f32 0.0, %v600
        %v602 = vpop.f32.mrb[0].mxu0
        %v603 = vpop.f32.mrb[0].mxu0
        %v604 = vadd.f32 0.0, %v603
        %v605 = vpop.f32.mrb[0].mxu0
        %606 = vmatprep.mubr.bf16.mxu0 0
        %607 = vmatmul.mubr.bf16.gmra.mrb[0].mxu0 %v444
        %v608 = vpop.f32.mrb[0].mxu0
        %v609 = vadd.f32 0.0, %v608
        %v610 = vpop.f32.mrb[0].mxu0
        %v611 = vpop.f32.mrb[0].mxu0
        %v612 = vadd.f32 0.0, %v611
        %v613 = vpop.f32.mrb[0].mxu0
        %614 = vmatprep.mubr.bf16.mxu0 0
        %615 = vmatmul.mubr.bf16.gmra.mrb[0].mxu0 %v447
        %v616 = vpop.f32.mrb[0].mxu0
        %v617 = vadd.f32 0.0, %v616
        %v618 = vpop.f32.mrb[0].mxu0
        %v619 = vpop.f32.mrb[0].mxu0
        %v620 = vadd.f32 0.0, %v619
        %v621 = vpop.f32.mrb[0].mxu0
        %622 = vmatprep.mubr.bf16.mxu0 0
        %623 = vmatmul.mubr.bf16.gmra.mrb[0].mxu0 %v450
        %v624 = vpop.f32.mrb[0].mxu0
        %v625 = vadd.f32 0.0, %v624
        %v626 = vpop.f32.mrb[0].mxu0
        %v627 = vpop.f32.mrb[0].mxu0
        %v628 = vadd.f32 0.0, %v627
        %v629 = vpop.f32.mrb[0].mxu0
        %630 = vmatprep.mubr.bf16.mxu0 0
        %631 = vmatmul.mubr.bf16.gmra.mrb[0].mxu0 %v453
        %v632 = vpop.f32.mrb[0].mxu0
        %v633 = vadd.f32 0.0, %v632
        %v634 = vpop.f32.mrb[0].mxu0
        %v635 = vpop.f32.mrb[0].mxu0
        %v636 = vadd.f32 0.0, %v635
        %v637 = vpop.f32.mrb[0].mxu0
        %638 = vmatprep.mubr.bf16.mxu0 0
        %639 = vmatmul.mubr.bf16.gmra.mrb[0].mxu0 %v456
        %v640 = vpop.f32.mrb[0].mxu0
        %v641 = vadd.f32 0.0, %v640
        %v642 = vpop.f32.mrb[0].mxu0
        %v643 = vpop.f32.mrb[0].mxu0
        %v644 = vadd.f32 0.0, %v643
        %v645 = vpop.f32.mrb[0].mxu0
        %646 = vmatprep.mubr.bf16.mxu0 0
        %647 = vmatmul.mubr.bf16.gmra.mrb[0].mxu0 %v459
        %v648 = vpop.f32.mrb[0].mxu0
        %v649 = vadd.f32 0.0, %v648
        %v650 = vpop.f32.mrb[0].mxu0
        %v651 = vpop.f32.mrb[0].mxu0
        %v652 = vadd.f32 0.0, %v651
        %v653 = vpop.f32.mrb[0].mxu0
        %654 = vmatprep.mubr.bf16.mxu0 0
        %655 = vmatmul.mubr.bf16.gmra.mrb[0].mxu0 %v462
        %v656 = vpop.f32.mrb[0].mxu0
        %v657 = vadd.f32 0.0, %v656
        %v658 = vpop.f32.mrb[0].mxu0
        %v659 = vpop.f32.mrb[0].mxu0
        %v660 = vadd.f32 0.0, %v659
        %v661 = vpop.f32.mrb[0].mxu0
        %662 = vmatprep.mubr.bf16.mxu0 0
        %663 = vmatmul.mubr.bf16.gmra.mrb[0].mxu0 %v465
        %v664 = vpop.f32.mrb[0].mxu0
        %v665 = vadd.f32 0.0, %v664
        %v666 = vpop.f32.mrb[0].mxu0
        %v667 = vpop.f32.mrb[0].mxu0
        %v668 = vadd.f32 0.0, %v667
        %v669 = vpop.f32.mrb[0].mxu0
        %670 = vmatprep.mubr.bf16.mxu0 0
        %671 = vmatmul.mubr.bf16.gmra.mrb[0].mxu0 %v468
        %v672 = vpop.f32.mrb[0].mxu0
        %v673 = vadd.f32 0.0, %v672
        %v674 = vpop.f32.mrb[0].mxu0
        %v675 = vpop.f32.mrb[0].mxu0
        %v676 = vadd.f32 0.0, %v675
        %v677 = vpop.f32.mrb[0].mxu0
        %678 = vmatprep.mubr.bf16.mxu0 0
        %679 = vmatmul.mubr.bf16.gmra.mrb[0].mxu0 %v471
        %v680 = vpop.f32.mrb[0].mxu0
        %v681 = vadd.f32 0.0, %v680
        %v682 = vpop.f32.mrb[0].mxu0
        %v683 = vpop.f32.mrb[0].mxu0
        %v684 = vadd.f32 0.0, %v683
        %v685 = vpop.f32.mrb[0].mxu0
        %686 = vmatprep.mubr.bf16.mxu0 0
        %687 = vmatmul.mubr.bf16.gmra.mrb[0].mxu0 %v474
        %v688 = vpop.f32.mrb[0].mxu0
        %v689 = vadd.f32 0.0, %v688
        %v690 = vpop.f32.mrb[0].mxu0
        %v691 = vpop.f32.mrb[0].mxu0
        %v692 = vadd.f32 0.0, %v691
        %v693 = vpop.f32.mrb[0].mxu0
        %694 = vmatprep.mubr.bf16.mxu0 0
        %695 = vmatmul.mubr.bf16.gmra.mrb[0].mxu0 %v477
        %v696 = vpop.f32.mrb[0].mxu0
        %v697 = vadd.f32 0.0, %v696
        %v698 = vpop.f32.mrb[0].mxu0
        %v699 = vpop.f32.mrb[0].mxu0
        %v700 = vadd.f32 0.0, %v699
        %v701 = vpop.f32.mrb[0].mxu0
        %702 = vmatprep.mubr.bf16.mxu0 0
        %703 = vmatmul.mubr.bf16.gmra.mrb[0].mxu0 %v480
        %v704 = vpop.f32.mrb[0].mxu0
        %v705 = vadd.f32 0.0, %v704
        %v706 = vpop.f32.mrb[0].mxu0
        %v707 = vpop.f32.mrb[0].mxu0
        %v708 = vadd.f32 0.0, %v707
        %v709 = vpop.f32.mrb[0].mxu0
        %710 = vmatprep.mubr.bf16.mxu0 0
        %711 = vmatmul.mubr.bf16.gmra.mrb[0].mxu0 %v483
        %v712 = vpop.f32.mrb[0].mxu0
        %v713 = vadd.f32 0.0, %v712
        %v714 = vpop.f32.mrb[0].mxu0
        %v715 = vpop.f32.mrb[0].mxu0
        %v716 = vadd.f32 0.0, %v715
        %v717 = vpop.f32.mrb[0].mxu0
        %718 = vmatprep.mubr.bf16.mxu0 0
        %719 = vmatmul.mubr.bf16.gmra.mrb[0].mxu0 %v486
        %v720 = vpop.f32.mrb[0].mxu0
        %v721 = vadd.f32 0.0, %v720
        %v722 = vpop.f32.mrb[0].mxu0
        %v723 = vpop.f32.mrb[0].mxu0
        %v724 = vadd.f32 0.0, %v723
        %v725 = vpop.f32.mrb[0].mxu0
        %726 = vmatprep.mubr.bf16.mxu0 0
        %727 = vmatmul.mubr.bf16.gmra.mrb[0].mxu0 %v489
        %v728 = vpop.f32.mrb[0].mxu0
        %v729 = vadd.f32 0.0, %v728
        %v730 = vpop.f32.mrb[0].mxu0
        %v731 = vpop.f32.mrb[0].mxu0
        %v732 = vadd.f32 0.0, %v731
        %v733 = vpop.f32.mrb[0].mxu0
        %734 = vmatprep.mubr.bf16.mxu0 0
        %735 = vmatmul.mubr.bf16.gmra.mrb[0].mxu0 %v492
        %v736 = vpop.f32.mrb[0].mxu0
        %v737 = vadd.f32 0.0, %v736
        %v738 = vpop.f32.mrb[0].mxu0
        %v739 = vpop.f32.mrb[0].mxu0
        %v740 = vadd.f32 0.0, %v739
        %v741 = vpop.f32.mrb[0].mxu0
        %742 = vmatprep.mubr.bf16.mxu0 0
        %743 = vmatmul.mubr.bf16.gmra.mrb[0].mxu0 %v495
        %v744 = vpop.f32.mrb[0].mxu0
        %v745 = vadd.f32 0.0, %v744
        %v746 = vpop.f32.mrb[0].mxu0
        %v747 = vpop.f32.mrb[0].mxu0
        %v748 = vadd.f32 0.0, %v747
        %v749 = vpop.f32.mrb[0].mxu0
        %750 = vmatprep.mubr.bf16.mxu0 0
        %751 = vmatmul.mubr.bf16.gmra.mrb[0].mxu0 %v498
        %v752 = vpop.f32.mrb[0].mxu0
        %v753 = vadd.f32 0.0, %v752
        %v754 = vpop.f32.mrb[0].mxu0
        %v755 = vpop.f32.mrb[0].mxu0
        %v756 = vadd.f32 0.0, %v755
        %v757 = vpop.f32.mrb[0].mxu0
        %758 = vmatprep.mubr.bf16.mxu0 0
        %759 = vmatmul.mubr.bf16.gmra.mrb[0].mxu0 %v501
        %v760 = vpop.f32.mrb[0].mxu0
        %v761 = vadd.f32 0.0, %v760
        %v762 = vpop.f32.mrb[0].mxu0
        %v763 = vpop.f32.mrb[0].mxu0
        %v764 = vadd.f32 0.0, %v763
        %v765 = vpop.f32.mrb[0].mxu0
        %766 = vmatprep.mubr.bf16.mxu0 0
        %767 = vmatmul.mubr.bf16.gmra.mrb[0].mxu0 %v504
        %v768 = vpop.f32.mrb[0].mxu0
        %v769 = vadd.f32 0.0, %v768
        %v770 = vpop.f32.mrb[0].mxu0
        %v771 = vpop.f32.mrb[0].mxu0
        %v772 = vadd.f32 0.0, %v771
        %v773 = vpop.f32.mrb[0].mxu0
        %774 = vmatprep.mubr.bf16.mxu0 0
        %775 = vmatmul.mubr.bf16.gmra.mrb[0].mxu0 %v507
        %v776 = vpop.f32.mrb[0].mxu0
        %v777 = vadd.f32 0.0, %v776
        %v778 = vpop.f32.mrb[0].mxu0
        %v779 = vpop.f32.mrb[0].mxu0
        %v780 = vadd.f32 0.0, %v779
        %v781 = vpop.f32.mrb[0].mxu0
        %782 = vmatprep.mubr.bf16.mxu0 0
        %783 = vmatmul.mubr.bf16.gmra.mrb[0].mxu0 %v510
        %v784 = vpop.f32.mrb[0].mxu0
        %v785 = vadd.f32 0.0, %v784
        %v786 = vpop.f32.mrb[0].mxu0
        %v787 = vpop.f32.mrb[0].mxu0
        %v788 = vadd.f32 0.0, %v787
        %v789 = vpop.f32.mrb[0].mxu0
        %790 = vmatprep.mubr.bf16.mxu0 0
        %791 = vmatmul.mubr.bf16.gmra.mrb[0].mxu0 %v513
        %v792 = vpop.f32.mrb[0].mxu0
        %v793 = vadd.f32 0.0, %v792
        %v794 = vpop.f32.mrb[0].mxu0
        %v795 = vpop.f32.mrb[0].mxu0
        %v796 = vadd.f32 0.0, %v795
        %v797 = vpop.f32.mrb[0].mxu0
        %798 = vmatprep.mubr.bf16.mxu0 0
        %799 = vmatmul.mubr.bf16.gmra.mrb[0].mxu0 %v516
        %v800 = vpop.f32.mrb[0].mxu0
        %v801 = vadd.f32 0.0, %v800
        %v802 = vpop.f32.mrb[0].mxu0
        %v803 = vpop.f32.mrb[0].mxu0
        %v804 = vadd.f32 0.0, %v803
        %v805 = vpop.f32.mrb[0].mxu0
        %806 = vdwg.mxu0
        %v807 = vpack.c.bf16 %v556, %v553
        %v808 = vpack.c.bf16 %v564, %v561
        %v809 = vpack.c.bf16 %v572, %v569
        %v810 = vpack.c.bf16 %v580, %v577
        %v811 = vpack.c.bf16 %v588, %v585
        %v812 = vpack.c.bf16 %v596, %v593
        %v813 = vpack.c.bf16 %v604, %v601
        %v814 = vpack.c.bf16 %v612, %v609
        %v815 = vpack.c.bf16 %v620, %v617
        %v816 = vpack.c.bf16 %v628, %v625
        %v817 = vpack.c.bf16 %v636, %v633
        %v818 = vpack.c.bf16 %v644, %v641
        %v819 = vpack.c.bf16 %v652, %v649
        %v820 = vpack.c.bf16 %v660, %v657
        %v821 = vpack.c.bf16 %v668, %v665
        %v822 = vpack.c.bf16 %v676, %v673
        %v823 = vpack.c.bf16 %v684, %v681
        %v824 = vpack.c.bf16 %v692, %v689
        %v825 = vpack.c.bf16 %v700, %v697
        %v826 = vpack.c.bf16 %v708, %v705
        %v827 = vpack.c.bf16 %v716, %v713
        %v828 = vpack.c.bf16 %v724, %v721
        %v829 = vpack.c.bf16 %v732, %v729
        %v830 = vpack.c.bf16 %v740, %v737
        %v831 = vpack.c.bf16 %v748, %v745
        %v832 = vpack.c.bf16 %v756, %v753
        %v833 = vpack.c.bf16 %v764, %v761
        %v834 = vpack.c.bf16 %v772, %v769
        %v835 = vpack.c.bf16 %v780, %v777
        %v836 = vpack.c.bf16 %v788, %v785
        %v837 = vpack.c.bf16 %v796, %v793
        %v838 = vpack.c.bf16 %v804, %v801
        %v871 = vunpack.c.l.b16 %v807
        %v872 = vunpack.c.h.b16 %v807
        %v873 = vunpack.c.l.b16 %v808
        %v874 = vunpack.c.h.b16 %v808
        %v875 = vunpack.c.l.b16 %v809
        %v876 = vunpack.c.h.b16 %v809
        %v877 = vunpack.c.l.b16 %v810
        %v878 = vunpack.c.h.b16 %v810
        %v879 = vunpack.c.l.b16 %v811
        %v880 = vunpack.c.h.b16 %v811
        %v881 = vunpack.c.l.b16 %v812
        %v882 = vunpack.c.h.b16 %v812
        %v883 = vunpack.c.l.b16 %v813
        %v884 = vunpack.c.h.b16 %v813
        %v885 = vunpack.c.l.b16 %v814
        %v886 = vunpack.c.h.b16 %v814
        %v887 = vunpack.c.l.b16 %v815
        %v888 = vunpack.c.h.b16 %v815
        %v889 = vunpack.c.l.b16 %v816
        %v890 = vunpack.c.h.b16 %v816
        %v891 = vunpack.c.l.b16 %v817
        %v892 = vunpack.c.h.b16 %v817
        %v893 = vunpack.c.l.b16 %v818
        %v894 = vunpack.c.h.b16 %v818
        %v895 = vunpack.c.l.b16 %v819
        %v896 = vunpack.c.h.b16 %v819
        %v897 = vunpack.c.l.b16 %v820
        %v898 = vunpack.c.h.b16 %v820
        %v899 = vunpack.c.l.b16 %v821
        %v900 = vunpack.c.h.b16 %v821
        %v901 = vunpack.c.l.b16 %v822
        %v902 = vunpack.c.h.b16 %v822
        %v903 = vunpack.c.l.b16 %v823
        %v904 = vunpack.c.h.b16 %v823
        %v905 = vunpack.c.l.b16 %v824
        %v906 = vunpack.c.h.b16 %v824
        %v907 = vunpack.c.l.b16 %v825
        %v908 = vunpack.c.h.b16 %v825
        %v909 = vunpack.c.l.b16 %v826
        %v910 = vunpack.c.h.b16 %v826
        %v911 = vunpack.c.l.b16 %v827
        %v912 = vunpack.c.h.b16 %v827
        %v913 = vunpack.c.l.b16 %v828
        %v914 = vunpack.c.h.b16 %v828
        %v915 = vunpack.c.l.b16 %v829
        %v916 = vunpack.c.h.b16 %v829
        %v917 = vunpack.c.l.b16 %v830
        %v918 = vunpack.c.h.b16 %v830
        %v919 = vunpack.c.l.b16 %v831
        %v920 = vunpack.c.h.b16 %v831
        %v921 = vunpack.c.l.b16 %v832
        %v922 = vunpack.c.h.b16 %v832
        %v923 = vunpack.c.l.b16 %v833
        %v924 = vunpack.c.h.b16 %v833
        %v925 = vunpack.c.l.b16 %v834
        %v926 = vunpack.c.h.b16 %v834
        %v927 = vunpack.c.l.b16 %v835
        %v928 = vunpack.c.h.b16 %v835
        %v929 = vunpack.c.l.b16 %v836
        %v930 = vunpack.c.h.b16 %v836
        %v931 = vunpack.c.l.b16 %v837
        %v932 = vunpack.c.h.b16 %v837
        %v933 = vunpack.c.l.b16 %v838
        %v934 = vunpack.c.h.b16 %v838
        %v935 = vpack.c.b16 %v871, %v871
        %v936 = vpack.c.b16 %v872, %v872
        %v937 = vpack.c.b16 %v873, %v873
        %v938 = vpack.c.b16 %v874, %v874
        %v939 = vpack.c.b16 %v875, %v875
        %v940 = vpack.c.b16 %v876, %v876
        %v941 = vpack.c.b16 %v877, %v877
        %v942 = vpack.c.b16 %v878, %v878
        %v943 = vpack.c.b16 %v879, %v879
        %v944 = vpack.c.b16 %v880, %v880
        %v945 = vpack.c.b16 %v881, %v881
        %v946 = vpack.c.b16 %v882, %v882
        %v947 = vpack.c.b16 %v883, %v883
        %v948 = vpack.c.b16 %v884, %v884
        %v949 = vpack.c.b16 %v885, %v885
        %v950 = vpack.c.b16 %v886, %v886
        %v951 = vpack.c.b16 %v887, %v887
        %v952 = vpack.c.b16 %v888, %v888
        %v953 = vpack.c.b16 %v889, %v889
        %v954 = vpack.c.b16 %v890, %v890
        %v955 = vpack.c.b16 %v891, %v891
        %v956 = vpack.c.b16 %v892, %v892
        %v957 = vpack.c.b16 %v893, %v893
        %v958 = vpack.c.b16 %v894, %v894
        %v959 = vpack.c.b16 %v895, %v895
        %v960 = vpack.c.b16 %v896, %v896
        %v961 = vpack.c.b16 %v897, %v897
        %v962 = vpack.c.b16 %v898, %v898
        %v963 = vpack.c.b16 %v899, %v899
        %v964 = vpack.c.b16 %v900, %v900
        %v965 = vpack.c.b16 %v901, %v901
        %v966 = vpack.c.b16 %v902, %v902
        %v967 = vpack.c.b16 %v903, %v903
        %v968 = vpack.c.b16 %v904, %v904
        %v969 = vpack.c.b16 %v905, %v905
        %v970 = vpack.c.b16 %v906, %v906
        %v971 = vpack.c.b16 %v907, %v907
        %v972 = vpack.c.b16 %v908, %v908
        %v973 = vpack.c.b16 %v909, %v909
        %v974 = vpack.c.b16 %v910, %v910
        %v975 = vpack.c.b16 %v911, %v911
        %v976 = vpack.c.b16 %v912, %v912
        %v977 = vpack.c.b16 %v913, %v913
        %v978 = vpack.c.b16 %v914, %v914
        %v979 = vpack.c.b16 %v915, %v915
        %v980 = vpack.c.b16 %v916, %v916
        %v981 = vpack.c.b16 %v917, %v917
        %v982 = vpack.c.b16 %v918, %v918
        %v983 = vpack.c.b16 %v919, %v919
        %v984 = vpack.c.b16 %v920, %v920
        %v985 = vpack.c.b16 %v921, %v921
        %v986 = vpack.c.b16 %v922, %v922
        %v987 = vpack.c.b16 %v923, %v923
        %v988 = vpack.c.b16 %v924, %v924
        %v989 = vpack.c.b16 %v925, %v925
        %v990 = vpack.c.b16 %v926, %v926
        %v991 = vpack.c.b16 %v927, %v927
        %v992 = vpack.c.b16 %v928, %v928
        %v993 = vpack.c.b16 %v929, %v929
        %v994 = vpack.c.b16 %v930, %v930
        %v995 = vpack.c.b16 %v931, %v931
        %v996 = vpack.c.b16 %v932, %v932
        %v997 = vpack.c.b16 %v933, %v933
        %v998 = vpack.c.b16 %v934, %v934
        %1063 = vst [vmem:[%s240] sm:$0xf] %v935
        %1064 = vst [vmem:[%s240 + $0x4] sm:$0xf] %v936
        %1065 = vst [vmem:[%s240 + $0x8] sm:$0xf] %v937
        %1066 = vst [vmem:[%s240 + $0xc] sm:$0xf] %v938
        %1067 = vst [vmem:[%s240 + $0x10] sm:$0xf] %v939
        %1068 = vst [vmem:[%s240 + $0x14] sm:$0xf] %v940
        %1069 = vst [vmem:[%s240 + $0x18] sm:$0xf] %v941
        %1070 = vst [vmem:[%s240 + $0x1c] sm:$0xf] %v942
        %1071 = vst [vmem:[%s240 + $0x20] sm:$0xf] %v943
        %1072 = vst [vmem:[%s240 + $0x24] sm:$0xf] %v944
        %1073 = vst [vmem:[%s240 + $0x28] sm:$0xf] %v945
        %1074 = vst [vmem:[%s240 + $0x2c] sm:$0xf] %v946
        %1075 = vst [vmem:[%s240 + $0x30] sm:$0xf] %v947
        %1076 = vst [vmem:[%s240 + $0x34] sm:$0xf] %v948
        %1077 = vst [vmem:[%s240 + $0x38] sm:$0xf] %v949
        %1078 = vst [vmem:[%s240 + $0x3c] sm:$0xf] %v950
        %1079 = vst [vmem:[%s240 + $0x40] sm:$0xf] %v951
        %1080 = vst [vmem:[%s240 + $0x44] sm:$0xf] %v952
        %1081 = vst [vmem:[%s240 + $0x48] sm:$0xf] %v953
        %1082 = vst [vmem:[%s240 + $0x4c] sm:$0xf] %v954
        %1083 = vst [vmem:[%s240 + $0x50] sm:$0xf] %v955
        %1084 = vst [vmem:[%s240 + $0x54] sm:$0xf] %v956
        %1085 = vst [vmem:[%s240 + $0x58] sm:$0xf] %v957
        %1086 = vst [vmem:[%s240 + $0x5c] sm:$0xf] %v958
        %1087 = vst [vmem:[%s240 + $0x60] sm:$0xf] %v959
        %1088 = vst [vmem:[%s240 + $0x64] sm:$0xf] %v960
        %1089 = vst [vmem:[%s240 + $0x68] sm:$0xf] %v961
        %1090 = vst [vmem:[%s240 + $0x6c] sm:$0xf] %v962
        %1091 = vst [vmem:[%s240 + $0x70] sm:$0xf] %v963
        %1092 = vst [vmem:[%s240 + $0x74] sm:$0xf] %v964
        %1093 = vst [vmem:[%s240 + $0x78] sm:$0xf] %v965
        %1094 = vst [vmem:[%s240 + $0x7c] sm:$0xf] %v966
        %1095 = vst [vmem:[%s240 + $0x80] sm:$0xf] %v967
        %1096 = vst [vmem:[%s240 + $0x84] sm:$0xf] %v968
        %1097 = vst [vmem:[%s240 + $0x88] sm:$0xf] %v969
        %1098 = vst [vmem:[%s240 + $0x8c] sm:$0xf] %v970
        %1099 = vst [vmem:[%s240 + $0x90] sm:$0xf] %v971
        %1100 = vst [vmem:[%s240 + $0x94] sm:$0xf] %v972
        %1101 = vst [vmem:[%s240 + $0x98] sm:$0xf] %v973
        %1102 = vst [vmem:[%s240 + $0x9c] sm:$0xf] %v974
        %1103 = vst [vmem:[%s240 + $0xa0] sm:$0xf] %v975
        %1104 = vst [vmem:[%s240 + $0xa4] sm:$0xf] %v976
        %1105 = vst [vmem:[%s240 + $0xa8] sm:$0xf] %v977
        %1106 = vst [vmem:[%s240 + $0xac] sm:$0xf] %v978
        %1107 = vst [vmem:[%s240 + $0xb0] sm:$0xf] %v979
        %1108 = vst [vmem:[%s240 + $0xb4] sm:$0xf] %v980
        %1109 = vst [vmem:[%s240 + $0xb8] sm:$0xf] %v981
        %1110 = vst [vmem:[%s240 + $0xbc] sm:$0xf] %v982
        %1111 = vst [vmem:[%s240 + $0xc0] sm:$0xf] %v983
        %1112 = vst [vmem:[%s240 + $0xc4] sm:$0xf] %v984
        %1113 = vst [vmem:[%s240 + $0xc8] sm:$0xf] %v985
        %1114 = vst [vmem:[%s240 + $0xcc] sm:$0xf] %v986
        %1115 = vst [vmem:[%s240 + $0xd0] sm:$0xf] %v987
        %1116 = vst [vmem:[%s240 + $0xd4] sm:$0xf] %v988
        %1117 = vst [vmem:[%s240 + $0xd8] sm:$0xf] %v989
        %1118 = vst [vmem:[%s240 + $0xdc] sm:$0xf] %v990
        %1119 = vst [vmem:[%s240 + $0xe0] sm:$0xf] %v991
        %1120 = vst [vmem:[%s240 + $0xe4] sm:$0xf] %v992
        %1121 = vst [vmem:[%s240 + $0xe8] sm:$0xf] %v993
        %1122 = vst [vmem:[%s240 + $0xec] sm:$0xf] %v994
        %1123 = vst [vmem:[%s240 + $0xf0] sm:$0xf] %v995
        %1124 = vst [vmem:[%s240 + $0xf4] sm:$0xf] %v996
        %1125 = vst [vmem:[%s240 + $0xf8] sm:$0xf] %v997
        %1126 = vst [vmem:[%s240 + $0xfc] sm:$0xf] %v998
        %p1127 = scmp.lt.s32.totalorder %s294, 2
        // Predicated region
        $region33: #{apply_node_func.3} parent=27 // pred_check
          %p1128 = pneg %p1127
        $region34: #{apply_node_func.3} parent=27 // pred_check_branch
          %1130 = sbr.rel (%p1128) target = $region36
        $region35: #{apply_node_func.3} parent=27 // pred_region
          %v1131 = vld [vmem:[%s287] sm:$0xff]
          %v1132 = vadd.f32 %v553, %v556
          %v1133 = vadd.f32 %v1132, %v561
          %v1134 = vadd.f32 %v1133, %v564
          %v1135 = vadd.f32 %v1134, %v569
          %v1136 = vadd.f32 %v1135, %v572
          %v1137 = vadd.f32 %v1136, %v577
          %v1138 = vadd.f32 %v1137, %v580
          %v1139 = vadd.f32 %v1138, %v585
          %v1140 = vadd.f32 %v1139, %v588
          %v1141 = vadd.f32 %v1140, %v593
          %v1142 = vadd.f32 %v1141, %v596
          %v1143 = vadd.f32 %v1142, %v601
          %v1144 = vadd.f32 %v1143, %v604
          %v1145 = vadd.f32 %v1144, %v609
          %v1146 = vadd.f32 %v1145, %v612
          %v1147 = vadd.f32 %v1146, %v617
          %v1148 = vadd.f32 %v1147, %v620
          %v1149 = vadd.f32 %v1148, %v625
          %v1150 = vadd.f32 %v1149, %v628
          %v1151 = vadd.f32 %v1150, %v633
          %v1152 = vadd.f32 %v1151, %v636
          %v1153 = vadd.f32 %v1152, %v641
          %v1154 = vadd.f32 %v1153, %v644
          %v1155 = vadd.f32 %v1154, %v649
          %v1156 = vadd.f32 %v1155, %v652
          %v1157 = vadd.f32 %v1156, %v657
          %v1158 = vadd.f32 %v1157, %v660
          %v1159 = vadd.f32 %v1158, %v665
          %v1160 = vadd.f32 %v1159, %v668
          %v1161 = vadd.f32 %v1160, %v673
          %v1162 = vadd.f32 %v1161, %v676
          %v1163 = vadd.f32 %v1162, %v681
          %v1164 = vadd.f32 %v1163, %v684
          %v1165 = vadd.f32 %v1164, %v689
          %v1166 = vadd.f32 %v1165, %v692
          %v1167 = vadd.f32 %v1166, %v697
          %v1168 = vadd.f32 %v1167, %v700
          %v1169 = vadd.f32 %v1168, %v705
          %v1170 = vadd.f32 %v1169, %v708
          %v1171 = vadd.f32 %v1170, %v713
          %v1172 = vadd.f32 %v1171, %v716
          %v1173 = vadd.f32 %v1172, %v721
          %v1174 = vadd.f32 %v1173, %v724
          %v1175 = vadd.f32 %v1174, %v729
          %v1176 = vadd.f32 %v1175, %v732
          %v1177 = vadd.f32 %v1176, %v737
          %v1178 = vadd.f32 %v1177, %v740
          %v1179 = vadd.f32 %v1178, %v745
          %v1180 = vadd.f32 %v1179, %v748
          %v1181 = vadd.f32 %v1180, %v753
          %v1182 = vadd.f32 %v1181, %v756
          %v1183 = vadd.f32 %v1182, %v761
          %v1184 = vadd.f32 %v1183, %v764
          %v1185 = vadd.f32 %v1184, %v769
          %v1186 = vadd.f32 %v1185, %v772
          %v1187 = vadd.f32 %v1186, %v777
          %v1188 = vadd.f32 %v1187, %v780
          %v1189 = vadd.f32 %v1188, %v785
          %v1190 = vadd.f32 %v1189, %v788
          %v1191 = vadd.f32 %v1190, %v793
          %v1192 = vadd.f32 %v1191, %v796
          %v1193 = vadd.f32 %v1192, %v801
          %v1194 = vadd.f32 %v1193, %v804
          %v1195 = vrot.slane %v1194, 4
          %v1196 = vadd.f32 %v1194, %v1195
          %v1197 = vrot.slane %v1196, 2
          %v1198 = vadd.f32 %v1196, %v1197
          %v1199 = vrot.slane %v1198, 1
          %v1200 = vadd.f32 %v1198, %v1199
          %v1201 = vadd.f32 %v1131, %v1200
          %1202 = vst [vmem:[%s287] sm:$0xff] %v1201
          %v1203 = vld [vmem:[%s291] sm:$0xff]
          %v1204 = vmul.f32 %v553, %v553
          %v1205 = vmul.f32 %v556, %v556
          %v1206 = vmul.f32 %v561, %v561
          %v1207 = vmul.f32 %v564, %v564
          %v1208 = vmul.f32 %v569, %v569
          %v1209 = vmul.f32 %v572, %v572
          %v1210 = vmul.f32 %v577, %v577
          %v1211 = vmul.f32 %v580, %v580
          %v1212 = vmul.f32 %v585, %v585
          %v1213 = vmul.f32 %v588, %v588
          %v1214 = vmul.f32 %v593, %v593
          %v1215 = vmul.f32 %v596, %v596
          %v1216 = vmul.f32 %v601, %v601
          %v1217 = vmul.f32 %v604, %v604
          %v1218 = vmul.f32 %v609, %v609
          %v1219 = vmul.f32 %v612, %v612
          %v1220 = vmul.f32 %v617, %v617
          %v1221 = vmul.f32 %v620, %v620
          %v1222 = vmul.f32 %v625, %v625
          %v1223 = vmul.f32 %v628, %v628
          %v1224 = vmul.f32 %v633, %v633
          %v1225 = vmul.f32 %v636, %v636
          %v1226 = vmul.f32 %v641, %v641
          %v1227 = vmul.f32 %v644, %v644
          %v1228 = vmul.f32 %v649, %v649
          %v1229 = vmul.f32 %v652, %v652
          %v1230 = vmul.f32 %v657, %v657
          %v1231 = vmul.f32 %v660, %v660
          %v1232 = vmul.f32 %v665, %v665
          %v1233 = vmul.f32 %v668, %v668
          %v1234 = vmul.f32 %v673, %v673
          %v1235 = vmul.f32 %v676, %v676
          %v1236 = vmul.f32 %v681, %v681
          %v1237 = vmul.f32 %v684, %v684
          %v1238 = vmul.f32 %v689, %v689
          %v1239 = vmul.f32 %v692, %v692
          %v1240 = vmul.f32 %v697, %v697
          %v1241 = vmul.f32 %v700, %v700
          %v1242 = vmul.f32 %v705, %v705
          %v1243 = vmul.f32 %v708, %v708
          %v1244 = vmul.f32 %v713, %v713
          %v1245 = vmul.f32 %v716, %v716
          %v1246 = vmul.f32 %v721, %v721
          %v1247 = vmul.f32 %v724, %v724
          %v1248 = vmul.f32 %v729, %v729
          %v1249 = vmul.f32 %v732, %v732
          %v1250 = vmul.f32 %v737, %v737
          %v1251 = vmul.f32 %v740, %v740
          %v1252 = vmul.f32 %v745, %v745
          %v1253 = vmul.f32 %v748, %v748
          %v1254 = vmul.f32 %v753, %v753
          %v1255 = vmul.f32 %v756, %v756
          %v1256 = vmul.f32 %v761, %v761
          %v1257 = vmul.f32 %v764, %v764
          %v1258 = vmul.f32 %v769, %v769
          %v1259 = vmul.f32 %v772, %v772
          %v1260 = vmul.f32 %v777, %v777
          %v1261 = vmul.f32 %v780, %v780
          %v1262 = vmul.f32 %v785, %v785
          %v1263 = vmul.f32 %v788, %v788
          %v1264 = vmul.f32 %v793, %v793
          %v1265 = vmul.f32 %v796, %v796
          %v1266 = vmul.f32 %v801, %v801
          %v1267 = vmul.f32 %v804, %v804
          %v1268 = vadd.f32 %v1204, %v1205
          %v1269 = vadd.f32 %v1268, %v1206
          %v1270 = vadd.f32 %v1269, %v1207
          %v1271 = vadd.f32 %v1270, %v1208
          %v1272 = vadd.f32 %v1271, %v1209
          %v1273 = vadd.f32 %v1272, %v1210
          %v1274 = vadd.f32 %v1273, %v1211
          %v1275 = vadd.f32 %v1274, %v1212
          %v1276 = vadd.f32 %v1275, %v1213
          %v1277 = vadd.f32 %v1276, %v1214
          %v1278 = vadd.f32 %v1277, %v1215
          %v1279 = vadd.f32 %v1278, %v1216
          %v1280 = vadd.f32 %v1279, %v1217
          %v1281 = vadd.f32 %v1280, %v1218
          %v1282 = vadd.f32 %v1281, %v1219
          %v1283 = vadd.f32 %v1282, %v1220
          %v1284 = vadd.f32 %v1283, %v1221
          %v1285 = vadd.f32 %v1284, %v1222
          %v1286 = vadd.f32 %v1285, %v1223
          %v1287 = vadd.f32 %v1286, %v1224
          %v1288 = vadd.f32 %v1287, %v1225
          %v1289 = vadd.f32 %v1288, %v1226
          %v1290 = vadd.f32 %v1289, %v1227
          %v1291 = vadd.f32 %v1290, %v1228
          %v1292 = vadd.f32 %v1291, %v1229
          %v1293 = vadd.f32 %v1292, %v1230
          %v1294 = vadd.f32 %v1293, %v1231
          %v1295 = vadd.f32 %v1294, %v1232
          %v1296 = vadd.f32 %v1295, %v1233
          %v1297 = vadd.f32 %v1296, %v1234
          %v1298 = vadd.f32 %v1297, %v1235
          %v1299 = vadd.f32 %v1298, %v1236
          %v1300 = vadd.f32 %v1299, %v1237
          %v1301 = vadd.f32 %v1300, %v1238
          %v1302 = vadd.f32 %v1301, %v1239
          %v1303 = vadd.f32 %v1302, %v1240
          %v1304 = vadd.f32 %v1303, %v1241
          %v1305 = vadd.f32 %v1304, %v1242
          %v1306 = vadd.f32 %v1305, %v1243
          %v1307 = vadd.f32 %v1306, %v1244
          %v1308 = vadd.f32 %v1307, %v1245
          %v1309 = vadd.f32 %v1308, %v1246
          %v1310 = vadd.f32 %v1309, %v1247
          %v1311 = vadd.f32 %v1310, %v1248
          %v1312 = vadd.f32 %v1311, %v1249
          %v1313 = vadd.f32 %v1312, %v1250
          %v1314 = vadd.f32 %v1313, %v1251
          %v1315 = vadd.f32 %v1314, %v1252
          %v1316 = vadd.f32 %v1315, %v1253
          %v1317 = vadd.f32 %v1316, %v1254
          %v1318 = vadd.f32 %v1317, %v1255
          %v1319 = vadd.f32 %v1318, %v1256
          %v1320 = vadd.f32 %v1319, %v1257
          %v1321 = vadd.f32 %v1320, %v1258
          %v1322 = vadd.f32 %v1321, %v1259
          %v1323 = vadd.f32 %v1322, %v1260
          %v1324 = vadd.f32 %v1323, %v1261
          %v1325 = vadd.f32 %v1324, %v1262
          %v1326 = vadd.f32 %v1325, %v1263
          %v1327 = vadd.f32 %v1326, %v1264
          %v1328 = vadd.f32 %v1327, %v1265
          %v1329 = vadd.f32 %v1328, %v1266
          %v1330 = vadd.f32 %v1329, %v1267
          %v1331 = vrot.slane %v1330, 4
          %v1332 = vadd.f32 %v1330, %v1331
          %v1333 = vrot.slane %v1332, 2
          %v1334 = vadd.f32 %v1332, %v1333
          %v1335 = vrot.slane %v1334, 1
          %v1336 = vadd.f32 %v1334, %v1335
          %v1337 = vadd.f32 %v1203, %v1336
          %1338 = vst [vmem:[%s291] sm:$0xff] %v1337
        $region36: #{apply_node_func.3} parent=27 // pred_fallthru
          _
        %p1339 = scmp.eq.s32.totalorder %s294, 2
        // Predicated region
        $region37: #{apply_node_func.3} parent=27 // pred_check
          %p1340 = pneg %p1339
        $region38: #{apply_node_func.3} parent=27 // pred_check_branch
          %1342 = sbr.rel (%p1340) target = $region40
        $region39: #{apply_node_func.3} parent=27 // pred_region
          %s1343 = smul.u32 %s294, 512
          %v1344 = vlaneseq
          %v1345 = vshrl.u32 %v1344, 7
          %v1346 = vadd.s32 %v1345, 8
          %v1347 = vadd.s32 %v1345, 16
          %v1348 = vadd.s32 %v1345, 24
          %v1349 = vadd.s32 %v1345, 32
          %v1350 = vadd.s32 %v1345, 40
          %v1351 = vadd.s32 %v1345, 48
          %v1352 = vadd.s32 %v1345, 56
          %v1353 = vadd.s32 %v1345, 64
          %v1354 = vadd.s32 %v1345, 72
          %v1355 = vadd.s32 %v1345, 80
          %v1356 = vadd.s32 %v1345, 88
          %v1357 = vadd.s32 %v1345, 96
          %v1358 = vadd.s32 %v1345, 104
          %v1359 = vadd.s32 %v1345, 112
          %v1360 = vadd.s32 %v1345, 120
          %v1361 = vadd.s32 %v1345, 128
          %v1362 = vadd.s32 %v1345, 136
          %v1363 = vadd.s32 %v1345, 144
          %v1364 = vadd.s32 %v1345, 152
          %v1365 = vadd.s32 %v1345, 160
          %v1366 = vadd.s32 %v1345, 168
          %v1367 = vadd.s32 %v1345, 176
          %v1368 = vadd.s32 %v1345, 184
          %v1369 = vadd.s32 %v1345, 192
          %v1370 = vadd.s32 %v1345, 200
          %v1371 = vadd.s32 %v1345, 208
          %v1372 = vadd.s32 %v1345, 216
          %v1373 = vadd.s32 %v1345, 224
          %v1374 = vadd.s32 %v1345, 232
          %v1375 = vadd.s32 %v1345, 240
          %v1376 = vadd.s32 %v1345, 248
          %v1377 = vadd.s32 %v1345, 256
          %v1378 = vadd.s32 %v1345, 264
          %v1379 = vadd.s32 %v1345, 272
          %v1380 = vadd.s32 %v1345, 280
          %v1381 = vadd.s32 %v1345, 288
          %v1382 = vadd.s32 %v1345, 296
          %v1383 = vadd.s32 %v1345, 304
          %v1384 = vadd.s32 %v1345, 312
          %v1385 = vadd.s32 %v1345, 320
          %v1386 = vadd.s32 %v1345, 328
          %v1387 = vadd.s32 %v1345, 336
          %v1388 = vadd.s32 %v1345, 344
          %v1389 = vadd.s32 %v1345, 352
          %v1390 = vadd.s32 %v1345, 360
          %v1391 = vadd.s32 %v1345, 368
          %v1392 = vadd.s32 %v1345, 376
          %v1393 = vadd.s32 %v1345, 384
          %v1394 = vadd.s32 %v1345, 392
          %v1395 = vadd.s32 %v1345, 400
          %v1396 = vadd.s32 %v1345, 408
          %v1397 = vadd.s32 %v1345, 416
          %v1398 = vadd.s32 %v1345, 424
          %v1399 = vadd.s32 %v1345, 432
          %v1400 = vadd.s32 %v1345, 440
          %v1401 = vadd.s32 %v1345, 448
          %v1402 = vadd.s32 %v1345, 456
          %v1403 = vadd.s32 %v1345, 464
          %v1404 = vadd.s32 %v1345, 472
          %v1405 = vadd.s32 %v1345, 480
          %v1406 = vadd.s32 %v1345, 488
          %v1407 = vadd.s32 %v1345, 496
          %v1408 = vadd.s32 %v1345, 504
          %v1409 = vstv %s1343
          %v1410 = vadd.s32 %v1409, %v1345
          %v1411 = vadd.s32 %v1409, %v1346
          %v1412 = vadd.s32 %v1409, %v1347
          %v1413 = vadd.s32 %v1409, %v1348
          %v1414 = vadd.s32 %v1409, %v1349
          %v1415 = vadd.s32 %v1409, %v1350
          %v1416 = vadd.s32 %v1409, %v1351
          %v1417 = vadd.s32 %v1409, %v1352
          %v1418 = vadd.s32 %v1409, %v1353
          %v1419 = vadd.s32 %v1409, %v1354
          %v1420 = vadd.s32 %v1409, %v1355
          %v1421 = vadd.s32 %v1409, %v1356
          %v1422 = vadd.s32 %v1409, %v1357
          %v1423 = vadd.s32 %v1409, %v1358
          %v1424 = vadd.s32 %v1409, %v1359
          %v1425 = vadd.s32 %v1409, %v1360
          %v1426 = vadd.s32 %v1409, %v1361
          %v1427 = vadd.s32 %v1409, %v1362
          %v1428 = vadd.s32 %v1409, %v1363
          %v1429 = vadd.s32 %v1409, %v1364
          %v1430 = vadd.s32 %v1409, %v1365
          %v1431 = vadd.s32 %v1409, %v1366
          %v1432 = vadd.s32 %v1409, %v1367
          %v1433 = vadd.s32 %v1409, %v1368
          %v1434 = vadd.s32 %v1409, %v1369
          %v1435 = vadd.s32 %v1409, %v1370
          %v1436 = vadd.s32 %v1409, %v1371
          %v1437 = vadd.s32 %v1409, %v1372
          %v1438 = vadd.s32 %v1409, %v1373
          %v1439 = vadd.s32 %v1409, %v1374
          %v1440 = vadd.s32 %v1409, %v1375
          %v1441 = vadd.s32 %v1409, %v1376
          %v1442 = vadd.s32 %v1409, %v1377
          %v1443 = vadd.s32 %v1409, %v1378
          %v1444 = vadd.s32 %v1409, %v1379
          %v1445 = vadd.s32 %v1409, %v1380
          %v1446 = vadd.s32 %v1409, %v1381
          %v1447 = vadd.s32 %v1409, %v1382
          %v1448 = vadd.s32 %v1409, %v1383
          %v1449 = vadd.s32 %v1409, %v1384
          %v1450 = vadd.s32 %v1409, %v1385
          %v1451 = vadd.s32 %v1409, %v1386
          %v1452 = vadd.s32 %v1409, %v1387
          %v1453 = vadd.s32 %v1409, %v1388
          %v1454 = vadd.s32 %v1409, %v1389
          %v1455 = vadd.s32 %v1409, %v1390
          %v1456 = vadd.s32 %v1409, %v1391
          %v1457 = vadd.s32 %v1409, %v1392
          %v1458 = vadd.s32 %v1409, %v1393
          %v1459 = vadd.s32 %v1409, %v1394
          %v1460 = vadd.s32 %v1409, %v1395
          %v1461 = vadd.s32 %v1409, %v1396
          %v1462 = vadd.s32 %v1409, %v1397
          %v1463 = vadd.s32 %v1409, %v1398
          %v1464 = vadd.s32 %v1409, %v1399
          %v1465 = vadd.s32 %v1409, %v1400
          %v1466 = vadd.s32 %v1409, %v1401
          %v1467 = vadd.s32 %v1409, %v1402
          %v1468 = vadd.s32 %v1409, %v1403
          %v1469 = vadd.s32 %v1409, %v1404
          %v1470 = vadd.s32 %v1409, %v1405
          %v1471 = vadd.s32 %v1409, %v1406
          %v1472 = vadd.s32 %v1409, %v1407
          %v1473 = vadd.s32 %v1409, %v1408
          %vm1474 = vcmp.lt.s32.totalorder %v1410, 1100
          %vm1475 = vcmp.lt.s32.totalorder %v1411, 1100
          %vm1476 = vcmp.lt.s32.totalorder %v1412, 1100
          %vm1477 = vcmp.lt.s32.totalorder %v1413, 1100
          %vm1478 = vcmp.lt.s32.totalorder %v1414, 1100
          %vm1479 = vcmp.lt.s32.totalorder %v1415, 1100
          %vm1480 = vcmp.lt.s32.totalorder %v1416, 1100
          %vm1481 = vcmp.lt.s32.totalorder %v1417, 1100
          %vm1482 = vcmp.lt.s32.totalorder %v1418, 1100
          %vm1483 = vcmp.lt.s32.totalorder %v1419, 1100
          %vm1484 = vcmp.lt.s32.totalorder %v1420, 1100
          %vm1485 = vcmp.lt.s32.totalorder %v1421, 1100
          %vm1486 = vcmp.lt.s32.totalorder %v1422, 1100
          %vm1487 = vcmp.lt.s32.totalorder %v1423, 1100
          %vm1488 = vcmp.lt.s32.totalorder %v1424, 1100
          %vm1489 = vcmp.lt.s32.totalorder %v1425, 1100
          %vm1490 = vcmp.lt.s32.totalorder %v1426, 1100
          %vm1491 = vcmp.lt.s32.totalorder %v1427, 1100
          %vm1492 = vcmp.lt.s32.totalorder %v1428, 1100
          %vm1493 = vcmp.lt.s32.totalorder %v1429, 1100
          %vm1494 = vcmp.lt.s32.totalorder %v1430, 1100
          %vm1495 = vcmp.lt.s32.totalorder %v1431, 1100
          %vm1496 = vcmp.lt.s32.totalorder %v1432, 1100
          %vm1497 = vcmp.lt.s32.totalorder %v1433, 1100
          %vm1498 = vcmp.lt.s32.totalorder %v1434, 1100
          %vm1499 = vcmp.lt.s32.totalorder %v1435, 1100
          %vm1500 = vcmp.lt.s32.totalorder %v1436, 1100
          %vm1501 = vcmp.lt.s32.totalorder %v1437, 1100
          %vm1502 = vcmp.lt.s32.totalorder %v1438, 1100
          %vm1503 = vcmp.lt.s32.totalorder %v1439, 1100
          %vm1504 = vcmp.lt.s32.totalorder %v1440, 1100
          %vm1505 = vcmp.lt.s32.totalorder %v1441, 1100
          %vm1506 = vcmp.lt.s32.totalorder %v1442, 1100
          %vm1507 = vcmp.lt.s32.totalorder %v1443, 1100
          %vm1508 = vcmp.lt.s32.totalorder %v1444, 1100
          %vm1509 = vcmp.lt.s32.totalorder %v1445, 1100
          %vm1510 = vcmp.lt.s32.totalorder %v1446, 1100
          %vm1511 = vcmp.lt.s32.totalorder %v1447, 1100
          %vm1512 = vcmp.lt.s32.totalorder %v1448, 1100
          %vm1513 = vcmp.lt.s32.totalorder %v1449, 1100
          %vm1514 = vcmp.lt.s32.totalorder %v1450, 1100
          %vm1515 = vcmp.lt.s32.totalorder %v1451, 1100
          %vm1516 = vcmp.lt.s32.totalorder %v1452, 1100
          %vm1517 = vcmp.lt.s32.totalorder %v1453, 1100
          %vm1518 = vcmp.lt.s32.totalorder %v1454, 1100
          %vm1519 = vcmp.lt.s32.totalorder %v1455, 1100
          %vm1520 = vcmp.lt.s32.totalorder %v1456, 1100
          %vm1521 = vcmp.lt.s32.totalorder %v1457, 1100
          %vm1522 = vcmp.lt.s32.totalorder %v1458, 1100
          %vm1523 = vcmp.lt.s32.totalorder %v1459, 1100
          %vm1524 = vcmp.lt.s32.totalorder %v1460, 1100
          %vm1525 = vcmp.lt.s32.totalorder %v1461, 1100
          %vm1526 = vcmp.lt.s32.totalorder %v1462, 1100
          %vm1527 = vcmp.lt.s32.totalorder %v1463, 1100
          %vm1528 = vcmp.lt.s32.totalorder %v1464, 1100
          %vm1529 = vcmp.lt.s32.totalorder %v1465, 1100
          %vm1530 = vcmp.lt.s32.totalorder %v1466, 1100
          %vm1531 = vcmp.lt.s32.totalorder %v1467, 1100
          %vm1532 = vcmp.lt.s32.totalorder %v1468, 1100
          %vm1533 = vcmp.lt.s32.totalorder %v1469, 1100
          %vm1534 = vcmp.lt.s32.totalorder %v1470, 1100
          %vm1535 = vcmp.lt.s32.totalorder %v1471, 1100
          %vm1536 = vcmp.lt.s32.totalorder %v1472, 1100
          %vm1537 = vcmp.lt.s32.totalorder %v1473, 1100
          %v1538 = vsel %vm1474, 1, 0
          %v1539 = vsel %vm1475, 1, 0
          %v1540 = vsel %vm1476, 1, 0
          %v1541 = vsel %vm1477, 1, 0
          %v1542 = vsel %vm1478, 1, 0
          %v1543 = vsel %vm1479, 1, 0
          %v1544 = vsel %vm1480, 1, 0
          %v1545 = vsel %vm1481, 1, 0
          %v1546 = vsel %vm1482, 1, 0
          %v1547 = vsel %vm1483, 1, 0
          %v1548 = vsel %vm1484, 1, 0
          %v1549 = vsel %vm1485, 1, 0
          %v1550 = vsel %vm1486, 1, 0
          %v1551 = vsel %vm1487, 1, 0
          %v1552 = vsel %vm1488, 1, 0
          %v1553 = vsel %vm1489, 1, 0
          %v1554 = vsel %vm1490, 1, 0
          %v1555 = vsel %vm1491, 1, 0
          %v1556 = vsel %vm1492, 1, 0
          %v1557 = vsel %vm1493, 1, 0
          %v1558 = vsel %vm1494, 1, 0
          %v1559 = vsel %vm1495, 1, 0
          %v1560 = vsel %vm1496, 1, 0
          %v1561 = vsel %vm1497, 1, 0
          %v1562 = vsel %vm1498, 1, 0
          %v1563 = vsel %vm1499, 1, 0
          %v1564 = vsel %vm1500, 1, 0
          %v1565 = vsel %vm1501, 1, 0
          %v1566 = vsel %vm1502, 1, 0
          %v1567 = vsel %vm1503, 1, 0
          %v1568 = vsel %vm1504, 1, 0
          %v1569 = vsel %vm1505, 1, 0
          %v1570 = vsel %vm1506, 1, 0
          %v1571 = vsel %vm1507, 1, 0
          %v1572 = vsel %vm1508, 1, 0
          %v1573 = vsel %vm1509, 1, 0
          %v1574 = vsel %vm1510, 1, 0
          %v1575 = vsel %vm1511, 1, 0
          %v1576 = vsel %vm1512, 1, 0
          %v1577 = vsel %vm1513, 1, 0
          %v1578 = vsel %vm1514, 1, 0
          %v1579 = vsel %vm1515, 1, 0
          %v1580 = vsel %vm1516, 1, 0
          %v1581 = vsel %vm1517, 1, 0
          %v1582 = vsel %vm1518, 1, 0
          %v1583 = vsel %vm1519, 1, 0
          %v1584 = vsel %vm1520, 1, 0
          %v1585 = vsel %vm1521, 1, 0
          %v1586 = vsel %vm1522, 1, 0
          %v1587 = vsel %vm1523, 1, 0
          %v1588 = vsel %vm1524, 1, 0
          %v1589 = vsel %vm1525, 1, 0
          %v1590 = vsel %vm1526, 1, 0
          %v1591 = vsel %vm1527, 1, 0
          %v1592 = vsel %vm1528, 1, 0
          %v1593 = vsel %vm1529, 1, 0
          %v1594 = vsel %vm1530, 1, 0
          %v1595 = vsel %vm1531, 1, 0
          %v1596 = vsel %vm1532, 1, 0
          %v1597 = vsel %vm1533, 1, 0
          %v1598 = vsel %vm1534, 1, 0
          %v1599 = vsel %vm1535, 1, 0
          %v1600 = vsel %vm1536, 1, 0
          %v1601 = vsel %vm1537, 1, 0
          %vm1602 = vcmp.eq.s32.totalorder %v1538, 1
          %vm1603 = vcmp.eq.s32.totalorder %v1539, 1
          %vm1604 = vcmp.eq.s32.totalorder %v1540, 1
          %vm1605 = vcmp.eq.s32.totalorder %v1541, 1
          %vm1606 = vcmp.eq.s32.totalorder %v1542, 1
          %vm1607 = vcmp.eq.s32.totalorder %v1543, 1
          %vm1608 = vcmp.eq.s32.totalorder %v1544, 1
          %vm1609 = vcmp.eq.s32.totalorder %v1545, 1
          %vm1610 = vcmp.eq.s32.totalorder %v1546, 1
          %vm1611 = vcmp.eq.s32.totalorder %v1547, 1
          %vm1612 = vcmp.eq.s32.totalorder %v1548, 1
          %vm1613 = vcmp.eq.s32.totalorder %v1549, 1
          %vm1614 = vcmp.eq.s32.totalorder %v1550, 1
          %vm1615 = vcmp.eq.s32.totalorder %v1551, 1
          %vm1616 = vcmp.eq.s32.totalorder %v1552, 1
          %vm1617 = vcmp.eq.s32.totalorder %v1553, 1
          %vm1618 = vcmp.eq.s32.totalorder %v1554, 1
          %vm1619 = vcmp.eq.s32.totalorder %v1555, 1
          %vm1620 = vcmp.eq.s32.totalorder %v1556, 1
          %vm1621 = vcmp.eq.s32.totalorder %v1557, 1
          %vm1622 = vcmp.eq.s32.totalorder %v1558, 1
          %vm1623 = vcmp.eq.s32.totalorder %v1559, 1
          %vm1624 = vcmp.eq.s32.totalorder %v1560, 1
          %vm1625 = vcmp.eq.s32.totalorder %v1561, 1
          %vm1626 = vcmp.eq.s32.totalorder %v1562, 1
          %vm1627 = vcmp.eq.s32.totalorder %v1563, 1
          %vm1628 = vcmp.eq.s32.totalorder %v1564, 1
          %vm1629 = vcmp.eq.s32.totalorder %v1565, 1
          %vm1630 = vcmp.eq.s32.totalorder %v1566, 1
          %vm1631 = vcmp.eq.s32.totalorder %v1567, 1
          %vm1632 = vcmp.eq.s32.totalorder %v1568, 1
          %vm1633 = vcmp.eq.s32.totalorder %v1569, 1
          %vm1634 = vcmp.eq.s32.totalorder %v1570, 1
          %vm1635 = vcmp.eq.s32.totalorder %v1571, 1
          %vm1636 = vcmp.eq.s32.totalorder %v1572, 1
          %vm1637 = vcmp.eq.s32.totalorder %v1573, 1
          %vm1638 = vcmp.eq.s32.totalorder %v1574, 1
          %vm1639 = vcmp.eq.s32.totalorder %v1575, 1
          %vm1640 = vcmp.eq.s32.totalorder %v1576, 1
          %vm1641 = vcmp.eq.s32.totalorder %v1577, 1
          %vm1642 = vcmp.eq.s32.totalorder %v1578, 1
          %vm1643 = vcmp.eq.s32.totalorder %v1579, 1
          %vm1644 = vcmp.eq.s32.totalorder %v1580, 1
          %vm1645 = vcmp.eq.s32.totalorder %v1581, 1
          %vm1646 = vcmp.eq.s32.totalorder %v1582, 1
          %vm1647 = vcmp.eq.s32.totalorder %v1583, 1
          %vm1648 = vcmp.eq.s32.totalorder %v1584, 1
          %vm1649 = vcmp.eq.s32.totalorder %v1585, 1
          %vm1650 = vcmp.eq.s32.totalorder %v1586, 1
          %vm1651 = vcmp.eq.s32.totalorder %v1587, 1
          %vm1652 = vcmp.eq.s32.totalorder %v1588, 1
          %vm1653 = vcmp.eq.s32.totalorder %v1589, 1
          %vm1654 = vcmp.eq.s32.totalorder %v1590, 1
          %vm1655 = vcmp.eq.s32.totalorder %v1591, 1
          %vm1656 = vcmp.eq.s32.totalorder %v1592, 1
          %vm1657 = vcmp.eq.s32.totalorder %v1593, 1
          %vm1658 = vcmp.eq.s32.totalorder %v1594, 1
          %vm1659 = vcmp.eq.s32.totalorder %v1595, 1
          %vm1660 = vcmp.eq.s32.totalorder %v1596, 1
          %vm1661 = vcmp.eq.s32.totalorder %v1597, 1
          %vm1662 = vcmp.eq.s32.totalorder %v1598, 1
          %vm1663 = vcmp.eq.s32.totalorder %v1599, 1
          %vm1664 = vcmp.eq.s32.totalorder %v1600, 1
          %vm1665 = vcmp.eq.s32.totalorder %v1601, 1
          %v1666 = vsel %vm1602, %v553, 0.0
          %v1667 = vsel %vm1603, %v556, 0.0
          %v1668 = vsel %vm1604, %v561, 0.0
          %v1669 = vsel %vm1605, %v564, 0.0
          %v1670 = vsel %vm1606, %v569, 0.0
          %v1671 = vsel %vm1607, %v572, 0.0
          %v1672 = vsel %vm1608, %v577, 0.0
          %v1673 = vsel %vm1609, %v580, 0.0
          %v1674 = vsel %vm1610, %v585, 0.0
          %v1675 = vsel %vm1611, %v588, 0.0
          %v1676 = vsel %vm1612, %v593, 0.0
          %v1677 = vsel %vm1613, %v596, 0.0
          %v1678 = vsel %vm1614, %v601, 0.0
          %v1679 = vsel %vm1615, %v604, 0.0
          %v1680 = vsel %vm1616, %v609, 0.0
          %v1681 = vsel %vm1617, %v612, 0.0
          %v1682 = vsel %vm1618, %v617, 0.0
          %v1683 = vsel %vm1619, %v620, 0.0
          %v1684 = vsel %vm1620, %v625, 0.0
          %v1685 = vsel %vm1621, %v628, 0.0
          %v1686 = vsel %vm1622, %v633, 0.0
          %v1687 = vsel %vm1623, %v636, 0.0
          %v1688 = vsel %vm1624, %v641, 0.0
          %v1689 = vsel %vm1625, %v644, 0.0
          %v1690 = vsel %vm1626, %v649, 0.0
          %v1691 = vsel %vm1627, %v652, 0.0
          %v1692 = vsel %vm1628, %v657, 0.0
          %v1693 = vsel %vm1629, %v660, 0.0
          %v1694 = vsel %vm1630, %v665, 0.0
          %v1695 = vsel %vm1631, %v668, 0.0
          %v1696 = vsel %vm1632, %v673, 0.0
          %v1697 = vsel %vm1633, %v676, 0.0
          %v1698 = vsel %vm1634, %v681, 0.0
          %v1699 = vsel %vm1635, %v684, 0.0
          %v1700 = vsel %vm1636, %v689, 0.0
          %v1701 = vsel %vm1637, %v692, 0.0
          %v1702 = vsel %vm1638, %v697, 0.0
          %v1703 = vsel %vm1639, %v700, 0.0
          %v1704 = vsel %vm1640, %v705, 0.0
          %v1705 = vsel %vm1641, %v708, 0.0
          %v1706 = vsel %vm1642, %v713, 0.0
          %v1707 = vsel %vm1643, %v716, 0.0
          %v1708 = vsel %vm1644, %v721, 0.0
          %v1709 = vsel %vm1645, %v724, 0.0
          %v1710 = vsel %vm1646, %v729, 0.0
          %v1711 = vsel %vm1647, %v732, 0.0
          %v1712 = vsel %vm1648, %v737, 0.0
          %v1713 = vsel %vm1649, %v740, 0.0
          %v1714 = vsel %vm1650, %v745, 0.0
          %v1715 = vsel %vm1651, %v748, 0.0
          %v1716 = vsel %vm1652, %v753, 0.0
          %v1717 = vsel %vm1653, %v756, 0.0
          %v1718 = vsel %vm1654, %v761, 0.0
          %v1719 = vsel %vm1655, %v764, 0.0
          %v1720 = vsel %vm1656, %v769, 0.0
          %v1721 = vsel %vm1657, %v772, 0.0
          %v1722 = vsel %vm1658, %v777, 0.0
          %v1723 = vsel %vm1659, %v780, 0.0
          %v1724 = vsel %vm1660, %v785, 0.0
          %v1725 = vsel %vm1661, %v788, 0.0
          %v1726 = vsel %vm1662, %v793, 0.0
          %v1727 = vsel %vm1663, %v796, 0.0
          %v1728 = vsel %vm1664, %v801, 0.0
          %v1729 = vsel %vm1665, %v804, 0.0
          %v1730 = vld [vmem:[%s287] sm:$0xff]
          %v1731 = vadd.f32 %v1666, %v1667
          %v1732 = vadd.f32 %v1731, %v1668
          %v1733 = vadd.f32 %v1732, %v1669
          %v1734 = vadd.f32 %v1733, %v1670
          %v1735 = vadd.f32 %v1734, %v1671
          %v1736 = vadd.f32 %v1735, %v1672
          %v1737 = vadd.f32 %v1736, %v1673
          %v1738 = vadd.f32 %v1737, %v1674
          %v1739 = vadd.f32 %v1738, %v1675
          %v1740 = vadd.f32 %v1739, %v1676
          %v1741 = vadd.f32 %v1740, %v1677
          %v1742 = vadd.f32 %v1741, %v1678
          %v1743 = vadd.f32 %v1742, %v1679
          %v1744 = vadd.f32 %v1743, %v1680
          %v1745 = vadd.f32 %v1744, %v1681
          %v1746 = vadd.f32 %v1745, %v1682
          %v1747 = vadd.f32 %v1746, %v1683
          %v1748 = vadd.f32 %v1747, %v1684
          %v1749 = vadd.f32 %v1748, %v1685
          %v1750 = vadd.f32 %v1749, %v1686
          %v1751 = vadd.f32 %v1750, %v1687
          %v1752 = vadd.f32 %v1751, %v1688
          %v1753 = vadd.f32 %v1752, %v1689
          %v1754 = vadd.f32 %v1753, %v1690
          %v1755 = vadd.f32 %v1754, %v1691
          %v1756 = vadd.f32 %v1755, %v1692
          %v1757 = vadd.f32 %v1756, %v1693
          %v1758 = vadd.f32 %v1757, %v1694
          %v1759 = vadd.f32 %v1758, %v1695
          %v1760 = vadd.f32 %v1759, %v1696
          %v1761 = vadd.f32 %v1760, %v1697
          %v1762 = vadd.f32 %v1761, %v1698
          %v1763 = vadd.f32 %v1762, %v1699
          %v1764 = vadd.f32 %v1763, %v1700
          %v1765 = vadd.f32 %v1764, %v1701
          %v1766 = vadd.f32 %v1765, %v1702
          %v1767 = vadd.f32 %v1766, %v1703
          %v1768 = vadd.f32 %v1767, %v1704
          %v1769 = vadd.f32 %v1768, %v1705
          %v1770 = vadd.f32 %v1769, %v1706
          %v1771 = vadd.f32 %v1770, %v1707
          %v1772 = vadd.f32 %v1771, %v1708
          %v1773 = vadd.f32 %v1772, %v1709
          %v1774 = vadd.f32 %v1773, %v1710
          %v1775 = vadd.f32 %v1774, %v1711
          %v1776 = vadd.f32 %v1775, %v1712
          %v1777 = vadd.f32 %v1776, %v1713
          %v1778 = vadd.f32 %v1777, %v1714
          %v1779 = vadd.f32 %v1778, %v1715
          %v1780 = vadd.f32 %v1779, %v1716
          %v1781 = vadd.f32 %v1780, %v1717
          %v1782 = vadd.f32 %v1781, %v1718
          %v1783 = vadd.f32 %v1782, %v1719
          %v1784 = vadd.f32 %v1783, %v1720
          %v1785 = vadd.f32 %v1784, %v1721
          %v1786 = vadd.f32 %v1785, %v1722
          %v1787 = vadd.f32 %v1786, %v1723
          %v1788 = vadd.f32 %v1787, %v1724
          %v1789 = vadd.f32 %v1788, %v1725
          %v1790 = vadd.f32 %v1789, %v1726
          %v1791 = vadd.f32 %v1790, %v1727
          %v1792 = vadd.f32 %v1791, %v1728
          %v1793 = vadd.f32 %v1792, %v1729
          %v1794 = vrot.slane %v1793, 4
          %v1795 = vadd.f32 %v1793, %v1794
          %v1796 = vrot.slane %v1795, 2
          %v1797 = vadd.f32 %v1795, %v1796
          %v1798 = vrot.slane %v1797, 1
          %v1799 = vadd.f32 %v1797, %v1798
          %v1800 = vadd.f32 %v1730, %v1799
          %1801 = vst [vmem:[%s287] sm:$0xff] %v1800
          %v1802 = vld [vmem:[%s291] sm:$0xff]
          %v1803 = vmul.f32 %v1666, %v1666
          %v1804 = vmul.f32 %v1667, %v1667
          %v1805 = vmul.f32 %v1668, %v1668
          %v1806 = vmul.f32 %v1669, %v1669
          %v1807 = vmul.f32 %v1670, %v1670
          %v1808 = vmul.f32 %v1671, %v1671
          %v1809 = vmul.f32 %v1672, %v1672
          %v1810 = vmul.f32 %v1673, %v1673
          %v1811 = vmul.f32 %v1674, %v1674
          %v1812 = vmul.f32 %v1675, %v1675
          %v1813 = vmul.f32 %v1676, %v1676
          %v1814 = vmul.f32 %v1677, %v1677
          %v1815 = vmul.f32 %v1678, %v1678
          %v1816 = vmul.f32 %v1679, %v1679
          %v1817 = vmul.f32 %v1680, %v1680
          %v1818 = vmul.f32 %v1681, %v1681
          %v1819 = vmul.f32 %v1682, %v1682
          %v1820 = vmul.f32 %v1683, %v1683
          %v1821 = vmul.f32 %v1684, %v1684
          %v1822 = vmul.f32 %v1685, %v1685
          %v1823 = vmul.f32 %v1686, %v1686
          %v1824 = vmul.f32 %v1687, %v1687
          %v1825 = vmul.f32 %v1688, %v1688
          %v1826 = vmul.f32 %v1689, %v1689
          %v1827 = vmul.f32 %v1690, %v1690
          %v1828 = vmul.f32 %v1691, %v1691
          %v1829 = vmul.f32 %v1692, %v1692
          %v1830 = vmul.f32 %v1693, %v1693
          %v1831 = vmul.f32 %v1694, %v1694
          %v1832 = vmul.f32 %v1695, %v1695
          %v1833 = vmul.f32 %v1696, %v1696
          %v1834 = vmul.f32 %v1697, %v1697
          %v1835 = vmul.f32 %v1698, %v1698
          %v1836 = vmul.f32 %v1699, %v1699
          %v1837 = vmul.f32 %v1700, %v1700
          %v1838 = vmul.f32 %v1701, %v1701
          %v1839 = vmul.f32 %v1702, %v1702
          %v1840 = vmul.f32 %v1703, %v1703
          %v1841 = vmul.f32 %v1704, %v1704
          %v1842 = vmul.f32 %v1705, %v1705
          %v1843 = vmul.f32 %v1706, %v1706
          %v1844 = vmul.f32 %v1707, %v1707
          %v1845 = vmul.f32 %v1708, %v1708
          %v1846 = vmul.f32 %v1709, %v1709
          %v1847 = vmul.f32 %v1710, %v1710
          %v1848 = vmul.f32 %v1711, %v1711
          %v1849 = vmul.f32 %v1712, %v1712
          %v1850 = vmul.f32 %v1713, %v1713
          %v1851 = vmul.f32 %v1714, %v1714
          %v1852 = vmul.f32 %v1715, %v1715
          %v1853 = vmul.f32 %v1716, %v1716
          %v1854 = vmul.f32 %v1717, %v1717
          %v1855 = vmul.f32 %v1718, %v1718
          %v1856 = vmul.f32 %v1719, %v1719
          %v1857 = vmul.f32 %v1720, %v1720
          %v1858 = vmul.f32 %v1721, %v1721
          %v1859 = vmul.f32 %v1722, %v1722
          %v1860 = vmul.f32 %v1723, %v1723
          %v1861 = vmul.f32 %v1724, %v1724
          %v1862 = vmul.f32 %v1725, %v1725
          %v1863 = vmul.f32 %v1726, %v1726
          %v1864 = vmul.f32 %v1727, %v1727
          %v1865 = vmul.f32 %v1728, %v1728
          %v1866 = vmul.f32 %v1729, %v1729
          %v1867 = vadd.f32 %v1803, %v1804
          %v1868 = vadd.f32 %v1867, %v1805
          %v1869 = vadd.f32 %v1868, %v1806
          %v1870 = vadd.f32 %v1869, %v1807
          %v1871 = vadd.f32 %v1870, %v1808
          %v1872 = vadd.f32 %v1871, %v1809
          %v1873 = vadd.f32 %v1872, %v1810
          %v1874 = vadd.f32 %v1873, %v1811
          %v1875 = vadd.f32 %v1874, %v1812
          %v1876 = vadd.f32 %v1875, %v1813
          %v1877 = vadd.f32 %v1876, %v1814
          %v1878 = vadd.f32 %v1877, %v1815
          %v1879 = vadd.f32 %v1878, %v1816
          %v1880 = vadd.f32 %v1879, %v1817
          %v1881 = vadd.f32 %v1880, %v1818
          %v1882 = vadd.f32 %v1881, %v1819
          %v1883 = vadd.f32 %v1882, %v1820
          %v1884 = vadd.f32 %v1883, %v1821
          %v1885 = vadd.f32 %v1884, %v1822
          %v1886 = vadd.f32 %v1885, %v1823
          %v1887 = vadd.f32 %v1886, %v1824
          %v1888 = vadd.f32 %v1887, %v1825
          %v1889 = vadd.f32 %v1888, %v1826
          %v1890 = vadd.f32 %v1889, %v1827
          %v1891 = vadd.f32 %v1890, %v1828
          %v1892 = vadd.f32 %v1891, %v1829
          %v1893 = vadd.f32 %v1892, %v1830
          %v1894 = vadd.f32 %v1893, %v1831
          %v1895 = vadd.f32 %v1894, %v1832
          %v1896 = vadd.f32 %v1895, %v1833
          %v1897 = vadd.f32 %v1896, %v1834
          %v1898 = vadd.f32 %v1897, %v1835
          %v1899 = vadd.f32 %v1898, %v1836
          %v1900 = vadd.f32 %v1899, %v1837
          %v1901 = vadd.f32 %v1900, %v1838
          %v1902 = vadd.f32 %v1901, %v1839
          %v1903 = vadd.f32 %v1902, %v1840
          %v1904 = vadd.f32 %v1903, %v1841
          %v1905 = vadd.f32 %v1904, %v1842
          %v1906 = vadd.f32 %v1905, %v1843
          %v1907 = vadd.f32 %v1906, %v1844
          %v1908 = vadd.f32 %v1907, %v1845
          %v1909 = vadd.f32 %v1908, %v1846
          %v1910 = vadd.f32 %v1909, %v1847
          %v1911 = vadd.f32 %v1910, %v1848
          %v1912 = vadd.f32 %v1911, %v1849
          %v1913 = vadd.f32 %v1912, %v1850
          %v1914 = vadd.f32 %v1913, %v1851
          %v1915 = vadd.f32 %v1914, %v1852
          %v1916 = vadd.f32 %v1915, %v1853
          %v1917 = vadd.f32 %v1916, %v1854
          %v1918 = vadd.f32 %v1917, %v1855
          %v1919 = vadd.f32 %v1918, %v1856
          %v1920 = vadd.f32 %v1919, %v1857
          %v1921 = vadd.f32 %v1920, %v1858
          %v1922 = vadd.f32 %v1921, %v1859
          %v1923 = vadd.f32 %v1922, %v1860
          %v1924 = vadd.f32 %v1923, %v1861
          %v1925 = vadd.f32 %v1924, %v1862
          %v1926 = vadd.f32 %v1925, %v1863
          %v1927 = vadd.f32 %v1926, %v1864
          %v1928 = vadd.f32 %v1927, %v1865
          %v1929 = vadd.f32 %v1928, %v1866
          %v1930 = vrot.slane %v1929, 4
          %v1931 = vadd.f32 %v1929, %v1930
          %v1932 = vrot.slane %v1931, 2
          %v1933 = vadd.f32 %v1931, %v1932
          %v1934 = vrot.slane %v1933, 1
          %v1935 = vadd.f32 %v1933, %v1934
          %v1936 = vadd.f32 %v1802, %v1935
          %1937 = vst [vmem:[%s291] sm:$0xff] %v1936
        $region40: #{apply_node_func.3} parent=27 // pred_fallthru
          _
        %s1938 = sand.u32 %s99, 1
        %s1939 = sand.u32 %s99, 1
        %s1940 = smul.addr %s1939, 256
        %s1941 = scalar_lea.vmem [#allocation2], %s1940
        %p1942 = scmp.lt.s32.totalorder %s20, 1
        %s1943 = scalar_select %p1942, %s20, 1
        %s1944 = smul.addr %s1943, 8
        %s1945 = scalar_lea.vmem %s3, %s1944
        %p1946 = scmp.lt.s32.totalorder %s20, 1
        %s1947 = scalar_select %p1946, %s20, 1
        %s1948 = smul.addr %s1947, 8
        %s1949 = scalar_lea.vmem %s4, %s1948
        // Predicated region
        $region41: #{apply_node_func.3} parent=27 // pred_check
          %p1950 = pneg %p109
        $region42: #{apply_node_func.3} parent=27 // pred_check_branch
          %1952 = sbr.rel (%p1950) target = $region44
        $region43: #{apply_node_func.3} parent=27 // pred_region
          %s1953 = smul.u32 %s20, 2
          %s1954 = sadd.s32 %s1953, %s21
          %p1955 = scmp.lt.s32.totalorder %s1954, 2
          %s1956 = scalar_select %p1955, %s1954, 2
          %s1957 = smul.u32 64, %s1956
          %s1958 = ssub.s32 138, %s1957
          %p1959 = scmp.lt.s32.totalorder %s1958, 64
          %s1960 = scalar_select %p1959, %s1958, 64
          %s1961 = smul.u32 64, %s1960
          %p1962 = scmp.ne.s32.totalorder 0, %s1961
          %s1963 = smul.addr %s1957, 4
          %s1964 = scalar_lea.vmem %s2, %s1963
          // Predicated region
          $region45: #{apply_node_func.3} parent=43 // pred_check
            %p1965 = pneg %p1962
          $region46: #{apply_node_func.3} parent=43 // pred_check_branch
            %1967 = sbr.rel (%p1965) target = $region48
          $region47: #{apply_node_func.3} parent=43 // pred_region
            // Predicated region
            $region49: #{apply_node_func.3} parent=47 // pred_check
              _
            $region50: #{apply_node_func.3} parent=47 // pred_check_branch
              %1969 = sbr.rel target = $region52
            $region51: #{apply_node_func.3} parent=47 // pred_region
              // Predicated region
              $region71: #{apply_node_func.3} parent=51 // pred_check
                _
              $region72: #{apply_node_func.3} parent=51 // pred_check_branch
                %2144 = sbr.rel (0) target = $region74
              $region73: #{apply_node_func.3} parent=51 // pred_region
                %s2146 = sshrl.u32 %s1960, 6
                // While loop
                $region75: #{apply_node_func.3} parent=73 // loop_pre_header
                  _
                $region76: #{apply_node_func.3} parent=73 // loop_header
                  %s2148 = sphi 0, %s2150
                  %p2149 = scmp.ge.s32.totalorder %s2148, %s2146
                  %s2153 = sphi 0, %s2286
                  %s2154 = sphi %s1941, %s2289
                  %s2155 = sphi %s1964, %s2290
                $region77: #{apply_node_func.3} parent=73 // loop_header_branch
                  %2152 = sbr.rel (%p2149) target = $region81
                $region78: #{apply_node_func.3} parent=73 // loop_body
                  %v2156 = vld [vmem:[%s2154] sm:$0xf]
                  %2157 = vst [vmem:[%s2155] sm:$0xf] %v2156
                  %v2158 = vld [vmem:[%s2154 + $0x4] sm:$0xf]
                  %2159 = vst [vmem:[%s2155 + $0x4] sm:$0xf] %v2158
                  %v2160 = vld [vmem:[%s2154 + $0x8] sm:$0xf]
                  %2161 = vst [vmem:[%s2155 + $0x8] sm:$0xf] %v2160
                  %v2162 = vld [vmem:[%s2154 + $0xc] sm:$0xf]
                  %2163 = vst [vmem:[%s2155 + $0xc] sm:$0xf] %v2162
                  %v2164 = vld [vmem:[%s2154 + $0x10] sm:$0xf]
                  %2165 = vst [vmem:[%s2155 + $0x10] sm:$0xf] %v2164
                  %v2166 = vld [vmem:[%s2154 + $0x14] sm:$0xf]
                  %2167 = vst [vmem:[%s2155 + $0x14] sm:$0xf] %v2166
                  %v2168 = vld [vmem:[%s2154 + $0x18] sm:$0xf]
                  %2169 = vst [vmem:[%s2155 + $0x18] sm:$0xf] %v2168
                  %v2170 = vld [vmem:[%s2154 + $0x1c] sm:$0xf]
                  %2171 = vst [vmem:[%s2155 + $0x1c] sm:$0xf] %v2170
                  %v2172 = vld [vmem:[%s2154 + $0x20] sm:$0xf]
                  %2173 = vst [vmem:[%s2155 + $0x20] sm:$0xf] %v2172
                  %v2174 = vld [vmem:[%s2154 + $0x24] sm:$0xf]
                  %2175 = vst [vmem:[%s2155 + $0x24] sm:$0xf] %v2174
                  %v2176 = vld [vmem:[%s2154 + $0x28] sm:$0xf]
                  %2177 = vst [vmem:[%s2155 + $0x28] sm:$0xf] %v2176
                  %v2178 = vld [vmem:[%s2154 + $0x2c] sm:$0xf]
                  %2179 = vst [vmem:[%s2155 + $0x2c] sm:$0xf] %v2178
                  %v2180 = vld [vmem:[%s2154 + $0x30] sm:$0xf]
                  %2181 = vst [vmem:[%s2155 + $0x30] sm:$0xf] %v2180
                  %v2182 = vld [vmem:[%s2154 + $0x34] sm:$0xf]
                  %2183 = vst [vmem:[%s2155 + $0x34] sm:$0xf] %v2182
                  %v2184 = vld [vmem:[%s2154 + $0x38] sm:$0xf]
                  %2185 = vst [vmem:[%s2155 + $0x38] sm:$0xf] %v2184
                  %v2186 = vld [vmem:[%s2154 + $0x3c] sm:$0xf]
                  %2187 = vst [vmem:[%s2155 + $0x3c] sm:$0xf] %v2186
                  %v2188 = vld [vmem:[%s2154 + $0x40] sm:$0xf]
                  %2189 = vst [vmem:[%s2155 + $0x40] sm:$0xf] %v2188
                  %v2190 = vld [vmem:[%s2154 + $0x44] sm:$0xf]
                  %2191 = vst [vmem:[%s2155 + $0x44] sm:$0xf] %v2190
                  %v2192 = vld [vmem:[%s2154 + $0x48] sm:$0xf]
                  %2193 = vst [vmem:[%s2155 + $0x48] sm:$0xf] %v2192
                  %v2194 = vld [vmem:[%s2154 + $0x4c] sm:$0xf]
                  %2195 = vst [vmem:[%s2155 + $0x4c] sm:$0xf] %v2194
                  %v2196 = vld [vmem:[%s2154 + $0x50] sm:$0xf]
                  %2197 = vst [vmem:[%s2155 + $0x50] sm:$0xf] %v2196
                  %v2198 = vld [vmem:[%s2154 + $0x54] sm:$0xf]
                  %2199 = vst [vmem:[%s2155 + $0x54] sm:$0xf] %v2198
                  %v2200 = vld [vmem:[%s2154 + $0x58] sm:$0xf]
                  %2201 = vst [vmem:[%s2155 + $0x58] sm:$0xf] %v2200
                  %v2202 = vld [vmem:[%s2154 + $0x5c] sm:$0xf]
                  %2203 = vst [vmem:[%s2155 + $0x5c] sm:$0xf] %v2202
                  %v2204 = vld [vmem:[%s2154 + $0x60] sm:$0xf]
                  %2205 = vst [vmem:[%s2155 + $0x60] sm:$0xf] %v2204
                  %v2206 = vld [vmem:[%s2154 + $0x64] sm:$0xf]
                  %2207 = vst [vmem:[%s2155 + $0x64] sm:$0xf] %v2206
                  %v2208 = vld [vmem:[%s2154 + $0x68] sm:$0xf]
                  %2209 = vst [vmem:[%s2155 + $0x68] sm:$0xf] %v2208
                  %v2210 = vld [vmem:[%s2154 + $0x6c] sm:$0xf]
                  %2211 = vst [vmem:[%s2155 + $0x6c] sm:$0xf] %v2210
                  %v2212 = vld [vmem:[%s2154 + $0x70] sm:$0xf]
                  %2213 = vst [vmem:[%s2155 + $0x70] sm:$0xf] %v2212
                  %v2214 = vld [vmem:[%s2154 + $0x74] sm:$0xf]
                  %2215 = vst [vmem:[%s2155 + $0x74] sm:$0xf] %v2214
                  %v2216 = vld [vmem:[%s2154 + $0x78] sm:$0xf]
                  %2217 = vst [vmem:[%s2155 + $0x78] sm:$0xf] %v2216
                  %v2218 = vld [vmem:[%s2154 + $0x7c] sm:$0xf]
                  %2219 = vst [vmem:[%s2155 + $0x7c] sm:$0xf] %v2218
                  %v2220 = vld [vmem:[%s2154 + $0x80] sm:$0xf]
                  %2221 = vst [vmem:[%s2155 + $0x80] sm:$0xf] %v2220
                  %v2222 = vld [vmem:[%s2154 + $0x84] sm:$0xf]
                  %2223 = vst [vmem:[%s2155 + $0x84] sm:$0xf] %v2222
                  %v2224 = vld [vmem:[%s2154 + $0x88] sm:$0xf]
                  %2225 = vst [vmem:[%s2155 + $0x88] sm:$0xf] %v2224
                  %v2226 = vld [vmem:[%s2154 + $0x8c] sm:$0xf]
                  %2227 = vst [vmem:[%s2155 + $0x8c] sm:$0xf] %v2226
                  %v2228 = vld [vmem:[%s2154 + $0x90] sm:$0xf]
                  %2229 = vst [vmem:[%s2155 + $0x90] sm:$0xf] %v2228
                  %v2230 = vld [vmem:[%s2154 + $0x94] sm:$0xf]
                  %2231 = vst [vmem:[%s2155 + $0x94] sm:$0xf] %v2230
                  %v2232 = vld [vmem:[%s2154 + $0x98] sm:$0xf]
                  %2233 = vst [vmem:[%s2155 + $0x98] sm:$0xf] %v2232
                  %v2234 = vld [vmem:[%s2154 + $0x9c] sm:$0xf]
                  %2235 = vst [vmem:[%s2155 + $0x9c] sm:$0xf] %v2234
                  %v2236 = vld [vmem:[%s2154 + $0xa0] sm:$0xf]
                  %2237 = vst [vmem:[%s2155 + $0xa0] sm:$0xf] %v2236
                  %v2238 = vld [vmem:[%s2154 + $0xa4] sm:$0xf]
                  %2239 = vst [vmem:[%s2155 + $0xa4] sm:$0xf] %v2238
                  %v2240 = vld [vmem:[%s2154 + $0xa8] sm:$0xf]
                  %2241 = vst [vmem:[%s2155 + $0xa8] sm:$0xf] %v2240
                  %v2242 = vld [vmem:[%s2154 + $0xac] sm:$0xf]
                  %2243 = vst [vmem:[%s2155 + $0xac] sm:$0xf] %v2242
                  %v2244 = vld [vmem:[%s2154 + $0xb0] sm:$0xf]
                  %2245 = vst [vmem:[%s2155 + $0xb0] sm:$0xf] %v2244
                  %v2246 = vld [vmem:[%s2154 + $0xb4] sm:$0xf]
                  %2247 = vst [vmem:[%s2155 + $0xb4] sm:$0xf] %v2246
                  %v2248 = vld [vmem:[%s2154 + $0xb8] sm:$0xf]
                  %2249 = vst [vmem:[%s2155 + $0xb8] sm:$0xf] %v2248
                  %v2250 = vld [vmem:[%s2154 + $0xbc] sm:$0xf]
                  %2251 = vst [vmem:[%s2155 + $0xbc] sm:$0xf] %v2250
                  %v2252 = vld [vmem:[%s2154 + $0xc0] sm:$0xf]
                  %2253 = vst [vmem:[%s2155 + $0xc0] sm:$0xf] %v2252
                  %v2254 = vld [vmem:[%s2154 + $0xc4] sm:$0xf]
                  %2255 = vst [vmem:[%s2155 + $0xc4] sm:$0xf] %v2254
                  %v2256 = vld [vmem:[%s2154 + $0xc8] sm:$0xf]
                  %2257 = vst [vmem:[%s2155 + $0xc8] sm:$0xf] %v2256
                  %v2258 = vld [vmem:[%s2154 + $0xcc] sm:$0xf]
                  %2259 = vst [vmem:[%s2155 + $0xcc] sm:$0xf] %v2258
                  %v2260 = vld [vmem:[%s2154 + $0xd0] sm:$0xf]
                  %2261 = vst [vmem:[%s2155 + $0xd0] sm:$0xf] %v2260
                  %v2262 = vld [vmem:[%s2154 + $0xd4] sm:$0xf]
                  %2263 = vst [vmem:[%s2155 + $0xd4] sm:$0xf] %v2262
                  %v2264 = vld [vmem:[%s2154 + $0xd8] sm:$0xf]
                  %2265 = vst [vmem:[%s2155 + $0xd8] sm:$0xf] %v2264
                  %v2266 = vld [vmem:[%s2154 + $0xdc] sm:$0xf]
                  %2267 = vst [vmem:[%s2155 + $0xdc] sm:$0xf] %v2266
                  %v2268 = vld [vmem:[%s2154 + $0xe0] sm:$0xf]
                  %2269 = vst [vmem:[%s2155 + $0xe0] sm:$0xf] %v2268
                  %v2270 = vld [vmem:[%s2154 + $0xe4] sm:$0xf]
                  %2271 = vst [vmem:[%s2155 + $0xe4] sm:$0xf] %v2270
                  %v2272 = vld [vmem:[%s2154 + $0xe8] sm:$0xf]
                  %2273 = vst [vmem:[%s2155 + $0xe8] sm:$0xf] %v2272
                  %v2274 = vld [vmem:[%s2154 + $0xec] sm:$0xf]
                  %2275 = vst [vmem:[%s2155 + $0xec] sm:$0xf] %v2274
                  %v2276 = vld [vmem:[%s2154 + $0xf0] sm:$0xf]
                  %2277 = vst [vmem:[%s2155 + $0xf0] sm:$0xf] %v2276
                  %v2278 = vld [vmem:[%s2154 + $0xf4] sm:$0xf]
                  %2279 = vst [vmem:[%s2155 + $0xf4] sm:$0xf] %v2278
                  %v2280 = vld [vmem:[%s2154 + $0xf8] sm:$0xf]
                  %2281 = vst [vmem:[%s2155 + $0xf8] sm:$0xf] %v2280
                  %v2282 = vld [vmem:[%s2154 + $0xfc] sm:$0xf]
                  %2283 = vst [vmem:[%s2155 + $0xfc] sm:$0xf] %v2282
                  %s2284 = sadd.s32 1, %s2153
                  %p2285 = scmp.ge.s32.totalorder %s2284, %s2146
                  %s2286 = scalar_select %p2285, 0, %s2284
                  %s2287 = smul.u32 %s2286, 256
                  %s2288 = smul.u32 %s2286, 256
                  %s2289 = scalar_lea.vmem %s1941, %s2287 [#allocation2]
                  %s2290 = scalar_lea.vmem %s1964, %s2288
                $region79: #{apply_node_func.3} parent=73 // loop_footer
                  %s2150 = sadd.s32 %s2148, 1
                $region80: #{apply_node_func.3} parent=73 // loop_footer_branch
                  %2147 = sbr.rel target = $region76
                $region81: #{apply_node_func.3} parent=73 // loop_exit
                  _
                %s2291 = sshrl.u32 %s1960, 6
                %s2292 = sand.u32 %s1960, 63
                %s2293 = smul.u32 %s2291, 64
                %s2294 = smul.u32 4, %s2293
                %s2295 = scalar_lea.vmem %s1941, %s2294 [#allocation2]
                %s2296 = smul.u32 4, %s2293
                %s2297 = scalar_lea.vmem %s1964, %s2296
                // While loop
                $region82: #{apply_node_func.3} parent=73 // loop_pre_header
                  _
                $region83: #{apply_node_func.3} parent=73 // loop_header
                  %s2299 = sphi 0, %s2301
                  %p2300 = scmp.ge.s32.totalorder %s2299, %s2292
                  %s2304 = sphi 0, %s2311
                  %s2305 = sphi %s2295, %s2314
                  %s2306 = sphi %s2297, %s2315
                $region84: #{apply_node_func.3} parent=73 // loop_header_branch
                  %2303 = sbr.rel (%p2300) target = $region88
                $region85: #{apply_node_func.3} parent=73 // loop_body
                  %v2307 = vld [vmem:[%s2305] sm:$0xf]
                  %2308 = vst [vmem:[%s2306] sm:$0xf] %v2307
                  %s2309 = sadd.s32 1, %s2304
                  %p2310 = scmp.ge.s32.totalorder %s2309, %s2292
                  %s2311 = scalar_select %p2310, 0, %s2309
                  %s2312 = smul.u32 %s2311, 4
                  %s2313 = smul.u32 %s2311, 4
                  %s2314 = scalar_lea.vmem %s2295, %s2312 [#allocation2]
                  %s2315 = scalar_lea.vmem %s2297, %s2313
                $region86: #{apply_node_func.3} parent=73 // loop_footer
                  %s2301 = sadd.s32 %s2299, 1
                $region87: #{apply_node_func.3} parent=73 // loop_footer_branch
                  %2298 = sbr.rel target = $region83
                $region88: #{apply_node_func.3} parent=73 // loop_exit
                  _
              $region74: #{apply_node_func.3} parent=51 // pred_fallthru
                _
            $region52: #{apply_node_func.3} parent=47 // pred_fallthru
              _
            // Predicated region
            $region53: #{apply_node_func.3} parent=47 // pred_check
              _
            $region54: #{apply_node_func.3} parent=47 // pred_check_branch
              %1971 = sbr.rel (0) target = $region56
            $region55: #{apply_node_func.3} parent=47 // pred_region
              %s1973 = sshrl.u32 %s1960, 6
              // While loop
              $region57: #{apply_node_func.3} parent=55 // loop_pre_header
                _
              $region58: #{apply_node_func.3} parent=55 // loop_header
                %s1975 = sphi 0, %s1977
                %p1976 = scmp.ge.s32.totalorder %s1975, %s1973
                %s1980 = sphi 0, %s2113
                %s1981 = sphi %s1941, %s2116
                %s1982 = sphi %s1964, %s2117
              $region59: #{apply_node_func.3} parent=55 // loop_header_branch
                %1979 = sbr.rel (%p1976) target = $region63
              $region60: #{apply_node_func.3} parent=55 // loop_body
                %v1983 = vld [vmem:[%s1981] sm:$0xf]
                %1984 = vst [vmem:[%s1982] sm:$0xf] %v1983
                %v1985 = vld [vmem:[%s1981 + $0x4] sm:$0xf]
                %1986 = vst [vmem:[%s1982 + $0x4] sm:$0xf] %v1985
                %v1987 = vld [vmem:[%s1981 + $0x8] sm:$0xf]
                %1988 = vst [vmem:[%s1982 + $0x8] sm:$0xf] %v1987
                %v1989 = vld [vmem:[%s1981 + $0xc] sm:$0xf]
                %1990 = vst [vmem:[%s1982 + $0xc] sm:$0xf] %v1989
                %v1991 = vld [vmem:[%s1981 + $0x10] sm:$0xf]
                %1992 = vst [vmem:[%s1982 + $0x10] sm:$0xf] %v1991
                %v1993 = vld [vmem:[%s1981 + $0x14] sm:$0xf]
                %1994 = vst [vmem:[%s1982 + $0x14] sm:$0xf] %v1993
                %v1995 = vld [vmem:[%s1981 + $0x18] sm:$0xf]
                %1996 = vst [vmem:[%s1982 + $0x18] sm:$0xf] %v1995
                %v1997 = vld [vmem:[%s1981 + $0x1c] sm:$0xf]
                %1998 = vst [vmem:[%s1982 + $0x1c] sm:$0xf] %v1997
                %v1999 = vld [vmem:[%s1981 + $0x20] sm:$0xf]
                %2000 = vst [vmem:[%s1982 + $0x20] sm:$0xf] %v1999
                %v2001 = vld [vmem:[%s1981 + $0x24] sm:$0xf]
                %2002 = vst [vmem:[%s1982 + $0x24] sm:$0xf] %v2001
                %v2003 = vld [vmem:[%s1981 + $0x28] sm:$0xf]
                %2004 = vst [vmem:[%s1982 + $0x28] sm:$0xf] %v2003
                %v2005 = vld [vmem:[%s1981 + $0x2c] sm:$0xf]
                %2006 = vst [vmem:[%s1982 + $0x2c] sm:$0xf] %v2005
                %v2007 = vld [vmem:[%s1981 + $0x30] sm:$0xf]
                %2008 = vst [vmem:[%s1982 + $0x30] sm:$0xf] %v2007
                %v2009 = vld [vmem:[%s1981 + $0x34] sm:$0xf]
                %2010 = vst [vmem:[%s1982 + $0x34] sm:$0xf] %v2009
                %v2011 = vld [vmem:[%s1981 + $0x38] sm:$0xf]
                %2012 = vst [vmem:[%s1982 + $0x38] sm:$0xf] %v2011
                %v2013 = vld [vmem:[%s1981 + $0x3c] sm:$0xf]
                %2014 = vst [vmem:[%s1982 + $0x3c] sm:$0xf] %v2013
                %v2015 = vld [vmem:[%s1981 + $0x40] sm:$0xf]
                %2016 = vst [vmem:[%s1982 + $0x40] sm:$0xf] %v2015
                %v2017 = vld [vmem:[%s1981 + $0x44] sm:$0xf]
                %2018 = vst [vmem:[%s1982 + $0x44] sm:$0xf] %v2017
                %v2019 = vld [vmem:[%s1981 + $0x48] sm:$0xf]
                %2020 = vst [vmem:[%s1982 + $0x48] sm:$0xf] %v2019
                %v2021 = vld [vmem:[%s1981 + $0x4c] sm:$0xf]
                %2022 = vst [vmem:[%s1982 + $0x4c] sm:$0xf] %v2021
                %v2023 = vld [vmem:[%s1981 + $0x50] sm:$0xf]
                %2024 = vst [vmem:[%s1982 + $0x50] sm:$0xf] %v2023
                %v2025 = vld [vmem:[%s1981 + $0x54] sm:$0xf]
                %2026 = vst [vmem:[%s1982 + $0x54] sm:$0xf] %v2025
                %v2027 = vld [vmem:[%s1981 + $0x58] sm:$0xf]
                %2028 = vst [vmem:[%s1982 + $0x58] sm:$0xf] %v2027
                %v2029 = vld [vmem:[%s1981 + $0x5c] sm:$0xf]
                %2030 = vst [vmem:[%s1982 + $0x5c] sm:$0xf] %v2029
                %v2031 = vld [vmem:[%s1981 + $0x60] sm:$0xf]
                %2032 = vst [vmem:[%s1982 + $0x60] sm:$0xf] %v2031
                %v2033 = vld [vmem:[%s1981 + $0x64] sm:$0xf]
                %2034 = vst [vmem:[%s1982 + $0x64] sm:$0xf] %v2033
                %v2035 = vld [vmem:[%s1981 + $0x68] sm:$0xf]
                %2036 = vst [vmem:[%s1982 + $0x68] sm:$0xf] %v2035
                %v2037 = vld [vmem:[%s1981 + $0x6c] sm:$0xf]
                %2038 = vst [vmem:[%s1982 + $0x6c] sm:$0xf] %v2037
                %v2039 = vld [vmem:[%s1981 + $0x70] sm:$0xf]
                %2040 = vst [vmem:[%s1982 + $0x70] sm:$0xf] %v2039
                %v2041 = vld [vmem:[%s1981 + $0x74] sm:$0xf]
                %2042 = vst [vmem:[%s1982 + $0x74] sm:$0xf] %v2041
                %v2043 = vld [vmem:[%s1981 + $0x78] sm:$0xf]
                %2044 = vst [vmem:[%s1982 + $0x78] sm:$0xf] %v2043
                %v2045 = vld [vmem:[%s1981 + $0x7c] sm:$0xf]
                %2046 = vst [vmem:[%s1982 + $0x7c] sm:$0xf] %v2045
                %v2047 = vld [vmem:[%s1981 + $0x80] sm:$0xf]
                %2048 = vst [vmem:[%s1982 + $0x80] sm:$0xf] %v2047
                %v2049 = vld [vmem:[%s1981 + $0x84] sm:$0xf]
                %2050 = vst [vmem:[%s1982 + $0x84] sm:$0xf] %v2049
                %v2051 = vld [vmem:[%s1981 + $0x88] sm:$0xf]
                %2052 = vst [vmem:[%s1982 + $0x88] sm:$0xf] %v2051
                %v2053 = vld [vmem:[%s1981 + $0x8c] sm:$0xf]
                %2054 = vst [vmem:[%s1982 + $0x8c] sm:$0xf] %v2053
                %v2055 = vld [vmem:[%s1981 + $0x90] sm:$0xf]
                %2056 = vst [vmem:[%s1982 + $0x90] sm:$0xf] %v2055
                %v2057 = vld [vmem:[%s1981 + $0x94] sm:$0xf]
                %2058 = vst [vmem:[%s1982 + $0x94] sm:$0xf] %v2057
                %v2059 = vld [vmem:[%s1981 + $0x98] sm:$0xf]
                %2060 = vst [vmem:[%s1982 + $0x98] sm:$0xf] %v2059
                %v2061 = vld [vmem:[%s1981 + $0x9c] sm:$0xf]
                %2062 = vst [vmem:[%s1982 + $0x9c] sm:$0xf] %v2061
                %v2063 = vld [vmem:[%s1981 + $0xa0] sm:$0xf]
                %2064 = vst [vmem:[%s1982 + $0xa0] sm:$0xf] %v2063
                %v2065 = vld [vmem:[%s1981 + $0xa4] sm:$0xf]
                %2066 = vst [vmem:[%s1982 + $0xa4] sm:$0xf] %v2065
                %v2067 = vld [vmem:[%s1981 + $0xa8] sm:$0xf]
                %2068 = vst [vmem:[%s1982 + $0xa8] sm:$0xf] %v2067
                %v2069 = vld [vmem:[%s1981 + $0xac] sm:$0xf]
                %2070 = vst [vmem:[%s1982 + $0xac] sm:$0xf] %v2069
                %v2071 = vld [vmem:[%s1981 + $0xb0] sm:$0xf]
                %2072 = vst [vmem:[%s1982 + $0xb0] sm:$0xf] %v2071
                %v2073 = vld [vmem:[%s1981 + $0xb4] sm:$0xf]
                %2074 = vst [vmem:[%s1982 + $0xb4] sm:$0xf] %v2073
                %v2075 = vld [vmem:[%s1981 + $0xb8] sm:$0xf]
                %2076 = vst [vmem:[%s1982 + $0xb8] sm:$0xf] %v2075
                %v2077 = vld [vmem:[%s1981 + $0xbc] sm:$0xf]
                %2078 = vst [vmem:[%s1982 + $0xbc] sm:$0xf] %v2077
                %v2079 = vld [vmem:[%s1981 + $0xc0] sm:$0xf]
                %2080 = vst [vmem:[%s1982 + $0xc0] sm:$0xf] %v2079
                %v2081 = vld [vmem:[%s1981 + $0xc4] sm:$0xf]
                %2082 = vst [vmem:[%s1982 + $0xc4] sm:$0xf] %v2081
                %v2083 = vld [vmem:[%s1981 + $0xc8] sm:$0xf]
                %2084 = vst [vmem:[%s1982 + $0xc8] sm:$0xf] %v2083
                %v2085 = vld [vmem:[%s1981 + $0xcc] sm:$0xf]
                %2086 = vst [vmem:[%s1982 + $0xcc] sm:$0xf] %v2085
                %v2087 = vld [vmem:[%s1981 + $0xd0] sm:$0xf]
                %2088 = vst [vmem:[%s1982 + $0xd0] sm:$0xf] %v2087
                %v2089 = vld [vmem:[%s1981 + $0xd4] sm:$0xf]
                %2090 = vst [vmem:[%s1982 + $0xd4] sm:$0xf] %v2089
                %v2091 = vld [vmem:[%s1981 + $0xd8] sm:$0xf]
                %2092 = vst [vmem:[%s1982 + $0xd8] sm:$0xf] %v2091
                %v2093 = vld [vmem:[%s1981 + $0xdc] sm:$0xf]
                %2094 = vst [vmem:[%s1982 + $0xdc] sm:$0xf] %v2093
                %v2095 = vld [vmem:[%s1981 + $0xe0] sm:$0xf]
                %2096 = vst [vmem:[%s1982 + $0xe0] sm:$0xf] %v2095
                %v2097 = vld [vmem:[%s1981 + $0xe4] sm:$0xf]
                %2098 = vst [vmem:[%s1982 + $0xe4] sm:$0xf] %v2097
                %v2099 = vld [vmem:[%s1981 + $0xe8] sm:$0xf]
                %2100 = vst [vmem:[%s1982 + $0xe8] sm:$0xf] %v2099
                %v2101 = vld [vmem:[%s1981 + $0xec] sm:$0xf]
                %2102 = vst [vmem:[%s1982 + $0xec] sm:$0xf] %v2101
                %v2103 = vld [vmem:[%s1981 + $0xf0] sm:$0xf]
                %2104 = vst [vmem:[%s1982 + $0xf0] sm:$0xf] %v2103
                %v2105 = vld [vmem:[%s1981 + $0xf4] sm:$0xf]
                %2106 = vst [vmem:[%s1982 + $0xf4] sm:$0xf] %v2105
                %v2107 = vld [vmem:[%s1981 + $0xf8] sm:$0xf]
                %2108 = vst [vmem:[%s1982 + $0xf8] sm:$0xf] %v2107
                %v2109 = vld [vmem:[%s1981 + $0xfc] sm:$0xf]
                %2110 = vst [vmem:[%s1982 + $0xfc] sm:$0xf] %v2109
                %s2111 = sadd.s32 1, %s1980
                %p2112 = scmp.ge.s32.totalorder %s2111, %s1973
                %s2113 = scalar_select %p2112, 0, %s2111
                %s2114 = smul.u32 %s2113, 256
                %s2115 = smul.u32 %s2113, 256
                %s2116 = scalar_lea.vmem %s1941, %s2114 [#allocation2]
                %s2117 = scalar_lea.vmem %s1964, %s2115
              $region61: #{apply_node_func.3} parent=55 // loop_footer
                %s1977 = sadd.s32 %s1975, 1
              $region62: #{apply_node_func.3} parent=55 // loop_footer_branch
                %1974 = sbr.rel target = $region58
              $region63: #{apply_node_func.3} parent=55 // loop_exit
                _
              %s2118 = sshrl.u32 %s1960, 6
              %s2119 = sand.u32 %s1960, 63
              %s2120 = smul.u32 %s2118, 64
              %s2121 = smul.u32 4, %s2120
              %s2122 = scalar_lea.vmem %s1941, %s2121 [#allocation2]
              %s2123 = smul.u32 4, %s2120
              %s2124 = scalar_lea.vmem %s1964, %s2123
              // While loop
              $region64: #{apply_node_func.3} parent=55 // loop_pre_header
                _
              $region65: #{apply_node_func.3} parent=55 // loop_header
                %s2126 = sphi 0, %s2128
                %p2127 = scmp.ge.s32.totalorder %s2126, %s2119
                %s2131 = sphi 0, %s2138
                %s2132 = sphi %s2122, %s2141
                %s2133 = sphi %s2124, %s2142
              $region66: #{apply_node_func.3} parent=55 // loop_header_branch
                %2130 = sbr.rel (%p2127) target = $region70
              $region67: #{apply_node_func.3} parent=55 // loop_body
                %v2134 = vld [vmem:[%s2132] sm:$0xf]
                %2135 = vst [vmem:[%s2133] sm:$0xf] %v2134
                %s2136 = sadd.s32 1, %s2131
                %p2137 = scmp.ge.s32.totalorder %s2136, %s2119
                %s2138 = scalar_select %p2137, 0, %s2136
                %s2139 = smul.u32 %s2138, 4
                %s2140 = smul.u32 %s2138, 4
                %s2141 = scalar_lea.vmem %s2122, %s2139 [#allocation2]
                %s2142 = scalar_lea.vmem %s2124, %s2140
              $region68: #{apply_node_func.3} parent=55 // loop_footer
                %s2128 = sadd.s32 %s2126, 1
              $region69: #{apply_node_func.3} parent=55 // loop_footer_branch
                %2125 = sbr.rel target = $region65
              $region70: #{apply_node_func.3} parent=55 // loop_exit
                _
            $region56: #{apply_node_func.3} parent=47 // pred_fallthru
              _
          $region48: #{apply_node_func.3} parent=43 // pred_fallthru
            _
          %2316 = vnop
        $region44: #{apply_node_func.3} parent=27 // pred_fallthru
          _
        // Predicated region
        $region89: #{apply_node_func.3} parent=27 // pred_check
          %p2317 = pneg %p135
        $region90: #{apply_node_func.3} parent=27 // pred_check_branch
          %2319 = sbr.rel (%p2317) target = $region92
        $region91: #{apply_node_func.3} parent=27 // pred_region
          _
        $region92: #{apply_node_func.3} parent=27 // pred_fallthru
          _
        // Predicated region
        $region93: #{apply_node_func.3} parent=27 // pred_check
          %p2320 = pneg %p161
        $region94: #{apply_node_func.3} parent=27 // pred_check_branch
          %2322 = sbr.rel (%p2320) target = $region96
        $region95: #{apply_node_func.3} parent=27 // pred_region
          _
        $region96: #{apply_node_func.3} parent=27 // pred_fallthru
          _
      $region28: #{apply_node_func.3} parent=5 // pred_fallthru
        _
      %p2323 = scmp.le.s32.totalorder 2, %s11
      // Predicated region
      $region97: #{apply_node_func.3} parent=5 // pred_check
        %p2324 = pneg %p2323
      $region98: #{apply_node_func.3} parent=5 // pred_check_branch
        %2326 = sbr.rel (%p2324) target = $region100
      $region99: #{apply_node_func.3} parent=5 // pred_region
        %s2327 = ssub.s32 %s11, 2
        // Predicated region
        $region101: #{apply_node_func.3} parent=99 // pred_check
          %p2328 = pneg %p115
        $region102: #{apply_node_func.3} parent=99 // pred_check_branch
          %2330 = sbr.rel (%p2328) target = $region104
        $region103: #{apply_node_func.3} parent=99 // pred_region
          %s2331 = sand.u32 %s100, 1
          %s2332 = sand.u32 %s100, 1
          %s2333 = smul.addr %s2332, 256
          %s2334 = scalar_lea.vmem [#allocation2], %s2333
        $region104: #{apply_node_func.3} parent=99 // pred_fallthru
          _
        // Predicated region
        $region105: #{apply_node_func.3} parent=99 // pred_check
          %p2335 = pneg %p141
        $region106: #{apply_node_func.3} parent=99 // pred_check_branch
          %2337 = sbr.rel (%p2335) target = $region108
        $region107: #{apply_node_func.3} parent=99 // pred_region
          %p2338 = scmp.lt.s32.totalorder %s22, 1
          %s2339 = scalar_select %p2338, %s22, 1
          %s2340 = smul.addr %s2339, 8
          %s2341 = scalar_lea.vmem %s3, %s2340
        $region108: #{apply_node_func.3} parent=99 // pred_fallthru
          _
        // Predicated region
        $region109: #{apply_node_func.3} parent=99 // pred_check
          %p2342 = pneg %p167
        $region110: #{apply_node_func.3} parent=99 // pred_check_branch
          %2344 = sbr.rel (%p2342) target = $region112
        $region111: #{apply_node_func.3} parent=99 // pred_region
          %p2345 = scmp.lt.s32.totalorder %s22, 1
          %s2346 = scalar_select %p2345, %s22, 1
          %s2347 = smul.addr %s2346, 8
          %s2348 = scalar_lea.vmem %s4, %s2347
        $region112: #{apply_node_func.3} parent=99 // pred_fallthru
          _
      $region100: #{apply_node_func.3} parent=5 // pred_fallthru
        _
    $region6: #{apply_node_func.3} parent=1 // loop_footer
      %s15 = sadd.s32 1, %s11
    $region7: #{apply_node_func.3} parent=1 // loop_footer_branch
      %10 = sbr.rel target = $region3
    $region8: #{apply_node_func.3} parent=1 // loop_exit
      _

</llo_original>
